<compile_context>
chip_gen: v7x
topology: tpu7x:2x2x1
jax: 0.10.0
libtpu: 0.0.40
codegen_flags: <defaults>
</compile_context>

<pallas_src>
import functools
import math

import numpy as np
import jax
import jax.numpy as jnp
from jax.experimental import pallas as pl
from jax.experimental.pallas import tpu as pltpu


# -----------------------------------------------------------------------------
# helpers
# -----------------------------------------------------------------------------
def _divisor_tile(n, max_tile, align):
    """Largest t <= max_tile with n % t == 0 and t % align == 0; else full n."""
    if n <= max_tile:
        return n
    t = (max_tile // align) * align
    while t >= align:
        if n % t == 0:
            return t
        t -= align
    return n


def _padded_tile(n, max_tile, align):
    """Tile for an axis that tolerates padding (used with a pl.cdiv grid).

    Prefers an exact divisor close to max_tile; otherwise returns an aligned
    max tile and Pallas pads the edge block (OOB reads only feed OOB output
    positions, whose writes are clipped)."""
    if n <= max_tile:
        return n
    t = _divisor_tile(n, max_tile, align)
    if t != n and t >= max(align, max_tile // 2):
        return t
    return (max_tile // align) * align


def l2_normalize(x):
    # F.normalize(x, dim=1): x / max(||x||_2, 1e-12).  Plain jnp — XLA fuses it.
    norm = jnp.sqrt(jnp.sum(x * x, axis=1, keepdims=True))
    return x / jnp.maximum(norm, 1e-12)


# -----------------------------------------------------------------------------
# InfoNCE negatives: streamed online-softmax over the queue's K axis.
#   negatives = einsum('nc,kc->nk', q, queue) / T      (queue stored as (C, K))
# Kernel emits per-split running (max, sum-exp); positive logit + final merge
# are a tiny plain-JAX epilogue.
# -----------------------------------------------------------------------------
def _neg_online_softmax_kernel(q_ref, kq_ref, m_ref, l_ref,
                               qbf_scr, m_scr, l_scr, *, inv_t):
    kk = pl.program_id(1)

    @pl.when(kk == 0)
    def _init():
        # hoisted out of the K loop: bf16 cast of q with 1/T folded in
        qbf_scr[...] = (q_ref[...] * inv_t).astype(jnp.bfloat16)
        m_scr[...] = jnp.full_like(m_scr, -jnp.inf)
        l_scr[...] = jnp.zeros_like(l_scr)

    # (nq, C) x (C, tk) -> (nq, tk), f32 accumulation on the MXU
    neg = jax.lax.dot_general(
        qbf_scr[...], kq_ref[...],
        dimension_numbers=(((1,), (0,)), ((), ())),
        preferred_element_type=jnp.float32)

    m_prev = m_scr[...]
    m_new = jnp.maximum(m_prev, jnp.max(neg, axis=-1, keepdims=True))
    l_scr[...] = (l_scr[...] * jnp.exp(m_prev - m_new)
                  + jnp.sum(jnp.exp(neg - m_new), axis=-1, keepdims=True))
    m_scr[...] = m_new

    @pl.when(kk == pl.num_programs(1) - 1)
    def _finalize():
        m_ref[...] = m_scr[...]
        l_ref[...] = l_scr[...]


def infonce_loss(q, p_rep, queue_t, *, temperature, tk=16384, num_splits=2):
    """q: (nq, C) f32 normalized, p_rep: (nq, C) f32, queue_t: (C, K) bf16."""
    nq, c = q.shape
    c2, K = queue_t.shape
    assert c2 == c and p_rep.shape == (nq, c)

    tk = min(tk, K)
    while K % tk:
        tk //= 2
    assert tk == K or tk % 128 == 0
    ktiles = K // tk
    ns = num_splits if (num_splits >= 1 and ktiles % num_splits == 0) else 1
    tps = ktiles // ns
    inv_t = float(1.0 / temperature)

    # double-buffered bf16 queue tiles dominate VMEM; small fixed headroom
    vmem_limit = min(int(2 * c * tk * 2 + (8 << 20)), 100 << 20)

    m_parts, l_parts = pl.pallas_call(
        functools.partial(_neg_online_softmax_kernel, inv_t=inv_t),
        out_shape=(jax.ShapeDtypeStruct((ns, nq, 1), jnp.float32),
                   jax.ShapeDtypeStruct((ns, nq, 1), jnp.float32)),
        grid_spec=pltpu.PrefetchScalarGridSpec(
            num_scalar_prefetch=0,
            grid=(ns, tps),
            in_specs=[pl.BlockSpec((nq, c), lambda s, kk: (0, 0)),
                      pl.BlockSpec((c, tk), lambda s, kk: (0, s * tps + kk))],
            out_specs=[pl.BlockSpec((pl.Squeezed(), nq, 1),
                                    lambda s, kk: (s, 0, 0)),
                       pl.BlockSpec((pl.Squeezed(), nq, 1),
                                    lambda s, kk: (s, 0, 0))],
            scratch_shapes=[pltpu.VMEM((nq, c), jnp.bfloat16),
                            pltpu.VMEM((nq, 1), jnp.float32),
                            pltpu.VMEM((nq, 1), jnp.float32)]),
        compiler_params=pltpu.CompilerParams(
            dimension_semantics=("parallel", "arbitrary"),
            vmem_limit_bytes=vmem_limit),
    )(q, queue_t)

    # tiny epilogue in plain JAX: positive logit + merge of per-split states
    pos = jnp.sum(q * p_rep, axis=-1, keepdims=True) * inv_t      # (nq, 1) f32
    m_tot = jnp.maximum(jnp.max(m_parts, axis=0), pos)            # (nq, 1)
    l_tot = (jnp.exp(pos - m_tot)
             + jnp.sum(l_parts * jnp.exp(m_parts - m_tot), axis=0))
    # -log_softmax at the positive column = logsumexp - pos, averaged over rows
    return jnp.mean((m_tot + jnp.log(l_tot)) - pos)


# -----------------------------------------------------------------------------
# build_positive_points (x2, shared RHS) -> torch.matmul(q, p.permute(0, 2, 1))
# Fused dual matmul: out1 = q1 @ p^T, out2 = q2 @ p^T, /128 and bf16 folded in.
# bf16 MXU inputs, f32 VMEM accumulators, pre-transposed RHS (b, C, HW).
# -----------------------------------------------------------------------------
def _dual_pos_points_kernel(q1_ref, q2_ref, pt_ref, o1_ref, o2_ref,
                            acc1_ref, acc2_ref, *, out_scale):
    @pl.when(pl.program_id(3) == 0)
    def _():
        acc1_ref[...] = jnp.zeros_like(acc1_ref)
        acc2_ref[...] = jnp.zeros_like(acc2_ref)

    pt = pt_ref[...]                                     # (tk, tn) bf16, shared
    acc1_ref[...] += jax.lax.dot_general(
        q1_ref[...], pt, dimension_numbers=(((1,), (0,)), ((), ())),
        preferred_element_type=jnp.float32)
    acc2_ref[...] += jax.lax.dot_general(
        q2_ref[...], pt, dimension_numbers=(((1,), (0,)), ((), ())),
        preferred_element_type=jnp.float32)

    @pl.when(pl.program_id(3) == pl.num_programs(3) - 1)
    def _():
        o1_ref[...] = (acc1_ref[...] * out_scale).astype(o1_ref.dtype)
        o2_ref[...] = (acc2_ref[...] * out_scale).astype(o2_ref.dtype)


def build_positive_points_pair(q1, q2, p, *, out_scale=1.0,
                               max_tm=448, max_tn=256, max_tk=512):
    """Returns (q1 @ p^T, q2 @ p^T) * out_scale as bf16, shapes (B, N, N)."""
    b, n, c = q1.shape
    assert q2.shape == (b, n, c) and p.shape == (b, n, c)

    q1b = q1.astype(jnp.bfloat16)
    q2b = q2.astype(jnp.bfloat16)
    # one-time HBM transpose of the shared RHS -> natural (tk, tn) MXU layout
    ptb = jnp.swapaxes(p, 1, 2).astype(jnp.bfloat16)     # (b, C, N)

    tm = _padded_tile(n, max_tm, 8)        # sublane dim of q / rows of output
    tn = _padded_tile(n, max_tn, 128)      # lane dim of output (cdiv-padded)
    tk = _divisor_tile(c, max_tk, 128)     # contraction must divide exactly
    assert c % tk == 0
    grid = (b, pl.cdiv(n, tm), pl.cdiv(n, tn), c // tk)

    vmem_limit = min(int(2 * (2 * tm * tk + tk * tn) * 2     # bf16 ins, 2-deep
                         + 2 * tm * tn * 4                   # f32 accumulators
                         + 2 * 2 * tm * tn * 2               # bf16 outs, 2-deep
                         + (8 << 20)), 100 << 20)

    return pl.pallas_call(
        functools.partial(_dual_pos_points_kernel, out_scale=float(out_scale)),
        out_shape=(jax.ShapeDtypeStruct((b, n, n), jnp.bfloat16),
                   jax.ShapeDtypeStruct((b, n, n), jnp.bfloat16)),
        grid_spec=pltpu.PrefetchScalarGridSpec(
            num_scalar_prefetch=0,
            grid=grid,
            in_specs=[pl.BlockSpec((pl.Squeezed(), tm, tk),
                                   lambda bb, i, j, k: (bb, i, k)),
                      pl.BlockSpec((pl.Squeezed(), tm, tk),
                                   lambda bb, i, j, k: (bb, i, k)),
                      pl.BlockSpec((pl.Squeezed(), tk, tn),
                                   lambda bb, i, j, k: (bb, k, j))],
            out_specs=[pl.BlockSpec((pl.Squeezed(), tm, tn),
                                    lambda bb, i, j, k: (bb, i, j)),
                       pl.BlockSpec((pl.Squeezed(), tm, tn),
                                    lambda bb, i, j, k: (bb, i, j))],
            scratch_shapes=[pltpu.VMEM((tm, tn), jnp.float32),
                            pltpu.VMEM((tm, tn), jnp.float32)]),
        compiler_params=pltpu.CompilerParams(
            dimension_semantics=("parallel", "parallel", "parallel",
                                 "arbitrary"),
            vmem_limit_bytes=vmem_limit),
    )(q1b, q2b, ptb)


# -----------------------------------------------------------------------------
# SelfDistillation: CE(teacher softmax, student log-softmax) + center stats.
# Student/teacher columns arrive as TWO refs per side (logical concat done
# in-kernel); per-split partial sums are merged + EMA'd in plain JAX outside.
# -----------------------------------------------------------------------------
def _self_distill_kernel(sa_ref, sb_ref, ta_ref, tb_ref, ca_ref, cb_ref,
                         loss_ref, tsa_ref, tsb_ref,
                         loss_acc, tsa_acc, tsb_acc, *,
                         inv_student_temp, inv_teacher_temp):
    r = pl.program_id(1)

    @pl.when(r == 0)
    def _init():
        loss_acc[...] = jnp.zeros_like(loss_acc)
        tsa_acc[...] = jnp.zeros_like(tsa_acc)
        tsb_acc[...] = jnp.zeros_like(tsb_acc)

    sa = sa_ref[...].astype(jnp.float32)
    sb = sb_ref[...].astype(jnp.float32)
    ta = ta_ref[...].astype(jnp.float32)
    tb = tb_ref[...].astype(jnp.float32)
    ca = ca_ref[...].astype(jnp.float32)
    cb = cb_ref[...].astype(jnp.float32)

    # teacher: softmax((t - center) / temp) over the logical concat [ta | tb]
    za = (ta - ca) * inv_teacher_temp
    zb = (tb - cb) * inv_teacher_temp
    m_t = jnp.maximum(jnp.max(za, axis=-1, keepdims=True),
                      jnp.max(zb, axis=-1, keepdims=True))
    ea = jnp.exp(za - m_t)
    eb = jnp.exp(zb - m_t)
    denom_t = (jnp.sum(ea, axis=-1, keepdims=True)
               + jnp.sum(eb, axis=-1, keepdims=True))          # exact division

    # student: log_softmax(s / student_temp) over the logical concat [sa | sb]
    ua = sa * inv_student_temp
    ub = sb * inv_student_temp
    m_s = jnp.maximum(jnp.max(ua, axis=-1, keepdims=True),
                      jnp.max(ub, axis=-1, keepdims=True))
    lse_s = m_s + jnp.log(jnp.sum(jnp.exp(ua - m_s), axis=-1, keepdims=True)
                          + jnp.sum(jnp.exp(ub - m_s), axis=-1, keepdims=True))

    # CE per row: sum_j softmax_teacher_j * (lse_s - u_j)
    ce = (jnp.sum(ea * (lse_s - ua), axis=-1, keepdims=True)
          + jnp.sum(eb * (lse_s - ub), axis=-1, keepdims=True)) / denom_t

    loss_acc[...] += jnp.sum(ce, axis=0, keepdims=True)          # (1, 1)
    tsa_acc[...] += jnp.sum(ta, axis=0, keepdims=True)           # (1, da)
    tsb_acc[...] += jnp.sum(tb, axis=0, keepdims=True)           # (1, db)

    @pl.when(r == pl.num_programs(1) - 1)
    def _finalize():
        loss_ref[...] = loss_acc[...]
        tsa_ref[...] = tsa_acc[...]
        tsb_ref[...] = tsb_acc[...]


def self_distillation(student_a, student_b, teacher_a, teacher_b, center, *,
                      student_temp, teacher_temp, center_momentum,
                      world_size=1, row_tile=128, num_splits=2):
    m, da = student_a.shape
    db = student_b.shape[1]
    assert teacher_a.shape == (m, da) and teacher_b.shape == (m, db)
    assert center.shape == (1, da + db)

    tm = _divisor_tile(m, row_tile, 8)       # exact divisor (no padded rows)
    m_tiles = m // tm
    ns = num_splits if (num_splits >= 1 and m_tiles % num_splits == 0) else 1
    rps = m_tiles // ns

    ca = center[:, :da]
    cb = center[:, da:]

    # 4 bf16 row-tiles double-buffered dominate VMEM
    vmem_limit = min(int(2 * 2 * tm * (da + db) * 2 + (8 << 20)), 100 << 20)

    loss_parts, tsa_parts, tsb_parts = pl.pallas_call(
        functools.partial(_self_distill_kernel,
                          inv_student_temp=float(1.0 / student_temp),
                          inv_teacher_temp=float(1.0 / teacher_temp)),
        out_shape=(jax.ShapeDtypeStruct((ns, 1), jnp.float32),
                   jax.ShapeDtypeStruct((ns, da), jnp.float32),
                   jax.ShapeDtypeStruct((ns, db), jnp.float32)),
        grid_spec=pltpu.PrefetchScalarGridSpec(
            num_scalar_prefetch=0,
            grid=(ns, rps),
            in_specs=[pl.BlockSpec((tm, da), lambda s, r: (s * rps + r, 0)),
                      pl.BlockSpec((tm, db), lambda s, r: (s * rps + r, 0)),
                      pl.BlockSpec((tm, da), lambda s, r: (s * rps + r, 0)),
                      pl.BlockSpec((tm, db), lambda s, r: (s * rps + r, 0)),
                      pl.BlockSpec((1, da), lambda s, r: (0, 0)),
                      pl.BlockSpec((1, db), lambda s, r: (0, 0))],
            out_specs=[pl.BlockSpec((1, 1), lambda s, r: (s, 0)),
                       pl.BlockSpec((1, da), lambda s, r: (s, 0)),
                       pl.BlockSpec((1, db), lambda s, r: (s, 0))],
            scratch_shapes=[pltpu.VMEM((1, 1), jnp.float32),
                            pltpu.VMEM((1, da), jnp.float32),
                            pltpu.VMEM((1, db), jnp.float32)]),
        compiler_params=pltpu.CompilerParams(
            dimension_semantics=("parallel", "arbitrary"),
            vmem_limit_bytes=vmem_limit),
    )(student_a, student_b, teacher_a, teacher_b, ca, cb)

    total_rows = float(m)
    loss = jnp.sum(loss_parts) / total_rows
    # TODO(synk): under data parallelism the reference all-reduces batch_center
    # across devices; single-device here.
    batch_center = jnp.concatenate(
        [jnp.sum(tsa_parts, axis=0, keepdims=True),
         jnp.sum(tsb_parts, axis=0, keepdims=True)],
        axis=-1) / (total_rows * float(world_size))
    new_center = (center * center_momentum
                  + batch_center * (1.0 - center_momentum))
    return loss, new_center


# -----------------------------------------------------------------------------
# In-place (donated) memory-queue insert: no full-queue copy per step.
# -----------------------------------------------------------------------------
@functools.partial(jax.jit, donate_argnums=(0,))
def _queue_insert(queue_t, ki_t, ptr):
    return jax.lax.dynamic_update_slice(queue_t, ki_t, (0, ptr))


# -----------------------------------------------------------------------------
# Memory_Loss module (buffers + forward glue)
# -----------------------------------------------------------------------------
class MemoryLossPallas:
    def __init__(self, key, *, dim=128, K=65536, mask_size=8, ts_feat_dim=32,
                 ts_ratio=1.0, cl_ratio=1.0, world_size=1,
                 neg_tile=16384, sd_row_tile=128, num_core_splits=2):
        self.T = 0.2
        self.dim = dim
        self.Ks = [K]
        self.mask_size = mask_size
        self.ts_ratio = ts_ratio
        self.cl_ratio = cl_ratio
        self.world_size = world_size
        self.neg_tile = neg_tile
        self.sd_row_tile = sd_row_tile
        # leading "parallel" split for the two streaming kernels (v7x dual-TC;
        # neutral on single-TC v5e/v6e)
        self.num_core_splits = num_core_splits

        # queue_x buffer: uniform in [-stdv, stdv], stdv = 1 / sqrt(dim / 3).
        # Stored transposed (C, K) in bf16 (HBM-bandwidth / MXU-orientation
        # optimization; f32 accumulation kept inside the kernel).
        stdv = 1.0 / math.sqrt(self.dim / 3)
        queue = (jax.random.uniform(key, (K, dim), jnp.float32)
                 * (2.0 * stdv) - stdv)
        self.queue_x_t = jnp.transpose(queue).astype(jnp.bfloat16)   # (C, K)
        self.ptr = 0

        # SelfDistillation buffers / schedule
        # (module uses center dim = mask_size^2 + 4096; ts_feat_dim scaled)
        self.student_temp = 0.1
        self.center_momentum = 0.9
        self.center = jnp.zeros((1, mask_size * mask_size + ts_feat_dim),
                                jnp.float32)
        warmup_teacher_temp, teacher_temp = 0.04, 0.07
        warmup_epochs, nepochs = 30, 100
        self.teacher_temp_schedule = np.concatenate(
            (np.linspace(warmup_teacher_temp, teacher_temp, warmup_epochs),
             np.ones(nepochs - warmup_epochs) * teacher_temp))

    # ----- mode == 'image' -----
    def forward_image(self, fxs, fxs_pre, fxs_hist_pre, is_train=True):
        fxs = [l2_normalize(fx) for fx in fxs]
        fxs_pre = [l2_normalize(fx) for fx in fxs_pre]
        fxs_hist_pre = [l2_normalize(fx) for fx in fxs_hist_pre]

        loss = jnp.zeros((), jnp.float32)
        for tri in [[0, 1, 0]]:
            qi, pi, _ = tri
            q = fxs[qi]
            p = fxs_pre[pi]
            nq, np_ = q.shape[0], p.shape[0]
            assert nq >= np_
            ncrops = nq // np_
            # row r of q pairs with p[r // ncrops] (matches q.view(np,ncrops,C))
            p_rep = jnp.repeat(p, ncrops, axis=0)
            # TODO(synk): build_loss / compute_cont_loss are abstract in the
            # reference; MoCo-style InfoNCE (positive at column 0, temp T) is
            # the stand-in, with the negative matmul + online softmax fused.
            loss = loss + infonce_loss(q, p_rep, self.queue_x_t,
                                       temperature=self.T,
                                       tk=self.neg_tile,
                                       num_splits=self.num_core_splits)
        if is_train:
            self.update_memory(fxs_hist_pre)
        return loss

    # ----- mode == 'point' (self-distillation branch) -----
    def forward_point_selfdistill(self, q_ts, p_2_ts, q_ts_f, p_ts_f, p_2_ts_f,
                                  cur_epoch):
        b, hw, c = q_ts.shape

        # out_pos_f = q_ts_f @ p_ts_f^T, out_pos_t_f = p_2_ts_f @ p_ts_f^T
        # fused (shared RHS streamed once); /128 and bf16 cast folded in.
        out_pos_s, out_pos_t = build_positive_points_pair(
            q_ts_f, p_2_ts_f, p_ts_f, out_scale=1.0 / 128.0)      # (B,HW,HW) bf16

        # TODO(synk): overlap() is undefined in the reference and torch.nonzero
        # produces a data-dependent ragged selection; the full static set of
        # points is used here instead of the overlap-masked subset.
        student_a = out_pos_s.reshape(b * hw, hw)
        student_b = q_ts.reshape(b * hw, c).astype(jnp.bfloat16)
        teacher_a = out_pos_t.reshape(b * hw, hw)
        teacher_b = p_2_ts.reshape(b * hw, c).astype(jnp.bfloat16)

        temp = float(self.teacher_temp_schedule[cur_epoch])
        loss_ts, new_center = self_distillation(
            student_a, student_b, teacher_a, teacher_b, self.center,
            student_temp=self.student_temp, teacher_temp=temp,
            center_momentum=self.center_momentum,
            world_size=self.world_size, row_tile=self.sd_row_tile,
            num_splits=self.num_core_splits)
        self.center = new_center
        return loss_ts

    # ----- memory queue update (no_grad buffer write; reference semantics:
    #        truncate at the queue end, wrap only when ptr lands exactly on K)
    def update_memory(self, fxs_hist):
        for ki, ni in zip(fxs_hist, [0]):
            ptr = int(self.ptr)
            K = self.Ks[ni]
            num_items = ki.shape[0]
            if num_items > K - ptr:
                num_items = K - ptr
            ki_t = jnp.transpose(ki[:num_items]).astype(jnp.bfloat16)  # (C, n)
            self.queue_x_t = _queue_insert(self.queue_x_t, ki_t,
                                           jnp.array(ptr, jnp.int32))
            ptr += num_items
            if ptr == K:
                ptr = 0
            self.ptr = ptr


# -----------------------------------------------------------------------------
if __name__ == "__main__":
    key = jax.random.PRNGKey(0)
    ks = jax.random.split(key, 10)

    # small demo shapes consistent with the module
    dim = 128            # self.dim / loss_input_dim
    batch = 8            # per-GPU batch (key/positive batch)
    ncrops = 2           # query crops per key
    K = 65536            # memory queue size (module buffer)
    mask_size = 8        # module uses 56; scaled down for the demo
    hw = mask_size * mask_size
    c_ts = 32            # point-feature dim (module implies 4096); scaled down
    b_pts = 2

    loss_mod = MemoryLossPallas(ks[9], dim=dim, K=K, mask_size=mask_size,
                                ts_feat_dim=c_ts, ts_ratio=1.0, cl_ratio=1.0,
                                neg_tile=16384, sd_row_tile=64,
                                num_core_splits=2)

    # ---------- image mode inputs ----------
    fxs = [jax.random.normal(ks[0], (batch * ncrops, dim), jnp.float32)]
    fxs_pre = [jax.random.normal(ks[1], (batch, dim), jnp.float32),
               jax.random.normal(ks[2], (batch, dim), jnp.float32)]
    fxs_hist_pre = [jax.random.normal(ks[3], (batch, dim), jnp.float32)]

    loss_img = loss_mod.forward_image(fxs, fxs_pre, fxs_hist_pre, is_train=True)

    # ---------- point mode (self-distillation) inputs ----------
    q_ts = jax.random.normal(ks[4], (b_pts, hw, c_ts), jnp.float32)
    p_2_ts = jax.random.normal(ks[5], (b_pts, hw, c_ts), jnp.float32)
    q_ts_f = jax.random.normal(ks[6], (b_pts, hw, c_ts), jnp.float32)
    p_ts_f = jax.random.normal(ks[7], (b_pts, hw, c_ts), jnp.float32)
    p_2_ts_f = jax.random.normal(ks[8], (b_pts, hw, c_ts), jnp.float32)

    loss_ts = loss_mod.forward_point_selfdistill(
        q_ts, p_2_ts, q_ts_f, p_ts_f, p_2_ts_f, cur_epoch=0)

    total = loss_mod.ts_ratio * loss_ts + loss_mod.cl_ratio * loss_img

    jax.block_until_ready((loss_img, loss_ts, total,
                           loss_mod.queue_x_t, loss_mod.center))
    print("KERNEL_OK")
</pallas_src>

<mosaic_0001>
module attributes {stable_mosaic.version = 11 : i64} {
  func.func @_neg_online_softmax_kernel(%arg0: i32, %arg1: i32, %arg2: memref<16x128xf32, #tpu.memory_space<vmem>>, %arg3: memref<128x16384xbf16, #tpu.memory_space<vmem>>, %arg4: memref<1x16x1xf32, #tpu.memory_space<vmem>>, %arg5: memref<1x16x1xf32, #tpu.memory_space<vmem>>, %arg6: memref<16x128xbf16, #tpu.memory_space<vmem>>, %arg7: memref<16x1xf32, #tpu.memory_space<vmem>>, %arg8: memref<16x1xf32, #tpu.memory_space<vmem>>) attributes {dimension_semantics = [#tpu.dimension_semantics<parallel>, #tpu.dimension_semantics<arbitrary>], iteration_bounds = array<i64: 2, 2>, scalar_prefetch = 0 : i64, scratch_operands = 3 : i64, tpu.core_type = #tpu.core_type<tc>, window_params = [{pipeline_mode = #tpu.pipeline_mode<synchronous>, transform_indices = @transform_0, window_bounds = array<i64: 16, 128>}, {transform_indices = @transform_1, window_bounds = array<i64: 128, 16384>}, {transform_indices = @transform_2, window_bounds = array<i64: 1, 16, 1>}, {transform_indices = @transform_3, window_bounds = array<i64: 1, 16, 1>}]} {
    %c0_i32 = arith.constant 0 : i32
    %0 = arith.cmpi eq, %arg1, %c0_i32 : i32
    %1 = arith.extui %0 : i1 to i32
    %c0_i32_0 = arith.constant 0 : i32
    %2 = arith.cmpi ne, %1, %c0_i32_0 : i32
    scf.if %2 {
      %c0_15 = arith.constant 0 : index
      %c0_16 = arith.constant 0 : index
      %25 = vector.load %arg2[%c0_15, %c0_16] : memref<16x128xf32, #tpu.memory_space<vmem>>, vector<16x128xf32>
      %cst_17 = arith.constant 5.000000e+00 : f32
      %26 = vector.broadcast %cst_17 : f32 to vector<16x128xf32>
      %27 = arith.mulf %25, %26 : vector<16x128xf32>
      %28 = arith.truncf %27 : vector<16x128xf32> to vector<16x128xbf16>
      %c0_18 = arith.constant 0 : index
      %c0_19 = arith.constant 0 : index
      %29 = vector.load %arg6[%c0_18, %c0_19] : memref<16x128xbf16, #tpu.memory_space<vmem>>, vector<16x128xbf16>
      tpu.vector_store %arg6[%c0_18, %c0_19], %28 {strides = array<i32>} : memref<16x128xbf16, #tpu.memory_space<vmem>>, vector<16x128xbf16>,
      %cst_20 = arith.constant 0xFF800000 : f32
      %30 = vector.broadcast %cst_20 : f32 to vector<16x1xf32>
      %c0_21 = arith.constant 0 : index
      %c0_22 = arith.constant 0 : index
      %31 = vector.load %arg7[%c0_21, %c0_22] : memref<16x1xf32, #tpu.memory_space<vmem>>, vector<16x1xf32>
      tpu.vector_store %arg7[%c0_21, %c0_22], %30 {strides = array<i32>} : memref<16x1xf32, #tpu.memory_space<vmem>>, vector<16x1xf32>,
      %cst_23 = arith.constant 0.000000e+00 : f32
      %32 = vector.broadcast %cst_23 : f32 to vector<16x1xf32>
      %c0_24 = arith.constant 0 : index
      %c0_25 = arith.constant 0 : index
      %33 = vector.load %arg8[%c0_24, %c0_25] : memref<16x1xf32, #tpu.memory_space<vmem>>, vector<16x1xf32>
      tpu.vector_store %arg8[%c0_24, %c0_25], %32 {strides = array<i32>} : memref<16x1xf32, #tpu.memory_space<vmem>>, vector<16x1xf32>,
    } else {
    }
    %c0 = arith.constant 0 : index
    %c0_1 = arith.constant 0 : index
    %3 = vector.load %arg6[%c0, %c0_1] : memref<16x128xbf16, #tpu.memory_space<vmem>>, vector<16x128xbf16>
    %c0_2 = arith.constant 0 : index
    %c0_3 = arith.constant 0 : index
    %4 = vector.load %arg3[%c0_2, %c0_3] : memref<128x16384xbf16, #tpu.memory_space<vmem>>, vector<128x16384xbf16>
    %cst = arith.constant dense<0.000000e+00> : vector<16x16384xf32>
    %5 = tpu.matmul %3, %4, %cst {dimension_numbers = #tpu.dot_dimension_numbers<[1], [0], [0], [1], [0, 0, 1, 1], [], []>} : vector<16x128xbf16>, vector<128x16384xbf16>, vector<16x16384xf32> -> vector<16x16384xf32>
    %c0_4 = arith.constant 0 : index
    %c0_5 = arith.constant 0 : index
    %6 = vector.load %arg7[%c0_4, %c0_5] : memref<16x1xf32, #tpu.memory_space<vmem>>, vector<16x1xf32>
    %cst_6 = arith.constant dense<0xFF800000> : vector<16xf32>
    %7 = vector.multi_reduction <maximumf>, %5, %cst_6 [1] : vector<16x16384xf32> to vector<16xf32>
    %8 = vector.shape_cast %7 : vector<16xf32> to vector<16x1xf32>
    %9 = arith.maximumf %6, %8 : vector<16x1xf32>
    %c0_7 = arith.constant 0 : index
    %c0_8 = arith.constant 0 : index
    %10 = vector.load %arg8[%c0_7, %c0_8] : memref<16x1xf32, #tpu.memory_space<vmem>>, vector<16x1xf32>
    %11 = arith.subf %6, %9 : vector<16x1xf32>
    %12 = math.exp %11 : vector<16x1xf32>
    %13 = arith.mulf %10, %12 : vector<16x1xf32>
    %14 = vector.broadcast %9 : vector<16x1xf32> to vector<16x16384xf32>
    %15 = arith.subf %5, %14 : vector<16x16384xf32>
    %16 = math.exp %15 : vector<16x16384xf32>
    %cst_9 = arith.constant dense<0.000000e+00> : vector<16xf32>
    %17 = vector.multi_reduction <add>, %16, %cst_9 [1] : vector<16x16384xf32> to vector<16xf32>
    %18 = vector.shape_cast %17 : vector<16xf32> to vector<16x1xf32>
    %19 = arith.addf %13, %18 : vector<16x1xf32>
    %c0_10 = arith.constant 0 : index
    %c0_11 = arith.constant 0 : index
    %20 = vector.load %arg8[%c0_10, %c0_11] : memref<16x1xf32, #tpu.memory_space<vmem>>, vector<16x1xf32>
    tpu.vector_store %arg8[%c0_10, %c0_11], %19 {strides = array<i32>} : memref<16x1xf32, #tpu.memory_space<vmem>>, vector<16x1xf32>,
    %c0_12 = arith.constant 0 : index
    %c0_13 = arith.constant 0 : index
    %21 = vector.load %arg7[%c0_12, %c0_13] : memref<16x1xf32, #tpu.memory_space<vmem>>, vector<16x1xf32>
    tpu.vector_store %arg7[%c0_12, %c0_13], %9 {strides = array<i32>} : memref<16x1xf32, #tpu.memory_space<vmem>>, vector<16x1xf32>,
    %c1_i32 = arith.constant 1 : i32
    %22 = arith.cmpi eq, %arg1, %c1_i32 : i32
    %23 = arith.extui %22 : i1 to i32
    %c0_i32_14 = arith.constant 0 : i32
    %24 = arith.cmpi ne, %23, %c0_i32_14 : i32
    scf.if %24 {
      %c0_15 = arith.constant 0 : index
      %c0_16 = arith.constant 0 : index
      %25 = vector.load %arg7[%c0_15, %c0_16] : memref<16x1xf32, #tpu.memory_space<vmem>>, vector<16x1xf32>
      %c0_17 = arith.constant 0 : index
      %c0_18 = arith.constant 0 : index
      %c0_19 = arith.constant 0 : index
      %26 = vector.load %arg4[%c0_17, %c0_18, %c0_19] : memref<1x16x1xf32, #tpu.memory_space<vmem>>, vector<1x16x1xf32>
      %27 = vector.shape_cast %26 : vector<1x16x1xf32> to vector<16x1xf32>
      %28 = vector.shape_cast %25 : vector<16x1xf32> to vector<1x16x1xf32>
      tpu.vector_store %arg4[%c0_17, %c0_18, %c0_19], %28 {strides = array<i32>} : memref<1x16x1xf32, #tpu.memory_space<vmem>>, vector<1x16x1xf32>,
      %c0_20 = arith.constant 0 : index
      %c0_21 = arith.constant 0 : index
      %29 = vector.load %arg8[%c0_20, %c0_21] : memref<16x1xf32, #tpu.memory_space<vmem>>, vector<16x1xf32>
      %c0_22 = arith.constant 0 : index
      %c0_23 = arith.constant 0 : index
      %c0_24 = arith.constant 0 : index
      %30 = vector.load %arg5[%c0_22, %c0_23, %c0_24] : memref<1x16x1xf32, #tpu.memory_space<vmem>>, vector<1x16x1xf32>
      %31 = vector.shape_cast %30 : vector<1x16x1xf32> to vector<16x1xf32>
      %32 = vector.shape_cast %29 : vector<16x1xf32> to vector<1x16x1xf32>
      tpu.vector_store %arg5[%c0_22, %c0_23, %c0_24], %32 {strides = array<i32>} : memref<1x16x1xf32, #tpu.memory_space<vmem>>, vector<1x16x1xf32>,
    } else {
    }
    return
  }
  func.func @transform_0(%arg0: i32, %arg1: i32) -> (i32, i32) {
    %c0_i32 = arith.constant 0 : i32
    %c0_i32_0 = arith.constant 0 : i32
    %c0_i32_1 = arith.constant 0 : i32
    return %c0_i32, %c0_i32_0 : i32, i32
  }
  func.func @transform_1(%arg0: i32, %arg1: i32) -> (i32, i32) {
    %c2_i32 = arith.constant 2 : i32
    %0 = arith.muli %arg0, %c2_i32 : i32
    %1 = arith.addi %0, %arg1 : i32
    %c0_i32 = arith.constant 0 : i32
    %c0_i32_0 = arith.constant 0 : i32
    return %c0_i32, %1 : i32, i32
  }
  func.func @transform_2(%arg0: i32, %arg1: i32) -> (i32, i32, i32) {
    %c0_i32 = arith.constant 0 : i32
    %c0_i32_0 = arith.constant 0 : i32
    %c0_i32_1 = arith.constant 0 : i32
    return %arg0, %c0_i32, %c0_i32_0 : i32, i32, i32
  }
  func.func @transform_3(%arg0: i32, %arg1: i32) -> (i32, i32, i32) {
    %c0_i32 = arith.constant 0 : i32
    %c0_i32_0 = arith.constant 0 : i32
    %c0_i32_1 = arith.constant 0 : i32
    return %arg0, %c0_i32, %c0_i32_0 : i32, i32, i32
  }
}

</mosaic_0001>

<llo_original>
// kernel: tpu_custom_call.1
$region0: #{tpu_custom_call.1}
  #allocation0 [shape = 'u32[]', space=smem, size = 0x4, offset = 0x4, fixed_abs, tag = 'smem constant byte address 0x4 - core index']
  #allocation1 [shape = 'u32[144,128]{1,0:T(1,128)}', space=vmem, size = 0x12000, scoped, tag = 'internal scratch']
  #allocation2 [shape = 'bf16[16,128]{1,0:T(16,128)(2,1)}', space=vmem, size = 0x1000, scoped, tag = 'scratch operand']
  #allocation3 [shape = 'f32[16,1]{1,0:T(8,128)}', space=vmem, size = 0x2000, scoped, tag = 'scratch operand']
  #allocation4 [shape = 'f32[16,1]{1,0:T(8,128)}', space=vmem, size = 0x2000, scoped, tag = 'scratch operand']
  %s0 = inlined_call_operand.hbm [shape: f32[16,128], index: 0, kind: input, shape index: {}]
  %s1 = inlined_call_operand.hbm [shape: bf16[128,65536], index: 1, kind: input, shape index: {}]
  %s2 = inlined_call_operand.vmem [shape: f32[2,16,1], index: 2, kind: output, shape index: {0}]
  %s3 = inlined_call_operand.vmem [shape: f32[2,16,1], index: 3, kind: output, shape index: {1}]
  %4 = xla_tuple %s2, %s3
  %s5 = sld [smem:[#allocation0]]
  $region65: #{tpu_custom_call.1} parent=0
    _
  %s7 = ssub.s32 1, %s5
  %s8 = scalar_select 0, %s7, %s5
  $region1: #{tpu_custom_call.1} parent=0
    #allocation5 [shape = 'u8[8192]{0}', space=vmem, size = 0x2000, scoped, tag = 'input window, operand 0, single buffered']
    #allocation6 [shape = 's32[2]{0}', space=sflag, size = 0x8, scoped, tag = 'scoped memory for tpu_custom_call.1']
    #allocation7 [shape = 'u8[8388608]{0}', space=vmem, size = 0x800000, scoped, tag = 'input window, operand 1']
    #allocation8 [shape = 's32[2]{0}', space=sflag, size = 0x8, scoped, tag = 'scoped memory for tpu_custom_call.1']
    %9 = vsyncpa [#allocation6], 0
    %10 = vsyncpa [#allocation8], 0
    %s11 = scalar_lea.sflag [#allocation8], 1
    %12 = vsyncpa %s11, 0
    loop: start=0, step=1, limit=6
    $region2: #{tpu_custom_call.1} parent=1 // loop_pre_header
      _
    $region3: #{tpu_custom_call.1} parent=1 // loop_header
      %s14 = sphi 0, %s18
      %p15 = scmp.ge.s32.totalorder %s14, 6
      %s21 = sphi 0, %s33
      %s22 = sphi 0, %s29
      %s23 = sphi 0, %s21
      %s24 = sphi 0, %s22
      %s25 = sphi 0, %s23
      %s26 = sphi 0, %s24
      %s34 = sphi 0, %s34
      %s36 = sphi 0, %s34
      %s37 = sphi 0, %s36
      %s51 = sphi 0, %s37
      %s61 = sphi 0, %s63
      %s64 = sphi 0, %s61
      %s65 = sphi 0, %s64
      %s81 = sphi 0, %s65
      %s87 = sphi 0, %s89
      %s90 = sphi 0, %s87
      %s91 = sphi 0, %s90
      %s107 = sphi 0, %s91
      %s113 = sphi 0, %s115
      %s116 = sphi 0, %s113
      %s117 = sphi 0, %s116
      %s133 = sphi 0, %s117
    $region4: #{tpu_custom_call.1} parent=1 // loop_header_branch
      %17 = sbr.rel (%p15) target = $region8
    $region5: #{tpu_custom_call.1} parent=1 // loop_body
      %s19 = ssub.s32 %s14, 1
      %s20 = ssub.s32 %s14, 2
      %s27 = sadd.s32 1, %s22
      %p28 = scmp.ge.s32.totalorder %s27, 2
      %s29 = scalar_select %p28, 0, %s27
      %s30 = sadd.s32 1, %s21
      %s31 = scalar_select %p28, %s30, %s21
      %p32 = scmp.ge.s32.totalorder %s31, 2
      %s33 = scalar_select %p32, 0, %s31
      %s35 = sadd.s32 %s34, 1
      %p38 = scmp.eq.s32.totalorder %s14, 3
      %p39 = scmp.ne.s32.totalorder %s34, %s36
      %p40 = scmp.eq.s32.totalorder %s14, 0
      %p41 = por %p39, %p40
      %p42 = scmp.ne.s32.totalorder %s34, %s36
      %p43 = scmp.eq.s32.totalorder %s19, 3
      %p44 = por %p42, %p43
      %p45 = scmp.ne.s32.totalorder %s36, %s37
      %p46 = scmp.eq.s32.totalorder %s19, 0
      %p47 = por %p45, %p46
      %p48 = scmp.ne.s32.totalorder %s36, %s37
      %p49 = scmp.eq.s32.totalorder %s20, 3
      %p50 = por %p48, %p49
      %p52 = scmp.ne.s32.totalorder %s37, %s51
      %p53 = scmp.eq.s32.totalorder %s20, 0
      %p54 = por %p52, %p53
      %s55 = smul.u32 %s21, 2
      %s56 = sadd.s32 %s55, %s22
      %s57 = smul.u32 %s33, 2
      %s58 = sadd.s32 %s57, %s29
      %s59 = ssub.s32 %s56, %s58
      %p60 = scmp.eq.s32.totalorder %s59, 0
      %s62 = sadd.s32 %s61, 1
      %s63 = scalar_select %p60, %s61, %s62
      %p66 = pneg %p60
      %p67 = scmp.eq.s32.totalorder %s14, 3
      %p68 = por %p66, %p67
      %p69 = scmp.ne.s32.totalorder %s61, %s64
      %p70 = scmp.eq.s32.totalorder %s14, 0
      %p71 = por %p69, %p70
      %p72 = scmp.ne.s32.totalorder %s61, %s64
      %p73 = scmp.eq.s32.totalorder %s19, 3
      %p74 = por %p72, %p73
      %p75 = scmp.ne.s32.totalorder %s64, %s65
      %p76 = scmp.eq.s32.totalorder %s19, 0
      %p77 = por %p75, %p76
      %p78 = scmp.ne.s32.totalorder %s64, %s65
      %p79 = scmp.eq.s32.totalorder %s20, 3
      %p80 = por %p78, %p79
      %p82 = scmp.ne.s32.totalorder %s65, %s81
      %p83 = scmp.eq.s32.totalorder %s20, 0
      %p84 = por %p82, %p83
      %s85 = ssub.s32 %s21, %s33
      %p86 = scmp.eq.s32.totalorder %s85, 0
      %s88 = sadd.s32 %s87, 1
      %s89 = scalar_select %p86, %s87, %s88
      %p92 = pneg %p86
      %p93 = scmp.eq.s32.totalorder %s14, 3
      %p94 = por %p92, %p93
      %p95 = scmp.ne.s32.totalorder %s87, %s90
      %p96 = scmp.eq.s32.totalorder %s14, 0
      %p97 = por %p95, %p96
      %p98 = scmp.ne.s32.totalorder %s87, %s90
      %p99 = scmp.eq.s32.totalorder %s19, 3
      %p100 = por %p98, %p99
      %p101 = scmp.ne.s32.totalorder %s90, %s91
      %p102 = scmp.eq.s32.totalorder %s19, 0
      %p103 = por %p101, %p102
      %p104 = scmp.ne.s32.totalorder %s90, %s91
      %p105 = scmp.eq.s32.totalorder %s20, 3
      %p106 = por %p104, %p105
      %p108 = scmp.ne.s32.totalorder %s91, %s107
      %p109 = scmp.eq.s32.totalorder %s20, 0
      %p110 = por %p108, %p109
      %s111 = ssub.s32 %s21, %s33
      %p112 = scmp.eq.s32.totalorder %s111, 0
      %s114 = sadd.s32 %s113, 1
      %s115 = scalar_select %p112, %s113, %s114
      %p118 = pneg %p112
      %p119 = scmp.eq.s32.totalorder %s14, 3
      %p120 = por %p118, %p119
      %p121 = scmp.ne.s32.totalorder %s113, %s116
      %p122 = scmp.eq.s32.totalorder %s14, 0
      %p123 = por %p121, %p122
      %p124 = scmp.ne.s32.totalorder %s113, %s116
      %p125 = scmp.eq.s32.totalorder %s19, 3
      %p126 = por %p124, %p125
      %p127 = scmp.ne.s32.totalorder %s116, %s117
      %p128 = scmp.eq.s32.totalorder %s19, 0
      %p129 = por %p127, %p128
      %p130 = scmp.ne.s32.totalorder %s116, %s117
      %p131 = scmp.eq.s32.totalorder %s20, 3
      %p132 = por %p130, %p131
      %p134 = scmp.ne.s32.totalorder %s117, %s133
      %p135 = scmp.eq.s32.totalorder %s20, 0
      %p136 = por %p134, %p135
      %p137 = scmp.le.s32.totalorder 1, %s14
      %p138 = scmp.lt.s32.totalorder %s14, 5
      %p139 = pnand %p137, %p138
      %p140 = pneg %p139
      // Predicated region
      $region9: #{tpu_custom_call.1} parent=5 // pred_check
        _
      $region10: #{tpu_custom_call.1} parent=5 // pred_check_branch
        %142 = sbr.rel (%p139) target = $region12
      $region11: #{tpu_custom_call.1} parent=5 // pred_region
        %s143 = ssub.s32 %s14, 1
        // Predicated region
        $region13: #{tpu_custom_call.1} parent=11 // pred_check
          %p144 = pneg %p47
        $region14: #{tpu_custom_call.1} parent=11 // pred_check_branch
          %146 = sbr.rel (%p144) target = $region16
        $region15: #{tpu_custom_call.1} parent=11 // pred_region
          %s148 = ssub.s32 256, 256
          %149 = vsyncadd [#allocation6], %s148
          %s150 = sshll.u32 [#allocation5], 4
          %s151 = int_to_ptr.vmem [resolvable:$true] %s150
          %156 = dma.hbm_to_vmem [thread:$0]  %s0, 256, %s151, [#allocation6], 128, 128, 8
        $region16: #{tpu_custom_call.1} parent=11 // pred_fallthru
          _
      $region12: #{tpu_custom_call.1} parent=5 // pred_fallthru
        _
      %p157 = scmp.lt.s32.totalorder %s14, 4
      // Predicated region
      $region17: #{tpu_custom_call.1} parent=5 // pred_check
        %p158 = pneg %p157
      $region18: #{tpu_custom_call.1} parent=5 // pred_check_branch
        %160 = sbr.rel (%p158) target = $region20
      $region19: #{tpu_custom_call.1} parent=5 // pred_region
        // Predicated region
        $region21: #{tpu_custom_call.1} parent=19 // pred_check
          %p161 = pneg %p71
        $region22: #{tpu_custom_call.1} parent=19 // pred_check_branch
          %163 = sbr.rel (%p161) target = $region24
        $region23: #{tpu_custom_call.1} parent=19 // pred_region
          %s164 = sand.u32 %s61, 1
          %s165 = scalar_lea.sflag [#allocation8], %s164
          %s166 = sand.u32 %s61, 1
          %s167 = smul.addr %s166, 8192
          %s168 = scalar_lea.vmem [#allocation7], %s167
          %s169 = smul.u32 %s21, 2
          %s170 = sadd.s32 %s169, %s22
          %s171 = smul.u32 128, %s170
          %s173 = ssub.s32 131072, 131072
          %174 = vsyncadd %s165, %s173
          %s175 = smul.addr %s171, 64
          %s176 = scalar_lea.hbm %s1, %s175
          %s177 = sshll.u32 %s168, 4
          %s178 = int_to_ptr.vmem [resolvable:$true] %s177
          %183 = dma.hbm_to_vmem [thread:$0]  %s176, 131072, %s178, %s165, 32768, 8192, 512
        $region24: #{tpu_custom_call.1} parent=19 // pred_fallthru
          _
      $region20: #{tpu_custom_call.1} parent=5 // pred_fallthru
        _
      %p184 = scmp.le.s32.totalorder 1, %s14
      %p185 = scmp.lt.s32.totalorder %s14, 5
      %p186 = pnand %p184, %p185
      %p187 = pneg %p186
      // Predicated region
      $region25: #{tpu_custom_call.1} parent=5 // pred_check
        _
      $region26: #{tpu_custom_call.1} parent=5 // pred_check_branch
        %189 = sbr.rel (%p186) target = $region28
      $region27: #{tpu_custom_call.1} parent=5 // pred_region
        %s190 = ssub.s32 %s14, 1
        // Predicated region
        $region29: #{tpu_custom_call.1} parent=27 // pred_check
          %p191 = pneg %p47
        $region30: #{tpu_custom_call.1} parent=27 // pred_check_branch
          %193 = sbr.rel (%p191) target = $region32
        $region31: #{tpu_custom_call.1} parent=27 // pred_region
          %194 = dma.done [#allocation6], 256
        $region32: #{tpu_custom_call.1} parent=27 // pred_fallthru
          _
        %s195 = sand.u32 %s64, 1
        %s196 = scalar_lea.sflag [#allocation8], %s195
        %s197 = sand.u32 %s64, 1
        %s198 = smul.addr %s197, 8192
        %s199 = scalar_lea.vmem [#allocation7], %s198
        // Predicated region
        $region33: #{tpu_custom_call.1} parent=27 // pred_check
          %p200 = pneg %p77
        $region34: #{tpu_custom_call.1} parent=27 // pred_check_branch
          %202 = sbr.rel (%p200) target = $region36
        $region35: #{tpu_custom_call.1} parent=27 // pred_region
          %203 = dma.done %s196, 131072
        $region36: #{tpu_custom_call.1} parent=27 // pred_fallthru
          _
        %p204 = pneg %p47
        %p205 = pneg %p44
        %s206 = sand.u32 %s64, 1
        %s207 = scalar_lea.sflag [#allocation8], %s206
        %s208 = sand.u32 %s64, 1
        %s209 = smul.addr %s208, 8192
        %s210 = scalar_lea.vmem [#allocation7], %s209
        %p211 = pneg %p77
        %p212 = pneg %p74
        %p213 = pneg %p103
        %p214 = pneg %p100
        %p215 = scmp.lt.s32.totalorder %s23, 1
        %s216 = scalar_select %p215, %s23, 1
        %s217 = smul.addr %s216, 2
        %s218 = smul.addr %s217, 8
        %s219 = scalar_lea.vmem %s2, %s218
        %p220 = pneg %p129
        %p221 = pneg %p126
        %p222 = scmp.lt.s32.totalorder %s23, 1
        %s223 = scalar_select %p222, %s23, 1
        %s224 = smul.addr %s223, 2
        %s225 = smul.addr %s224, 8
        %s226 = scalar_lea.vmem %s3, %s225
        %s227 = smul.u32 %s23, 2
        %s228 = sadd.s32 %s227, %s24
        %s229 = smul.u32 128, %s228
        %p230 = scmp.lt.s32.totalorder %s23, 1
        %s231 = scalar_select %p230, %s23, 1
        %s232 = smul.addr %s231, 2
        %s233 = smul.addr %s232, 8
        %s234 = scalar_lea.vmem %s2, %s233
        %p235 = scmp.lt.s32.totalorder %s23, 1
        %s236 = scalar_select %p235, %s23, 1
        %s237 = smul.addr %s236, 2
        %s238 = smul.addr %s237, 8
        %s239 = scalar_lea.vmem %s3, %s238
        %p241 = scmp.eq.s32.totalorder %s24, 0
        // Predicated region
        $region37: #{tpu_custom_call.1} parent=27 // pred_check
          %p242 = pneg %p241
        $region38: #{tpu_custom_call.1} parent=27 // pred_check_branch
          %244 = sbr.rel (%p242) target = $region40
        $region39: #{tpu_custom_call.1} parent=27 // pred_region
          %v245 = vld [vmem:[#allocation5] sm:$0xff]
          %v246 = vld [vmem:[#allocation5 + $0x8] sm:$0xff]
          %v247 = vmul.f32 %v245, 5.0
          %v248 = vmul.f32 %v246, 5.0
          %v249 = vpack.c.bf16 %v248, %v247
          %250 = vst [vmem:[#allocation2] sm:$0xff] %v249
          %vm251 = vcmask 7168
          %252 = vst.msk [vmem:[#allocation3] sm:$0xff] %vm251, -inf
          %253 = vst.msk [vmem:[#allocation3 + $0x8] sm:$0xff] %vm251, -inf
          %254 = vst.msk [vmem:[#allocation4] sm:$0xff] %vm251, 0.0
          %255 = vst.msk [vmem:[#allocation4 + $0x8] sm:$0xff] %vm251, 0.0
        $region40: #{tpu_custom_call.1} parent=27 // pred_fallthru
          _
        %v256 = vld [vmem:[#allocation2] sm:$0xff]
        %v257 = vld [vmem:[%s199] sm:$0xff]
        %v258 = vld [vmem:[%s199 + $0x8] sm:$0xff]
        %v259 = vld [vmem:[%s199 + $0x10] sm:$0xff]
        %v260 = vld [vmem:[%s199 + $0x18] sm:$0xff]
        %v261 = vld [vmem:[%s199 + $0x20] sm:$0xff]
        %v262 = vld [vmem:[%s199 + $0x28] sm:$0xff]
        %v263 = vld [vmem:[%s199 + $0x30] sm:$0xff]
        %v264 = vld [vmem:[%s199 + $0x38] sm:$0xff]
        %v265 = vld [vmem:[%s199 + $0x40] sm:$0xff]
        %v266 = vld [vmem:[%s199 + $0x48] sm:$0xff]
        %v267 = vld [vmem:[%s199 + $0x50] sm:$0xff]
        %v268 = vld [vmem:[%s199 + $0x58] sm:$0xff]
        %v269 = vld [vmem:[%s199 + $0x60] sm:$0xff]
        %v270 = vld [vmem:[%s199 + $0x68] sm:$0xff]
        %v271 = vld [vmem:[%s199 + $0x70] sm:$0xff]
        %v272 = vld [vmem:[%s199 + $0x78] sm:$0xff]
        %v273 = vld [vmem:[%s199 + $0x80] sm:$0xff]
        %v274 = vld [vmem:[%s199 + $0x88] sm:$0xff]
        %v275 = vld [vmem:[%s199 + $0x90] sm:$0xff]
        %v276 = vld [vmem:[%s199 + $0x98] sm:$0xff]
        %v277 = vld [vmem:[%s199 + $0xa0] sm:$0xff]
        %v278 = vld [vmem:[%s199 + $0xa8] sm:$0xff]
        %v279 = vld [vmem:[%s199 + $0xb0] sm:$0xff]
        %v280 = vld [vmem:[%s199 + $0xb8] sm:$0xff]
        %v281 = vld [vmem:[%s199 + $0xc0] sm:$0xff]
        %v282 = vld [vmem:[%s199 + $0xc8] sm:$0xff]
        %v283 = vld [vmem:[%s199 + $0xd0] sm:$0xff]
        %v284 = vld [vmem:[%s199 + $0xd8] sm:$0xff]
        %v285 = vld [vmem:[%s199 + $0xe0] sm:$0xff]
        %v286 = vld [vmem:[%s199 + $0xe8] sm:$0xff]
        %v287 = vld [vmem:[%s199 + $0xf0] sm:$0xff]
        %v288 = vld [vmem:[%s199 + $0xf8] sm:$0xff]
        %v289 = vld [vmem:[%s199 + $0x100] sm:$0xff]
        %v290 = vld [vmem:[%s199 + $0x108] sm:$0xff]
        %v291 = vld [vmem:[%s199 + $0x110] sm:$0xff]
        %v292 = vld [vmem:[%s199 + $0x118] sm:$0xff]
        %v293 = vld [vmem:[%s199 + $0x120] sm:$0xff]
        %v294 = vld [vmem:[%s199 + $0x128] sm:$0xff]
        %v295 = vld [vmem:[%s199 + $0x130] sm:$0xff]
        %v296 = vld [vmem:[%s199 + $0x138] sm:$0xff]
        %v297 = vld [vmem:[%s199 + $0x140] sm:$0xff]
        %v298 = vld [vmem:[%s199 + $0x148] sm:$0xff]
        %v299 = vld [vmem:[%s199 + $0x150] sm:$0xff]
        %v300 = vld [vmem:[%s199 + $0x158] sm:$0xff]
        %v301 = vld [vmem:[%s199 + $0x160] sm:$0xff]
        %v302 = vld [vmem:[%s199 + $0x168] sm:$0xff]
        %v303 = vld [vmem:[%s199 + $0x170] sm:$0xff]
        %v304 = vld [vmem:[%s199 + $0x178] sm:$0xff]
        %v305 = vld [vmem:[%s199 + $0x180] sm:$0xff]
        %v306 = vld [vmem:[%s199 + $0x188] sm:$0xff]
        %v307 = vld [vmem:[%s199 + $0x190] sm:$0xff]
        %v308 = vld [vmem:[%s199 + $0x198] sm:$0xff]
        %v309 = vld [vmem:[%s199 + $0x1a0] sm:$0xff]
        %v310 = vld [vmem:[%s199 + $0x1a8] sm:$0xff]
        %v311 = vld [vmem:[%s199 + $0x1b0] sm:$0xff]
        %v312 = vld [vmem:[%s199 + $0x1b8] sm:$0xff]
        %v313 = vld [vmem:[%s199 + $0x1c0] sm:$0xff]
        %v314 = vld [vmem:[%s199 + $0x1c8] sm:$0xff]
        %v315 = vld [vmem:[%s199 + $0x1d0] sm:$0xff]
        %v316 = vld [vmem:[%s199 + $0x1d8] sm:$0xff]
        %v317 = vld [vmem:[%s199 + $0x1e0] sm:$0xff]
        %v318 = vld [vmem:[%s199 + $0x1e8] sm:$0xff]
        %v319 = vld [vmem:[%s199 + $0x1f0] sm:$0xff]
        %v320 = vld [vmem:[%s199 + $0x1f8] sm:$0xff]
        %v321 = vld [vmem:[%s199 + $0x200] sm:$0xff]
        %v322 = vld [vmem:[%s199 + $0x208] sm:$0xff]
        %v323 = vld [vmem:[%s199 + $0x210] sm:$0xff]
        %v324 = vld [vmem:[%s199 + $0x218] sm:$0xff]
        %v325 = vld [vmem:[%s199 + $0x220] sm:$0xff]
        %v326 = vld [vmem:[%s199 + $0x228] sm:$0xff]
        %v327 = vld [vmem:[%s199 + $0x230] sm:$0xff]
        %v328 = vld [vmem:[%s199 + $0x238] sm:$0xff]
        %v329 = vld [vmem:[%s199 + $0x240] sm:$0xff]
        %v330 = vld [vmem:[%s199 + $0x248] sm:$0xff]
        %v331 = vld [vmem:[%s199 + $0x250] sm:$0xff]
        %v332 = vld [vmem:[%s199 + $0x258] sm:$0xff]
        %v333 = vld [vmem:[%s199 + $0x260] sm:$0xff]
        %v334 = vld [vmem:[%s199 + $0x268] sm:$0xff]
        %v335 = vld [vmem:[%s199 + $0x270] sm:$0xff]
        %v336 = vld [vmem:[%s199 + $0x278] sm:$0xff]
        %v337 = vld [vmem:[%s199 + $0x280] sm:$0xff]
        %v338 = vld [vmem:[%s199 + $0x288] sm:$0xff]
        %v339 = vld [vmem:[%s199 + $0x290] sm:$0xff]
        %v340 = vld [vmem:[%s199 + $0x298] sm:$0xff]
        %v341 = vld [vmem:[%s199 + $0x2a0] sm:$0xff]
        %v342 = vld [vmem:[%s199 + $0x2a8] sm:$0xff]
        %v343 = vld [vmem:[%s199 + $0x2b0] sm:$0xff]
        %v344 = vld [vmem:[%s199 + $0x2b8] sm:$0xff]
        %v345 = vld [vmem:[%s199 + $0x2c0] sm:$0xff]
        %v346 = vld [vmem:[%s199 + $0x2c8] sm:$0xff]
        %v347 = vld [vmem:[%s199 + $0x2d0] sm:$0xff]
        %v348 = vld [vmem:[%s199 + $0x2d8] sm:$0xff]
        %v349 = vld [vmem:[%s199 + $0x2e0] sm:$0xff]
        %v350 = vld [vmem:[%s199 + $0x2e8] sm:$0xff]
        %v351 = vld [vmem:[%s199 + $0x2f0] sm:$0xff]
        %v352 = vld [vmem:[%s199 + $0x2f8] sm:$0xff]
        %v353 = vld [vmem:[%s199 + $0x300] sm:$0xff]
        %v354 = vld [vmem:[%s199 + $0x308] sm:$0xff]
        %v355 = vld [vmem:[%s199 + $0x310] sm:$0xff]
        %v356 = vld [vmem:[%s199 + $0x318] sm:$0xff]
        %v357 = vld [vmem:[%s199 + $0x320] sm:$0xff]
        %v358 = vld [vmem:[%s199 + $0x328] sm:$0xff]
        %v359 = vld [vmem:[%s199 + $0x330] sm:$0xff]
        %v360 = vld [vmem:[%s199 + $0x338] sm:$0xff]
        %v361 = vld [vmem:[%s199 + $0x340] sm:$0xff]
        %v362 = vld [vmem:[%s199 + $0x348] sm:$0xff]
        %v363 = vld [vmem:[%s199 + $0x350] sm:$0xff]
        %v364 = vld [vmem:[%s199 + $0x358] sm:$0xff]
        %v365 = vld [vmem:[%s199 + $0x360] sm:$0xff]
        %v366 = vld [vmem:[%s199 + $0x368] sm:$0xff]
        %v367 = vld [vmem:[%s199 + $0x370] sm:$0xff]
        %v368 = vld [vmem:[%s199 + $0x378] sm:$0xff]
        %v369 = vld [vmem:[%s199 + $0x380] sm:$0xff]
        %v370 = vld [vmem:[%s199 + $0x388] sm:$0xff]
        %v371 = vld [vmem:[%s199 + $0x390] sm:$0xff]
        %v372 = vld [vmem:[%s199 + $0x398] sm:$0xff]
        %v373 = vld [vmem:[%s199 + $0x3a0] sm:$0xff]
        %v374 = vld [vmem:[%s199 + $0x3a8] sm:$0xff]
        %v375 = vld [vmem:[%s199 + $0x3b0] sm:$0xff]
        %v376 = vld [vmem:[%s199 + $0x3b8] sm:$0xff]
        %v377 = vld [vmem:[%s199 + $0x3c0] sm:$0xff]
        %v378 = vld [vmem:[%s199 + $0x3c8] sm:$0xff]
        %v379 = vld [vmem:[%s199 + $0x3d0] sm:$0xff]
        %v380 = vld [vmem:[%s199 + $0x3d8] sm:$0xff]
        %v381 = vld [vmem:[%s199 + $0x3e0] sm:$0xff]
        %v382 = vld [vmem:[%s199 + $0x3e8] sm:$0xff]
        %v383 = vld [vmem:[%s199 + $0x3f0] sm:$0xff]
        %v384 = vld [vmem:[%s199 + $0x3f8] sm:$0xff]
        %v385 = vld [vmem:[%s199 + $0x400] sm:$0xff]
        %v386 = vld [vmem:[%s199 + $0x408] sm:$0xff]
        %v387 = vld [vmem:[%s199 + $0x410] sm:$0xff]
        %v388 = vld [vmem:[%s199 + $0x418] sm:$0xff]
        %v389 = vld [vmem:[%s199 + $0x420] sm:$0xff]
        %v390 = vld [vmem:[%s199 + $0x428] sm:$0xff]
        %v391 = vld [vmem:[%s199 + $0x430] sm:$0xff]
        %v392 = vld [vmem:[%s199 + $0x438] sm:$0xff]
        %v393 = vld [vmem:[%s199 + $0x440] sm:$0xff]
        %v394 = vld [vmem:[%s199 + $0x448] sm:$0xff]
        %v395 = vld [vmem:[%s199 + $0x450] sm:$0xff]
        %v396 = vld [vmem:[%s199 + $0x458] sm:$0xff]
        %v397 = vld [vmem:[%s199 + $0x460] sm:$0xff]
        %v398 = vld [vmem:[%s199 + $0x468] sm:$0xff]
        %v399 = vld [vmem:[%s199 + $0x470] sm:$0xff]
        %v400 = vld [vmem:[%s199 + $0x478] sm:$0xff]
        %v401 = vld [vmem:[%s199 + $0x480] sm:$0xff]
        %v402 = vld [vmem:[%s199 + $0x488] sm:$0xff]
        %v403 = vld [vmem:[%s199 + $0x490] sm:$0xff]
        %v404 = vld [vmem:[%s199 + $0x498] sm:$0xff]
        %v405 = vld [vmem:[%s199 + $0x4a0] sm:$0xff]
        %v406 = vld [vmem:[%s199 + $0x4a8] sm:$0xff]
        %v407 = vld [vmem:[%s199 + $0x4b0] sm:$0xff]
        %v408 = vld [vmem:[%s199 + $0x4b8] sm:$0xff]
        %v409 = vld [vmem:[%s199 + $0x4c0] sm:$0xff]
        %v410 = vld [vmem:[%s199 + $0x4c8] sm:$0xff]
        %v411 = vld [vmem:[%s199 + $0x4d0] sm:$0xff]
        %v412 = vld [vmem:[%s199 + $0x4d8] sm:$0xff]
        %v413 = vld [vmem:[%s199 + $0x4e0] sm:$0xff]
        %v414 = vld [vmem:[%s199 + $0x4e8] sm:$0xff]
        %v415 = vld [vmem:[%s199 + $0x4f0] sm:$0xff]
        %v416 = vld [vmem:[%s199 + $0x4f8] sm:$0xff]
        %v417 = vld [vmem:[%s199 + $0x500] sm:$0xff]
        %v418 = vld [vmem:[%s199 + $0x508] sm:$0xff]
        %v419 = vld [vmem:[%s199 + $0x510] sm:$0xff]
        %v420 = vld [vmem:[%s199 + $0x518] sm:$0xff]
        %v421 = vld [vmem:[%s199 + $0x520] sm:$0xff]
        %v422 = vld [vmem:[%s199 + $0x528] sm:$0xff]
        %v423 = vld [vmem:[%s199 + $0x530] sm:$0xff]
        %v424 = vld [vmem:[%s199 + $0x538] sm:$0xff]
        %v425 = vld [vmem:[%s199 + $0x540] sm:$0xff]
        %v426 = vld [vmem:[%s199 + $0x548] sm:$0xff]
        %v427 = vld [vmem:[%s199 + $0x550] sm:$0xff]
        %v428 = vld [vmem:[%s199 + $0x558] sm:$0xff]
        %v429 = vld [vmem:[%s199 + $0x560] sm:$0xff]
        %v430 = vld [vmem:[%s199 + $0x568] sm:$0xff]
        %v431 = vld [vmem:[%s199 + $0x570] sm:$0xff]
        %v432 = vld [vmem:[%s199 + $0x578] sm:$0xff]
        %v433 = vld [vmem:[%s199 + $0x580] sm:$0xff]
        %v434 = vld [vmem:[%s199 + $0x588] sm:$0xff]
        %v435 = vld [vmem:[%s199 + $0x590] sm:$0xff]
        %v436 = vld [vmem:[%s199 + $0x598] sm:$0xff]
        %v437 = vld [vmem:[%s199 + $0x5a0] sm:$0xff]
        %v438 = vld [vmem:[%s199 + $0x5a8] sm:$0xff]
        %v439 = vld [vmem:[%s199 + $0x5b0] sm:$0xff]
        %v440 = vld [vmem:[%s199 + $0x5b8] sm:$0xff]
        %v441 = vld [vmem:[%s199 + $0x5c0] sm:$0xff]
        %v442 = vld [vmem:[%s199 + $0x5c8] sm:$0xff]
        %v443 = vld [vmem:[%s199 + $0x5d0] sm:$0xff]
        %v444 = vld [vmem:[%s199 + $0x5d8] sm:$0xff]
        %v445 = vld [vmem:[%s199 + $0x5e0] sm:$0xff]
        %v446 = vld [vmem:[%s199 + $0x5e8] sm:$0xff]
        %v447 = vld [vmem:[%s199 + $0x5f0] sm:$0xff]
        %v448 = vld [vmem:[%s199 + $0x5f8] sm:$0xff]
        %v449 = vld [vmem:[%s199 + $0x600] sm:$0xff]
        %v450 = vld [vmem:[%s199 + $0x608] sm:$0xff]
        %v451 = vld [vmem:[%s199 + $0x610] sm:$0xff]
        %v452 = vld [vmem:[%s199 + $0x618] sm:$0xff]
        %v453 = vld [vmem:[%s199 + $0x620] sm:$0xff]
        %v454 = vld [vmem:[%s199 + $0x628] sm:$0xff]
        %v455 = vld [vmem:[%s199 + $0x630] sm:$0xff]
        %v456 = vld [vmem:[%s199 + $0x638] sm:$0xff]
        %v457 = vld [vmem:[%s199 + $0x640] sm:$0xff]
        %v458 = vld [vmem:[%s199 + $0x648] sm:$0xff]
        %v459 = vld [vmem:[%s199 + $0x650] sm:$0xff]
        %v460 = vld [vmem:[%s199 + $0x658] sm:$0xff]
        %v461 = vld [vmem:[%s199 + $0x660] sm:$0xff]
        %v462 = vld [vmem:[%s199 + $0x668] sm:$0xff]
        %v463 = vld [vmem:[%s199 + $0x670] sm:$0xff]
        %v464 = vld [vmem:[%s199 + $0x678] sm:$0xff]
        %v465 = vld [vmem:[%s199 + $0x680] sm:$0xff]
        %v466 = vld [vmem:[%s199 + $0x688] sm:$0xff]
        %v467 = vld [vmem:[%s199 + $0x690] sm:$0xff]
        %v468 = vld [vmem:[%s199 + $0x698] sm:$0xff]
        %v469 = vld [vmem:[%s199 + $0x6a0] sm:$0xff]
        %v470 = vld [vmem:[%s199 + $0x6a8] sm:$0xff]
        %v471 = vld [vmem:[%s199 + $0x6b0] sm:$0xff]
        %v472 = vld [vmem:[%s199 + $0x6b8] sm:$0xff]
        %v473 = vld [vmem:[%s199 + $0x6c0] sm:$0xff]
        %v474 = vld [vmem:[%s199 + $0x6c8] sm:$0xff]
        %v475 = vld [vmem:[%s199 + $0x6d0] sm:$0xff]
        %v476 = vld [vmem:[%s199 + $0x6d8] sm:$0xff]
        %v477 = vld [vmem:[%s199 + $0x6e0] sm:$0xff]
        %v478 = vld [vmem:[%s199 + $0x6e8] sm:$0xff]
        %v479 = vld [vmem:[%s199 + $0x6f0] sm:$0xff]
        %v480 = vld [vmem:[%s199 + $0x6f8] sm:$0xff]
        %v481 = vld [vmem:[%s199 + $0x700] sm:$0xff]
        %v482 = vld [vmem:[%s199 + $0x708] sm:$0xff]
        %v483 = vld [vmem:[%s199 + $0x710] sm:$0xff]
        %v484 = vld [vmem:[%s199 + $0x718] sm:$0xff]
        %v485 = vld [vmem:[%s199 + $0x720] sm:$0xff]
        %v486 = vld [vmem:[%s199 + $0x728] sm:$0xff]
        %v487 = vld [vmem:[%s199 + $0x730] sm:$0xff]
        %v488 = vld [vmem:[%s199 + $0x738] sm:$0xff]
        %v489 = vld [vmem:[%s199 + $0x740] sm:$0xff]
        %v490 = vld [vmem:[%s199 + $0x748] sm:$0xff]
        %v491 = vld [vmem:[%s199 + $0x750] sm:$0xff]
        %v492 = vld [vmem:[%s199 + $0x758] sm:$0xff]
        %v493 = vld [vmem:[%s199 + $0x760] sm:$0xff]
        %v494 = vld [vmem:[%s199 + $0x768] sm:$0xff]
        %v495 = vld [vmem:[%s199 + $0x770] sm:$0xff]
        %v496 = vld [vmem:[%s199 + $0x778] sm:$0xff]
        %v497 = vld [vmem:[%s199 + $0x780] sm:$0xff]
        %v498 = vld [vmem:[%s199 + $0x788] sm:$0xff]
        %v499 = vld [vmem:[%s199 + $0x790] sm:$0xff]
        %v500 = vld [vmem:[%s199 + $0x798] sm:$0xff]
        %v501 = vld [vmem:[%s199 + $0x7a0] sm:$0xff]
        %v502 = vld [vmem:[%s199 + $0x7a8] sm:$0xff]
        %v503 = vld [vmem:[%s199 + $0x7b0] sm:$0xff]
        %v504 = vld [vmem:[%s199 + $0x7b8] sm:$0xff]
        %v505 = vld [vmem:[%s199 + $0x7c0] sm:$0xff]
        %v506 = vld [vmem:[%s199 + $0x7c8] sm:$0xff]
        %v507 = vld [vmem:[%s199 + $0x7d0] sm:$0xff]
        %v508 = vld [vmem:[%s199 + $0x7d8] sm:$0xff]
        %v509 = vld [vmem:[%s199 + $0x7e0] sm:$0xff]
        %v510 = vld [vmem:[%s199 + $0x7e8] sm:$0xff]
        %v511 = vld [vmem:[%s199 + $0x7f0] sm:$0xff]
        %v512 = vld [vmem:[%s199 + $0x7f8] sm:$0xff]
        %v513 = vld [vmem:[%s199 + $0x800] sm:$0xff]
        %v514 = vld [vmem:[%s199 + $0x808] sm:$0xff]
        %v515 = vld [vmem:[%s199 + $0x810] sm:$0xff]
        %v516 = vld [vmem:[%s199 + $0x818] sm:$0xff]
        %v517 = vld [vmem:[%s199 + $0x820] sm:$0xff]
        %v518 = vld [vmem:[%s199 + $0x828] sm:$0xff]
        %v519 = vld [vmem:[%s199 + $0x830] sm:$0xff]
        %v520 = vld [vmem:[%s199 + $0x838] sm:$0xff]
        %v521 = vld [vmem:[%s199 + $0x840] sm:$0xff]
        %v522 = vld [vmem:[%s199 + $0x848] sm:$0xff]
        %v523 = vld [vmem:[%s199 + $0x850] sm:$0xff]
        %v524 = vld [vmem:[%s199 + $0x858] sm:$0xff]
        %v525 = vld [vmem:[%s199 + $0x860] sm:$0xff]
        %v526 = vld [vmem:[%s199 + $0x868] sm:$0xff]
        %v527 = vld [vmem:[%s199 + $0x870] sm:$0xff]
        %v528 = vld [vmem:[%s199 + $0x878] sm:$0xff]
        %v529 = vld [vmem:[%s199 + $0x880] sm:$0xff]
        %v530 = vld [vmem:[%s199 + $0x888] sm:$0xff]
        %v531 = vld [vmem:[%s199 + $0x890] sm:$0xff]
        %v532 = vld [vmem:[%s199 + $0x898] sm:$0xff]
        %v533 = vld [vmem:[%s199 + $0x8a0] sm:$0xff]
        %v534 = vld [vmem:[%s199 + $0x8a8] sm:$0xff]
        %v535 = vld [vmem:[%s199 + $0x8b0] sm:$0xff]
        %v536 = vld [vmem:[%s199 + $0x8b8] sm:$0xff]
        %v537 = vld [vmem:[%s199 + $0x8c0] sm:$0xff]
        %v538 = vld [vmem:[%s199 + $0x8c8] sm:$0xff]
        %v539 = vld [vmem:[%s199 + $0x8d0] sm:$0xff]
        %v540 = vld [vmem:[%s199 + $0x8d8] sm:$0xff]
        %v541 = vld [vmem:[%s199 + $0x8e0] sm:$0xff]
        %v542 = vld [vmem:[%s199 + $0x8e8] sm:$0xff]
        %v543 = vld [vmem:[%s199 + $0x8f0] sm:$0xff]
        %v544 = vld [vmem:[%s199 + $0x8f8] sm:$0xff]
        %v545 = vld [vmem:[%s199 + $0x900] sm:$0xff]
        %v546 = vld [vmem:[%s199 + $0x908] sm:$0xff]
        %v547 = vld [vmem:[%s199 + $0x910] sm:$0xff]
        %v548 = vld [vmem:[%s199 + $0x918] sm:$0xff]
        %v549 = vld [vmem:[%s199 + $0x920] sm:$0xff]
        %v550 = vld [vmem:[%s199 + $0x928] sm:$0xff]
        %v551 = vld [vmem:[%s199 + $0x930] sm:$0xff]
        %v552 = vld [vmem:[%s199 + $0x938] sm:$0xff]
        %v553 = vld [vmem:[%s199 + $0x940] sm:$0xff]
        %v554 = vld [vmem:[%s199 + $0x948] sm:$0xff]
        %v555 = vld [vmem:[%s199 + $0x950] sm:$0xff]
        %v556 = vld [vmem:[%s199 + $0x958] sm:$0xff]
        %v557 = vld [vmem:[%s199 + $0x960] sm:$0xff]
        %v558 = vld [vmem:[%s199 + $0x968] sm:$0xff]
        %v559 = vld [vmem:[%s199 + $0x970] sm:$0xff]
        %v560 = vld [vmem:[%s199 + $0x978] sm:$0xff]
        %v561 = vld [vmem:[%s199 + $0x980] sm:$0xff]
        %v562 = vld [vmem:[%s199 + $0x988] sm:$0xff]
        %v563 = vld [vmem:[%s199 + $0x990] sm:$0xff]
        %v564 = vld [vmem:[%s199 + $0x998] sm:$0xff]
        %v565 = vld [vmem:[%s199 + $0x9a0] sm:$0xff]
        %v566 = vld [vmem:[%s199 + $0x9a8] sm:$0xff]
        %v567 = vld [vmem:[%s199 + $0x9b0] sm:$0xff]
        %v568 = vld [vmem:[%s199 + $0x9b8] sm:$0xff]
        %v569 = vld [vmem:[%s199 + $0x9c0] sm:$0xff]
        %v570 = vld [vmem:[%s199 + $0x9c8] sm:$0xff]
        %v571 = vld [vmem:[%s199 + $0x9d0] sm:$0xff]
        %v572 = vld [vmem:[%s199 + $0x9d8] sm:$0xff]
        %v573 = vld [vmem:[%s199 + $0x9e0] sm:$0xff]
        %v574 = vld [vmem:[%s199 + $0x9e8] sm:$0xff]
        %v575 = vld [vmem:[%s199 + $0x9f0] sm:$0xff]
        %v576 = vld [vmem:[%s199 + $0x9f8] sm:$0xff]
        %v577 = vld [vmem:[%s199 + $0xa00] sm:$0xff]
        %v578 = vld [vmem:[%s199 + $0xa08] sm:$0xff]
        %v579 = vld [vmem:[%s199 + $0xa10] sm:$0xff]
        %v580 = vld [vmem:[%s199 + $0xa18] sm:$0xff]
        %v581 = vld [vmem:[%s199 + $0xa20] sm:$0xff]
        %v582 = vld [vmem:[%s199 + $0xa28] sm:$0xff]
        %v583 = vld [vmem:[%s199 + $0xa30] sm:$0xff]
        %v584 = vld [vmem:[%s199 + $0xa38] sm:$0xff]
        %v585 = vld [vmem:[%s199 + $0xa40] sm:$0xff]
        %v586 = vld [vmem:[%s199 + $0xa48] sm:$0xff]
        %v587 = vld [vmem:[%s199 + $0xa50] sm:$0xff]
        %v588 = vld [vmem:[%s199 + $0xa58] sm:$0xff]
        %v589 = vld [vmem:[%s199 + $0xa60] sm:$0xff]
        %v590 = vld [vmem:[%s199 + $0xa68] sm:$0xff]
        %v591 = vld [vmem:[%s199 + $0xa70] sm:$0xff]
        %v592 = vld [vmem:[%s199 + $0xa78] sm:$0xff]
        %v593 = vld [vmem:[%s199 + $0xa80] sm:$0xff]
        %v594 = vld [vmem:[%s199 + $0xa88] sm:$0xff]
        %v595 = vld [vmem:[%s199 + $0xa90] sm:$0xff]
        %v596 = vld [vmem:[%s199 + $0xa98] sm:$0xff]
        %v597 = vld [vmem:[%s199 + $0xaa0] sm:$0xff]
        %v598 = vld [vmem:[%s199 + $0xaa8] sm:$0xff]
        %v599 = vld [vmem:[%s199 + $0xab0] sm:$0xff]
        %v600 = vld [vmem:[%s199 + $0xab8] sm:$0xff]
        %v601 = vld [vmem:[%s199 + $0xac0] sm:$0xff]
        %v602 = vld [vmem:[%s199 + $0xac8] sm:$0xff]
        %v603 = vld [vmem:[%s199 + $0xad0] sm:$0xff]
        %v604 = vld [vmem:[%s199 + $0xad8] sm:$0xff]
        %v605 = vld [vmem:[%s199 + $0xae0] sm:$0xff]
        %v606 = vld [vmem:[%s199 + $0xae8] sm:$0xff]
        %v607 = vld [vmem:[%s199 + $0xaf0] sm:$0xff]
        %v608 = vld [vmem:[%s199 + $0xaf8] sm:$0xff]
        %v609 = vld [vmem:[%s199 + $0xb00] sm:$0xff]
        %v610 = vld [vmem:[%s199 + $0xb08] sm:$0xff]
        %v611 = vld [vmem:[%s199 + $0xb10] sm:$0xff]
        %v612 = vld [vmem:[%s199 + $0xb18] sm:$0xff]
        %v613 = vld [vmem:[%s199 + $0xb20] sm:$0xff]
        %v614 = vld [vmem:[%s199 + $0xb28] sm:$0xff]
        %v615 = vld [vmem:[%s199 + $0xb30] sm:$0xff]
        %v616 = vld [vmem:[%s199 + $0xb38] sm:$0xff]
        %v617 = vld [vmem:[%s199 + $0xb40] sm:$0xff]
        %v618 = vld [vmem:[%s199 + $0xb48] sm:$0xff]
        %v619 = vld [vmem:[%s199 + $0xb50] sm:$0xff]
        %v620 = vld [vmem:[%s199 + $0xb58] sm:$0xff]
        %v621 = vld [vmem:[%s199 + $0xb60] sm:$0xff]
        %v622 = vld [vmem:[%s199 + $0xb68] sm:$0xff]
        %v623 = vld [vmem:[%s199 + $0xb70] sm:$0xff]
        %v624 = vld [vmem:[%s199 + $0xb78] sm:$0xff]
        %v625 = vld [vmem:[%s199 + $0xb80] sm:$0xff]
        %v626 = vld [vmem:[%s199 + $0xb88] sm:$0xff]
        %v627 = vld [vmem:[%s199 + $0xb90] sm:$0xff]
        %v628 = vld [vmem:[%s199 + $0xb98] sm:$0xff]
        %v629 = vld [vmem:[%s199 + $0xba0] sm:$0xff]
        %v630 = vld [vmem:[%s199 + $0xba8] sm:$0xff]
        %v631 = vld [vmem:[%s199 + $0xbb0] sm:$0xff]
        %v632 = vld [vmem:[%s199 + $0xbb8] sm:$0xff]
        %v633 = vld [vmem:[%s199 + $0xbc0] sm:$0xff]
        %v634 = vld [vmem:[%s199 + $0xbc8] sm:$0xff]
        %v635 = vld [vmem:[%s199 + $0xbd0] sm:$0xff]
        %v636 = vld [vmem:[%s199 + $0xbd8] sm:$0xff]
        %v637 = vld [vmem:[%s199 + $0xbe0] sm:$0xff]
        %v638 = vld [vmem:[%s199 + $0xbe8] sm:$0xff]
        %v639 = vld [vmem:[%s199 + $0xbf0] sm:$0xff]
        %v640 = vld [vmem:[%s199 + $0xbf8] sm:$0xff]
        %v641 = vld [vmem:[%s199 + $0xc00] sm:$0xff]
        %v642 = vld [vmem:[%s199 + $0xc08] sm:$0xff]
        %v643 = vld [vmem:[%s199 + $0xc10] sm:$0xff]
        %v644 = vld [vmem:[%s199 + $0xc18] sm:$0xff]
        %v645 = vld [vmem:[%s199 + $0xc20] sm:$0xff]
        %v646 = vld [vmem:[%s199 + $0xc28] sm:$0xff]
        %v647 = vld [vmem:[%s199 + $0xc30] sm:$0xff]
        %v648 = vld [vmem:[%s199 + $0xc38] sm:$0xff]
        %v649 = vld [vmem:[%s199 + $0xc40] sm:$0xff]
        %v650 = vld [vmem:[%s199 + $0xc48] sm:$0xff]
        %v651 = vld [vmem:[%s199 + $0xc50] sm:$0xff]
        %v652 = vld [vmem:[%s199 + $0xc58] sm:$0xff]
        %v653 = vld [vmem:[%s199 + $0xc60] sm:$0xff]
        %v654 = vld [vmem:[%s199 + $0xc68] sm:$0xff]
        %v655 = vld [vmem:[%s199 + $0xc70] sm:$0xff]
        %v656 = vld [vmem:[%s199 + $0xc78] sm:$0xff]
        %v657 = vld [vmem:[%s199 + $0xc80] sm:$0xff]
        %v658 = vld [vmem:[%s199 + $0xc88] sm:$0xff]
        %v659 = vld [vmem:[%s199 + $0xc90] sm:$0xff]
        %v660 = vld [vmem:[%s199 + $0xc98] sm:$0xff]
        %v661 = vld [vmem:[%s199 + $0xca0] sm:$0xff]
        %v662 = vld [vmem:[%s199 + $0xca8] sm:$0xff]
        %v663 = vld [vmem:[%s199 + $0xcb0] sm:$0xff]
        %v664 = vld [vmem:[%s199 + $0xcb8] sm:$0xff]
        %v665 = vld [vmem:[%s199 + $0xcc0] sm:$0xff]
        %v666 = vld [vmem:[%s199 + $0xcc8] sm:$0xff]
        %v667 = vld [vmem:[%s199 + $0xcd0] sm:$0xff]
        %v668 = vld [vmem:[%s199 + $0xcd8] sm:$0xff]
        %v669 = vld [vmem:[%s199 + $0xce0] sm:$0xff]
        %v670 = vld [vmem:[%s199 + $0xce8] sm:$0xff]
        %v671 = vld [vmem:[%s199 + $0xcf0] sm:$0xff]
        %v672 = vld [vmem:[%s199 + $0xcf8] sm:$0xff]
        %v673 = vld [vmem:[%s199 + $0xd00] sm:$0xff]
        %v674 = vld [vmem:[%s199 + $0xd08] sm:$0xff]
        %v675 = vld [vmem:[%s199 + $0xd10] sm:$0xff]
        %v676 = vld [vmem:[%s199 + $0xd18] sm:$0xff]
        %v677 = vld [vmem:[%s199 + $0xd20] sm:$0xff]
        %v678 = vld [vmem:[%s199 + $0xd28] sm:$0xff]
        %v679 = vld [vmem:[%s199 + $0xd30] sm:$0xff]
        %v680 = vld [vmem:[%s199 + $0xd38] sm:$0xff]
        %v681 = vld [vmem:[%s199 + $0xd40] sm:$0xff]
        %v682 = vld [vmem:[%s199 + $0xd48] sm:$0xff]
        %v683 = vld [vmem:[%s199 + $0xd50] sm:$0xff]
        %v684 = vld [vmem:[%s199 + $0xd58] sm:$0xff]
        %v685 = vld [vmem:[%s199 + $0xd60] sm:$0xff]
        %v686 = vld [vmem:[%s199 + $0xd68] sm:$0xff]
        %v687 = vld [vmem:[%s199 + $0xd70] sm:$0xff]
        %v688 = vld [vmem:[%s199 + $0xd78] sm:$0xff]
        %v689 = vld [vmem:[%s199 + $0xd80] sm:$0xff]
        %v690 = vld [vmem:[%s199 + $0xd88] sm:$0xff]
        %v691 = vld [vmem:[%s199 + $0xd90] sm:$0xff]
        %v692 = vld [vmem:[%s199 + $0xd98] sm:$0xff]
        %v693 = vld [vmem:[%s199 + $0xda0] sm:$0xff]
        %v694 = vld [vmem:[%s199 + $0xda8] sm:$0xff]
        %v695 = vld [vmem:[%s199 + $0xdb0] sm:$0xff]
        %v696 = vld [vmem:[%s199 + $0xdb8] sm:$0xff]
        %v697 = vld [vmem:[%s199 + $0xdc0] sm:$0xff]
        %v698 = vld [vmem:[%s199 + $0xdc8] sm:$0xff]
        %v699 = vld [vmem:[%s199 + $0xdd0] sm:$0xff]
        %v700 = vld [vmem:[%s199 + $0xdd8] sm:$0xff]
        %v701 = vld [vmem:[%s199 + $0xde0] sm:$0xff]
        %v702 = vld [vmem:[%s199 + $0xde8] sm:$0xff]
        %v703 = vld [vmem:[%s199 + $0xdf0] sm:$0xff]
        %v704 = vld [vmem:[%s199 + $0xdf8] sm:$0xff]
        %v705 = vld [vmem:[%s199 + $0xe00] sm:$0xff]
        %v706 = vld [vmem:[%s199 + $0xe08] sm:$0xff]
        %v707 = vld [vmem:[%s199 + $0xe10] sm:$0xff]
        %v708 = vld [vmem:[%s199 + $0xe18] sm:$0xff]
        %v709 = vld [vmem:[%s199 + $0xe20] sm:$0xff]
        %v710 = vld [vmem:[%s199 + $0xe28] sm:$0xff]
        %v711 = vld [vmem:[%s199 + $0xe30] sm:$0xff]
        %v712 = vld [vmem:[%s199 + $0xe38] sm:$0xff]
        %v713 = vld [vmem:[%s199 + $0xe40] sm:$0xff]
        %v714 = vld [vmem:[%s199 + $0xe48] sm:$0xff]
        %v715 = vld [vmem:[%s199 + $0xe50] sm:$0xff]
        %v716 = vld [vmem:[%s199 + $0xe58] sm:$0xff]
        %v717 = vld [vmem:[%s199 + $0xe60] sm:$0xff]
        %v718 = vld [vmem:[%s199 + $0xe68] sm:$0xff]
        %v719 = vld [vmem:[%s199 + $0xe70] sm:$0xff]
        %v720 = vld [vmem:[%s199 + $0xe78] sm:$0xff]
        %v721 = vld [vmem:[%s199 + $0xe80] sm:$0xff]
        %v722 = vld [vmem:[%s199 + $0xe88] sm:$0xff]
        %v723 = vld [vmem:[%s199 + $0xe90] sm:$0xff]
        %v724 = vld [vmem:[%s199 + $0xe98] sm:$0xff]
        %v725 = vld [vmem:[%s199 + $0xea0] sm:$0xff]
        %v726 = vld [vmem:[%s199 + $0xea8] sm:$0xff]
        %v727 = vld [vmem:[%s199 + $0xeb0] sm:$0xff]
        %v728 = vld [vmem:[%s199 + $0xeb8] sm:$0xff]
        %v729 = vld [vmem:[%s199 + $0xec0] sm:$0xff]
        %v730 = vld [vmem:[%s199 + $0xec8] sm:$0xff]
        %v731 = vld [vmem:[%s199 + $0xed0] sm:$0xff]
        %v732 = vld [vmem:[%s199 + $0xed8] sm:$0xff]
        %v733 = vld [vmem:[%s199 + $0xee0] sm:$0xff]
        %v734 = vld [vmem:[%s199 + $0xee8] sm:$0xff]
        %v735 = vld [vmem:[%s199 + $0xef0] sm:$0xff]
        %v736 = vld [vmem:[%s199 + $0xef8] sm:$0xff]
        %v737 = vld [vmem:[%s199 + $0xf00] sm:$0xff]
        %v738 = vld [vmem:[%s199 + $0xf08] sm:$0xff]
        %v739 = vld [vmem:[%s199 + $0xf10] sm:$0xff]
        %v740 = vld [vmem:[%s199 + $0xf18] sm:$0xff]
        %v741 = vld [vmem:[%s199 + $0xf20] sm:$0xff]
        %v742 = vld [vmem:[%s199 + $0xf28] sm:$0xff]
        %v743 = vld [vmem:[%s199 + $0xf30] sm:$0xff]
        %v744 = vld [vmem:[%s199 + $0xf38] sm:$0xff]
        %v745 = vld [vmem:[%s199 + $0xf40] sm:$0xff]
        %v746 = vld [vmem:[%s199 + $0xf48] sm:$0xff]
        %v747 = vld [vmem:[%s199 + $0xf50] sm:$0xff]
        %v748 = vld [vmem:[%s199 + $0xf58] sm:$0xff]
        %v749 = vld [vmem:[%s199 + $0xf60] sm:$0xff]
        %v750 = vld [vmem:[%s199 + $0xf68] sm:$0xff]
        %v751 = vld [vmem:[%s199 + $0xf70] sm:$0xff]
        %v752 = vld [vmem:[%s199 + $0xf78] sm:$0xff]
        %v753 = vld [vmem:[%s199 + $0xf80] sm:$0xff]
        %v754 = vld [vmem:[%s199 + $0xf88] sm:$0xff]
        %v755 = vld [vmem:[%s199 + $0xf90] sm:$0xff]
        %v756 = vld [vmem:[%s199 + $0xf98] sm:$0xff]
        %v757 = vld [vmem:[%s199 + $0xfa0] sm:$0xff]
        %v758 = vld [vmem:[%s199 + $0xfa8] sm:$0xff]
        %v759 = vld [vmem:[%s199 + $0xfb0] sm:$0xff]
        %v760 = vld [vmem:[%s199 + $0xfb8] sm:$0xff]
        %v761 = vld [vmem:[%s199 + $0xfc0] sm:$0xff]
        %v762 = vld [vmem:[%s199 + $0xfc8] sm:$0xff]
        %v763 = vld [vmem:[%s199 + $0xfd0] sm:$0xff]
        %v764 = vld [vmem:[%s199 + $0xfd8] sm:$0xff]
        %v765 = vld [vmem:[%s199 + $0xfe0] sm:$0xff]
        %v766 = vld [vmem:[%s199 + $0xfe8] sm:$0xff]
        %v767 = vld [vmem:[%s199 + $0xff0] sm:$0xff]
        %v768 = vld [vmem:[%s199 + $0xff8] sm:$0xff]
        %v769 = vld [vmem:[%s199 + $0x1000] sm:$0xff]
        %v770 = vld [vmem:[%s199 + $0x1008] sm:$0xff]
        %v771 = vld [vmem:[%s199 + $0x1010] sm:$0xff]
        %v772 = vld [vmem:[%s199 + $0x1018] sm:$0xff]
        %v773 = vld [vmem:[%s199 + $0x1020] sm:$0xff]
        %v774 = vld [vmem:[%s199 + $0x1028] sm:$0xff]
        %v775 = vld [vmem:[%s199 + $0x1030] sm:$0xff]
        %v776 = vld [vmem:[%s199 + $0x1038] sm:$0xff]
        %v777 = vld [vmem:[%s199 + $0x1040] sm:$0xff]
        %v778 = vld [vmem:[%s199 + $0x1048] sm:$0xff]
        %v779 = vld [vmem:[%s199 + $0x1050] sm:$0xff]
        %v780 = vld [vmem:[%s199 + $0x1058] sm:$0xff]
        %v781 = vld [vmem:[%s199 + $0x1060] sm:$0xff]
        %v782 = vld [vmem:[%s199 + $0x1068] sm:$0xff]
        %v783 = vld [vmem:[%s199 + $0x1070] sm:$0xff]
        %v784 = vld [vmem:[%s199 + $0x1078] sm:$0xff]
        %v785 = vld [vmem:[%s199 + $0x1080] sm:$0xff]
        %v786 = vld [vmem:[%s199 + $0x1088] sm:$0xff]
        %v787 = vld [vmem:[%s199 + $0x1090] sm:$0xff]
        %v788 = vld [vmem:[%s199 + $0x1098] sm:$0xff]
        %v789 = vld [vmem:[%s199 + $0x10a0] sm:$0xff]
        %v790 = vld [vmem:[%s199 + $0x10a8] sm:$0xff]
        %v791 = vld [vmem:[%s199 + $0x10b0] sm:$0xff]
        %v792 = vld [vmem:[%s199 + $0x10b8] sm:$0xff]
        %v793 = vld [vmem:[%s199 + $0x10c0] sm:$0xff]
        %v794 = vld [vmem:[%s199 + $0x10c8] sm:$0xff]
        %v795 = vld [vmem:[%s199 + $0x10d0] sm:$0xff]
        %v796 = vld [vmem:[%s199 + $0x10d8] sm:$0xff]
        %v797 = vld [vmem:[%s199 + $0x10e0] sm:$0xff]
        %v798 = vld [vmem:[%s199 + $0x10e8] sm:$0xff]
        %v799 = vld [vmem:[%s199 + $0x10f0] sm:$0xff]
        %v800 = vld [vmem:[%s199 + $0x10f8] sm:$0xff]
        %v801 = vld [vmem:[%s199 + $0x1100] sm:$0xff]
        %v802 = vld [vmem:[%s199 + $0x1108] sm:$0xff]
        %v803 = vld [vmem:[%s199 + $0x1110] sm:$0xff]
        %v804 = vld [vmem:[%s199 + $0x1118] sm:$0xff]
        %v805 = vld [vmem:[%s199 + $0x1120] sm:$0xff]
        %v806 = vld [vmem:[%s199 + $0x1128] sm:$0xff]
        %v807 = vld [vmem:[%s199 + $0x1130] sm:$0xff]
        %v808 = vld [vmem:[%s199 + $0x1138] sm:$0xff]
        %v809 = vld [vmem:[%s199 + $0x1140] sm:$0xff]
        %v810 = vld [vmem:[%s199 + $0x1148] sm:$0xff]
        %v811 = vld [vmem:[%s199 + $0x1150] sm:$0xff]
        %v812 = vld [vmem:[%s199 + $0x1158] sm:$0xff]
        %v813 = vld [vmem:[%s199 + $0x1160] sm:$0xff]
        %v814 = vld [vmem:[%s199 + $0x1168] sm:$0xff]
        %v815 = vld [vmem:[%s199 + $0x1170] sm:$0xff]
        %v816 = vld [vmem:[%s199 + $0x1178] sm:$0xff]
        %v817 = vld [vmem:[%s199 + $0x1180] sm:$0xff]
        %v818 = vld [vmem:[%s199 + $0x1188] sm:$0xff]
        %v819 = vld [vmem:[%s199 + $0x1190] sm:$0xff]
        %v820 = vld [vmem:[%s199 + $0x1198] sm:$0xff]
        %v821 = vld [vmem:[%s199 + $0x11a0] sm:$0xff]
        %v822 = vld [vmem:[%s199 + $0x11a8] sm:$0xff]
        %v823 = vld [vmem:[%s199 + $0x11b0] sm:$0xff]
        %v824 = vld [vmem:[%s199 + $0x11b8] sm:$0xff]
        %v825 = vld [vmem:[%s199 + $0x11c0] sm:$0xff]
        %v826 = vld [vmem:[%s199 + $0x11c8] sm:$0xff]
        %v827 = vld [vmem:[%s199 + $0x11d0] sm:$0xff]
        %v828 = vld [vmem:[%s199 + $0x11d8] sm:$0xff]
        %v829 = vld [vmem:[%s199 + $0x11e0] sm:$0xff]
        %v830 = vld [vmem:[%s199 + $0x11e8] sm:$0xff]
        %v831 = vld [vmem:[%s199 + $0x11f0] sm:$0xff]
        %v832 = vld [vmem:[%s199 + $0x11f8] sm:$0xff]
        %v833 = vld [vmem:[%s199 + $0x1200] sm:$0xff]
        %v834 = vld [vmem:[%s199 + $0x1208] sm:$0xff]
        %v835 = vld [vmem:[%s199 + $0x1210] sm:$0xff]
        %v836 = vld [vmem:[%s199 + $0x1218] sm:$0xff]
        %v837 = vld [vmem:[%s199 + $0x1220] sm:$0xff]
        %v838 = vld [vmem:[%s199 + $0x1228] sm:$0xff]
        %v839 = vld [vmem:[%s199 + $0x1230] sm:$0xff]
        %v840 = vld [vmem:[%s199 + $0x1238] sm:$0xff]
        %v841 = vld [vmem:[%s199 + $0x1240] sm:$0xff]
        %v842 = vld [vmem:[%s199 + $0x1248] sm:$0xff]
        %v843 = vld [vmem:[%s199 + $0x1250] sm:$0xff]
        %v844 = vld [vmem:[%s199 + $0x1258] sm:$0xff]
        %v845 = vld [vmem:[%s199 + $0x1260] sm:$0xff]
        %v846 = vld [vmem:[%s199 + $0x1268] sm:$0xff]
        %v847 = vld [vmem:[%s199 + $0x1270] sm:$0xff]
        %v848 = vld [vmem:[%s199 + $0x1278] sm:$0xff]
        %v849 = vld [vmem:[%s199 + $0x1280] sm:$0xff]
        %v850 = vld [vmem:[%s199 + $0x1288] sm:$0xff]
        %v851 = vld [vmem:[%s199 + $0x1290] sm:$0xff]
        %v852 = vld [vmem:[%s199 + $0x1298] sm:$0xff]
        %v853 = vld [vmem:[%s199 + $0x12a0] sm:$0xff]
        %v854 = vld [vmem:[%s199 + $0x12a8] sm:$0xff]
        %v855 = vld [vmem:[%s199 + $0x12b0] sm:$0xff]
        %v856 = vld [vmem:[%s199 + $0x12b8] sm:$0xff]
        %v857 = vld [vmem:[%s199 + $0x12c0] sm:$0xff]
        %v858 = vld [vmem:[%s199 + $0x12c8] sm:$0xff]
        %v859 = vld [vmem:[%s199 + $0x12d0] sm:$0xff]
        %v860 = vld [vmem:[%s199 + $0x12d8] sm:$0xff]
        %v861 = vld [vmem:[%s199 + $0x12e0] sm:$0xff]
        %v862 = vld [vmem:[%s199 + $0x12e8] sm:$0xff]
        %v863 = vld [vmem:[%s199 + $0x12f0] sm:$0xff]
        %v864 = vld [vmem:[%s199 + $0x12f8] sm:$0xff]
        %v865 = vld [vmem:[%s199 + $0x1300] sm:$0xff]
        %v866 = vld [vmem:[%s199 + $0x1308] sm:$0xff]
        %v867 = vld [vmem:[%s199 + $0x1310] sm:$0xff]
        %v868 = vld [vmem:[%s199 + $0x1318] sm:$0xff]
        %v869 = vld [vmem:[%s199 + $0x1320] sm:$0xff]
        %v870 = vld [vmem:[%s199 + $0x1328] sm:$0xff]
        %v871 = vld [vmem:[%s199 + $0x1330] sm:$0xff]
        %v872 = vld [vmem:[%s199 + $0x1338] sm:$0xff]
        %v873 = vld [vmem:[%s199 + $0x1340] sm:$0xff]
        %v874 = vld [vmem:[%s199 + $0x1348] sm:$0xff]
        %v875 = vld [vmem:[%s199 + $0x1350] sm:$0xff]
        %v876 = vld [vmem:[%s199 + $0x1358] sm:$0xff]
        %v877 = vld [vmem:[%s199 + $0x1360] sm:$0xff]
        %v878 = vld [vmem:[%s199 + $0x1368] sm:$0xff]
        %v879 = vld [vmem:[%s199 + $0x1370] sm:$0xff]
        %v880 = vld [vmem:[%s199 + $0x1378] sm:$0xff]
        %v881 = vld [vmem:[%s199 + $0x1380] sm:$0xff]
        %v882 = vld [vmem:[%s199 + $0x1388] sm:$0xff]
        %v883 = vld [vmem:[%s199 + $0x1390] sm:$0xff]
        %v884 = vld [vmem:[%s199 + $0x1398] sm:$0xff]
        %v885 = vld [vmem:[%s199 + $0x13a0] sm:$0xff]
        %v886 = vld [vmem:[%s199 + $0x13a8] sm:$0xff]
        %v887 = vld [vmem:[%s199 + $0x13b0] sm:$0xff]
        %v888 = vld [vmem:[%s199 + $0x13b8] sm:$0xff]
        %v889 = vld [vmem:[%s199 + $0x13c0] sm:$0xff]
        %v890 = vld [vmem:[%s199 + $0x13c8] sm:$0xff]
        %v891 = vld [vmem:[%s199 + $0x13d0] sm:$0xff]
        %v892 = vld [vmem:[%s199 + $0x13d8] sm:$0xff]
        %v893 = vld [vmem:[%s199 + $0x13e0] sm:$0xff]
        %v894 = vld [vmem:[%s199 + $0x13e8] sm:$0xff]
        %v895 = vld [vmem:[%s199 + $0x13f0] sm:$0xff]
        %v896 = vld [vmem:[%s199 + $0x13f8] sm:$0xff]
        %v897 = vld [vmem:[%s199 + $0x1400] sm:$0xff]
        %v898 = vld [vmem:[%s199 + $0x1408] sm:$0xff]
        %v899 = vld [vmem:[%s199 + $0x1410] sm:$0xff]
        %v900 = vld [vmem:[%s199 + $0x1418] sm:$0xff]
        %v901 = vld [vmem:[%s199 + $0x1420] sm:$0xff]
        %v902 = vld [vmem:[%s199 + $0x1428] sm:$0xff]
        %v903 = vld [vmem:[%s199 + $0x1430] sm:$0xff]
        %v904 = vld [vmem:[%s199 + $0x1438] sm:$0xff]
        %v905 = vld [vmem:[%s199 + $0x1440] sm:$0xff]
        %v906 = vld [vmem:[%s199 + $0x1448] sm:$0xff]
        %v907 = vld [vmem:[%s199 + $0x1450] sm:$0xff]
        %v908 = vld [vmem:[%s199 + $0x1458] sm:$0xff]
        %v909 = vld [vmem:[%s199 + $0x1460] sm:$0xff]
        %v910 = vld [vmem:[%s199 + $0x1468] sm:$0xff]
        %v911 = vld [vmem:[%s199 + $0x1470] sm:$0xff]
        %v912 = vld [vmem:[%s199 + $0x1478] sm:$0xff]
        %v913 = vld [vmem:[%s199 + $0x1480] sm:$0xff]
        %v914 = vld [vmem:[%s199 + $0x1488] sm:$0xff]
        %v915 = vld [vmem:[%s199 + $0x1490] sm:$0xff]
        %v916 = vld [vmem:[%s199 + $0x1498] sm:$0xff]
        %v917 = vld [vmem:[%s199 + $0x14a0] sm:$0xff]
        %v918 = vld [vmem:[%s199 + $0x14a8] sm:$0xff]
        %v919 = vld [vmem:[%s199 + $0x14b0] sm:$0xff]
        %v920 = vld [vmem:[%s199 + $0x14b8] sm:$0xff]
        %v921 = vld [vmem:[%s199 + $0x14c0] sm:$0xff]
        %v922 = vld [vmem:[%s199 + $0x14c8] sm:$0xff]
        %v923 = vld [vmem:[%s199 + $0x14d0] sm:$0xff]
        %v924 = vld [vmem:[%s199 + $0x14d8] sm:$0xff]
        %v925 = vld [vmem:[%s199 + $0x14e0] sm:$0xff]
        %v926 = vld [vmem:[%s199 + $0x14e8] sm:$0xff]
        %v927 = vld [vmem:[%s199 + $0x14f0] sm:$0xff]
        %v928 = vld [vmem:[%s199 + $0x14f8] sm:$0xff]
        %v929 = vld [vmem:[%s199 + $0x1500] sm:$0xff]
        %v930 = vld [vmem:[%s199 + $0x1508] sm:$0xff]
        %v931 = vld [vmem:[%s199 + $0x1510] sm:$0xff]
        %v932 = vld [vmem:[%s199 + $0x1518] sm:$0xff]
        %v933 = vld [vmem:[%s199 + $0x1520] sm:$0xff]
        %v934 = vld [vmem:[%s199 + $0x1528] sm:$0xff]
        %v935 = vld [vmem:[%s199 + $0x1530] sm:$0xff]
        %v936 = vld [vmem:[%s199 + $0x1538] sm:$0xff]
        %v937 = vld [vmem:[%s199 + $0x1540] sm:$0xff]
        %v938 = vld [vmem:[%s199 + $0x1548] sm:$0xff]
        %v939 = vld [vmem:[%s199 + $0x1550] sm:$0xff]
        %v940 = vld [vmem:[%s199 + $0x1558] sm:$0xff]
        %v941 = vld [vmem:[%s199 + $0x1560] sm:$0xff]
        %v942 = vld [vmem:[%s199 + $0x1568] sm:$0xff]
        %v943 = vld [vmem:[%s199 + $0x1570] sm:$0xff]
        %v944 = vld [vmem:[%s199 + $0x1578] sm:$0xff]
        %v945 = vld [vmem:[%s199 + $0x1580] sm:$0xff]
        %v946 = vld [vmem:[%s199 + $0x1588] sm:$0xff]
        %v947 = vld [vmem:[%s199 + $0x1590] sm:$0xff]
        %v948 = vld [vmem:[%s199 + $0x1598] sm:$0xff]
        %v949 = vld [vmem:[%s199 + $0x15a0] sm:$0xff]
        %v950 = vld [vmem:[%s199 + $0x15a8] sm:$0xff]
        %v951 = vld [vmem:[%s199 + $0x15b0] sm:$0xff]
        %v952 = vld [vmem:[%s199 + $0x15b8] sm:$0xff]
        %v953 = vld [vmem:[%s199 + $0x15c0] sm:$0xff]
        %v954 = vld [vmem:[%s199 + $0x15c8] sm:$0xff]
        %v955 = vld [vmem:[%s199 + $0x15d0] sm:$0xff]
        %v956 = vld [vmem:[%s199 + $0x15d8] sm:$0xff]
        %v957 = vld [vmem:[%s199 + $0x15e0] sm:$0xff]
        %v958 = vld [vmem:[%s199 + $0x15e8] sm:$0xff]
        %v959 = vld [vmem:[%s199 + $0x15f0] sm:$0xff]
        %v960 = vld [vmem:[%s199 + $0x15f8] sm:$0xff]
        %v961 = vld [vmem:[%s199 + $0x1600] sm:$0xff]
        %v962 = vld [vmem:[%s199 + $0x1608] sm:$0xff]
        %v963 = vld [vmem:[%s199 + $0x1610] sm:$0xff]
        %v964 = vld [vmem:[%s199 + $0x1618] sm:$0xff]
        %v965 = vld [vmem:[%s199 + $0x1620] sm:$0xff]
        %v966 = vld [vmem:[%s199 + $0x1628] sm:$0xff]
        %v967 = vld [vmem:[%s199 + $0x1630] sm:$0xff]
        %v968 = vld [vmem:[%s199 + $0x1638] sm:$0xff]
        %v969 = vld [vmem:[%s199 + $0x1640] sm:$0xff]
        %v970 = vld [vmem:[%s199 + $0x1648] sm:$0xff]
        %v971 = vld [vmem:[%s199 + $0x1650] sm:$0xff]
        %v972 = vld [vmem:[%s199 + $0x1658] sm:$0xff]
        %v973 = vld [vmem:[%s199 + $0x1660] sm:$0xff]
        %v974 = vld [vmem:[%s199 + $0x1668] sm:$0xff]
        %v975 = vld [vmem:[%s199 + $0x1670] sm:$0xff]
        %v976 = vld [vmem:[%s199 + $0x1678] sm:$0xff]
        %v977 = vld [vmem:[%s199 + $0x1680] sm:$0xff]
        %v978 = vld [vmem:[%s199 + $0x1688] sm:$0xff]
        %v979 = vld [vmem:[%s199 + $0x1690] sm:$0xff]
        %v980 = vld [vmem:[%s199 + $0x1698] sm:$0xff]
        %v981 = vld [vmem:[%s199 + $0x16a0] sm:$0xff]
        %v982 = vld [vmem:[%s199 + $0x16a8] sm:$0xff]
        %v983 = vld [vmem:[%s199 + $0x16b0] sm:$0xff]
        %v984 = vld [vmem:[%s199 + $0x16b8] sm:$0xff]
        %v985 = vld [vmem:[%s199 + $0x16c0] sm:$0xff]
        %v986 = vld [vmem:[%s199 + $0x16c8] sm:$0xff]
        %v987 = vld [vmem:[%s199 + $0x16d0] sm:$0xff]
        %v988 = vld [vmem:[%s199 + $0x16d8] sm:$0xff]
        %v989 = vld [vmem:[%s199 + $0x16e0] sm:$0xff]
        %v990 = vld [vmem:[%s199 + $0x16e8] sm:$0xff]
        %v991 = vld [vmem:[%s199 + $0x16f0] sm:$0xff]
        %v992 = vld [vmem:[%s199 + $0x16f8] sm:$0xff]
        %v993 = vld [vmem:[%s199 + $0x1700] sm:$0xff]
        %v994 = vld [vmem:[%s199 + $0x1708] sm:$0xff]
        %v995 = vld [vmem:[%s199 + $0x1710] sm:$0xff]
        %v996 = vld [vmem:[%s199 + $0x1718] sm:$0xff]
        %v997 = vld [vmem:[%s199 + $0x1720] sm:$0xff]
        %v998 = vld [vmem:[%s199 + $0x1728] sm:$0xff]
        %v999 = vld [vmem:[%s199 + $0x1730] sm:$0xff]
        %v1000 = vld [vmem:[%s199 + $0x1738] sm:$0xff]
        %v1001 = vld [vmem:[%s199 + $0x1740] sm:$0xff]
        %v1002 = vld [vmem:[%s199 + $0x1748] sm:$0xff]
        %v1003 = vld [vmem:[%s199 + $0x1750] sm:$0xff]
        %v1004 = vld [vmem:[%s199 + $0x1758] sm:$0xff]
        %v1005 = vld [vmem:[%s199 + $0x1760] sm:$0xff]
        %v1006 = vld [vmem:[%s199 + $0x1768] sm:$0xff]
        %v1007 = vld [vmem:[%s199 + $0x1770] sm:$0xff]
        %v1008 = vld [vmem:[%s199 + $0x1778] sm:$0xff]
        %v1009 = vld [vmem:[%s199 + $0x1780] sm:$0xff]
        %v1010 = vld [vmem:[%s199 + $0x1788] sm:$0xff]
        %v1011 = vld [vmem:[%s199 + $0x1790] sm:$0xff]
        %v1012 = vld [vmem:[%s199 + $0x1798] sm:$0xff]
        %v1013 = vld [vmem:[%s199 + $0x17a0] sm:$0xff]
        %v1014 = vld [vmem:[%s199 + $0x17a8] sm:$0xff]
        %v1015 = vld [vmem:[%s199 + $0x17b0] sm:$0xff]
        %v1016 = vld [vmem:[%s199 + $0x17b8] sm:$0xff]
        %v1017 = vld [vmem:[%s199 + $0x17c0] sm:$0xff]
        %v1018 = vld [vmem:[%s199 + $0x17c8] sm:$0xff]
        %v1019 = vld [vmem:[%s199 + $0x17d0] sm:$0xff]
        %v1020 = vld [vmem:[%s199 + $0x17d8] sm:$0xff]
        %v1021 = vld [vmem:[%s199 + $0x17e0] sm:$0xff]
        %v1022 = vld [vmem:[%s199 + $0x17e8] sm:$0xff]
        %v1023 = vld [vmem:[%s199 + $0x17f0] sm:$0xff]
        %v1024 = vld [vmem:[%s199 + $0x17f8] sm:$0xff]
        %v1025 = vld [vmem:[%s199 + $0x1800] sm:$0xff]
        %v1026 = vld [vmem:[%s199 + $0x1808] sm:$0xff]
        %v1027 = vld [vmem:[%s199 + $0x1810] sm:$0xff]
        %v1028 = vld [vmem:[%s199 + $0x1818] sm:$0xff]
        %v1029 = vld [vmem:[%s199 + $0x1820] sm:$0xff]
        %v1030 = vld [vmem:[%s199 + $0x1828] sm:$0xff]
        %v1031 = vld [vmem:[%s199 + $0x1830] sm:$0xff]
        %v1032 = vld [vmem:[%s199 + $0x1838] sm:$0xff]
        %v1033 = vld [vmem:[%s199 + $0x1840] sm:$0xff]
        %v1034 = vld [vmem:[%s199 + $0x1848] sm:$0xff]
        %v1035 = vld [vmem:[%s199 + $0x1850] sm:$0xff]
        %v1036 = vld [vmem:[%s199 + $0x1858] sm:$0xff]
        %v1037 = vld [vmem:[%s199 + $0x1860] sm:$0xff]
        %v1038 = vld [vmem:[%s199 + $0x1868] sm:$0xff]
        %v1039 = vld [vmem:[%s199 + $0x1870] sm:$0xff]
        %v1040 = vld [vmem:[%s199 + $0x1878] sm:$0xff]
        %v1041 = vld [vmem:[%s199 + $0x1880] sm:$0xff]
        %v1042 = vld [vmem:[%s199 + $0x1888] sm:$0xff]
        %v1043 = vld [vmem:[%s199 + $0x1890] sm:$0xff]
        %v1044 = vld [vmem:[%s199 + $0x1898] sm:$0xff]
        %v1045 = vld [vmem:[%s199 + $0x18a0] sm:$0xff]
        %v1046 = vld [vmem:[%s199 + $0x18a8] sm:$0xff]
        %v1047 = vld [vmem:[%s199 + $0x18b0] sm:$0xff]
        %v1048 = vld [vmem:[%s199 + $0x18b8] sm:$0xff]
        %v1049 = vld [vmem:[%s199 + $0x18c0] sm:$0xff]
        %v1050 = vld [vmem:[%s199 + $0x18c8] sm:$0xff]
        %v1051 = vld [vmem:[%s199 + $0x18d0] sm:$0xff]
        %v1052 = vld [vmem:[%s199 + $0x18d8] sm:$0xff]
        %v1053 = vld [vmem:[%s199 + $0x18e0] sm:$0xff]
        %v1054 = vld [vmem:[%s199 + $0x18e8] sm:$0xff]
        %v1055 = vld [vmem:[%s199 + $0x18f0] sm:$0xff]
        %v1056 = vld [vmem:[%s199 + $0x18f8] sm:$0xff]
        %v1057 = vld [vmem:[%s199 + $0x1900] sm:$0xff]
        %v1058 = vld [vmem:[%s199 + $0x1908] sm:$0xff]
        %v1059 = vld [vmem:[%s199 + $0x1910] sm:$0xff]
        %v1060 = vld [vmem:[%s199 + $0x1918] sm:$0xff]
        %v1061 = vld [vmem:[%s199 + $0x1920] sm:$0xff]
        %v1062 = vld [vmem:[%s199 + $0x1928] sm:$0xff]
        %v1063 = vld [vmem:[%s199 + $0x1930] sm:$0xff]
        %v1064 = vld [vmem:[%s199 + $0x1938] sm:$0xff]
        %v1065 = vld [vmem:[%s199 + $0x1940] sm:$0xff]
        %v1066 = vld [vmem:[%s199 + $0x1948] sm:$0xff]
        %v1067 = vld [vmem:[%s199 + $0x1950] sm:$0xff]
        %v1068 = vld [vmem:[%s199 + $0x1958] sm:$0xff]
        %v1069 = vld [vmem:[%s199 + $0x1960] sm:$0xff]
        %v1070 = vld [vmem:[%s199 + $0x1968] sm:$0xff]
        %v1071 = vld [vmem:[%s199 + $0x1970] sm:$0xff]
        %v1072 = vld [vmem:[%s199 + $0x1978] sm:$0xff]
        %v1073 = vld [vmem:[%s199 + $0x1980] sm:$0xff]
        %v1074 = vld [vmem:[%s199 + $0x1988] sm:$0xff]
        %v1075 = vld [vmem:[%s199 + $0x1990] sm:$0xff]
        %v1076 = vld [vmem:[%s199 + $0x1998] sm:$0xff]
        %v1077 = vld [vmem:[%s199 + $0x19a0] sm:$0xff]
        %v1078 = vld [vmem:[%s199 + $0x19a8] sm:$0xff]
        %v1079 = vld [vmem:[%s199 + $0x19b0] sm:$0xff]
        %v1080 = vld [vmem:[%s199 + $0x19b8] sm:$0xff]
        %v1081 = vld [vmem:[%s199 + $0x19c0] sm:$0xff]
        %v1082 = vld [vmem:[%s199 + $0x19c8] sm:$0xff]
        %v1083 = vld [vmem:[%s199 + $0x19d0] sm:$0xff]
        %v1084 = vld [vmem:[%s199 + $0x19d8] sm:$0xff]
        %v1085 = vld [vmem:[%s199 + $0x19e0] sm:$0xff]
        %v1086 = vld [vmem:[%s199 + $0x19e8] sm:$0xff]
        %v1087 = vld [vmem:[%s199 + $0x19f0] sm:$0xff]
        %v1088 = vld [vmem:[%s199 + $0x19f8] sm:$0xff]
        %v1089 = vld [vmem:[%s199 + $0x1a00] sm:$0xff]
        %v1090 = vld [vmem:[%s199 + $0x1a08] sm:$0xff]
        %v1091 = vld [vmem:[%s199 + $0x1a10] sm:$0xff]
        %v1092 = vld [vmem:[%s199 + $0x1a18] sm:$0xff]
        %v1093 = vld [vmem:[%s199 + $0x1a20] sm:$0xff]
        %v1094 = vld [vmem:[%s199 + $0x1a28] sm:$0xff]
        %v1095 = vld [vmem:[%s199 + $0x1a30] sm:$0xff]
        %v1096 = vld [vmem:[%s199 + $0x1a38] sm:$0xff]
        %v1097 = vld [vmem:[%s199 + $0x1a40] sm:$0xff]
        %v1098 = vld [vmem:[%s199 + $0x1a48] sm:$0xff]
        %v1099 = vld [vmem:[%s199 + $0x1a50] sm:$0xff]
        %v1100 = vld [vmem:[%s199 + $0x1a58] sm:$0xff]
        %v1101 = vld [vmem:[%s199 + $0x1a60] sm:$0xff]
        %v1102 = vld [vmem:[%s199 + $0x1a68] sm:$0xff]
        %v1103 = vld [vmem:[%s199 + $0x1a70] sm:$0xff]
        %v1104 = vld [vmem:[%s199 + $0x1a78] sm:$0xff]
        %v1105 = vld [vmem:[%s199 + $0x1a80] sm:$0xff]
        %v1106 = vld [vmem:[%s199 + $0x1a88] sm:$0xff]
        %v1107 = vld [vmem:[%s199 + $0x1a90] sm:$0xff]
        %v1108 = vld [vmem:[%s199 + $0x1a98] sm:$0xff]
        %v1109 = vld [vmem:[%s199 + $0x1aa0] sm:$0xff]
        %v1110 = vld [vmem:[%s199 + $0x1aa8] sm:$0xff]
        %v1111 = vld [vmem:[%s199 + $0x1ab0] sm:$0xff]
        %v1112 = vld [vmem:[%s199 + $0x1ab8] sm:$0xff]
        %v1113 = vld [vmem:[%s199 + $0x1ac0] sm:$0xff]
        %v1114 = vld [vmem:[%s199 + $0x1ac8] sm:$0xff]
        %v1115 = vld [vmem:[%s199 + $0x1ad0] sm:$0xff]
        %v1116 = vld [vmem:[%s199 + $0x1ad8] sm:$0xff]
        %v1117 = vld [vmem:[%s199 + $0x1ae0] sm:$0xff]
        %v1118 = vld [vmem:[%s199 + $0x1ae8] sm:$0xff]
        %v1119 = vld [vmem:[%s199 + $0x1af0] sm:$0xff]
        %v1120 = vld [vmem:[%s199 + $0x1af8] sm:$0xff]
        %v1121 = vld [vmem:[%s199 + $0x1b00] sm:$0xff]
        %v1122 = vld [vmem:[%s199 + $0x1b08] sm:$0xff]
        %v1123 = vld [vmem:[%s199 + $0x1b10] sm:$0xff]
        %v1124 = vld [vmem:[%s199 + $0x1b18] sm:$0xff]
        %v1125 = vld [vmem:[%s199 + $0x1b20] sm:$0xff]
        %v1126 = vld [vmem:[%s199 + $0x1b28] sm:$0xff]
        %v1127 = vld [vmem:[%s199 + $0x1b30] sm:$0xff]
        %v1128 = vld [vmem:[%s199 + $0x1b38] sm:$0xff]
        %v1129 = vld [vmem:[%s199 + $0x1b40] sm:$0xff]
        %v1130 = vld [vmem:[%s199 + $0x1b48] sm:$0xff]
        %v1131 = vld [vmem:[%s199 + $0x1b50] sm:$0xff]
        %v1132 = vld [vmem:[%s199 + $0x1b58] sm:$0xff]
        %v1133 = vld [vmem:[%s199 + $0x1b60] sm:$0xff]
        %v1134 = vld [vmem:[%s199 + $0x1b68] sm:$0xff]
        %v1135 = vld [vmem:[%s199 + $0x1b70] sm:$0xff]
        %v1136 = vld [vmem:[%s199 + $0x1b78] sm:$0xff]
        %v1137 = vld [vmem:[%s199 + $0x1b80] sm:$0xff]
        %v1138 = vld [vmem:[%s199 + $0x1b88] sm:$0xff]
        %v1139 = vld [vmem:[%s199 + $0x1b90] sm:$0xff]
        %v1140 = vld [vmem:[%s199 + $0x1b98] sm:$0xff]
        %v1141 = vld [vmem:[%s199 + $0x1ba0] sm:$0xff]
        %v1142 = vld [vmem:[%s199 + $0x1ba8] sm:$0xff]
        %v1143 = vld [vmem:[%s199 + $0x1bb0] sm:$0xff]
        %v1144 = vld [vmem:[%s199 + $0x1bb8] sm:$0xff]
        %v1145 = vld [vmem:[%s199 + $0x1bc0] sm:$0xff]
        %v1146 = vld [vmem:[%s199 + $0x1bc8] sm:$0xff]
        %v1147 = vld [vmem:[%s199 + $0x1bd0] sm:$0xff]
        %v1148 = vld [vmem:[%s199 + $0x1bd8] sm:$0xff]
        %v1149 = vld [vmem:[%s199 + $0x1be0] sm:$0xff]
        %v1150 = vld [vmem:[%s199 + $0x1be8] sm:$0xff]
        %v1151 = vld [vmem:[%s199 + $0x1bf0] sm:$0xff]
        %v1152 = vld [vmem:[%s199 + $0x1bf8] sm:$0xff]
        %v1153 = vld [vmem:[%s199 + $0x1c00] sm:$0xff]
        %v1154 = vld [vmem:[%s199 + $0x1c08] sm:$0xff]
        %v1155 = vld [vmem:[%s199 + $0x1c10] sm:$0xff]
        %v1156 = vld [vmem:[%s199 + $0x1c18] sm:$0xff]
        %v1157 = vld [vmem:[%s199 + $0x1c20] sm:$0xff]
        %v1158 = vld [vmem:[%s199 + $0x1c28] sm:$0xff]
        %v1159 = vld [vmem:[%s199 + $0x1c30] sm:$0xff]
        %v1160 = vld [vmem:[%s199 + $0x1c38] sm:$0xff]
        %v1161 = vld [vmem:[%s199 + $0x1c40] sm:$0xff]
        %v1162 = vld [vmem:[%s199 + $0x1c48] sm:$0xff]
        %v1163 = vld [vmem:[%s199 + $0x1c50] sm:$0xff]
        %v1164 = vld [vmem:[%s199 + $0x1c58] sm:$0xff]
        %v1165 = vld [vmem:[%s199 + $0x1c60] sm:$0xff]
        %v1166 = vld [vmem:[%s199 + $0x1c68] sm:$0xff]
        %v1167 = vld [vmem:[%s199 + $0x1c70] sm:$0xff]
        %v1168 = vld [vmem:[%s199 + $0x1c78] sm:$0xff]
        %v1169 = vld [vmem:[%s199 + $0x1c80] sm:$0xff]
        %v1170 = vld [vmem:[%s199 + $0x1c88] sm:$0xff]
        %v1171 = vld [vmem:[%s199 + $0x1c90] sm:$0xff]
        %v1172 = vld [vmem:[%s199 + $0x1c98] sm:$0xff]
        %v1173 = vld [vmem:[%s199 + $0x1ca0] sm:$0xff]
        %v1174 = vld [vmem:[%s199 + $0x1ca8] sm:$0xff]
        %v1175 = vld [vmem:[%s199 + $0x1cb0] sm:$0xff]
        %v1176 = vld [vmem:[%s199 + $0x1cb8] sm:$0xff]
        %v1177 = vld [vmem:[%s199 + $0x1cc0] sm:$0xff]
        %v1178 = vld [vmem:[%s199 + $0x1cc8] sm:$0xff]
        %v1179 = vld [vmem:[%s199 + $0x1cd0] sm:$0xff]
        %v1180 = vld [vmem:[%s199 + $0x1cd8] sm:$0xff]
        %v1181 = vld [vmem:[%s199 + $0x1ce0] sm:$0xff]
        %v1182 = vld [vmem:[%s199 + $0x1ce8] sm:$0xff]
        %v1183 = vld [vmem:[%s199 + $0x1cf0] sm:$0xff]
        %v1184 = vld [vmem:[%s199 + $0x1cf8] sm:$0xff]
        %v1185 = vld [vmem:[%s199 + $0x1d00] sm:$0xff]
        %v1186 = vld [vmem:[%s199 + $0x1d08] sm:$0xff]
        %v1187 = vld [vmem:[%s199 + $0x1d10] sm:$0xff]
        %v1188 = vld [vmem:[%s199 + $0x1d18] sm:$0xff]
        %v1189 = vld [vmem:[%s199 + $0x1d20] sm:$0xff]
        %v1190 = vld [vmem:[%s199 + $0x1d28] sm:$0xff]
        %v1191 = vld [vmem:[%s199 + $0x1d30] sm:$0xff]
        %v1192 = vld [vmem:[%s199 + $0x1d38] sm:$0xff]
        %v1193 = vld [vmem:[%s199 + $0x1d40] sm:$0xff]
        %v1194 = vld [vmem:[%s199 + $0x1d48] sm:$0xff]
        %v1195 = vld [vmem:[%s199 + $0x1d50] sm:$0xff]
        %v1196 = vld [vmem:[%s199 + $0x1d58] sm:$0xff]
        %v1197 = vld [vmem:[%s199 + $0x1d60] sm:$0xff]
        %v1198 = vld [vmem:[%s199 + $0x1d68] sm:$0xff]
        %v1199 = vld [vmem:[%s199 + $0x1d70] sm:$0xff]
        %v1200 = vld [vmem:[%s199 + $0x1d78] sm:$0xff]
        %v1201 = vld [vmem:[%s199 + $0x1d80] sm:$0xff]
        %v1202 = vld [vmem:[%s199 + $0x1d88] sm:$0xff]
        %v1203 = vld [vmem:[%s199 + $0x1d90] sm:$0xff]
        %v1204 = vld [vmem:[%s199 + $0x1d98] sm:$0xff]
        %v1205 = vld [vmem:[%s199 + $0x1da0] sm:$0xff]
        %v1206 = vld [vmem:[%s199 + $0x1da8] sm:$0xff]
        %v1207 = vld [vmem:[%s199 + $0x1db0] sm:$0xff]
        %v1208 = vld [vmem:[%s199 + $0x1db8] sm:$0xff]
        %v1209 = vld [vmem:[%s199 + $0x1dc0] sm:$0xff]
        %v1210 = vld [vmem:[%s199 + $0x1dc8] sm:$0xff]
        %v1211 = vld [vmem:[%s199 + $0x1dd0] sm:$0xff]
        %v1212 = vld [vmem:[%s199 + $0x1dd8] sm:$0xff]
        %v1213 = vld [vmem:[%s199 + $0x1de0] sm:$0xff]
        %v1214 = vld [vmem:[%s199 + $0x1de8] sm:$0xff]
        %v1215 = vld [vmem:[%s199 + $0x1df0] sm:$0xff]
        %v1216 = vld [vmem:[%s199 + $0x1df8] sm:$0xff]
        %v1217 = vld [vmem:[%s199 + $0x1e00] sm:$0xff]
        %v1218 = vld [vmem:[%s199 + $0x1e08] sm:$0xff]
        %v1219 = vld [vmem:[%s199 + $0x1e10] sm:$0xff]
        %v1220 = vld [vmem:[%s199 + $0x1e18] sm:$0xff]
        %v1221 = vld [vmem:[%s199 + $0x1e20] sm:$0xff]
        %v1222 = vld [vmem:[%s199 + $0x1e28] sm:$0xff]
        %v1223 = vld [vmem:[%s199 + $0x1e30] sm:$0xff]
        %v1224 = vld [vmem:[%s199 + $0x1e38] sm:$0xff]
        %v1225 = vld [vmem:[%s199 + $0x1e40] sm:$0xff]
        %v1226 = vld [vmem:[%s199 + $0x1e48] sm:$0xff]
        %v1227 = vld [vmem:[%s199 + $0x1e50] sm:$0xff]
        %v1228 = vld [vmem:[%s199 + $0x1e58] sm:$0xff]
        %v1229 = vld [vmem:[%s199 + $0x1e60] sm:$0xff]
        %v1230 = vld [vmem:[%s199 + $0x1e68] sm:$0xff]
        %v1231 = vld [vmem:[%s199 + $0x1e70] sm:$0xff]
        %v1232 = vld [vmem:[%s199 + $0x1e78] sm:$0xff]
        %v1233 = vld [vmem:[%s199 + $0x1e80] sm:$0xff]
        %v1234 = vld [vmem:[%s199 + $0x1e88] sm:$0xff]
        %v1235 = vld [vmem:[%s199 + $0x1e90] sm:$0xff]
        %v1236 = vld [vmem:[%s199 + $0x1e98] sm:$0xff]
        %v1237 = vld [vmem:[%s199 + $0x1ea0] sm:$0xff]
        %v1238 = vld [vmem:[%s199 + $0x1ea8] sm:$0xff]
        %v1239 = vld [vmem:[%s199 + $0x1eb0] sm:$0xff]
        %v1240 = vld [vmem:[%s199 + $0x1eb8] sm:$0xff]
        %v1241 = vld [vmem:[%s199 + $0x1ec0] sm:$0xff]
        %v1242 = vld [vmem:[%s199 + $0x1ec8] sm:$0xff]
        %v1243 = vld [vmem:[%s199 + $0x1ed0] sm:$0xff]
        %v1244 = vld [vmem:[%s199 + $0x1ed8] sm:$0xff]
        %v1245 = vld [vmem:[%s199 + $0x1ee0] sm:$0xff]
        %v1246 = vld [vmem:[%s199 + $0x1ee8] sm:$0xff]
        %v1247 = vld [vmem:[%s199 + $0x1ef0] sm:$0xff]
        %v1248 = vld [vmem:[%s199 + $0x1ef8] sm:$0xff]
        %v1249 = vld [vmem:[%s199 + $0x1f00] sm:$0xff]
        %v1250 = vld [vmem:[%s199 + $0x1f08] sm:$0xff]
        %v1251 = vld [vmem:[%s199 + $0x1f10] sm:$0xff]
        %v1252 = vld [vmem:[%s199 + $0x1f18] sm:$0xff]
        %v1253 = vld [vmem:[%s199 + $0x1f20] sm:$0xff]
        %v1254 = vld [vmem:[%s199 + $0x1f28] sm:$0xff]
        %v1255 = vld [vmem:[%s199 + $0x1f30] sm:$0xff]
        %v1256 = vld [vmem:[%s199 + $0x1f38] sm:$0xff]
        %v1257 = vld [vmem:[%s199 + $0x1f40] sm:$0xff]
        %v1258 = vld [vmem:[%s199 + $0x1f48] sm:$0xff]
        %v1259 = vld [vmem:[%s199 + $0x1f50] sm:$0xff]
        %v1260 = vld [vmem:[%s199 + $0x1f58] sm:$0xff]
        %v1261 = vld [vmem:[%s199 + $0x1f60] sm:$0xff]
        %v1262 = vld [vmem:[%s199 + $0x1f68] sm:$0xff]
        %v1263 = vld [vmem:[%s199 + $0x1f70] sm:$0xff]
        %v1264 = vld [vmem:[%s199 + $0x1f78] sm:$0xff]
        %v1265 = vld [vmem:[%s199 + $0x1f80] sm:$0xff]
        %v1266 = vld [vmem:[%s199 + $0x1f88] sm:$0xff]
        %v1267 = vld [vmem:[%s199 + $0x1f90] sm:$0xff]
        %v1268 = vld [vmem:[%s199 + $0x1f98] sm:$0xff]
        %v1269 = vld [vmem:[%s199 + $0x1fa0] sm:$0xff]
        %v1270 = vld [vmem:[%s199 + $0x1fa8] sm:$0xff]
        %v1271 = vld [vmem:[%s199 + $0x1fb0] sm:$0xff]
        %v1272 = vld [vmem:[%s199 + $0x1fb8] sm:$0xff]
        %v1273 = vld [vmem:[%s199 + $0x1fc0] sm:$0xff]
        %v1274 = vld [vmem:[%s199 + $0x1fc8] sm:$0xff]
        %v1275 = vld [vmem:[%s199 + $0x1fd0] sm:$0xff]
        %v1276 = vld [vmem:[%s199 + $0x1fd8] sm:$0xff]
        %v1277 = vld [vmem:[%s199 + $0x1fe0] sm:$0xff]
        %v1278 = vld [vmem:[%s199 + $0x1fe8] sm:$0xff]
        %v1279 = vld [vmem:[%s199 + $0x1ff0] sm:$0xff]
        %v1280 = vld [vmem:[%s199 + $0x1ff8] sm:$0xff]
        %v2305 = vunpack.c.l.b16 %v257
        %v2306 = vunpack.c.h.b16 %v257
        %v2307 = vunpack.c.l.b16 %v258
        %v2308 = vunpack.c.h.b16 %v258
        %v2309 = vunpack.c.l.b16 %v259
        %v2310 = vunpack.c.h.b16 %v259
        %v2311 = vunpack.c.l.b16 %v260
        %v2312 = vunpack.c.h.b16 %v260
        %v2313 = vunpack.c.l.b16 %v261
        %v2314 = vunpack.c.h.b16 %v261
        %v2315 = vunpack.c.l.b16 %v262
        %v2316 = vunpack.c.h.b16 %v262
        %v2317 = vunpack.c.l.b16 %v263
        %v2318 = vunpack.c.h.b16 %v263
        %v2319 = vunpack.c.l.b16 %v264
        %v2320 = vunpack.c.h.b16 %v264
        %v2321 = vunpack.c.l.b16 %v265
        %v2322 = vunpack.c.h.b16 %v265
        %v2323 = vunpack.c.l.b16 %v266
        %v2324 = vunpack.c.h.b16 %v266
        %v2325 = vunpack.c.l.b16 %v267
        %v2326 = vunpack.c.h.b16 %v267
        %v2327 = vunpack.c.l.b16 %v268
        %v2328 = vunpack.c.h.b16 %v268
        %v2329 = vunpack.c.l.b16 %v269
        %v2330 = vunpack.c.h.b16 %v269
        %v2331 = vunpack.c.l.b16 %v270
        %v2332 = vunpack.c.h.b16 %v270
        %v2333 = vunpack.c.l.b16 %v271
        %v2334 = vunpack.c.h.b16 %v271
        %v2335 = vunpack.c.l.b16 %v272
        %v2336 = vunpack.c.h.b16 %v272
        %v2337 = vunpack.c.l.b16 %v273
        %v2338 = vunpack.c.h.b16 %v273
        %v2339 = vunpack.c.l.b16 %v274
        %v2340 = vunpack.c.h.b16 %v274
        %v2341 = vunpack.c.l.b16 %v275
        %v2342 = vunpack.c.h.b16 %v275
        %v2343 = vunpack.c.l.b16 %v276
        %v2344 = vunpack.c.h.b16 %v276
        %v2345 = vunpack.c.l.b16 %v277
        %v2346 = vunpack.c.h.b16 %v277
        %v2347 = vunpack.c.l.b16 %v278
        %v2348 = vunpack.c.h.b16 %v278
        %v2349 = vunpack.c.l.b16 %v279
        %v2350 = vunpack.c.h.b16 %v279
        %v2351 = vunpack.c.l.b16 %v280
        %v2352 = vunpack.c.h.b16 %v280
        %v2353 = vunpack.c.l.b16 %v281
        %v2354 = vunpack.c.h.b16 %v281
        %v2355 = vunpack.c.l.b16 %v282
        %v2356 = vunpack.c.h.b16 %v282
        %v2357 = vunpack.c.l.b16 %v283
        %v2358 = vunpack.c.h.b16 %v283
        %v2359 = vunpack.c.l.b16 %v284
        %v2360 = vunpack.c.h.b16 %v284
        %v2361 = vunpack.c.l.b16 %v285
        %v2362 = vunpack.c.h.b16 %v285
        %v2363 = vunpack.c.l.b16 %v286
        %v2364 = vunpack.c.h.b16 %v286
        %v2365 = vunpack.c.l.b16 %v287
        %v2366 = vunpack.c.h.b16 %v287
        %v2367 = vunpack.c.l.b16 %v288
        %v2368 = vunpack.c.h.b16 %v288
        %v2369 = vunpack.c.l.b16 %v289
        %v2370 = vunpack.c.h.b16 %v289
        %v2371 = vunpack.c.l.b16 %v290
        %v2372 = vunpack.c.h.b16 %v290
        %v2373 = vunpack.c.l.b16 %v291
        %v2374 = vunpack.c.h.b16 %v291
        %v2375 = vunpack.c.l.b16 %v292
        %v2376 = vunpack.c.h.b16 %v292
        %v2377 = vunpack.c.l.b16 %v293
        %v2378 = vunpack.c.h.b16 %v293
        %v2379 = vunpack.c.l.b16 %v294
        %v2380 = vunpack.c.h.b16 %v294
        %v2381 = vunpack.c.l.b16 %v295
        %v2382 = vunpack.c.h.b16 %v295
        %v2383 = vunpack.c.l.b16 %v296
        %v2384 = vunpack.c.h.b16 %v296
        %v2385 = vunpack.c.l.b16 %v297
        %v2386 = vunpack.c.h.b16 %v297
        %v2387 = vunpack.c.l.b16 %v298
        %v2388 = vunpack.c.h.b16 %v298
        %v2389 = vunpack.c.l.b16 %v299
        %v2390 = vunpack.c.h.b16 %v299
        %v2391 = vunpack.c.l.b16 %v300
        %v2392 = vunpack.c.h.b16 %v300
        %v2393 = vunpack.c.l.b16 %v301
        %v2394 = vunpack.c.h.b16 %v301
        %v2395 = vunpack.c.l.b16 %v302
        %v2396 = vunpack.c.h.b16 %v302
        %v2397 = vunpack.c.l.b16 %v303
        %v2398 = vunpack.c.h.b16 %v303
        %v2399 = vunpack.c.l.b16 %v304
        %v2400 = vunpack.c.h.b16 %v304
        %v2401 = vunpack.c.l.b16 %v305
        %v2402 = vunpack.c.h.b16 %v305
        %v2403 = vunpack.c.l.b16 %v306
        %v2404 = vunpack.c.h.b16 %v306
        %v2405 = vunpack.c.l.b16 %v307
        %v2406 = vunpack.c.h.b16 %v307
        %v2407 = vunpack.c.l.b16 %v308
        %v2408 = vunpack.c.h.b16 %v308
        %v2409 = vunpack.c.l.b16 %v309
        %v2410 = vunpack.c.h.b16 %v309
        %v2411 = vunpack.c.l.b16 %v310
        %v2412 = vunpack.c.h.b16 %v310
        %v2413 = vunpack.c.l.b16 %v311
        %v2414 = vunpack.c.h.b16 %v311
        %v2415 = vunpack.c.l.b16 %v312
        %v2416 = vunpack.c.h.b16 %v312
        %v2417 = vunpack.c.l.b16 %v313
        %v2418 = vunpack.c.h.b16 %v313
        %v2419 = vunpack.c.l.b16 %v314
        %v2420 = vunpack.c.h.b16 %v314
        %v2421 = vunpack.c.l.b16 %v315
        %v2422 = vunpack.c.h.b16 %v315
        %v2423 = vunpack.c.l.b16 %v316
        %v2424 = vunpack.c.h.b16 %v316
        %v2425 = vunpack.c.l.b16 %v317
        %v2426 = vunpack.c.h.b16 %v317
        %v2427 = vunpack.c.l.b16 %v318
        %v2428 = vunpack.c.h.b16 %v318
        %v2429 = vunpack.c.l.b16 %v319
        %v2430 = vunpack.c.h.b16 %v319
        %v2431 = vunpack.c.l.b16 %v320
        %v2432 = vunpack.c.h.b16 %v320
        %v2433 = vunpack.c.l.b16 %v321
        %v2434 = vunpack.c.h.b16 %v321
        %v2435 = vunpack.c.l.b16 %v322
        %v2436 = vunpack.c.h.b16 %v322
        %v2437 = vunpack.c.l.b16 %v323
        %v2438 = vunpack.c.h.b16 %v323
        %v2439 = vunpack.c.l.b16 %v324
        %v2440 = vunpack.c.h.b16 %v324
        %v2441 = vunpack.c.l.b16 %v325
        %v2442 = vunpack.c.h.b16 %v325
        %v2443 = vunpack.c.l.b16 %v326
        %v2444 = vunpack.c.h.b16 %v326
        %v2445 = vunpack.c.l.b16 %v327
        %v2446 = vunpack.c.h.b16 %v327
        %v2447 = vunpack.c.l.b16 %v328
        %v2448 = vunpack.c.h.b16 %v328
        %v2449 = vunpack.c.l.b16 %v329
        %v2450 = vunpack.c.h.b16 %v329
        %v2451 = vunpack.c.l.b16 %v330
        %v2452 = vunpack.c.h.b16 %v330
        %v2453 = vunpack.c.l.b16 %v331
        %v2454 = vunpack.c.h.b16 %v331
        %v2455 = vunpack.c.l.b16 %v332
        %v2456 = vunpack.c.h.b16 %v332
        %v2457 = vunpack.c.l.b16 %v333
        %v2458 = vunpack.c.h.b16 %v333
        %v2459 = vunpack.c.l.b16 %v334
        %v2460 = vunpack.c.h.b16 %v334
        %v2461 = vunpack.c.l.b16 %v335
        %v2462 = vunpack.c.h.b16 %v335
        %v2463 = vunpack.c.l.b16 %v336
        %v2464 = vunpack.c.h.b16 %v336
        %v2465 = vunpack.c.l.b16 %v337
        %v2466 = vunpack.c.h.b16 %v337
        %v2467 = vunpack.c.l.b16 %v338
        %v2468 = vunpack.c.h.b16 %v338
        %v2469 = vunpack.c.l.b16 %v339
        %v2470 = vunpack.c.h.b16 %v339
        %v2471 = vunpack.c.l.b16 %v340
        %v2472 = vunpack.c.h.b16 %v340
        %v2473 = vunpack.c.l.b16 %v341
        %v2474 = vunpack.c.h.b16 %v341
        %v2475 = vunpack.c.l.b16 %v342
        %v2476 = vunpack.c.h.b16 %v342
        %v2477 = vunpack.c.l.b16 %v343
        %v2478 = vunpack.c.h.b16 %v343
        %v2479 = vunpack.c.l.b16 %v344
        %v2480 = vunpack.c.h.b16 %v344
        %v2481 = vunpack.c.l.b16 %v345
        %v2482 = vunpack.c.h.b16 %v345
        %v2483 = vunpack.c.l.b16 %v346
        %v2484 = vunpack.c.h.b16 %v346
        %v2485 = vunpack.c.l.b16 %v347
        %v2486 = vunpack.c.h.b16 %v347
        %v2487 = vunpack.c.l.b16 %v348
        %v2488 = vunpack.c.h.b16 %v348
        %v2489 = vunpack.c.l.b16 %v349
        %v2490 = vunpack.c.h.b16 %v349
        %v2491 = vunpack.c.l.b16 %v350
        %v2492 = vunpack.c.h.b16 %v350
        %v2493 = vunpack.c.l.b16 %v351
        %v2494 = vunpack.c.h.b16 %v351
        %v2495 = vunpack.c.l.b16 %v352
        %v2496 = vunpack.c.h.b16 %v352
        %v2497 = vunpack.c.l.b16 %v353
        %v2498 = vunpack.c.h.b16 %v353
        %v2499 = vunpack.c.l.b16 %v354
        %v2500 = vunpack.c.h.b16 %v354
        %v2501 = vunpack.c.l.b16 %v355
        %v2502 = vunpack.c.h.b16 %v355
        %v2503 = vunpack.c.l.b16 %v356
        %v2504 = vunpack.c.h.b16 %v356
        %v2505 = vunpack.c.l.b16 %v357
        %v2506 = vunpack.c.h.b16 %v357
        %v2507 = vunpack.c.l.b16 %v358
        %v2508 = vunpack.c.h.b16 %v358
        %v2509 = vunpack.c.l.b16 %v359
        %v2510 = vunpack.c.h.b16 %v359
        %v2511 = vunpack.c.l.b16 %v360
        %v2512 = vunpack.c.h.b16 %v360
        %v2513 = vunpack.c.l.b16 %v361
        %v2514 = vunpack.c.h.b16 %v361
        %v2515 = vunpack.c.l.b16 %v362
        %v2516 = vunpack.c.h.b16 %v362
        %v2517 = vunpack.c.l.b16 %v363
        %v2518 = vunpack.c.h.b16 %v363
        %v2519 = vunpack.c.l.b16 %v364
        %v2520 = vunpack.c.h.b16 %v364
        %v2521 = vunpack.c.l.b16 %v365
        %v2522 = vunpack.c.h.b16 %v365
        %v2523 = vunpack.c.l.b16 %v366
        %v2524 = vunpack.c.h.b16 %v366
        %v2525 = vunpack.c.l.b16 %v367
        %v2526 = vunpack.c.h.b16 %v367
        %v2527 = vunpack.c.l.b16 %v368
        %v2528 = vunpack.c.h.b16 %v368
        %v2529 = vunpack.c.l.b16 %v369
        %v2530 = vunpack.c.h.b16 %v369
        %v2531 = vunpack.c.l.b16 %v370
        %v2532 = vunpack.c.h.b16 %v370
        %v2533 = vunpack.c.l.b16 %v371
        %v2534 = vunpack.c.h.b16 %v371
        %v2535 = vunpack.c.l.b16 %v372
        %v2536 = vunpack.c.h.b16 %v372
        %v2537 = vunpack.c.l.b16 %v373
        %v2538 = vunpack.c.h.b16 %v373
        %v2539 = vunpack.c.l.b16 %v374
        %v2540 = vunpack.c.h.b16 %v374
        %v2541 = vunpack.c.l.b16 %v375
        %v2542 = vunpack.c.h.b16 %v375
        %v2543 = vunpack.c.l.b16 %v376
        %v2544 = vunpack.c.h.b16 %v376
        %v2545 = vunpack.c.l.b16 %v377
        %v2546 = vunpack.c.h.b16 %v377
        %v2547 = vunpack.c.l.b16 %v378
        %v2548 = vunpack.c.h.b16 %v378
        %v2549 = vunpack.c.l.b16 %v379
        %v2550 = vunpack.c.h.b16 %v379
        %v2551 = vunpack.c.l.b16 %v380
        %v2552 = vunpack.c.h.b16 %v380
        %v2553 = vunpack.c.l.b16 %v381
        %v2554 = vunpack.c.h.b16 %v381
        %v2555 = vunpack.c.l.b16 %v382
        %v2556 = vunpack.c.h.b16 %v382
        %v2557 = vunpack.c.l.b16 %v383
        %v2558 = vunpack.c.h.b16 %v383
        %v2559 = vunpack.c.l.b16 %v384
        %v2560 = vunpack.c.h.b16 %v384
        %v2561 = vunpack.c.l.b16 %v385
        %v2562 = vunpack.c.h.b16 %v385
        %v2563 = vunpack.c.l.b16 %v386
        %v2564 = vunpack.c.h.b16 %v386
        %v2565 = vunpack.c.l.b16 %v387
        %v2566 = vunpack.c.h.b16 %v387
        %v2567 = vunpack.c.l.b16 %v388
        %v2568 = vunpack.c.h.b16 %v388
        %v2569 = vunpack.c.l.b16 %v389
        %v2570 = vunpack.c.h.b16 %v389
        %v2571 = vunpack.c.l.b16 %v390
        %v2572 = vunpack.c.h.b16 %v390
        %v2573 = vunpack.c.l.b16 %v391
        %v2574 = vunpack.c.h.b16 %v391
        %v2575 = vunpack.c.l.b16 %v392
        %v2576 = vunpack.c.h.b16 %v392
        %v2577 = vunpack.c.l.b16 %v393
        %v2578 = vunpack.c.h.b16 %v393
        %v2579 = vunpack.c.l.b16 %v394
        %v2580 = vunpack.c.h.b16 %v394
        %v2581 = vunpack.c.l.b16 %v395
        %v2582 = vunpack.c.h.b16 %v395
        %v2583 = vunpack.c.l.b16 %v396
        %v2584 = vunpack.c.h.b16 %v396
        %v2585 = vunpack.c.l.b16 %v397
        %v2586 = vunpack.c.h.b16 %v397
        %v2587 = vunpack.c.l.b16 %v398
        %v2588 = vunpack.c.h.b16 %v398
        %v2589 = vunpack.c.l.b16 %v399
        %v2590 = vunpack.c.h.b16 %v399
        %v2591 = vunpack.c.l.b16 %v400
        %v2592 = vunpack.c.h.b16 %v400
        %v2593 = vunpack.c.l.b16 %v401
        %v2594 = vunpack.c.h.b16 %v401
        %v2595 = vunpack.c.l.b16 %v402
        %v2596 = vunpack.c.h.b16 %v402
        %v2597 = vunpack.c.l.b16 %v403
        %v2598 = vunpack.c.h.b16 %v403
        %v2599 = vunpack.c.l.b16 %v404
        %v2600 = vunpack.c.h.b16 %v404
        %v2601 = vunpack.c.l.b16 %v405
        %v2602 = vunpack.c.h.b16 %v405
        %v2603 = vunpack.c.l.b16 %v406
        %v2604 = vunpack.c.h.b16 %v406
        %v2605 = vunpack.c.l.b16 %v407
        %v2606 = vunpack.c.h.b16 %v407
        %v2607 = vunpack.c.l.b16 %v408
        %v2608 = vunpack.c.h.b16 %v408
        %v2609 = vunpack.c.l.b16 %v409
        %v2610 = vunpack.c.h.b16 %v409
        %v2611 = vunpack.c.l.b16 %v410
        %v2612 = vunpack.c.h.b16 %v410
        %v2613 = vunpack.c.l.b16 %v411
        %v2614 = vunpack.c.h.b16 %v411
        %v2615 = vunpack.c.l.b16 %v412
        %v2616 = vunpack.c.h.b16 %v412
        %v2617 = vunpack.c.l.b16 %v413
        %v2618 = vunpack.c.h.b16 %v413
        %v2619 = vunpack.c.l.b16 %v414
        %v2620 = vunpack.c.h.b16 %v414
        %v2621 = vunpack.c.l.b16 %v415
        %v2622 = vunpack.c.h.b16 %v415
        %v2623 = vunpack.c.l.b16 %v416
        %v2624 = vunpack.c.h.b16 %v416
        %v2625 = vunpack.c.l.b16 %v417
        %v2626 = vunpack.c.h.b16 %v417
        %v2627 = vunpack.c.l.b16 %v418
        %v2628 = vunpack.c.h.b16 %v418
        %v2629 = vunpack.c.l.b16 %v419
        %v2630 = vunpack.c.h.b16 %v419
        %v2631 = vunpack.c.l.b16 %v420
        %v2632 = vunpack.c.h.b16 %v420
        %v2633 = vunpack.c.l.b16 %v421
        %v2634 = vunpack.c.h.b16 %v421
        %v2635 = vunpack.c.l.b16 %v422
        %v2636 = vunpack.c.h.b16 %v422
        %v2637 = vunpack.c.l.b16 %v423
        %v2638 = vunpack.c.h.b16 %v423
        %v2639 = vunpack.c.l.b16 %v424
        %v2640 = vunpack.c.h.b16 %v424
        %v2641 = vunpack.c.l.b16 %v425
        %v2642 = vunpack.c.h.b16 %v425
        %v2643 = vunpack.c.l.b16 %v426
        %v2644 = vunpack.c.h.b16 %v426
        %v2645 = vunpack.c.l.b16 %v427
        %v2646 = vunpack.c.h.b16 %v427
        %v2647 = vunpack.c.l.b16 %v428
        %v2648 = vunpack.c.h.b16 %v428
        %v2649 = vunpack.c.l.b16 %v429
        %v2650 = vunpack.c.h.b16 %v429
        %v2651 = vunpack.c.l.b16 %v430
        %v2652 = vunpack.c.h.b16 %v430
        %v2653 = vunpack.c.l.b16 %v431
        %v2654 = vunpack.c.h.b16 %v431
        %v2655 = vunpack.c.l.b16 %v432
        %v2656 = vunpack.c.h.b16 %v432
        %v2657 = vunpack.c.l.b16 %v433
        %v2658 = vunpack.c.h.b16 %v433
        %v2659 = vunpack.c.l.b16 %v434
        %v2660 = vunpack.c.h.b16 %v434
        %v2661 = vunpack.c.l.b16 %v435
        %v2662 = vunpack.c.h.b16 %v435
        %v2663 = vunpack.c.l.b16 %v436
        %v2664 = vunpack.c.h.b16 %v436
        %v2665 = vunpack.c.l.b16 %v437
        %v2666 = vunpack.c.h.b16 %v437
        %v2667 = vunpack.c.l.b16 %v438
        %v2668 = vunpack.c.h.b16 %v438
        %v2669 = vunpack.c.l.b16 %v439
        %v2670 = vunpack.c.h.b16 %v439
        %v2671 = vunpack.c.l.b16 %v440
        %v2672 = vunpack.c.h.b16 %v440
        %v2673 = vunpack.c.l.b16 %v441
        %v2674 = vunpack.c.h.b16 %v441
        %v2675 = vunpack.c.l.b16 %v442
        %v2676 = vunpack.c.h.b16 %v442
        %v2677 = vunpack.c.l.b16 %v443
        %v2678 = vunpack.c.h.b16 %v443
        %v2679 = vunpack.c.l.b16 %v444
        %v2680 = vunpack.c.h.b16 %v444
        %v2681 = vunpack.c.l.b16 %v445
        %v2682 = vunpack.c.h.b16 %v445
        %v2683 = vunpack.c.l.b16 %v446
        %v2684 = vunpack.c.h.b16 %v446
        %v2685 = vunpack.c.l.b16 %v447
        %v2686 = vunpack.c.h.b16 %v447
        %v2687 = vunpack.c.l.b16 %v448
        %v2688 = vunpack.c.h.b16 %v448
        %v2689 = vunpack.c.l.b16 %v449
        %v2690 = vunpack.c.h.b16 %v449
        %v2691 = vunpack.c.l.b16 %v450
        %v2692 = vunpack.c.h.b16 %v450
        %v2693 = vunpack.c.l.b16 %v451
        %v2694 = vunpack.c.h.b16 %v451
        %v2695 = vunpack.c.l.b16 %v452
        %v2696 = vunpack.c.h.b16 %v452
        %v2697 = vunpack.c.l.b16 %v453
        %v2698 = vunpack.c.h.b16 %v453
        %v2699 = vunpack.c.l.b16 %v454
        %v2700 = vunpack.c.h.b16 %v454
        %v2701 = vunpack.c.l.b16 %v455
        %v2702 = vunpack.c.h.b16 %v455
        %v2703 = vunpack.c.l.b16 %v456
        %v2704 = vunpack.c.h.b16 %v456
        %v2705 = vunpack.c.l.b16 %v457
        %v2706 = vunpack.c.h.b16 %v457
        %v2707 = vunpack.c.l.b16 %v458
        %v2708 = vunpack.c.h.b16 %v458
        %v2709 = vunpack.c.l.b16 %v459
        %v2710 = vunpack.c.h.b16 %v459
        %v2711 = vunpack.c.l.b16 %v460
        %v2712 = vunpack.c.h.b16 %v460
        %v2713 = vunpack.c.l.b16 %v461
        %v2714 = vunpack.c.h.b16 %v461
        %v2715 = vunpack.c.l.b16 %v462
        %v2716 = vunpack.c.h.b16 %v462
        %v2717 = vunpack.c.l.b16 %v463
        %v2718 = vunpack.c.h.b16 %v463
        %v2719 = vunpack.c.l.b16 %v464
        %v2720 = vunpack.c.h.b16 %v464
        %v2721 = vunpack.c.l.b16 %v465
        %v2722 = vunpack.c.h.b16 %v465
        %v2723 = vunpack.c.l.b16 %v466
        %v2724 = vunpack.c.h.b16 %v466
        %v2725 = vunpack.c.l.b16 %v467
        %v2726 = vunpack.c.h.b16 %v467
        %v2727 = vunpack.c.l.b16 %v468
        %v2728 = vunpack.c.h.b16 %v468
        %v2729 = vunpack.c.l.b16 %v469
        %v2730 = vunpack.c.h.b16 %v469
        %v2731 = vunpack.c.l.b16 %v470
        %v2732 = vunpack.c.h.b16 %v470
        %v2733 = vunpack.c.l.b16 %v471
        %v2734 = vunpack.c.h.b16 %v471
        %v2735 = vunpack.c.l.b16 %v472
        %v2736 = vunpack.c.h.b16 %v472
        %v2737 = vunpack.c.l.b16 %v473
        %v2738 = vunpack.c.h.b16 %v473
        %v2739 = vunpack.c.l.b16 %v474
        %v2740 = vunpack.c.h.b16 %v474
        %v2741 = vunpack.c.l.b16 %v475
        %v2742 = vunpack.c.h.b16 %v475
        %v2743 = vunpack.c.l.b16 %v476
        %v2744 = vunpack.c.h.b16 %v476
        %v2745 = vunpack.c.l.b16 %v477
        %v2746 = vunpack.c.h.b16 %v477
        %v2747 = vunpack.c.l.b16 %v478
        %v2748 = vunpack.c.h.b16 %v478
        %v2749 = vunpack.c.l.b16 %v479
        %v2750 = vunpack.c.h.b16 %v479
        %v2751 = vunpack.c.l.b16 %v480
        %v2752 = vunpack.c.h.b16 %v480
        %v2753 = vunpack.c.l.b16 %v481
        %v2754 = vunpack.c.h.b16 %v481
        %v2755 = vunpack.c.l.b16 %v482
        %v2756 = vunpack.c.h.b16 %v482
        %v2757 = vunpack.c.l.b16 %v483
        %v2758 = vunpack.c.h.b16 %v483
        %v2759 = vunpack.c.l.b16 %v484
        %v2760 = vunpack.c.h.b16 %v484
        %v2761 = vunpack.c.l.b16 %v485
        %v2762 = vunpack.c.h.b16 %v485
        %v2763 = vunpack.c.l.b16 %v486
        %v2764 = vunpack.c.h.b16 %v486
        %v2765 = vunpack.c.l.b16 %v487
        %v2766 = vunpack.c.h.b16 %v487
        %v2767 = vunpack.c.l.b16 %v488
        %v2768 = vunpack.c.h.b16 %v488
        %v2769 = vunpack.c.l.b16 %v489
        %v2770 = vunpack.c.h.b16 %v489
        %v2771 = vunpack.c.l.b16 %v490
        %v2772 = vunpack.c.h.b16 %v490
        %v2773 = vunpack.c.l.b16 %v491
        %v2774 = vunpack.c.h.b16 %v491
        %v2775 = vunpack.c.l.b16 %v492
        %v2776 = vunpack.c.h.b16 %v492
        %v2777 = vunpack.c.l.b16 %v493
        %v2778 = vunpack.c.h.b16 %v493
        %v2779 = vunpack.c.l.b16 %v494
        %v2780 = vunpack.c.h.b16 %v494
        %v2781 = vunpack.c.l.b16 %v495
        %v2782 = vunpack.c.h.b16 %v495
        %v2783 = vunpack.c.l.b16 %v496
        %v2784 = vunpack.c.h.b16 %v496
        %v2785 = vunpack.c.l.b16 %v497
        %v2786 = vunpack.c.h.b16 %v497
        %v2787 = vunpack.c.l.b16 %v498
        %v2788 = vunpack.c.h.b16 %v498
        %v2789 = vunpack.c.l.b16 %v499
        %v2790 = vunpack.c.h.b16 %v499
        %v2791 = vunpack.c.l.b16 %v500
        %v2792 = vunpack.c.h.b16 %v500
        %v2793 = vunpack.c.l.b16 %v501
        %v2794 = vunpack.c.h.b16 %v501
        %v2795 = vunpack.c.l.b16 %v502
        %v2796 = vunpack.c.h.b16 %v502
        %v2797 = vunpack.c.l.b16 %v503
        %v2798 = vunpack.c.h.b16 %v503
        %v2799 = vunpack.c.l.b16 %v504
        %v2800 = vunpack.c.h.b16 %v504
        %v2801 = vunpack.c.l.b16 %v505
        %v2802 = vunpack.c.h.b16 %v505
        %v2803 = vunpack.c.l.b16 %v506
        %v2804 = vunpack.c.h.b16 %v506
        %v2805 = vunpack.c.l.b16 %v507
        %v2806 = vunpack.c.h.b16 %v507
        %v2807 = vunpack.c.l.b16 %v508
        %v2808 = vunpack.c.h.b16 %v508
        %v2809 = vunpack.c.l.b16 %v509
        %v2810 = vunpack.c.h.b16 %v509
        %v2811 = vunpack.c.l.b16 %v510
        %v2812 = vunpack.c.h.b16 %v510
        %v2813 = vunpack.c.l.b16 %v511
        %v2814 = vunpack.c.h.b16 %v511
        %v2815 = vunpack.c.l.b16 %v512
        %v2816 = vunpack.c.h.b16 %v512
        %v2817 = vunpack.c.l.b16 %v513
        %v2818 = vunpack.c.h.b16 %v513
        %v2819 = vunpack.c.l.b16 %v514
        %v2820 = vunpack.c.h.b16 %v514
        %v2821 = vunpack.c.l.b16 %v515
        %v2822 = vunpack.c.h.b16 %v515
        %v2823 = vunpack.c.l.b16 %v516
        %v2824 = vunpack.c.h.b16 %v516
        %v2825 = vunpack.c.l.b16 %v517
        %v2826 = vunpack.c.h.b16 %v517
        %v2827 = vunpack.c.l.b16 %v518
        %v2828 = vunpack.c.h.b16 %v518
        %v2829 = vunpack.c.l.b16 %v519
        %v2830 = vunpack.c.h.b16 %v519
        %v2831 = vunpack.c.l.b16 %v520
        %v2832 = vunpack.c.h.b16 %v520
        %v2833 = vunpack.c.l.b16 %v521
        %v2834 = vunpack.c.h.b16 %v521
        %v2835 = vunpack.c.l.b16 %v522
        %v2836 = vunpack.c.h.b16 %v522
        %v2837 = vunpack.c.l.b16 %v523
        %v2838 = vunpack.c.h.b16 %v523
        %v2839 = vunpack.c.l.b16 %v524
        %v2840 = vunpack.c.h.b16 %v524
        %v2841 = vunpack.c.l.b16 %v525
        %v2842 = vunpack.c.h.b16 %v525
        %v2843 = vunpack.c.l.b16 %v526
        %v2844 = vunpack.c.h.b16 %v526
        %v2845 = vunpack.c.l.b16 %v527
        %v2846 = vunpack.c.h.b16 %v527
        %v2847 = vunpack.c.l.b16 %v528
        %v2848 = vunpack.c.h.b16 %v528
        %v2849 = vunpack.c.l.b16 %v529
        %v2850 = vunpack.c.h.b16 %v529
        %v2851 = vunpack.c.l.b16 %v530
        %v2852 = vunpack.c.h.b16 %v530
        %v2853 = vunpack.c.l.b16 %v531
        %v2854 = vunpack.c.h.b16 %v531
        %v2855 = vunpack.c.l.b16 %v532
        %v2856 = vunpack.c.h.b16 %v532
        %v2857 = vunpack.c.l.b16 %v533
        %v2858 = vunpack.c.h.b16 %v533
        %v2859 = vunpack.c.l.b16 %v534
        %v2860 = vunpack.c.h.b16 %v534
        %v2861 = vunpack.c.l.b16 %v535
        %v2862 = vunpack.c.h.b16 %v535
        %v2863 = vunpack.c.l.b16 %v536
        %v2864 = vunpack.c.h.b16 %v536
        %v2865 = vunpack.c.l.b16 %v537
        %v2866 = vunpack.c.h.b16 %v537
        %v2867 = vunpack.c.l.b16 %v538
        %v2868 = vunpack.c.h.b16 %v538
        %v2869 = vunpack.c.l.b16 %v539
        %v2870 = vunpack.c.h.b16 %v539
        %v2871 = vunpack.c.l.b16 %v540
        %v2872 = vunpack.c.h.b16 %v540
        %v2873 = vunpack.c.l.b16 %v541
        %v2874 = vunpack.c.h.b16 %v541
        %v2875 = vunpack.c.l.b16 %v542
        %v2876 = vunpack.c.h.b16 %v542
        %v2877 = vunpack.c.l.b16 %v543
        %v2878 = vunpack.c.h.b16 %v543
        %v2879 = vunpack.c.l.b16 %v544
        %v2880 = vunpack.c.h.b16 %v544
        %v2881 = vunpack.c.l.b16 %v545
        %v2882 = vunpack.c.h.b16 %v545
        %v2883 = vunpack.c.l.b16 %v546
        %v2884 = vunpack.c.h.b16 %v546
        %v2885 = vunpack.c.l.b16 %v547
        %v2886 = vunpack.c.h.b16 %v547
        %v2887 = vunpack.c.l.b16 %v548
        %v2888 = vunpack.c.h.b16 %v548
        %v2889 = vunpack.c.l.b16 %v549
        %v2890 = vunpack.c.h.b16 %v549
        %v2891 = vunpack.c.l.b16 %v550
        %v2892 = vunpack.c.h.b16 %v550
        %v2893 = vunpack.c.l.b16 %v551
        %v2894 = vunpack.c.h.b16 %v551
        %v2895 = vunpack.c.l.b16 %v552
        %v2896 = vunpack.c.h.b16 %v552
        %v2897 = vunpack.c.l.b16 %v553
        %v2898 = vunpack.c.h.b16 %v553
        %v2899 = vunpack.c.l.b16 %v554
        %v2900 = vunpack.c.h.b16 %v554
        %v2901 = vunpack.c.l.b16 %v555
        %v2902 = vunpack.c.h.b16 %v555
        %v2903 = vunpack.c.l.b16 %v556
        %v2904 = vunpack.c.h.b16 %v556
        %v2905 = vunpack.c.l.b16 %v557
        %v2906 = vunpack.c.h.b16 %v557
        %v2907 = vunpack.c.l.b16 %v558
        %v2908 = vunpack.c.h.b16 %v558
        %v2909 = vunpack.c.l.b16 %v559
        %v2910 = vunpack.c.h.b16 %v559
        %v2911 = vunpack.c.l.b16 %v560
        %v2912 = vunpack.c.h.b16 %v560
        %v2913 = vunpack.c.l.b16 %v561
        %v2914 = vunpack.c.h.b16 %v561
        %v2915 = vunpack.c.l.b16 %v562
        %v2916 = vunpack.c.h.b16 %v562
        %v2917 = vunpack.c.l.b16 %v563
        %v2918 = vunpack.c.h.b16 %v563
        %v2919 = vunpack.c.l.b16 %v564
        %v2920 = vunpack.c.h.b16 %v564
        %v2921 = vunpack.c.l.b16 %v565
        %v2922 = vunpack.c.h.b16 %v565
        %v2923 = vunpack.c.l.b16 %v566
        %v2924 = vunpack.c.h.b16 %v566
        %v2925 = vunpack.c.l.b16 %v567
        %v2926 = vunpack.c.h.b16 %v567
        %v2927 = vunpack.c.l.b16 %v568
        %v2928 = vunpack.c.h.b16 %v568
        %v2929 = vunpack.c.l.b16 %v569
        %v2930 = vunpack.c.h.b16 %v569
        %v2931 = vunpack.c.l.b16 %v570
        %v2932 = vunpack.c.h.b16 %v570
        %v2933 = vunpack.c.l.b16 %v571
        %v2934 = vunpack.c.h.b16 %v571
        %v2935 = vunpack.c.l.b16 %v572
        %v2936 = vunpack.c.h.b16 %v572
        %v2937 = vunpack.c.l.b16 %v573
        %v2938 = vunpack.c.h.b16 %v573
        %v2939 = vunpack.c.l.b16 %v574
        %v2940 = vunpack.c.h.b16 %v574
        %v2941 = vunpack.c.l.b16 %v575
        %v2942 = vunpack.c.h.b16 %v575
        %v2943 = vunpack.c.l.b16 %v576
        %v2944 = vunpack.c.h.b16 %v576
        %v2945 = vunpack.c.l.b16 %v577
        %v2946 = vunpack.c.h.b16 %v577
        %v2947 = vunpack.c.l.b16 %v578
        %v2948 = vunpack.c.h.b16 %v578
        %v2949 = vunpack.c.l.b16 %v579
        %v2950 = vunpack.c.h.b16 %v579
        %v2951 = vunpack.c.l.b16 %v580
        %v2952 = vunpack.c.h.b16 %v580
        %v2953 = vunpack.c.l.b16 %v581
        %v2954 = vunpack.c.h.b16 %v581
        %v2955 = vunpack.c.l.b16 %v582
        %v2956 = vunpack.c.h.b16 %v582
        %v2957 = vunpack.c.l.b16 %v583
        %v2958 = vunpack.c.h.b16 %v583
        %v2959 = vunpack.c.l.b16 %v584
        %v2960 = vunpack.c.h.b16 %v584
        %v2961 = vunpack.c.l.b16 %v585
        %v2962 = vunpack.c.h.b16 %v585
        %v2963 = vunpack.c.l.b16 %v586
        %v2964 = vunpack.c.h.b16 %v586
        %v2965 = vunpack.c.l.b16 %v587
        %v2966 = vunpack.c.h.b16 %v587
        %v2967 = vunpack.c.l.b16 %v588
        %v2968 = vunpack.c.h.b16 %v588
        %v2969 = vunpack.c.l.b16 %v589
        %v2970 = vunpack.c.h.b16 %v589
        %v2971 = vunpack.c.l.b16 %v590
        %v2972 = vunpack.c.h.b16 %v590
        %v2973 = vunpack.c.l.b16 %v591
        %v2974 = vunpack.c.h.b16 %v591
        %v2975 = vunpack.c.l.b16 %v592
        %v2976 = vunpack.c.h.b16 %v592
        %v2977 = vunpack.c.l.b16 %v593
        %v2978 = vunpack.c.h.b16 %v593
        %v2979 = vunpack.c.l.b16 %v594
        %v2980 = vunpack.c.h.b16 %v594
        %v2981 = vunpack.c.l.b16 %v595
        %v2982 = vunpack.c.h.b16 %v595
        %v2983 = vunpack.c.l.b16 %v596
        %v2984 = vunpack.c.h.b16 %v596
        %v2985 = vunpack.c.l.b16 %v597
        %v2986 = vunpack.c.h.b16 %v597
        %v2987 = vunpack.c.l.b16 %v598
        %v2988 = vunpack.c.h.b16 %v598
        %v2989 = vunpack.c.l.b16 %v599
        %v2990 = vunpack.c.h.b16 %v599
        %v2991 = vunpack.c.l.b16 %v600
        %v2992 = vunpack.c.h.b16 %v600
        %v2993 = vunpack.c.l.b16 %v601
        %v2994 = vunpack.c.h.b16 %v601
        %v2995 = vunpack.c.l.b16 %v602
        %v2996 = vunpack.c.h.b16 %v602
        %v2997 = vunpack.c.l.b16 %v603
        %v2998 = vunpack.c.h.b16 %v603
        %v2999 = vunpack.c.l.b16 %v604
        %v3000 = vunpack.c.h.b16 %v604
        %v3001 = vunpack.c.l.b16 %v605
        %v3002 = vunpack.c.h.b16 %v605
        %v3003 = vunpack.c.l.b16 %v606
        %v3004 = vunpack.c.h.b16 %v606
        %v3005 = vunpack.c.l.b16 %v607
        %v3006 = vunpack.c.h.b16 %v607
        %v3007 = vunpack.c.l.b16 %v608
        %v3008 = vunpack.c.h.b16 %v608
        %v3009 = vunpack.c.l.b16 %v609
        %v3010 = vunpack.c.h.b16 %v609
        %v3011 = vunpack.c.l.b16 %v610
        %v3012 = vunpack.c.h.b16 %v610
        %v3013 = vunpack.c.l.b16 %v611
        %v3014 = vunpack.c.h.b16 %v611
        %v3015 = vunpack.c.l.b16 %v612
        %v3016 = vunpack.c.h.b16 %v612
        %v3017 = vunpack.c.l.b16 %v613
        %v3018 = vunpack.c.h.b16 %v613
        %v3019 = vunpack.c.l.b16 %v614
        %v3020 = vunpack.c.h.b16 %v614
        %v3021 = vunpack.c.l.b16 %v615
        %v3022 = vunpack.c.h.b16 %v615
        %v3023 = vunpack.c.l.b16 %v616
        %v3024 = vunpack.c.h.b16 %v616
        %v3025 = vunpack.c.l.b16 %v617
        %v3026 = vunpack.c.h.b16 %v617
        %v3027 = vunpack.c.l.b16 %v618
        %v3028 = vunpack.c.h.b16 %v618
        %v3029 = vunpack.c.l.b16 %v619
        %v3030 = vunpack.c.h.b16 %v619
        %v3031 = vunpack.c.l.b16 %v620
        %v3032 = vunpack.c.h.b16 %v620
        %v3033 = vunpack.c.l.b16 %v621
        %v3034 = vunpack.c.h.b16 %v621
        %v3035 = vunpack.c.l.b16 %v622
        %v3036 = vunpack.c.h.b16 %v622
        %v3037 = vunpack.c.l.b16 %v623
        %v3038 = vunpack.c.h.b16 %v623
        %v3039 = vunpack.c.l.b16 %v624
        %v3040 = vunpack.c.h.b16 %v624
        %v3041 = vunpack.c.l.b16 %v625
        %v3042 = vunpack.c.h.b16 %v625
        %v3043 = vunpack.c.l.b16 %v626
        %v3044 = vunpack.c.h.b16 %v626
        %v3045 = vunpack.c.l.b16 %v627
        %v3046 = vunpack.c.h.b16 %v627
        %v3047 = vunpack.c.l.b16 %v628
        %v3048 = vunpack.c.h.b16 %v628
        %v3049 = vunpack.c.l.b16 %v629
        %v3050 = vunpack.c.h.b16 %v629
        %v3051 = vunpack.c.l.b16 %v630
        %v3052 = vunpack.c.h.b16 %v630
        %v3053 = vunpack.c.l.b16 %v631
        %v3054 = vunpack.c.h.b16 %v631
        %v3055 = vunpack.c.l.b16 %v632
        %v3056 = vunpack.c.h.b16 %v632
        %v3057 = vunpack.c.l.b16 %v633
        %v3058 = vunpack.c.h.b16 %v633
        %v3059 = vunpack.c.l.b16 %v634
        %v3060 = vunpack.c.h.b16 %v634
        %v3061 = vunpack.c.l.b16 %v635
        %v3062 = vunpack.c.h.b16 %v635
        %v3063 = vunpack.c.l.b16 %v636
        %v3064 = vunpack.c.h.b16 %v636
        %v3065 = vunpack.c.l.b16 %v637
        %v3066 = vunpack.c.h.b16 %v637
        %v3067 = vunpack.c.l.b16 %v638
        %v3068 = vunpack.c.h.b16 %v638
        %v3069 = vunpack.c.l.b16 %v639
        %v3070 = vunpack.c.h.b16 %v639
        %v3071 = vunpack.c.l.b16 %v640
        %v3072 = vunpack.c.h.b16 %v640
        %v3073 = vunpack.c.l.b16 %v641
        %v3074 = vunpack.c.h.b16 %v641
        %v3075 = vunpack.c.l.b16 %v642
        %v3076 = vunpack.c.h.b16 %v642
        %v3077 = vunpack.c.l.b16 %v643
        %v3078 = vunpack.c.h.b16 %v643
        %v3079 = vunpack.c.l.b16 %v644
        %v3080 = vunpack.c.h.b16 %v644
        %v3081 = vunpack.c.l.b16 %v645
        %v3082 = vunpack.c.h.b16 %v645
        %v3083 = vunpack.c.l.b16 %v646
        %v3084 = vunpack.c.h.b16 %v646
        %v3085 = vunpack.c.l.b16 %v647
        %v3086 = vunpack.c.h.b16 %v647
        %v3087 = vunpack.c.l.b16 %v648
        %v3088 = vunpack.c.h.b16 %v648
        %v3089 = vunpack.c.l.b16 %v649
        %v3090 = vunpack.c.h.b16 %v649
        %v3091 = vunpack.c.l.b16 %v650
        %v3092 = vunpack.c.h.b16 %v650
        %v3093 = vunpack.c.l.b16 %v651
        %v3094 = vunpack.c.h.b16 %v651
        %v3095 = vunpack.c.l.b16 %v652
        %v3096 = vunpack.c.h.b16 %v652
        %v3097 = vunpack.c.l.b16 %v653
        %v3098 = vunpack.c.h.b16 %v653
        %v3099 = vunpack.c.l.b16 %v654
        %v3100 = vunpack.c.h.b16 %v654
        %v3101 = vunpack.c.l.b16 %v655
        %v3102 = vunpack.c.h.b16 %v655
        %v3103 = vunpack.c.l.b16 %v656
        %v3104 = vunpack.c.h.b16 %v656
        %v3105 = vunpack.c.l.b16 %v657
        %v3106 = vunpack.c.h.b16 %v657
        %v3107 = vunpack.c.l.b16 %v658
        %v3108 = vunpack.c.h.b16 %v658
        %v3109 = vunpack.c.l.b16 %v659
        %v3110 = vunpack.c.h.b16 %v659
        %v3111 = vunpack.c.l.b16 %v660
        %v3112 = vunpack.c.h.b16 %v660
        %v3113 = vunpack.c.l.b16 %v661
        %v3114 = vunpack.c.h.b16 %v661
        %v3115 = vunpack.c.l.b16 %v662
        %v3116 = vunpack.c.h.b16 %v662
        %v3117 = vunpack.c.l.b16 %v663
        %v3118 = vunpack.c.h.b16 %v663
        %v3119 = vunpack.c.l.b16 %v664
        %v3120 = vunpack.c.h.b16 %v664
        %v3121 = vunpack.c.l.b16 %v665
        %v3122 = vunpack.c.h.b16 %v665
        %v3123 = vunpack.c.l.b16 %v666
        %v3124 = vunpack.c.h.b16 %v666
        %v3125 = vunpack.c.l.b16 %v667
        %v3126 = vunpack.c.h.b16 %v667
        %v3127 = vunpack.c.l.b16 %v668
        %v3128 = vunpack.c.h.b16 %v668
        %v3129 = vunpack.c.l.b16 %v669
        %v3130 = vunpack.c.h.b16 %v669
        %v3131 = vunpack.c.l.b16 %v670
        %v3132 = vunpack.c.h.b16 %v670
        %v3133 = vunpack.c.l.b16 %v671
        %v3134 = vunpack.c.h.b16 %v671
        %v3135 = vunpack.c.l.b16 %v672
        %v3136 = vunpack.c.h.b16 %v672
        %v3137 = vunpack.c.l.b16 %v673
        %v3138 = vunpack.c.h.b16 %v673
        %v3139 = vunpack.c.l.b16 %v674
        %v3140 = vunpack.c.h.b16 %v674
        %v3141 = vunpack.c.l.b16 %v675
        %v3142 = vunpack.c.h.b16 %v675
        %v3143 = vunpack.c.l.b16 %v676
        %v3144 = vunpack.c.h.b16 %v676
        %v3145 = vunpack.c.l.b16 %v677
        %v3146 = vunpack.c.h.b16 %v677
        %v3147 = vunpack.c.l.b16 %v678
        %v3148 = vunpack.c.h.b16 %v678
        %v3149 = vunpack.c.l.b16 %v679
        %v3150 = vunpack.c.h.b16 %v679
        %v3151 = vunpack.c.l.b16 %v680
        %v3152 = vunpack.c.h.b16 %v680
        %v3153 = vunpack.c.l.b16 %v681
        %v3154 = vunpack.c.h.b16 %v681
        %v3155 = vunpack.c.l.b16 %v682
        %v3156 = vunpack.c.h.b16 %v682
        %v3157 = vunpack.c.l.b16 %v683
        %v3158 = vunpack.c.h.b16 %v683
        %v3159 = vunpack.c.l.b16 %v684
        %v3160 = vunpack.c.h.b16 %v684
        %v3161 = vunpack.c.l.b16 %v685
        %v3162 = vunpack.c.h.b16 %v685
        %v3163 = vunpack.c.l.b16 %v686
        %v3164 = vunpack.c.h.b16 %v686
        %v3165 = vunpack.c.l.b16 %v687
        %v3166 = vunpack.c.h.b16 %v687
        %v3167 = vunpack.c.l.b16 %v688
        %v3168 = vunpack.c.h.b16 %v688
        %v3169 = vunpack.c.l.b16 %v689
        %v3170 = vunpack.c.h.b16 %v689
        %v3171 = vunpack.c.l.b16 %v690
        %v3172 = vunpack.c.h.b16 %v690
        %v3173 = vunpack.c.l.b16 %v691
        %v3174 = vunpack.c.h.b16 %v691
        %v3175 = vunpack.c.l.b16 %v692
        %v3176 = vunpack.c.h.b16 %v692
        %v3177 = vunpack.c.l.b16 %v693
        %v3178 = vunpack.c.h.b16 %v693
        %v3179 = vunpack.c.l.b16 %v694
        %v3180 = vunpack.c.h.b16 %v694
        %v3181 = vunpack.c.l.b16 %v695
        %v3182 = vunpack.c.h.b16 %v695
        %v3183 = vunpack.c.l.b16 %v696
        %v3184 = vunpack.c.h.b16 %v696
        %v3185 = vunpack.c.l.b16 %v697
        %v3186 = vunpack.c.h.b16 %v697
        %v3187 = vunpack.c.l.b16 %v698
        %v3188 = vunpack.c.h.b16 %v698
        %v3189 = vunpack.c.l.b16 %v699
        %v3190 = vunpack.c.h.b16 %v699
        %v3191 = vunpack.c.l.b16 %v700
        %v3192 = vunpack.c.h.b16 %v700
        %v3193 = vunpack.c.l.b16 %v701
        %v3194 = vunpack.c.h.b16 %v701
        %v3195 = vunpack.c.l.b16 %v702
        %v3196 = vunpack.c.h.b16 %v702
        %v3197 = vunpack.c.l.b16 %v703
        %v3198 = vunpack.c.h.b16 %v703
        %v3199 = vunpack.c.l.b16 %v704
        %v3200 = vunpack.c.h.b16 %v704
        %v3201 = vunpack.c.l.b16 %v705
        %v3202 = vunpack.c.h.b16 %v705
        %v3203 = vunpack.c.l.b16 %v706
        %v3204 = vunpack.c.h.b16 %v706
        %v3205 = vunpack.c.l.b16 %v707
        %v3206 = vunpack.c.h.b16 %v707
        %v3207 = vunpack.c.l.b16 %v708
        %v3208 = vunpack.c.h.b16 %v708
        %v3209 = vunpack.c.l.b16 %v709
        %v3210 = vunpack.c.h.b16 %v709
        %v3211 = vunpack.c.l.b16 %v710
        %v3212 = vunpack.c.h.b16 %v710
        %v3213 = vunpack.c.l.b16 %v711
        %v3214 = vunpack.c.h.b16 %v711
        %v3215 = vunpack.c.l.b16 %v712
        %v3216 = vunpack.c.h.b16 %v712
        %v3217 = vunpack.c.l.b16 %v713
        %v3218 = vunpack.c.h.b16 %v713
        %v3219 = vunpack.c.l.b16 %v714
        %v3220 = vunpack.c.h.b16 %v714
        %v3221 = vunpack.c.l.b16 %v715
        %v3222 = vunpack.c.h.b16 %v715
        %v3223 = vunpack.c.l.b16 %v716
        %v3224 = vunpack.c.h.b16 %v716
        %v3225 = vunpack.c.l.b16 %v717
        %v3226 = vunpack.c.h.b16 %v717
        %v3227 = vunpack.c.l.b16 %v718
        %v3228 = vunpack.c.h.b16 %v718
        %v3229 = vunpack.c.l.b16 %v719
        %v3230 = vunpack.c.h.b16 %v719
        %v3231 = vunpack.c.l.b16 %v720
        %v3232 = vunpack.c.h.b16 %v720
        %v3233 = vunpack.c.l.b16 %v721
        %v3234 = vunpack.c.h.b16 %v721
        %v3235 = vunpack.c.l.b16 %v722
        %v3236 = vunpack.c.h.b16 %v722
        %v3237 = vunpack.c.l.b16 %v723
        %v3238 = vunpack.c.h.b16 %v723
        %v3239 = vunpack.c.l.b16 %v724
        %v3240 = vunpack.c.h.b16 %v724
        %v3241 = vunpack.c.l.b16 %v725
        %v3242 = vunpack.c.h.b16 %v725
        %v3243 = vunpack.c.l.b16 %v726
        %v3244 = vunpack.c.h.b16 %v726
        %v3245 = vunpack.c.l.b16 %v727
        %v3246 = vunpack.c.h.b16 %v727
        %v3247 = vunpack.c.l.b16 %v728
        %v3248 = vunpack.c.h.b16 %v728
        %v3249 = vunpack.c.l.b16 %v729
        %v3250 = vunpack.c.h.b16 %v729
        %v3251 = vunpack.c.l.b16 %v730
        %v3252 = vunpack.c.h.b16 %v730
        %v3253 = vunpack.c.l.b16 %v731
        %v3254 = vunpack.c.h.b16 %v731
        %v3255 = vunpack.c.l.b16 %v732
        %v3256 = vunpack.c.h.b16 %v732
        %v3257 = vunpack.c.l.b16 %v733
        %v3258 = vunpack.c.h.b16 %v733
        %v3259 = vunpack.c.l.b16 %v734
        %v3260 = vunpack.c.h.b16 %v734
        %v3261 = vunpack.c.l.b16 %v735
        %v3262 = vunpack.c.h.b16 %v735
        %v3263 = vunpack.c.l.b16 %v736
        %v3264 = vunpack.c.h.b16 %v736
        %v3265 = vunpack.c.l.b16 %v737
        %v3266 = vunpack.c.h.b16 %v737
        %v3267 = vunpack.c.l.b16 %v738
        %v3268 = vunpack.c.h.b16 %v738
        %v3269 = vunpack.c.l.b16 %v739
        %v3270 = vunpack.c.h.b16 %v739
        %v3271 = vunpack.c.l.b16 %v740
        %v3272 = vunpack.c.h.b16 %v740
        %v3273 = vunpack.c.l.b16 %v741
        %v3274 = vunpack.c.h.b16 %v741
        %v3275 = vunpack.c.l.b16 %v742
        %v3276 = vunpack.c.h.b16 %v742
        %v3277 = vunpack.c.l.b16 %v743
        %v3278 = vunpack.c.h.b16 %v743
        %v3279 = vunpack.c.l.b16 %v744
        %v3280 = vunpack.c.h.b16 %v744
        %v3281 = vunpack.c.l.b16 %v745
        %v3282 = vunpack.c.h.b16 %v745
        %v3283 = vunpack.c.l.b16 %v746
        %v3284 = vunpack.c.h.b16 %v746
        %v3285 = vunpack.c.l.b16 %v747
        %v3286 = vunpack.c.h.b16 %v747
        %v3287 = vunpack.c.l.b16 %v748
        %v3288 = vunpack.c.h.b16 %v748
        %v3289 = vunpack.c.l.b16 %v749
        %v3290 = vunpack.c.h.b16 %v749
        %v3291 = vunpack.c.l.b16 %v750
        %v3292 = vunpack.c.h.b16 %v750
        %v3293 = vunpack.c.l.b16 %v751
        %v3294 = vunpack.c.h.b16 %v751
        %v3295 = vunpack.c.l.b16 %v752
        %v3296 = vunpack.c.h.b16 %v752
        %v3297 = vunpack.c.l.b16 %v753
        %v3298 = vunpack.c.h.b16 %v753
        %v3299 = vunpack.c.l.b16 %v754
        %v3300 = vunpack.c.h.b16 %v754
        %v3301 = vunpack.c.l.b16 %v755
        %v3302 = vunpack.c.h.b16 %v755
        %v3303 = vunpack.c.l.b16 %v756
        %v3304 = vunpack.c.h.b16 %v756
        %v3305 = vunpack.c.l.b16 %v757
        %v3306 = vunpack.c.h.b16 %v757
        %v3307 = vunpack.c.l.b16 %v758
        %v3308 = vunpack.c.h.b16 %v758
        %v3309 = vunpack.c.l.b16 %v759
        %v3310 = vunpack.c.h.b16 %v759
        %v3311 = vunpack.c.l.b16 %v760
        %v3312 = vunpack.c.h.b16 %v760
        %v3313 = vunpack.c.l.b16 %v761
        %v3314 = vunpack.c.h.b16 %v761
        %v3315 = vunpack.c.l.b16 %v762
        %v3316 = vunpack.c.h.b16 %v762
        %v3317 = vunpack.c.l.b16 %v763
        %v3318 = vunpack.c.h.b16 %v763
        %v3319 = vunpack.c.l.b16 %v764
        %v3320 = vunpack.c.h.b16 %v764
        %v3321 = vunpack.c.l.b16 %v765
        %v3322 = vunpack.c.h.b16 %v765
        %v3323 = vunpack.c.l.b16 %v766
        %v3324 = vunpack.c.h.b16 %v766
        %v3325 = vunpack.c.l.b16 %v767
        %v3326 = vunpack.c.h.b16 %v767
        %v3327 = vunpack.c.l.b16 %v768
        %v3328 = vunpack.c.h.b16 %v768
        %v3329 = vunpack.c.l.b16 %v769
        %v3330 = vunpack.c.h.b16 %v769
        %v3331 = vunpack.c.l.b16 %v770
        %v3332 = vunpack.c.h.b16 %v770
        %v3333 = vunpack.c.l.b16 %v771
        %v3334 = vunpack.c.h.b16 %v771
        %v3335 = vunpack.c.l.b16 %v772
        %v3336 = vunpack.c.h.b16 %v772
        %v3337 = vunpack.c.l.b16 %v773
        %v3338 = vunpack.c.h.b16 %v773
        %v3339 = vunpack.c.l.b16 %v774
        %v3340 = vunpack.c.h.b16 %v774
        %v3341 = vunpack.c.l.b16 %v775
        %v3342 = vunpack.c.h.b16 %v775
        %v3343 = vunpack.c.l.b16 %v776
        %v3344 = vunpack.c.h.b16 %v776
        %v3345 = vunpack.c.l.b16 %v777
        %v3346 = vunpack.c.h.b16 %v777
        %v3347 = vunpack.c.l.b16 %v778
        %v3348 = vunpack.c.h.b16 %v778
        %v3349 = vunpack.c.l.b16 %v779
        %v3350 = vunpack.c.h.b16 %v779
        %v3351 = vunpack.c.l.b16 %v780
        %v3352 = vunpack.c.h.b16 %v780
        %v3353 = vunpack.c.l.b16 %v781
        %v3354 = vunpack.c.h.b16 %v781
        %v3355 = vunpack.c.l.b16 %v782
        %v3356 = vunpack.c.h.b16 %v782
        %v3357 = vunpack.c.l.b16 %v783
        %v3358 = vunpack.c.h.b16 %v783
        %v3359 = vunpack.c.l.b16 %v784
        %v3360 = vunpack.c.h.b16 %v784
        %v3361 = vunpack.c.l.b16 %v785
        %v3362 = vunpack.c.h.b16 %v785
        %v3363 = vunpack.c.l.b16 %v786
        %v3364 = vunpack.c.h.b16 %v786
        %v3365 = vunpack.c.l.b16 %v787
        %v3366 = vunpack.c.h.b16 %v787
        %v3367 = vunpack.c.l.b16 %v788
        %v3368 = vunpack.c.h.b16 %v788
        %v3369 = vunpack.c.l.b16 %v789
        %v3370 = vunpack.c.h.b16 %v789
        %v3371 = vunpack.c.l.b16 %v790
        %v3372 = vunpack.c.h.b16 %v790
        %v3373 = vunpack.c.l.b16 %v791
        %v3374 = vunpack.c.h.b16 %v791
        %v3375 = vunpack.c.l.b16 %v792
        %v3376 = vunpack.c.h.b16 %v792
        %v3377 = vunpack.c.l.b16 %v793
        %v3378 = vunpack.c.h.b16 %v793
        %v3379 = vunpack.c.l.b16 %v794
        %v3380 = vunpack.c.h.b16 %v794
        %v3381 = vunpack.c.l.b16 %v795
        %v3382 = vunpack.c.h.b16 %v795
        %v3383 = vunpack.c.l.b16 %v796
        %v3384 = vunpack.c.h.b16 %v796
        %v3385 = vunpack.c.l.b16 %v797
        %v3386 = vunpack.c.h.b16 %v797
        %v3387 = vunpack.c.l.b16 %v798
        %v3388 = vunpack.c.h.b16 %v798
        %v3389 = vunpack.c.l.b16 %v799
        %v3390 = vunpack.c.h.b16 %v799
        %v3391 = vunpack.c.l.b16 %v800
        %v3392 = vunpack.c.h.b16 %v800
        %v3393 = vunpack.c.l.b16 %v801
        %v3394 = vunpack.c.h.b16 %v801
        %v3395 = vunpack.c.l.b16 %v802
        %v3396 = vunpack.c.h.b16 %v802
        %v3397 = vunpack.c.l.b16 %v803
        %v3398 = vunpack.c.h.b16 %v803
        %v3399 = vunpack.c.l.b16 %v804
        %v3400 = vunpack.c.h.b16 %v804
        %v3401 = vunpack.c.l.b16 %v805
        %v3402 = vunpack.c.h.b16 %v805
        %v3403 = vunpack.c.l.b16 %v806
        %v3404 = vunpack.c.h.b16 %v806
        %v3405 = vunpack.c.l.b16 %v807
        %v3406 = vunpack.c.h.b16 %v807
        %v3407 = vunpack.c.l.b16 %v808
        %v3408 = vunpack.c.h.b16 %v808
        %v3409 = vunpack.c.l.b16 %v809
        %v3410 = vunpack.c.h.b16 %v809
        %v3411 = vunpack.c.l.b16 %v810
        %v3412 = vunpack.c.h.b16 %v810
        %v3413 = vunpack.c.l.b16 %v811
        %v3414 = vunpack.c.h.b16 %v811
        %v3415 = vunpack.c.l.b16 %v812
        %v3416 = vunpack.c.h.b16 %v812
        %v3417 = vunpack.c.l.b16 %v813
        %v3418 = vunpack.c.h.b16 %v813
        %v3419 = vunpack.c.l.b16 %v814
        %v3420 = vunpack.c.h.b16 %v814
        %v3421 = vunpack.c.l.b16 %v815
        %v3422 = vunpack.c.h.b16 %v815
        %v3423 = vunpack.c.l.b16 %v816
        %v3424 = vunpack.c.h.b16 %v816
        %v3425 = vunpack.c.l.b16 %v817
        %v3426 = vunpack.c.h.b16 %v817
        %v3427 = vunpack.c.l.b16 %v818
        %v3428 = vunpack.c.h.b16 %v818
        %v3429 = vunpack.c.l.b16 %v819
        %v3430 = vunpack.c.h.b16 %v819
        %v3431 = vunpack.c.l.b16 %v820
        %v3432 = vunpack.c.h.b16 %v820
        %v3433 = vunpack.c.l.b16 %v821
        %v3434 = vunpack.c.h.b16 %v821
        %v3435 = vunpack.c.l.b16 %v822
        %v3436 = vunpack.c.h.b16 %v822
        %v3437 = vunpack.c.l.b16 %v823
        %v3438 = vunpack.c.h.b16 %v823
        %v3439 = vunpack.c.l.b16 %v824
        %v3440 = vunpack.c.h.b16 %v824
        %v3441 = vunpack.c.l.b16 %v825
        %v3442 = vunpack.c.h.b16 %v825
        %v3443 = vunpack.c.l.b16 %v826
        %v3444 = vunpack.c.h.b16 %v826
        %v3445 = vunpack.c.l.b16 %v827
        %v3446 = vunpack.c.h.b16 %v827
        %v3447 = vunpack.c.l.b16 %v828
        %v3448 = vunpack.c.h.b16 %v828
        %v3449 = vunpack.c.l.b16 %v829
        %v3450 = vunpack.c.h.b16 %v829
        %v3451 = vunpack.c.l.b16 %v830
        %v3452 = vunpack.c.h.b16 %v830
        %v3453 = vunpack.c.l.b16 %v831
        %v3454 = vunpack.c.h.b16 %v831
        %v3455 = vunpack.c.l.b16 %v832
        %v3456 = vunpack.c.h.b16 %v832
        %v3457 = vunpack.c.l.b16 %v833
        %v3458 = vunpack.c.h.b16 %v833
        %v3459 = vunpack.c.l.b16 %v834
        %v3460 = vunpack.c.h.b16 %v834
        %v3461 = vunpack.c.l.b16 %v835
        %v3462 = vunpack.c.h.b16 %v835
        %v3463 = vunpack.c.l.b16 %v836
        %v3464 = vunpack.c.h.b16 %v836
        %v3465 = vunpack.c.l.b16 %v837
        %v3466 = vunpack.c.h.b16 %v837
        %v3467 = vunpack.c.l.b16 %v838
        %v3468 = vunpack.c.h.b16 %v838
        %v3469 = vunpack.c.l.b16 %v839
        %v3470 = vunpack.c.h.b16 %v839
        %v3471 = vunpack.c.l.b16 %v840
        %v3472 = vunpack.c.h.b16 %v840
        %v3473 = vunpack.c.l.b16 %v841
        %v3474 = vunpack.c.h.b16 %v841
        %v3475 = vunpack.c.l.b16 %v842
        %v3476 = vunpack.c.h.b16 %v842
        %v3477 = vunpack.c.l.b16 %v843
        %v3478 = vunpack.c.h.b16 %v843
        %v3479 = vunpack.c.l.b16 %v844
        %v3480 = vunpack.c.h.b16 %v844
        %v3481 = vunpack.c.l.b16 %v845
        %v3482 = vunpack.c.h.b16 %v845
        %v3483 = vunpack.c.l.b16 %v846
        %v3484 = vunpack.c.h.b16 %v846
        %v3485 = vunpack.c.l.b16 %v847
        %v3486 = vunpack.c.h.b16 %v847
        %v3487 = vunpack.c.l.b16 %v848
        %v3488 = vunpack.c.h.b16 %v848
        %v3489 = vunpack.c.l.b16 %v849
        %v3490 = vunpack.c.h.b16 %v849
        %v3491 = vunpack.c.l.b16 %v850
        %v3492 = vunpack.c.h.b16 %v850
        %v3493 = vunpack.c.l.b16 %v851
        %v3494 = vunpack.c.h.b16 %v851
        %v3495 = vunpack.c.l.b16 %v852
        %v3496 = vunpack.c.h.b16 %v852
        %v3497 = vunpack.c.l.b16 %v853
        %v3498 = vunpack.c.h.b16 %v853
        %v3499 = vunpack.c.l.b16 %v854
        %v3500 = vunpack.c.h.b16 %v854
        %v3501 = vunpack.c.l.b16 %v855
        %v3502 = vunpack.c.h.b16 %v855
        %v3503 = vunpack.c.l.b16 %v856
        %v3504 = vunpack.c.h.b16 %v856
        %v3505 = vunpack.c.l.b16 %v857
        %v3506 = vunpack.c.h.b16 %v857
        %v3507 = vunpack.c.l.b16 %v858
        %v3508 = vunpack.c.h.b16 %v858
        %v3509 = vunpack.c.l.b16 %v859
        %v3510 = vunpack.c.h.b16 %v859
        %v3511 = vunpack.c.l.b16 %v860
        %v3512 = vunpack.c.h.b16 %v860
        %v3513 = vunpack.c.l.b16 %v861
        %v3514 = vunpack.c.h.b16 %v861
        %v3515 = vunpack.c.l.b16 %v862
        %v3516 = vunpack.c.h.b16 %v862
        %v3517 = vunpack.c.l.b16 %v863
        %v3518 = vunpack.c.h.b16 %v863
        %v3519 = vunpack.c.l.b16 %v864
        %v3520 = vunpack.c.h.b16 %v864
        %v3521 = vunpack.c.l.b16 %v865
        %v3522 = vunpack.c.h.b16 %v865
        %v3523 = vunpack.c.l.b16 %v866
        %v3524 = vunpack.c.h.b16 %v866
        %v3525 = vunpack.c.l.b16 %v867
        %v3526 = vunpack.c.h.b16 %v867
        %v3527 = vunpack.c.l.b16 %v868
        %v3528 = vunpack.c.h.b16 %v868
        %v3529 = vunpack.c.l.b16 %v869
        %v3530 = vunpack.c.h.b16 %v869
        %v3531 = vunpack.c.l.b16 %v870
        %v3532 = vunpack.c.h.b16 %v870
        %v3533 = vunpack.c.l.b16 %v871
        %v3534 = vunpack.c.h.b16 %v871
        %v3535 = vunpack.c.l.b16 %v872
        %v3536 = vunpack.c.h.b16 %v872
        %v3537 = vunpack.c.l.b16 %v873
        %v3538 = vunpack.c.h.b16 %v873
        %v3539 = vunpack.c.l.b16 %v874
        %v3540 = vunpack.c.h.b16 %v874
        %v3541 = vunpack.c.l.b16 %v875
        %v3542 = vunpack.c.h.b16 %v875
        %v3543 = vunpack.c.l.b16 %v876
        %v3544 = vunpack.c.h.b16 %v876
        %v3545 = vunpack.c.l.b16 %v877
        %v3546 = vunpack.c.h.b16 %v877
        %v3547 = vunpack.c.l.b16 %v878
        %v3548 = vunpack.c.h.b16 %v878
        %v3549 = vunpack.c.l.b16 %v879
        %v3550 = vunpack.c.h.b16 %v879
        %v3551 = vunpack.c.l.b16 %v880
        %v3552 = vunpack.c.h.b16 %v880
        %v3553 = vunpack.c.l.b16 %v881
        %v3554 = vunpack.c.h.b16 %v881
        %v3555 = vunpack.c.l.b16 %v882
        %v3556 = vunpack.c.h.b16 %v882
        %v3557 = vunpack.c.l.b16 %v883
        %v3558 = vunpack.c.h.b16 %v883
        %v3559 = vunpack.c.l.b16 %v884
        %v3560 = vunpack.c.h.b16 %v884
        %v3561 = vunpack.c.l.b16 %v885
        %v3562 = vunpack.c.h.b16 %v885
        %v3563 = vunpack.c.l.b16 %v886
        %v3564 = vunpack.c.h.b16 %v886
        %v3565 = vunpack.c.l.b16 %v887
        %v3566 = vunpack.c.h.b16 %v887
        %v3567 = vunpack.c.l.b16 %v888
        %v3568 = vunpack.c.h.b16 %v888
        %v3569 = vunpack.c.l.b16 %v889
        %v3570 = vunpack.c.h.b16 %v889
        %v3571 = vunpack.c.l.b16 %v890
        %v3572 = vunpack.c.h.b16 %v890
        %v3573 = vunpack.c.l.b16 %v891
        %v3574 = vunpack.c.h.b16 %v891
        %v3575 = vunpack.c.l.b16 %v892
        %v3576 = vunpack.c.h.b16 %v892
        %v3577 = vunpack.c.l.b16 %v893
        %v3578 = vunpack.c.h.b16 %v893
        %v3579 = vunpack.c.l.b16 %v894
        %v3580 = vunpack.c.h.b16 %v894
        %v3581 = vunpack.c.l.b16 %v895
        %v3582 = vunpack.c.h.b16 %v895
        %v3583 = vunpack.c.l.b16 %v896
        %v3584 = vunpack.c.h.b16 %v896
        %v3585 = vunpack.c.l.b16 %v897
        %v3586 = vunpack.c.h.b16 %v897
        %v3587 = vunpack.c.l.b16 %v898
        %v3588 = vunpack.c.h.b16 %v898
        %v3589 = vunpack.c.l.b16 %v899
        %v3590 = vunpack.c.h.b16 %v899
        %v3591 = vunpack.c.l.b16 %v900
        %v3592 = vunpack.c.h.b16 %v900
        %v3593 = vunpack.c.l.b16 %v901
        %v3594 = vunpack.c.h.b16 %v901
        %v3595 = vunpack.c.l.b16 %v902
        %v3596 = vunpack.c.h.b16 %v902
        %v3597 = vunpack.c.l.b16 %v903
        %v3598 = vunpack.c.h.b16 %v903
        %v3599 = vunpack.c.l.b16 %v904
        %v3600 = vunpack.c.h.b16 %v904
        %v3601 = vunpack.c.l.b16 %v905
        %v3602 = vunpack.c.h.b16 %v905
        %v3603 = vunpack.c.l.b16 %v906
        %v3604 = vunpack.c.h.b16 %v906
        %v3605 = vunpack.c.l.b16 %v907
        %v3606 = vunpack.c.h.b16 %v907
        %v3607 = vunpack.c.l.b16 %v908
        %v3608 = vunpack.c.h.b16 %v908
        %v3609 = vunpack.c.l.b16 %v909
        %v3610 = vunpack.c.h.b16 %v909
        %v3611 = vunpack.c.l.b16 %v910
        %v3612 = vunpack.c.h.b16 %v910
        %v3613 = vunpack.c.l.b16 %v911
        %v3614 = vunpack.c.h.b16 %v911
        %v3615 = vunpack.c.l.b16 %v912
        %v3616 = vunpack.c.h.b16 %v912
        %v3617 = vunpack.c.l.b16 %v913
        %v3618 = vunpack.c.h.b16 %v913
        %v3619 = vunpack.c.l.b16 %v914
        %v3620 = vunpack.c.h.b16 %v914
        %v3621 = vunpack.c.l.b16 %v915
        %v3622 = vunpack.c.h.b16 %v915
        %v3623 = vunpack.c.l.b16 %v916
        %v3624 = vunpack.c.h.b16 %v916
        %v3625 = vunpack.c.l.b16 %v917
        %v3626 = vunpack.c.h.b16 %v917
        %v3627 = vunpack.c.l.b16 %v918
        %v3628 = vunpack.c.h.b16 %v918
        %v3629 = vunpack.c.l.b16 %v919
        %v3630 = vunpack.c.h.b16 %v919
        %v3631 = vunpack.c.l.b16 %v920
        %v3632 = vunpack.c.h.b16 %v920
        %v3633 = vunpack.c.l.b16 %v921
        %v3634 = vunpack.c.h.b16 %v921
        %v3635 = vunpack.c.l.b16 %v922
        %v3636 = vunpack.c.h.b16 %v922
        %v3637 = vunpack.c.l.b16 %v923
        %v3638 = vunpack.c.h.b16 %v923
        %v3639 = vunpack.c.l.b16 %v924
        %v3640 = vunpack.c.h.b16 %v924
        %v3641 = vunpack.c.l.b16 %v925
        %v3642 = vunpack.c.h.b16 %v925
        %v3643 = vunpack.c.l.b16 %v926
        %v3644 = vunpack.c.h.b16 %v926
        %v3645 = vunpack.c.l.b16 %v927
        %v3646 = vunpack.c.h.b16 %v927
        %v3647 = vunpack.c.l.b16 %v928
        %v3648 = vunpack.c.h.b16 %v928
        %v3649 = vunpack.c.l.b16 %v929
        %v3650 = vunpack.c.h.b16 %v929
        %v3651 = vunpack.c.l.b16 %v930
        %v3652 = vunpack.c.h.b16 %v930
        %v3653 = vunpack.c.l.b16 %v931
        %v3654 = vunpack.c.h.b16 %v931
        %v3655 = vunpack.c.l.b16 %v932
        %v3656 = vunpack.c.h.b16 %v932
        %v3657 = vunpack.c.l.b16 %v933
        %v3658 = vunpack.c.h.b16 %v933
        %v3659 = vunpack.c.l.b16 %v934
        %v3660 = vunpack.c.h.b16 %v934
        %v3661 = vunpack.c.l.b16 %v935
        %v3662 = vunpack.c.h.b16 %v935
        %v3663 = vunpack.c.l.b16 %v936
        %v3664 = vunpack.c.h.b16 %v936
        %v3665 = vunpack.c.l.b16 %v937
        %v3666 = vunpack.c.h.b16 %v937
        %v3667 = vunpack.c.l.b16 %v938
        %v3668 = vunpack.c.h.b16 %v938
        %v3669 = vunpack.c.l.b16 %v939
        %v3670 = vunpack.c.h.b16 %v939
        %v3671 = vunpack.c.l.b16 %v940
        %v3672 = vunpack.c.h.b16 %v940
        %v3673 = vunpack.c.l.b16 %v941
        %v3674 = vunpack.c.h.b16 %v941
        %v3675 = vunpack.c.l.b16 %v942
        %v3676 = vunpack.c.h.b16 %v942
        %v3677 = vunpack.c.l.b16 %v943
        %v3678 = vunpack.c.h.b16 %v943
        %v3679 = vunpack.c.l.b16 %v944
        %v3680 = vunpack.c.h.b16 %v944
        %v3681 = vunpack.c.l.b16 %v945
        %v3682 = vunpack.c.h.b16 %v945
        %v3683 = vunpack.c.l.b16 %v946
        %v3684 = vunpack.c.h.b16 %v946
        %v3685 = vunpack.c.l.b16 %v947
        %v3686 = vunpack.c.h.b16 %v947
        %v3687 = vunpack.c.l.b16 %v948
        %v3688 = vunpack.c.h.b16 %v948
        %v3689 = vunpack.c.l.b16 %v949
        %v3690 = vunpack.c.h.b16 %v949
        %v3691 = vunpack.c.l.b16 %v950
        %v3692 = vunpack.c.h.b16 %v950
        %v3693 = vunpack.c.l.b16 %v951
        %v3694 = vunpack.c.h.b16 %v951
        %v3695 = vunpack.c.l.b16 %v952
        %v3696 = vunpack.c.h.b16 %v952
        %v3697 = vunpack.c.l.b16 %v953
        %v3698 = vunpack.c.h.b16 %v953
        %v3699 = vunpack.c.l.b16 %v954
        %v3700 = vunpack.c.h.b16 %v954
        %v3701 = vunpack.c.l.b16 %v955
        %v3702 = vunpack.c.h.b16 %v955
        %v3703 = vunpack.c.l.b16 %v956
        %v3704 = vunpack.c.h.b16 %v956
        %v3705 = vunpack.c.l.b16 %v957
        %v3706 = vunpack.c.h.b16 %v957
        %v3707 = vunpack.c.l.b16 %v958
        %v3708 = vunpack.c.h.b16 %v958
        %v3709 = vunpack.c.l.b16 %v959
        %v3710 = vunpack.c.h.b16 %v959
        %v3711 = vunpack.c.l.b16 %v960
        %v3712 = vunpack.c.h.b16 %v960
        %v3713 = vunpack.c.l.b16 %v961
        %v3714 = vunpack.c.h.b16 %v961
        %v3715 = vunpack.c.l.b16 %v962
        %v3716 = vunpack.c.h.b16 %v962
        %v3717 = vunpack.c.l.b16 %v963
        %v3718 = vunpack.c.h.b16 %v963
        %v3719 = vunpack.c.l.b16 %v964
        %v3720 = vunpack.c.h.b16 %v964
        %v3721 = vunpack.c.l.b16 %v965
        %v3722 = vunpack.c.h.b16 %v965
        %v3723 = vunpack.c.l.b16 %v966
        %v3724 = vunpack.c.h.b16 %v966
        %v3725 = vunpack.c.l.b16 %v967
        %v3726 = vunpack.c.h.b16 %v967
        %v3727 = vunpack.c.l.b16 %v968
        %v3728 = vunpack.c.h.b16 %v968
        %v3729 = vunpack.c.l.b16 %v969
        %v3730 = vunpack.c.h.b16 %v969
        %v3731 = vunpack.c.l.b16 %v970
        %v3732 = vunpack.c.h.b16 %v970
        %v3733 = vunpack.c.l.b16 %v971
        %v3734 = vunpack.c.h.b16 %v971
        %v3735 = vunpack.c.l.b16 %v972
        %v3736 = vunpack.c.h.b16 %v972
        %v3737 = vunpack.c.l.b16 %v973
        %v3738 = vunpack.c.h.b16 %v973
        %v3739 = vunpack.c.l.b16 %v974
        %v3740 = vunpack.c.h.b16 %v974
        %v3741 = vunpack.c.l.b16 %v975
        %v3742 = vunpack.c.h.b16 %v975
        %v3743 = vunpack.c.l.b16 %v976
        %v3744 = vunpack.c.h.b16 %v976
        %v3745 = vunpack.c.l.b16 %v977
        %v3746 = vunpack.c.h.b16 %v977
        %v3747 = vunpack.c.l.b16 %v978
        %v3748 = vunpack.c.h.b16 %v978
        %v3749 = vunpack.c.l.b16 %v979
        %v3750 = vunpack.c.h.b16 %v979
        %v3751 = vunpack.c.l.b16 %v980
        %v3752 = vunpack.c.h.b16 %v980
        %v3753 = vunpack.c.l.b16 %v981
        %v3754 = vunpack.c.h.b16 %v981
        %v3755 = vunpack.c.l.b16 %v982
        %v3756 = vunpack.c.h.b16 %v982
        %v3757 = vunpack.c.l.b16 %v983
        %v3758 = vunpack.c.h.b16 %v983
        %v3759 = vunpack.c.l.b16 %v984
        %v3760 = vunpack.c.h.b16 %v984
        %v3761 = vunpack.c.l.b16 %v985
        %v3762 = vunpack.c.h.b16 %v985
        %v3763 = vunpack.c.l.b16 %v986
        %v3764 = vunpack.c.h.b16 %v986
        %v3765 = vunpack.c.l.b16 %v987
        %v3766 = vunpack.c.h.b16 %v987
        %v3767 = vunpack.c.l.b16 %v988
        %v3768 = vunpack.c.h.b16 %v988
        %v3769 = vunpack.c.l.b16 %v989
        %v3770 = vunpack.c.h.b16 %v989
        %v3771 = vunpack.c.l.b16 %v990
        %v3772 = vunpack.c.h.b16 %v990
        %v3773 = vunpack.c.l.b16 %v991
        %v3774 = vunpack.c.h.b16 %v991
        %v3775 = vunpack.c.l.b16 %v992
        %v3776 = vunpack.c.h.b16 %v992
        %v3777 = vunpack.c.l.b16 %v993
        %v3778 = vunpack.c.h.b16 %v993
        %v3779 = vunpack.c.l.b16 %v994
        %v3780 = vunpack.c.h.b16 %v994
        %v3781 = vunpack.c.l.b16 %v995
        %v3782 = vunpack.c.h.b16 %v995
        %v3783 = vunpack.c.l.b16 %v996
        %v3784 = vunpack.c.h.b16 %v996
        %v3785 = vunpack.c.l.b16 %v997
        %v3786 = vunpack.c.h.b16 %v997
        %v3787 = vunpack.c.l.b16 %v998
        %v3788 = vunpack.c.h.b16 %v998
        %v3789 = vunpack.c.l.b16 %v999
        %v3790 = vunpack.c.h.b16 %v999
        %v3791 = vunpack.c.l.b16 %v1000
        %v3792 = vunpack.c.h.b16 %v1000
        %v3793 = vunpack.c.l.b16 %v1001
        %v3794 = vunpack.c.h.b16 %v1001
        %v3795 = vunpack.c.l.b16 %v1002
        %v3796 = vunpack.c.h.b16 %v1002
        %v3797 = vunpack.c.l.b16 %v1003
        %v3798 = vunpack.c.h.b16 %v1003
        %v3799 = vunpack.c.l.b16 %v1004
        %v3800 = vunpack.c.h.b16 %v1004
        %v3801 = vunpack.c.l.b16 %v1005
        %v3802 = vunpack.c.h.b16 %v1005
        %v3803 = vunpack.c.l.b16 %v1006
        %v3804 = vunpack.c.h.b16 %v1006
        %v3805 = vunpack.c.l.b16 %v1007
        %v3806 = vunpack.c.h.b16 %v1007
        %v3807 = vunpack.c.l.b16 %v1008
        %v3808 = vunpack.c.h.b16 %v1008
        %v3809 = vunpack.c.l.b16 %v1009
        %v3810 = vunpack.c.h.b16 %v1009
        %v3811 = vunpack.c.l.b16 %v1010
        %v3812 = vunpack.c.h.b16 %v1010
        %v3813 = vunpack.c.l.b16 %v1011
        %v3814 = vunpack.c.h.b16 %v1011
        %v3815 = vunpack.c.l.b16 %v1012
        %v3816 = vunpack.c.h.b16 %v1012
        %v3817 = vunpack.c.l.b16 %v1013
        %v3818 = vunpack.c.h.b16 %v1013
        %v3819 = vunpack.c.l.b16 %v1014
        %v3820 = vunpack.c.h.b16 %v1014
        %v3821 = vunpack.c.l.b16 %v1015
        %v3822 = vunpack.c.h.b16 %v1015
        %v3823 = vunpack.c.l.b16 %v1016
        %v3824 = vunpack.c.h.b16 %v1016
        %v3825 = vunpack.c.l.b16 %v1017
        %v3826 = vunpack.c.h.b16 %v1017
        %v3827 = vunpack.c.l.b16 %v1018
        %v3828 = vunpack.c.h.b16 %v1018
        %v3829 = vunpack.c.l.b16 %v1019
        %v3830 = vunpack.c.h.b16 %v1019
        %v3831 = vunpack.c.l.b16 %v1020
        %v3832 = vunpack.c.h.b16 %v1020
        %v3833 = vunpack.c.l.b16 %v1021
        %v3834 = vunpack.c.h.b16 %v1021
        %v3835 = vunpack.c.l.b16 %v1022
        %v3836 = vunpack.c.h.b16 %v1022
        %v3837 = vunpack.c.l.b16 %v1023
        %v3838 = vunpack.c.h.b16 %v1023
        %v3839 = vunpack.c.l.b16 %v1024
        %v3840 = vunpack.c.h.b16 %v1024
        %v3841 = vunpack.c.l.b16 %v1025
        %v3842 = vunpack.c.h.b16 %v1025
        %v3843 = vunpack.c.l.b16 %v1026
        %v3844 = vunpack.c.h.b16 %v1026
        %v3845 = vunpack.c.l.b16 %v1027
        %v3846 = vunpack.c.h.b16 %v1027
        %v3847 = vunpack.c.l.b16 %v1028
        %v3848 = vunpack.c.h.b16 %v1028
        %v3849 = vunpack.c.l.b16 %v1029
        %v3850 = vunpack.c.h.b16 %v1029
        %v3851 = vunpack.c.l.b16 %v1030
        %v3852 = vunpack.c.h.b16 %v1030
        %v3853 = vunpack.c.l.b16 %v1031
        %v3854 = vunpack.c.h.b16 %v1031
        %v3855 = vunpack.c.l.b16 %v1032
        %v3856 = vunpack.c.h.b16 %v1032
        %v3857 = vunpack.c.l.b16 %v1033
        %v3858 = vunpack.c.h.b16 %v1033
        %v3859 = vunpack.c.l.b16 %v1034
        %v3860 = vunpack.c.h.b16 %v1034
        %v3861 = vunpack.c.l.b16 %v1035
        %v3862 = vunpack.c.h.b16 %v1035
        %v3863 = vunpack.c.l.b16 %v1036
        %v3864 = vunpack.c.h.b16 %v1036
        %v3865 = vunpack.c.l.b16 %v1037
        %v3866 = vunpack.c.h.b16 %v1037
        %v3867 = vunpack.c.l.b16 %v1038
        %v3868 = vunpack.c.h.b16 %v1038
        %v3869 = vunpack.c.l.b16 %v1039
        %v3870 = vunpack.c.h.b16 %v1039
        %v3871 = vunpack.c.l.b16 %v1040
        %v3872 = vunpack.c.h.b16 %v1040
        %v3873 = vunpack.c.l.b16 %v1041
        %v3874 = vunpack.c.h.b16 %v1041
        %v3875 = vunpack.c.l.b16 %v1042
        %v3876 = vunpack.c.h.b16 %v1042
        %v3877 = vunpack.c.l.b16 %v1043
        %v3878 = vunpack.c.h.b16 %v1043
        %v3879 = vunpack.c.l.b16 %v1044
        %v3880 = vunpack.c.h.b16 %v1044
        %v3881 = vunpack.c.l.b16 %v1045
        %v3882 = vunpack.c.h.b16 %v1045
        %v3883 = vunpack.c.l.b16 %v1046
        %v3884 = vunpack.c.h.b16 %v1046
        %v3885 = vunpack.c.l.b16 %v1047
        %v3886 = vunpack.c.h.b16 %v1047
        %v3887 = vunpack.c.l.b16 %v1048
        %v3888 = vunpack.c.h.b16 %v1048
        %v3889 = vunpack.c.l.b16 %v1049
        %v3890 = vunpack.c.h.b16 %v1049
        %v3891 = vunpack.c.l.b16 %v1050
        %v3892 = vunpack.c.h.b16 %v1050
        %v3893 = vunpack.c.l.b16 %v1051
        %v3894 = vunpack.c.h.b16 %v1051
        %v3895 = vunpack.c.l.b16 %v1052
        %v3896 = vunpack.c.h.b16 %v1052
        %v3897 = vunpack.c.l.b16 %v1053
        %v3898 = vunpack.c.h.b16 %v1053
        %v3899 = vunpack.c.l.b16 %v1054
        %v3900 = vunpack.c.h.b16 %v1054
        %v3901 = vunpack.c.l.b16 %v1055
        %v3902 = vunpack.c.h.b16 %v1055
        %v3903 = vunpack.c.l.b16 %v1056
        %v3904 = vunpack.c.h.b16 %v1056
        %v3905 = vunpack.c.l.b16 %v1057
        %v3906 = vunpack.c.h.b16 %v1057
        %v3907 = vunpack.c.l.b16 %v1058
        %v3908 = vunpack.c.h.b16 %v1058
        %v3909 = vunpack.c.l.b16 %v1059
        %v3910 = vunpack.c.h.b16 %v1059
        %v3911 = vunpack.c.l.b16 %v1060
        %v3912 = vunpack.c.h.b16 %v1060
        %v3913 = vunpack.c.l.b16 %v1061
        %v3914 = vunpack.c.h.b16 %v1061
        %v3915 = vunpack.c.l.b16 %v1062
        %v3916 = vunpack.c.h.b16 %v1062
        %v3917 = vunpack.c.l.b16 %v1063
        %v3918 = vunpack.c.h.b16 %v1063
        %v3919 = vunpack.c.l.b16 %v1064
        %v3920 = vunpack.c.h.b16 %v1064
        %v3921 = vunpack.c.l.b16 %v1065
        %v3922 = vunpack.c.h.b16 %v1065
        %v3923 = vunpack.c.l.b16 %v1066
        %v3924 = vunpack.c.h.b16 %v1066
        %v3925 = vunpack.c.l.b16 %v1067
        %v3926 = vunpack.c.h.b16 %v1067
        %v3927 = vunpack.c.l.b16 %v1068
        %v3928 = vunpack.c.h.b16 %v1068
        %v3929 = vunpack.c.l.b16 %v1069
        %v3930 = vunpack.c.h.b16 %v1069
        %v3931 = vunpack.c.l.b16 %v1070
        %v3932 = vunpack.c.h.b16 %v1070
        %v3933 = vunpack.c.l.b16 %v1071
        %v3934 = vunpack.c.h.b16 %v1071
        %v3935 = vunpack.c.l.b16 %v1072
        %v3936 = vunpack.c.h.b16 %v1072
        %v3937 = vunpack.c.l.b16 %v1073
        %v3938 = vunpack.c.h.b16 %v1073
        %v3939 = vunpack.c.l.b16 %v1074
        %v3940 = vunpack.c.h.b16 %v1074
        %v3941 = vunpack.c.l.b16 %v1075
        %v3942 = vunpack.c.h.b16 %v1075
        %v3943 = vunpack.c.l.b16 %v1076
        %v3944 = vunpack.c.h.b16 %v1076
        %v3945 = vunpack.c.l.b16 %v1077
        %v3946 = vunpack.c.h.b16 %v1077
        %v3947 = vunpack.c.l.b16 %v1078
        %v3948 = vunpack.c.h.b16 %v1078
        %v3949 = vunpack.c.l.b16 %v1079
        %v3950 = vunpack.c.h.b16 %v1079
        %v3951 = vunpack.c.l.b16 %v1080
        %v3952 = vunpack.c.h.b16 %v1080
        %v3953 = vunpack.c.l.b16 %v1081
        %v3954 = vunpack.c.h.b16 %v1081
        %v3955 = vunpack.c.l.b16 %v1082
        %v3956 = vunpack.c.h.b16 %v1082
        %v3957 = vunpack.c.l.b16 %v1083
        %v3958 = vunpack.c.h.b16 %v1083
        %v3959 = vunpack.c.l.b16 %v1084
        %v3960 = vunpack.c.h.b16 %v1084
        %v3961 = vunpack.c.l.b16 %v1085
        %v3962 = vunpack.c.h.b16 %v1085
        %v3963 = vunpack.c.l.b16 %v1086
        %v3964 = vunpack.c.h.b16 %v1086
        %v3965 = vunpack.c.l.b16 %v1087
        %v3966 = vunpack.c.h.b16 %v1087
        %v3967 = vunpack.c.l.b16 %v1088
        %v3968 = vunpack.c.h.b16 %v1088
        %v3969 = vunpack.c.l.b16 %v1089
        %v3970 = vunpack.c.h.b16 %v1089
        %v3971 = vunpack.c.l.b16 %v1090
        %v3972 = vunpack.c.h.b16 %v1090
        %v3973 = vunpack.c.l.b16 %v1091
        %v3974 = vunpack.c.h.b16 %v1091
        %v3975 = vunpack.c.l.b16 %v1092
        %v3976 = vunpack.c.h.b16 %v1092
        %v3977 = vunpack.c.l.b16 %v1093
        %v3978 = vunpack.c.h.b16 %v1093
        %v3979 = vunpack.c.l.b16 %v1094
        %v3980 = vunpack.c.h.b16 %v1094
        %v3981 = vunpack.c.l.b16 %v1095
        %v3982 = vunpack.c.h.b16 %v1095
        %v3983 = vunpack.c.l.b16 %v1096
        %v3984 = vunpack.c.h.b16 %v1096
        %v3985 = vunpack.c.l.b16 %v1097
        %v3986 = vunpack.c.h.b16 %v1097
        %v3987 = vunpack.c.l.b16 %v1098
        %v3988 = vunpack.c.h.b16 %v1098
        %v3989 = vunpack.c.l.b16 %v1099
        %v3990 = vunpack.c.h.b16 %v1099
        %v3991 = vunpack.c.l.b16 %v1100
        %v3992 = vunpack.c.h.b16 %v1100
        %v3993 = vunpack.c.l.b16 %v1101
        %v3994 = vunpack.c.h.b16 %v1101
        %v3995 = vunpack.c.l.b16 %v1102
        %v3996 = vunpack.c.h.b16 %v1102
        %v3997 = vunpack.c.l.b16 %v1103
        %v3998 = vunpack.c.h.b16 %v1103
        %v3999 = vunpack.c.l.b16 %v1104
        %v4000 = vunpack.c.h.b16 %v1104
        %v4001 = vunpack.c.l.b16 %v1105
        %v4002 = vunpack.c.h.b16 %v1105
        %v4003 = vunpack.c.l.b16 %v1106
        %v4004 = vunpack.c.h.b16 %v1106
        %v4005 = vunpack.c.l.b16 %v1107
        %v4006 = vunpack.c.h.b16 %v1107
        %v4007 = vunpack.c.l.b16 %v1108
        %v4008 = vunpack.c.h.b16 %v1108
        %v4009 = vunpack.c.l.b16 %v1109
        %v4010 = vunpack.c.h.b16 %v1109
        %v4011 = vunpack.c.l.b16 %v1110
        %v4012 = vunpack.c.h.b16 %v1110
        %v4013 = vunpack.c.l.b16 %v1111
        %v4014 = vunpack.c.h.b16 %v1111
        %v4015 = vunpack.c.l.b16 %v1112
        %v4016 = vunpack.c.h.b16 %v1112
        %v4017 = vunpack.c.l.b16 %v1113
        %v4018 = vunpack.c.h.b16 %v1113
        %v4019 = vunpack.c.l.b16 %v1114
        %v4020 = vunpack.c.h.b16 %v1114
        %v4021 = vunpack.c.l.b16 %v1115
        %v4022 = vunpack.c.h.b16 %v1115
        %v4023 = vunpack.c.l.b16 %v1116
        %v4024 = vunpack.c.h.b16 %v1116
        %v4025 = vunpack.c.l.b16 %v1117
        %v4026 = vunpack.c.h.b16 %v1117
        %v4027 = vunpack.c.l.b16 %v1118
        %v4028 = vunpack.c.h.b16 %v1118
        %v4029 = vunpack.c.l.b16 %v1119
        %v4030 = vunpack.c.h.b16 %v1119
        %v4031 = vunpack.c.l.b16 %v1120
        %v4032 = vunpack.c.h.b16 %v1120
        %v4033 = vunpack.c.l.b16 %v1121
        %v4034 = vunpack.c.h.b16 %v1121
        %v4035 = vunpack.c.l.b16 %v1122
        %v4036 = vunpack.c.h.b16 %v1122
        %v4037 = vunpack.c.l.b16 %v1123
        %v4038 = vunpack.c.h.b16 %v1123
        %v4039 = vunpack.c.l.b16 %v1124
        %v4040 = vunpack.c.h.b16 %v1124
        %v4041 = vunpack.c.l.b16 %v1125
        %v4042 = vunpack.c.h.b16 %v1125
        %v4043 = vunpack.c.l.b16 %v1126
        %v4044 = vunpack.c.h.b16 %v1126
        %v4045 = vunpack.c.l.b16 %v1127
        %v4046 = vunpack.c.h.b16 %v1127
        %v4047 = vunpack.c.l.b16 %v1128
        %v4048 = vunpack.c.h.b16 %v1128
        %v4049 = vunpack.c.l.b16 %v1129
        %v4050 = vunpack.c.h.b16 %v1129
        %v4051 = vunpack.c.l.b16 %v1130
        %v4052 = vunpack.c.h.b16 %v1130
        %v4053 = vunpack.c.l.b16 %v1131
        %v4054 = vunpack.c.h.b16 %v1131
        %v4055 = vunpack.c.l.b16 %v1132
        %v4056 = vunpack.c.h.b16 %v1132
        %v4057 = vunpack.c.l.b16 %v1133
        %v4058 = vunpack.c.h.b16 %v1133
        %v4059 = vunpack.c.l.b16 %v1134
        %v4060 = vunpack.c.h.b16 %v1134
        %v4061 = vunpack.c.l.b16 %v1135
        %v4062 = vunpack.c.h.b16 %v1135
        %v4063 = vunpack.c.l.b16 %v1136
        %v4064 = vunpack.c.h.b16 %v1136
        %v4065 = vunpack.c.l.b16 %v1137
        %v4066 = vunpack.c.h.b16 %v1137
        %v4067 = vunpack.c.l.b16 %v1138
        %v4068 = vunpack.c.h.b16 %v1138
        %v4069 = vunpack.c.l.b16 %v1139
        %v4070 = vunpack.c.h.b16 %v1139
        %v4071 = vunpack.c.l.b16 %v1140
        %v4072 = vunpack.c.h.b16 %v1140
        %v4073 = vunpack.c.l.b16 %v1141
        %v4074 = vunpack.c.h.b16 %v1141
        %v4075 = vunpack.c.l.b16 %v1142
        %v4076 = vunpack.c.h.b16 %v1142
        %v4077 = vunpack.c.l.b16 %v1143
        %v4078 = vunpack.c.h.b16 %v1143
        %v4079 = vunpack.c.l.b16 %v1144
        %v4080 = vunpack.c.h.b16 %v1144
        %v4081 = vunpack.c.l.b16 %v1145
        %v4082 = vunpack.c.h.b16 %v1145
        %v4083 = vunpack.c.l.b16 %v1146
        %v4084 = vunpack.c.h.b16 %v1146
        %v4085 = vunpack.c.l.b16 %v1147
        %v4086 = vunpack.c.h.b16 %v1147
        %v4087 = vunpack.c.l.b16 %v1148
        %v4088 = vunpack.c.h.b16 %v1148
        %v4089 = vunpack.c.l.b16 %v1149
        %v4090 = vunpack.c.h.b16 %v1149
        %v4091 = vunpack.c.l.b16 %v1150
        %v4092 = vunpack.c.h.b16 %v1150
        %v4093 = vunpack.c.l.b16 %v1151
        %v4094 = vunpack.c.h.b16 %v1151
        %v4095 = vunpack.c.l.b16 %v1152
        %v4096 = vunpack.c.h.b16 %v1152
        %v4097 = vunpack.c.l.b16 %v1153
        %v4098 = vunpack.c.h.b16 %v1153
        %v4099 = vunpack.c.l.b16 %v1154
        %v4100 = vunpack.c.h.b16 %v1154
        %v4101 = vunpack.c.l.b16 %v1155
        %v4102 = vunpack.c.h.b16 %v1155
        %v4103 = vunpack.c.l.b16 %v1156
        %v4104 = vunpack.c.h.b16 %v1156
        %v4105 = vunpack.c.l.b16 %v1157
        %v4106 = vunpack.c.h.b16 %v1157
        %v4107 = vunpack.c.l.b16 %v1158
        %v4108 = vunpack.c.h.b16 %v1158
        %v4109 = vunpack.c.l.b16 %v1159
        %v4110 = vunpack.c.h.b16 %v1159
        %v4111 = vunpack.c.l.b16 %v1160
        %v4112 = vunpack.c.h.b16 %v1160
        %v4113 = vunpack.c.l.b16 %v1161
        %v4114 = vunpack.c.h.b16 %v1161
        %v4115 = vunpack.c.l.b16 %v1162
        %v4116 = vunpack.c.h.b16 %v1162
        %v4117 = vunpack.c.l.b16 %v1163
        %v4118 = vunpack.c.h.b16 %v1163
        %v4119 = vunpack.c.l.b16 %v1164
        %v4120 = vunpack.c.h.b16 %v1164
        %v4121 = vunpack.c.l.b16 %v1165
        %v4122 = vunpack.c.h.b16 %v1165
        %v4123 = vunpack.c.l.b16 %v1166
        %v4124 = vunpack.c.h.b16 %v1166
        %v4125 = vunpack.c.l.b16 %v1167
        %v4126 = vunpack.c.h.b16 %v1167
        %v4127 = vunpack.c.l.b16 %v1168
        %v4128 = vunpack.c.h.b16 %v1168
        %v4129 = vunpack.c.l.b16 %v1169
        %v4130 = vunpack.c.h.b16 %v1169
        %v4131 = vunpack.c.l.b16 %v1170
        %v4132 = vunpack.c.h.b16 %v1170
        %v4133 = vunpack.c.l.b16 %v1171
        %v4134 = vunpack.c.h.b16 %v1171
        %v4135 = vunpack.c.l.b16 %v1172
        %v4136 = vunpack.c.h.b16 %v1172
        %v4137 = vunpack.c.l.b16 %v1173
        %v4138 = vunpack.c.h.b16 %v1173
        %v4139 = vunpack.c.l.b16 %v1174
        %v4140 = vunpack.c.h.b16 %v1174
        %v4141 = vunpack.c.l.b16 %v1175
        %v4142 = vunpack.c.h.b16 %v1175
        %v4143 = vunpack.c.l.b16 %v1176
        %v4144 = vunpack.c.h.b16 %v1176
        %v4145 = vunpack.c.l.b16 %v1177
        %v4146 = vunpack.c.h.b16 %v1177
        %v4147 = vunpack.c.l.b16 %v1178
        %v4148 = vunpack.c.h.b16 %v1178
        %v4149 = vunpack.c.l.b16 %v1179
        %v4150 = vunpack.c.h.b16 %v1179
        %v4151 = vunpack.c.l.b16 %v1180
        %v4152 = vunpack.c.h.b16 %v1180
        %v4153 = vunpack.c.l.b16 %v1181
        %v4154 = vunpack.c.h.b16 %v1181
        %v4155 = vunpack.c.l.b16 %v1182
        %v4156 = vunpack.c.h.b16 %v1182
        %v4157 = vunpack.c.l.b16 %v1183
        %v4158 = vunpack.c.h.b16 %v1183
        %v4159 = vunpack.c.l.b16 %v1184
        %v4160 = vunpack.c.h.b16 %v1184
        %v4161 = vunpack.c.l.b16 %v1185
        %v4162 = vunpack.c.h.b16 %v1185
        %v4163 = vunpack.c.l.b16 %v1186
        %v4164 = vunpack.c.h.b16 %v1186
        %v4165 = vunpack.c.l.b16 %v1187
        %v4166 = vunpack.c.h.b16 %v1187
        %v4167 = vunpack.c.l.b16 %v1188
        %v4168 = vunpack.c.h.b16 %v1188
        %v4169 = vunpack.c.l.b16 %v1189
        %v4170 = vunpack.c.h.b16 %v1189
        %v4171 = vunpack.c.l.b16 %v1190
        %v4172 = vunpack.c.h.b16 %v1190
        %v4173 = vunpack.c.l.b16 %v1191
        %v4174 = vunpack.c.h.b16 %v1191
        %v4175 = vunpack.c.l.b16 %v1192
        %v4176 = vunpack.c.h.b16 %v1192
        %v4177 = vunpack.c.l.b16 %v1193
        %v4178 = vunpack.c.h.b16 %v1193
        %v4179 = vunpack.c.l.b16 %v1194
        %v4180 = vunpack.c.h.b16 %v1194
        %v4181 = vunpack.c.l.b16 %v1195
        %v4182 = vunpack.c.h.b16 %v1195
        %v4183 = vunpack.c.l.b16 %v1196
        %v4184 = vunpack.c.h.b16 %v1196
        %v4185 = vunpack.c.l.b16 %v1197
        %v4186 = vunpack.c.h.b16 %v1197
        %v4187 = vunpack.c.l.b16 %v1198
        %v4188 = vunpack.c.h.b16 %v1198
        %v4189 = vunpack.c.l.b16 %v1199
        %v4190 = vunpack.c.h.b16 %v1199
        %v4191 = vunpack.c.l.b16 %v1200
        %v4192 = vunpack.c.h.b16 %v1200
        %v4193 = vunpack.c.l.b16 %v1201
        %v4194 = vunpack.c.h.b16 %v1201
        %v4195 = vunpack.c.l.b16 %v1202
        %v4196 = vunpack.c.h.b16 %v1202
        %v4197 = vunpack.c.l.b16 %v1203
        %v4198 = vunpack.c.h.b16 %v1203
        %v4199 = vunpack.c.l.b16 %v1204
        %v4200 = vunpack.c.h.b16 %v1204
        %v4201 = vunpack.c.l.b16 %v1205
        %v4202 = vunpack.c.h.b16 %v1205
        %v4203 = vunpack.c.l.b16 %v1206
        %v4204 = vunpack.c.h.b16 %v1206
        %v4205 = vunpack.c.l.b16 %v1207
        %v4206 = vunpack.c.h.b16 %v1207
        %v4207 = vunpack.c.l.b16 %v1208
        %v4208 = vunpack.c.h.b16 %v1208
        %v4209 = vunpack.c.l.b16 %v1209
        %v4210 = vunpack.c.h.b16 %v1209
        %v4211 = vunpack.c.l.b16 %v1210
        %v4212 = vunpack.c.h.b16 %v1210
        %v4213 = vunpack.c.l.b16 %v1211
        %v4214 = vunpack.c.h.b16 %v1211
        %v4215 = vunpack.c.l.b16 %v1212
        %v4216 = vunpack.c.h.b16 %v1212
        %v4217 = vunpack.c.l.b16 %v1213
        %v4218 = vunpack.c.h.b16 %v1213
        %v4219 = vunpack.c.l.b16 %v1214
        %v4220 = vunpack.c.h.b16 %v1214
        %v4221 = vunpack.c.l.b16 %v1215
        %v4222 = vunpack.c.h.b16 %v1215
        %v4223 = vunpack.c.l.b16 %v1216
        %v4224 = vunpack.c.h.b16 %v1216
        %v4225 = vunpack.c.l.b16 %v1217
        %v4226 = vunpack.c.h.b16 %v1217
        %v4227 = vunpack.c.l.b16 %v1218
        %v4228 = vunpack.c.h.b16 %v1218
        %v4229 = vunpack.c.l.b16 %v1219
        %v4230 = vunpack.c.h.b16 %v1219
        %v4231 = vunpack.c.l.b16 %v1220
        %v4232 = vunpack.c.h.b16 %v1220
        %v4233 = vunpack.c.l.b16 %v1221
        %v4234 = vunpack.c.h.b16 %v1221
        %v4235 = vunpack.c.l.b16 %v1222
        %v4236 = vunpack.c.h.b16 %v1222
        %v4237 = vunpack.c.l.b16 %v1223
        %v4238 = vunpack.c.h.b16 %v1223
        %v4239 = vunpack.c.l.b16 %v1224
        %v4240 = vunpack.c.h.b16 %v1224
        %v4241 = vunpack.c.l.b16 %v1225
        %v4242 = vunpack.c.h.b16 %v1225
        %v4243 = vunpack.c.l.b16 %v1226
        %v4244 = vunpack.c.h.b16 %v1226
        %v4245 = vunpack.c.l.b16 %v1227
        %v4246 = vunpack.c.h.b16 %v1227
        %v4247 = vunpack.c.l.b16 %v1228
        %v4248 = vunpack.c.h.b16 %v1228
        %v4249 = vunpack.c.l.b16 %v1229
        %v4250 = vunpack.c.h.b16 %v1229
        %v4251 = vunpack.c.l.b16 %v1230
        %v4252 = vunpack.c.h.b16 %v1230
        %v4253 = vunpack.c.l.b16 %v1231
        %v4254 = vunpack.c.h.b16 %v1231
        %v4255 = vunpack.c.l.b16 %v1232
        %v4256 = vunpack.c.h.b16 %v1232
        %v4257 = vunpack.c.l.b16 %v1233
        %v4258 = vunpack.c.h.b16 %v1233
        %v4259 = vunpack.c.l.b16 %v1234
        %v4260 = vunpack.c.h.b16 %v1234
        %v4261 = vunpack.c.l.b16 %v1235
        %v4262 = vunpack.c.h.b16 %v1235
        %v4263 = vunpack.c.l.b16 %v1236
        %v4264 = vunpack.c.h.b16 %v1236
        %v4265 = vunpack.c.l.b16 %v1237
        %v4266 = vunpack.c.h.b16 %v1237
        %v4267 = vunpack.c.l.b16 %v1238
        %v4268 = vunpack.c.h.b16 %v1238
        %v4269 = vunpack.c.l.b16 %v1239
        %v4270 = vunpack.c.h.b16 %v1239
        %v4271 = vunpack.c.l.b16 %v1240
        %v4272 = vunpack.c.h.b16 %v1240
        %v4273 = vunpack.c.l.b16 %v1241
        %v4274 = vunpack.c.h.b16 %v1241
        %v4275 = vunpack.c.l.b16 %v1242
        %v4276 = vunpack.c.h.b16 %v1242
        %v4277 = vunpack.c.l.b16 %v1243
        %v4278 = vunpack.c.h.b16 %v1243
        %v4279 = vunpack.c.l.b16 %v1244
        %v4280 = vunpack.c.h.b16 %v1244
        %v4281 = vunpack.c.l.b16 %v1245
        %v4282 = vunpack.c.h.b16 %v1245
        %v4283 = vunpack.c.l.b16 %v1246
        %v4284 = vunpack.c.h.b16 %v1246
        %v4285 = vunpack.c.l.b16 %v1247
        %v4286 = vunpack.c.h.b16 %v1247
        %v4287 = vunpack.c.l.b16 %v1248
        %v4288 = vunpack.c.h.b16 %v1248
        %v4289 = vunpack.c.l.b16 %v1249
        %v4290 = vunpack.c.h.b16 %v1249
        %v4291 = vunpack.c.l.b16 %v1250
        %v4292 = vunpack.c.h.b16 %v1250
        %v4293 = vunpack.c.l.b16 %v1251
        %v4294 = vunpack.c.h.b16 %v1251
        %v4295 = vunpack.c.l.b16 %v1252
        %v4296 = vunpack.c.h.b16 %v1252
        %v4297 = vunpack.c.l.b16 %v1253
        %v4298 = vunpack.c.h.b16 %v1253
        %v4299 = vunpack.c.l.b16 %v1254
        %v4300 = vunpack.c.h.b16 %v1254
        %v4301 = vunpack.c.l.b16 %v1255
        %v4302 = vunpack.c.h.b16 %v1255
        %v4303 = vunpack.c.l.b16 %v1256
        %v4304 = vunpack.c.h.b16 %v1256
        %v4305 = vunpack.c.l.b16 %v1257
        %v4306 = vunpack.c.h.b16 %v1257
        %v4307 = vunpack.c.l.b16 %v1258
        %v4308 = vunpack.c.h.b16 %v1258
        %v4309 = vunpack.c.l.b16 %v1259
        %v4310 = vunpack.c.h.b16 %v1259
        %v4311 = vunpack.c.l.b16 %v1260
        %v4312 = vunpack.c.h.b16 %v1260
        %v4313 = vunpack.c.l.b16 %v1261
        %v4314 = vunpack.c.h.b16 %v1261
        %v4315 = vunpack.c.l.b16 %v1262
        %v4316 = vunpack.c.h.b16 %v1262
        %v4317 = vunpack.c.l.b16 %v1263
        %v4318 = vunpack.c.h.b16 %v1263
        %v4319 = vunpack.c.l.b16 %v1264
        %v4320 = vunpack.c.h.b16 %v1264
        %v4321 = vunpack.c.l.b16 %v1265
        %v4322 = vunpack.c.h.b16 %v1265
        %v4323 = vunpack.c.l.b16 %v1266
        %v4324 = vunpack.c.h.b16 %v1266
        %v4325 = vunpack.c.l.b16 %v1267
        %v4326 = vunpack.c.h.b16 %v1267
        %v4327 = vunpack.c.l.b16 %v1268
        %v4328 = vunpack.c.h.b16 %v1268
        %v4329 = vunpack.c.l.b16 %v1269
        %v4330 = vunpack.c.h.b16 %v1269
        %v4331 = vunpack.c.l.b16 %v1270
        %v4332 = vunpack.c.h.b16 %v1270
        %v4333 = vunpack.c.l.b16 %v1271
        %v4334 = vunpack.c.h.b16 %v1271
        %v4335 = vunpack.c.l.b16 %v1272
        %v4336 = vunpack.c.h.b16 %v1272
        %v4337 = vunpack.c.l.b16 %v1273
        %v4338 = vunpack.c.h.b16 %v1273
        %v4339 = vunpack.c.l.b16 %v1274
        %v4340 = vunpack.c.h.b16 %v1274
        %v4341 = vunpack.c.l.b16 %v1275
        %v4342 = vunpack.c.h.b16 %v1275
        %v4343 = vunpack.c.l.b16 %v1276
        %v4344 = vunpack.c.h.b16 %v1276
        %v4345 = vunpack.c.l.b16 %v1277
        %v4346 = vunpack.c.h.b16 %v1277
        %v4347 = vunpack.c.l.b16 %v1278
        %v4348 = vunpack.c.h.b16 %v1278
        %v4349 = vunpack.c.l.b16 %v1279
        %v4350 = vunpack.c.h.b16 %v1279
        %v4351 = vunpack.c.l.b16 %v1280
        %v4352 = vunpack.c.h.b16 %v1280
        %v4353 = vpack.c.b16 %v2433, %v2305
        %v4354 = vpack.c.b16 %v2434, %v2306
        %v4355 = vpack.c.b16 %v2435, %v2307
        %v4356 = vpack.c.b16 %v2436, %v2308
        %v4357 = vpack.c.b16 %v2437, %v2309
        %v4358 = vpack.c.b16 %v2438, %v2310
        %v4359 = vpack.c.b16 %v2439, %v2311
        %v4360 = vpack.c.b16 %v2440, %v2312
        %v4361 = vpack.c.b16 %v2441, %v2313
        %v4362 = vpack.c.b16 %v2442, %v2314
        %v4363 = vpack.c.b16 %v2443, %v2315
        %v4364 = vpack.c.b16 %v2444, %v2316
        %v4365 = vpack.c.b16 %v2445, %v2317
        %v4366 = vpack.c.b16 %v2446, %v2318
        %v4367 = vpack.c.b16 %v2447, %v2319
        %v4368 = vpack.c.b16 %v2448, %v2320
        %v4369 = vpack.c.b16 %v2449, %v2321
        %v4370 = vpack.c.b16 %v2450, %v2322
        %v4371 = vpack.c.b16 %v2451, %v2323
        %v4372 = vpack.c.b16 %v2452, %v2324
        %v4373 = vpack.c.b16 %v2453, %v2325
        %v4374 = vpack.c.b16 %v2454, %v2326
        %v4375 = vpack.c.b16 %v2455, %v2327
        %v4376 = vpack.c.b16 %v2456, %v2328
        %v4377 = vpack.c.b16 %v2457, %v2329
        %v4378 = vpack.c.b16 %v2458, %v2330
        %v4379 = vpack.c.b16 %v2459, %v2331
        %v4380 = vpack.c.b16 %v2460, %v2332
        %v4381 = vpack.c.b16 %v2461, %v2333
        %v4382 = vpack.c.b16 %v2462, %v2334
        %v4383 = vpack.c.b16 %v2463, %v2335
        %v4384 = vpack.c.b16 %v2464, %v2336
        %v4385 = vpack.c.b16 %v2465, %v2337
        %v4386 = vpack.c.b16 %v2466, %v2338
        %v4387 = vpack.c.b16 %v2467, %v2339
        %v4388 = vpack.c.b16 %v2468, %v2340
        %v4389 = vpack.c.b16 %v2469, %v2341
        %v4390 = vpack.c.b16 %v2470, %v2342
        %v4391 = vpack.c.b16 %v2471, %v2343
        %v4392 = vpack.c.b16 %v2472, %v2344
        %v4393 = vpack.c.b16 %v2473, %v2345
        %v4394 = vpack.c.b16 %v2474, %v2346
        %v4395 = vpack.c.b16 %v2475, %v2347
        %v4396 = vpack.c.b16 %v2476, %v2348
        %v4397 = vpack.c.b16 %v2477, %v2349
        %v4398 = vpack.c.b16 %v2478, %v2350
        %v4399 = vpack.c.b16 %v2479, %v2351
        %v4400 = vpack.c.b16 %v2480, %v2352
        %v4401 = vpack.c.b16 %v2481, %v2353
        %v4402 = vpack.c.b16 %v2482, %v2354
        %v4403 = vpack.c.b16 %v2483, %v2355
        %v4404 = vpack.c.b16 %v2484, %v2356
        %v4405 = vpack.c.b16 %v2485, %v2357
        %v4406 = vpack.c.b16 %v2486, %v2358
        %v4407 = vpack.c.b16 %v2487, %v2359
        %v4408 = vpack.c.b16 %v2488, %v2360
        %v4409 = vpack.c.b16 %v2489, %v2361
        %v4410 = vpack.c.b16 %v2490, %v2362
        %v4411 = vpack.c.b16 %v2491, %v2363
        %v4412 = vpack.c.b16 %v2492, %v2364
        %v4413 = vpack.c.b16 %v2493, %v2365
        %v4414 = vpack.c.b16 %v2494, %v2366
        %v4415 = vpack.c.b16 %v2495, %v2367
        %v4416 = vpack.c.b16 %v2496, %v2368
        %v4417 = vpack.c.b16 %v2497, %v2369
        %v4418 = vpack.c.b16 %v2498, %v2370
        %v4419 = vpack.c.b16 %v2499, %v2371
        %v4420 = vpack.c.b16 %v2500, %v2372
        %v4421 = vpack.c.b16 %v2501, %v2373
        %v4422 = vpack.c.b16 %v2502, %v2374
        %v4423 = vpack.c.b16 %v2503, %v2375
        %v4424 = vpack.c.b16 %v2504, %v2376
        %v4425 = vpack.c.b16 %v2505, %v2377
        %v4426 = vpack.c.b16 %v2506, %v2378
        %v4427 = vpack.c.b16 %v2507, %v2379
        %v4428 = vpack.c.b16 %v2508, %v2380
        %v4429 = vpack.c.b16 %v2509, %v2381
        %v4430 = vpack.c.b16 %v2510, %v2382
        %v4431 = vpack.c.b16 %v2511, %v2383
        %v4432 = vpack.c.b16 %v2512, %v2384
        %v4433 = vpack.c.b16 %v2513, %v2385
        %v4434 = vpack.c.b16 %v2514, %v2386
        %v4435 = vpack.c.b16 %v2515, %v2387
        %v4436 = vpack.c.b16 %v2516, %v2388
        %v4437 = vpack.c.b16 %v2517, %v2389
        %v4438 = vpack.c.b16 %v2518, %v2390
        %v4439 = vpack.c.b16 %v2519, %v2391
        %v4440 = vpack.c.b16 %v2520, %v2392
        %v4441 = vpack.c.b16 %v2521, %v2393
        %v4442 = vpack.c.b16 %v2522, %v2394
        %v4443 = vpack.c.b16 %v2523, %v2395
        %v4444 = vpack.c.b16 %v2524, %v2396
        %v4445 = vpack.c.b16 %v2525, %v2397
        %v4446 = vpack.c.b16 %v2526, %v2398
        %v4447 = vpack.c.b16 %v2527, %v2399
        %v4448 = vpack.c.b16 %v2528, %v2400
        %v4449 = vpack.c.b16 %v2529, %v2401
        %v4450 = vpack.c.b16 %v2530, %v2402
        %v4451 = vpack.c.b16 %v2531, %v2403
        %v4452 = vpack.c.b16 %v2532, %v2404
        %v4453 = vpack.c.b16 %v2533, %v2405
        %v4454 = vpack.c.b16 %v2534, %v2406
        %v4455 = vpack.c.b16 %v2535, %v2407
        %v4456 = vpack.c.b16 %v2536, %v2408
        %v4457 = vpack.c.b16 %v2537, %v2409
        %v4458 = vpack.c.b16 %v2538, %v2410
        %v4459 = vpack.c.b16 %v2539, %v2411
        %v4460 = vpack.c.b16 %v2540, %v2412
        %v4461 = vpack.c.b16 %v2541, %v2413
        %v4462 = vpack.c.b16 %v2542, %v2414
        %v4463 = vpack.c.b16 %v2543, %v2415
        %v4464 = vpack.c.b16 %v2544, %v2416
        %v4465 = vpack.c.b16 %v2545, %v2417
        %v4466 = vpack.c.b16 %v2546, %v2418
        %v4467 = vpack.c.b16 %v2547, %v2419
        %v4468 = vpack.c.b16 %v2548, %v2420
        %v4469 = vpack.c.b16 %v2549, %v2421
        %v4470 = vpack.c.b16 %v2550, %v2422
        %v4471 = vpack.c.b16 %v2551, %v2423
        %v4472 = vpack.c.b16 %v2552, %v2424
        %v4473 = vpack.c.b16 %v2553, %v2425
        %v4474 = vpack.c.b16 %v2554, %v2426
        %v4475 = vpack.c.b16 %v2555, %v2427
        %v4476 = vpack.c.b16 %v2556, %v2428
        %v4477 = vpack.c.b16 %v2557, %v2429
        %v4478 = vpack.c.b16 %v2558, %v2430
        %v4479 = vpack.c.b16 %v2559, %v2431
        %v4480 = vpack.c.b16 %v2560, %v2432
        %v4481 = vpack.c.b16 %v2689, %v2561
        %v4482 = vpack.c.b16 %v2690, %v2562
        %v4483 = vpack.c.b16 %v2691, %v2563
        %v4484 = vpack.c.b16 %v2692, %v2564
        %v4485 = vpack.c.b16 %v2693, %v2565
        %v4486 = vpack.c.b16 %v2694, %v2566
        %v4487 = vpack.c.b16 %v2695, %v2567
        %v4488 = vpack.c.b16 %v2696, %v2568
        %v4489 = vpack.c.b16 %v2697, %v2569
        %v4490 = vpack.c.b16 %v2698, %v2570
        %v4491 = vpack.c.b16 %v2699, %v2571
        %v4492 = vpack.c.b16 %v2700, %v2572
        %v4493 = vpack.c.b16 %v2701, %v2573
        %v4494 = vpack.c.b16 %v2702, %v2574
        %v4495 = vpack.c.b16 %v2703, %v2575
        %v4496 = vpack.c.b16 %v2704, %v2576
        %v4497 = vpack.c.b16 %v2705, %v2577
        %v4498 = vpack.c.b16 %v2706, %v2578
        %v4499 = vpack.c.b16 %v2707, %v2579
        %v4500 = vpack.c.b16 %v2708, %v2580
        %v4501 = vpack.c.b16 %v2709, %v2581
        %v4502 = vpack.c.b16 %v2710, %v2582
        %v4503 = vpack.c.b16 %v2711, %v2583
        %v4504 = vpack.c.b16 %v2712, %v2584
        %v4505 = vpack.c.b16 %v2713, %v2585
        %v4506 = vpack.c.b16 %v2714, %v2586
        %v4507 = vpack.c.b16 %v2715, %v2587
        %v4508 = vpack.c.b16 %v2716, %v2588
        %v4509 = vpack.c.b16 %v2717, %v2589
        %v4510 = vpack.c.b16 %v2718, %v2590
        %v4511 = vpack.c.b16 %v2719, %v2591
        %v4512 = vpack.c.b16 %v2720, %v2592
        %v4513 = vpack.c.b16 %v2721, %v2593
        %v4514 = vpack.c.b16 %v2722, %v2594
        %v4515 = vpack.c.b16 %v2723, %v2595
        %v4516 = vpack.c.b16 %v2724, %v2596
        %v4517 = vpack.c.b16 %v2725, %v2597
        %v4518 = vpack.c.b16 %v2726, %v2598
        %v4519 = vpack.c.b16 %v2727, %v2599
        %v4520 = vpack.c.b16 %v2728, %v2600
        %v4521 = vpack.c.b16 %v2729, %v2601
        %v4522 = vpack.c.b16 %v2730, %v2602
        %v4523 = vpack.c.b16 %v2731, %v2603
        %v4524 = vpack.c.b16 %v2732, %v2604
        %v4525 = vpack.c.b16 %v2733, %v2605
        %v4526 = vpack.c.b16 %v2734, %v2606
        %v4527 = vpack.c.b16 %v2735, %v2607
        %v4528 = vpack.c.b16 %v2736, %v2608
        %v4529 = vpack.c.b16 %v2737, %v2609
        %v4530 = vpack.c.b16 %v2738, %v2610
        %v4531 = vpack.c.b16 %v2739, %v2611
        %v4532 = vpack.c.b16 %v2740, %v2612
        %v4533 = vpack.c.b16 %v2741, %v2613
        %v4534 = vpack.c.b16 %v2742, %v2614
        %v4535 = vpack.c.b16 %v2743, %v2615
        %v4536 = vpack.c.b16 %v2744, %v2616
        %v4537 = vpack.c.b16 %v2745, %v2617
        %v4538 = vpack.c.b16 %v2746, %v2618
        %v4539 = vpack.c.b16 %v2747, %v2619
        %v4540 = vpack.c.b16 %v2748, %v2620
        %v4541 = vpack.c.b16 %v2749, %v2621
        %v4542 = vpack.c.b16 %v2750, %v2622
        %v4543 = vpack.c.b16 %v2751, %v2623
        %v4544 = vpack.c.b16 %v2752, %v2624
        %v4545 = vpack.c.b16 %v2753, %v2625
        %v4546 = vpack.c.b16 %v2754, %v2626
        %v4547 = vpack.c.b16 %v2755, %v2627
        %v4548 = vpack.c.b16 %v2756, %v2628
        %v4549 = vpack.c.b16 %v2757, %v2629
        %v4550 = vpack.c.b16 %v2758, %v2630
        %v4551 = vpack.c.b16 %v2759, %v2631
        %v4552 = vpack.c.b16 %v2760, %v2632
        %v4553 = vpack.c.b16 %v2761, %v2633
        %v4554 = vpack.c.b16 %v2762, %v2634
        %v4555 = vpack.c.b16 %v2763, %v2635
        %v4556 = vpack.c.b16 %v2764, %v2636
        %v4557 = vpack.c.b16 %v2765, %v2637
        %v4558 = vpack.c.b16 %v2766, %v2638
        %v4559 = vpack.c.b16 %v2767, %v2639
        %v4560 = vpack.c.b16 %v2768, %v2640
        %v4561 = vpack.c.b16 %v2769, %v2641
        %v4562 = vpack.c.b16 %v2770, %v2642
        %v4563 = vpack.c.b16 %v2771, %v2643
        %v4564 = vpack.c.b16 %v2772, %v2644
        %v4565 = vpack.c.b16 %v2773, %v2645
        %v4566 = vpack.c.b16 %v2774, %v2646
        %v4567 = vpack.c.b16 %v2775, %v2647
        %v4568 = vpack.c.b16 %v2776, %v2648
        %v4569 = vpack.c.b16 %v2777, %v2649
        %v4570 = vpack.c.b16 %v2778, %v2650
        %v4571 = vpack.c.b16 %v2779, %v2651
        %v4572 = vpack.c.b16 %v2780, %v2652
        %v4573 = vpack.c.b16 %v2781, %v2653
        %v4574 = vpack.c.b16 %v2782, %v2654
        %v4575 = vpack.c.b16 %v2783, %v2655
        %v4576 = vpack.c.b16 %v2784, %v2656
        %v4577 = vpack.c.b16 %v2785, %v2657
        %v4578 = vpack.c.b16 %v2786, %v2658
        %v4579 = vpack.c.b16 %v2787, %v2659
        %v4580 = vpack.c.b16 %v2788, %v2660
        %v4581 = vpack.c.b16 %v2789, %v2661
        %v4582 = vpack.c.b16 %v2790, %v2662
        %v4583 = vpack.c.b16 %v2791, %v2663
        %v4584 = vpack.c.b16 %v2792, %v2664
        %v4585 = vpack.c.b16 %v2793, %v2665
        %v4586 = vpack.c.b16 %v2794, %v2666
        %v4587 = vpack.c.b16 %v2795, %v2667
        %v4588 = vpack.c.b16 %v2796, %v2668
        %v4589 = vpack.c.b16 %v2797, %v2669
        %v4590 = vpack.c.b16 %v2798, %v2670
        %v4591 = vpack.c.b16 %v2799, %v2671
        %v4592 = vpack.c.b16 %v2800, %v2672
        %v4593 = vpack.c.b16 %v2801, %v2673
        %v4594 = vpack.c.b16 %v2802, %v2674
        %v4595 = vpack.c.b16 %v2803, %v2675
        %v4596 = vpack.c.b16 %v2804, %v2676
        %v4597 = vpack.c.b16 %v2805, %v2677
        %v4598 = vpack.c.b16 %v2806, %v2678
        %v4599 = vpack.c.b16 %v2807, %v2679
        %v4600 = vpack.c.b16 %v2808, %v2680
        %v4601 = vpack.c.b16 %v2809, %v2681
        %v4602 = vpack.c.b16 %v2810, %v2682
        %v4603 = vpack.c.b16 %v2811, %v2683
        %v4604 = vpack.c.b16 %v2812, %v2684
        %v4605 = vpack.c.b16 %v2813, %v2685
        %v4606 = vpack.c.b16 %v2814, %v2686
        %v4607 = vpack.c.b16 %v2815, %v2687
        %v4608 = vpack.c.b16 %v2816, %v2688
        %v4609 = vpack.c.b16 %v2945, %v2817
        %v4610 = vpack.c.b16 %v2946, %v2818
        %v4611 = vpack.c.b16 %v2947, %v2819
        %v4612 = vpack.c.b16 %v2948, %v2820
        %v4613 = vpack.c.b16 %v2949, %v2821
        %v4614 = vpack.c.b16 %v2950, %v2822
        %v4615 = vpack.c.b16 %v2951, %v2823
        %v4616 = vpack.c.b16 %v2952, %v2824
        %v4617 = vpack.c.b16 %v2953, %v2825
        %v4618 = vpack.c.b16 %v2954, %v2826
        %v4619 = vpack.c.b16 %v2955, %v2827
        %v4620 = vpack.c.b16 %v2956, %v2828
        %v4621 = vpack.c.b16 %v2957, %v2829
        %v4622 = vpack.c.b16 %v2958, %v2830
        %v4623 = vpack.c.b16 %v2959, %v2831
        %v4624 = vpack.c.b16 %v2960, %v2832
        %v4625 = vpack.c.b16 %v2961, %v2833
        %v4626 = vpack.c.b16 %v2962, %v2834
        %v4627 = vpack.c.b16 %v2963, %v2835
        %v4628 = vpack.c.b16 %v2964, %v2836
        %v4629 = vpack.c.b16 %v2965, %v2837
        %v4630 = vpack.c.b16 %v2966, %v2838
        %v4631 = vpack.c.b16 %v2967, %v2839
        %v4632 = vpack.c.b16 %v2968, %v2840
        %v4633 = vpack.c.b16 %v2969, %v2841
        %v4634 = vpack.c.b16 %v2970, %v2842
        %v4635 = vpack.c.b16 %v2971, %v2843
        %v4636 = vpack.c.b16 %v2972, %v2844
        %v4637 = vpack.c.b16 %v2973, %v2845
        %v4638 = vpack.c.b16 %v2974, %v2846
        %v4639 = vpack.c.b16 %v2975, %v2847
        %v4640 = vpack.c.b16 %v2976, %v2848
        %v4641 = vpack.c.b16 %v2977, %v2849
        %v4642 = vpack.c.b16 %v2978, %v2850
        %v4643 = vpack.c.b16 %v2979, %v2851
        %v4644 = vpack.c.b16 %v2980, %v2852
        %v4645 = vpack.c.b16 %v2981, %v2853
        %v4646 = vpack.c.b16 %v2982, %v2854
        %v4647 = vpack.c.b16 %v2983, %v2855
        %v4648 = vpack.c.b16 %v2984, %v2856
        %v4649 = vpack.c.b16 %v2985, %v2857
        %v4650 = vpack.c.b16 %v2986, %v2858
        %v4651 = vpack.c.b16 %v2987, %v2859
        %v4652 = vpack.c.b16 %v2988, %v2860
        %v4653 = vpack.c.b16 %v2989, %v2861
        %v4654 = vpack.c.b16 %v2990, %v2862
        %v4655 = vpack.c.b16 %v2991, %v2863
        %v4656 = vpack.c.b16 %v2992, %v2864
        %v4657 = vpack.c.b16 %v2993, %v2865
        %v4658 = vpack.c.b16 %v2994, %v2866
        %v4659 = vpack.c.b16 %v2995, %v2867
        %v4660 = vpack.c.b16 %v2996, %v2868
        %v4661 = vpack.c.b16 %v2997, %v2869
        %v4662 = vpack.c.b16 %v2998, %v2870
        %v4663 = vpack.c.b16 %v2999, %v2871
        %v4664 = vpack.c.b16 %v3000, %v2872
        %v4665 = vpack.c.b16 %v3001, %v2873
        %v4666 = vpack.c.b16 %v3002, %v2874
        %v4667 = vpack.c.b16 %v3003, %v2875
        %v4668 = vpack.c.b16 %v3004, %v2876
        %v4669 = vpack.c.b16 %v3005, %v2877
        %v4670 = vpack.c.b16 %v3006, %v2878
        %v4671 = vpack.c.b16 %v3007, %v2879
        %v4672 = vpack.c.b16 %v3008, %v2880
        %v4673 = vpack.c.b16 %v3009, %v2881
        %v4674 = vpack.c.b16 %v3010, %v2882
        %v4675 = vpack.c.b16 %v3011, %v2883
        %v4676 = vpack.c.b16 %v3012, %v2884
        %v4677 = vpack.c.b16 %v3013, %v2885
        %v4678 = vpack.c.b16 %v3014, %v2886
        %v4679 = vpack.c.b16 %v3015, %v2887
        %v4680 = vpack.c.b16 %v3016, %v2888
        %v4681 = vpack.c.b16 %v3017, %v2889
        %v4682 = vpack.c.b16 %v3018, %v2890
        %v4683 = vpack.c.b16 %v3019, %v2891
        %v4684 = vpack.c.b16 %v3020, %v2892
        %v4685 = vpack.c.b16 %v3021, %v2893
        %v4686 = vpack.c.b16 %v3022, %v2894
        %v4687 = vpack.c.b16 %v3023, %v2895
        %v4688 = vpack.c.b16 %v3024, %v2896
        %v4689 = vpack.c.b16 %v3025, %v2897
        %v4690 = vpack.c.b16 %v3026, %v2898
        %v4691 = vpack.c.b16 %v3027, %v2899
        %v4692 = vpack.c.b16 %v3028, %v2900
        %v4693 = vpack.c.b16 %v3029, %v2901
        %v4694 = vpack.c.b16 %v3030, %v2902
        %v4695 = vpack.c.b16 %v3031, %v2903
        %v4696 = vpack.c.b16 %v3032, %v2904
        %v4697 = vpack.c.b16 %v3033, %v2905
        %v4698 = vpack.c.b16 %v3034, %v2906
        %v4699 = vpack.c.b16 %v3035, %v2907
        %v4700 = vpack.c.b16 %v3036, %v2908
        %v4701 = vpack.c.b16 %v3037, %v2909
        %v4702 = vpack.c.b16 %v3038, %v2910
        %v4703 = vpack.c.b16 %v3039, %v2911
        %v4704 = vpack.c.b16 %v3040, %v2912
        %v4705 = vpack.c.b16 %v3041, %v2913
        %v4706 = vpack.c.b16 %v3042, %v2914
        %v4707 = vpack.c.b16 %v3043, %v2915
        %v4708 = vpack.c.b16 %v3044, %v2916
        %v4709 = vpack.c.b16 %v3045, %v2917
        %v4710 = vpack.c.b16 %v3046, %v2918
        %v4711 = vpack.c.b16 %v3047, %v2919
        %v4712 = vpack.c.b16 %v3048, %v2920
        %v4713 = vpack.c.b16 %v3049, %v2921
        %v4714 = vpack.c.b16 %v3050, %v2922
        %v4715 = vpack.c.b16 %v3051, %v2923
        %v4716 = vpack.c.b16 %v3052, %v2924
        %v4717 = vpack.c.b16 %v3053, %v2925
        %v4718 = vpack.c.b16 %v3054, %v2926
        %v4719 = vpack.c.b16 %v3055, %v2927
        %v4720 = vpack.c.b16 %v3056, %v2928
        %v4721 = vpack.c.b16 %v3057, %v2929
        %v4722 = vpack.c.b16 %v3058, %v2930
        %v4723 = vpack.c.b16 %v3059, %v2931
        %v4724 = vpack.c.b16 %v3060, %v2932
        %v4725 = vpack.c.b16 %v3061, %v2933
        %v4726 = vpack.c.b16 %v3062, %v2934
        %v4727 = vpack.c.b16 %v3063, %v2935
        %v4728 = vpack.c.b16 %v3064, %v2936
        %v4729 = vpack.c.b16 %v3065, %v2937
        %v4730 = vpack.c.b16 %v3066, %v2938
        %v4731 = vpack.c.b16 %v3067, %v2939
        %v4732 = vpack.c.b16 %v3068, %v2940
        %v4733 = vpack.c.b16 %v3069, %v2941
        %v4734 = vpack.c.b16 %v3070, %v2942
        %v4735 = vpack.c.b16 %v3071, %v2943
        %v4736 = vpack.c.b16 %v3072, %v2944
        %v4737 = vpack.c.b16 %v3201, %v3073
        %v4738 = vpack.c.b16 %v3202, %v3074
        %v4739 = vpack.c.b16 %v3203, %v3075
        %v4740 = vpack.c.b16 %v3204, %v3076
        %v4741 = vpack.c.b16 %v3205, %v3077
        %v4742 = vpack.c.b16 %v3206, %v3078
        %v4743 = vpack.c.b16 %v3207, %v3079
        %v4744 = vpack.c.b16 %v3208, %v3080
        %v4745 = vpack.c.b16 %v3209, %v3081
        %v4746 = vpack.c.b16 %v3210, %v3082
        %v4747 = vpack.c.b16 %v3211, %v3083
        %v4748 = vpack.c.b16 %v3212, %v3084
        %v4749 = vpack.c.b16 %v3213, %v3085
        %v4750 = vpack.c.b16 %v3214, %v3086
        %v4751 = vpack.c.b16 %v3215, %v3087
        %v4752 = vpack.c.b16 %v3216, %v3088
        %v4753 = vpack.c.b16 %v3217, %v3089
        %v4754 = vpack.c.b16 %v3218, %v3090
        %v4755 = vpack.c.b16 %v3219, %v3091
        %v4756 = vpack.c.b16 %v3220, %v3092
        %v4757 = vpack.c.b16 %v3221, %v3093
        %v4758 = vpack.c.b16 %v3222, %v3094
        %v4759 = vpack.c.b16 %v3223, %v3095
        %v4760 = vpack.c.b16 %v3224, %v3096
        %v4761 = vpack.c.b16 %v3225, %v3097
        %v4762 = vpack.c.b16 %v3226, %v3098
        %v4763 = vpack.c.b16 %v3227, %v3099
        %v4764 = vpack.c.b16 %v3228, %v3100
        %v4765 = vpack.c.b16 %v3229, %v3101
        %v4766 = vpack.c.b16 %v3230, %v3102
        %v4767 = vpack.c.b16 %v3231, %v3103
        %v4768 = vpack.c.b16 %v3232, %v3104
        %v4769 = vpack.c.b16 %v3233, %v3105
        %v4770 = vpack.c.b16 %v3234, %v3106
        %v4771 = vpack.c.b16 %v3235, %v3107
        %v4772 = vpack.c.b16 %v3236, %v3108
        %v4773 = vpack.c.b16 %v3237, %v3109
        %v4774 = vpack.c.b16 %v3238, %v3110
        %v4775 = vpack.c.b16 %v3239, %v3111
        %v4776 = vpack.c.b16 %v3240, %v3112
        %v4777 = vpack.c.b16 %v3241, %v3113
        %v4778 = vpack.c.b16 %v3242, %v3114
        %v4779 = vpack.c.b16 %v3243, %v3115
        %v4780 = vpack.c.b16 %v3244, %v3116
        %v4781 = vpack.c.b16 %v3245, %v3117
        %v4782 = vpack.c.b16 %v3246, %v3118
        %v4783 = vpack.c.b16 %v3247, %v3119
        %v4784 = vpack.c.b16 %v3248, %v3120
        %v4785 = vpack.c.b16 %v3249, %v3121
        %v4786 = vpack.c.b16 %v3250, %v3122
        %v4787 = vpack.c.b16 %v3251, %v3123
        %v4788 = vpack.c.b16 %v3252, %v3124
        %v4789 = vpack.c.b16 %v3253, %v3125
        %v4790 = vpack.c.b16 %v3254, %v3126
        %v4791 = vpack.c.b16 %v3255, %v3127
        %v4792 = vpack.c.b16 %v3256, %v3128
        %v4793 = vpack.c.b16 %v3257, %v3129
        %v4794 = vpack.c.b16 %v3258, %v3130
        %v4795 = vpack.c.b16 %v3259, %v3131
        %v4796 = vpack.c.b16 %v3260, %v3132
        %v4797 = vpack.c.b16 %v3261, %v3133
        %v4798 = vpack.c.b16 %v3262, %v3134
        %v4799 = vpack.c.b16 %v3263, %v3135
        %v4800 = vpack.c.b16 %v3264, %v3136
        %v4801 = vpack.c.b16 %v3265, %v3137
        %v4802 = vpack.c.b16 %v3266, %v3138
        %v4803 = vpack.c.b16 %v3267, %v3139
        %v4804 = vpack.c.b16 %v3268, %v3140
        %v4805 = vpack.c.b16 %v3269, %v3141
        %v4806 = vpack.c.b16 %v3270, %v3142
        %v4807 = vpack.c.b16 %v3271, %v3143
        %v4808 = vpack.c.b16 %v3272, %v3144
        %v4809 = vpack.c.b16 %v3273, %v3145
        %v4810 = vpack.c.b16 %v3274, %v3146
        %v4811 = vpack.c.b16 %v3275, %v3147
        %v4812 = vpack.c.b16 %v3276, %v3148
        %v4813 = vpack.c.b16 %v3277, %v3149
        %v4814 = vpack.c.b16 %v3278, %v3150
        %v4815 = vpack.c.b16 %v3279, %v3151
        %v4816 = vpack.c.b16 %v3280, %v3152
        %v4817 = vpack.c.b16 %v3281, %v3153
        %v4818 = vpack.c.b16 %v3282, %v3154
        %v4819 = vpack.c.b16 %v3283, %v3155
        %v4820 = vpack.c.b16 %v3284, %v3156
        %v4821 = vpack.c.b16 %v3285, %v3157
        %v4822 = vpack.c.b16 %v3286, %v3158
        %v4823 = vpack.c.b16 %v3287, %v3159
        %v4824 = vpack.c.b16 %v3288, %v3160
        %v4825 = vpack.c.b16 %v3289, %v3161
        %v4826 = vpack.c.b16 %v3290, %v3162
        %v4827 = vpack.c.b16 %v3291, %v3163
        %v4828 = vpack.c.b16 %v3292, %v3164
        %v4829 = vpack.c.b16 %v3293, %v3165
        %v4830 = vpack.c.b16 %v3294, %v3166
        %v4831 = vpack.c.b16 %v3295, %v3167
        %v4832 = vpack.c.b16 %v3296, %v3168
        %v4833 = vpack.c.b16 %v3297, %v3169
        %v4834 = vpack.c.b16 %v3298, %v3170
        %v4835 = vpack.c.b16 %v3299, %v3171
        %v4836 = vpack.c.b16 %v3300, %v3172
        %v4837 = vpack.c.b16 %v3301, %v3173
        %v4838 = vpack.c.b16 %v3302, %v3174
        %v4839 = vpack.c.b16 %v3303, %v3175
        %v4840 = vpack.c.b16 %v3304, %v3176
        %v4841 = vpack.c.b16 %v3305, %v3177
        %v4842 = vpack.c.b16 %v3306, %v3178
        %v4843 = vpack.c.b16 %v3307, %v3179
        %v4844 = vpack.c.b16 %v3308, %v3180
        %v4845 = vpack.c.b16 %v3309, %v3181
        %v4846 = vpack.c.b16 %v3310, %v3182
        %v4847 = vpack.c.b16 %v3311, %v3183
        %v4848 = vpack.c.b16 %v3312, %v3184
        %v4849 = vpack.c.b16 %v3313, %v3185
        %v4850 = vpack.c.b16 %v3314, %v3186
        %v4851 = vpack.c.b16 %v3315, %v3187
        %v4852 = vpack.c.b16 %v3316, %v3188
        %v4853 = vpack.c.b16 %v3317, %v3189
        %v4854 = vpack.c.b16 %v3318, %v3190
        %v4855 = vpack.c.b16 %v3319, %v3191
        %v4856 = vpack.c.b16 %v3320, %v3192
        %v4857 = vpack.c.b16 %v3321, %v3193
        %v4858 = vpack.c.b16 %v3322, %v3194
        %v4859 = vpack.c.b16 %v3323, %v3195
        %v4860 = vpack.c.b16 %v3324, %v3196
        %v4861 = vpack.c.b16 %v3325, %v3197
        %v4862 = vpack.c.b16 %v3326, %v3198
        %v4863 = vpack.c.b16 %v3327, %v3199
        %v4864 = vpack.c.b16 %v3328, %v3200
        %v4865 = vpack.c.b16 %v3457, %v3329
        %v4866 = vpack.c.b16 %v3458, %v3330
        %v4867 = vpack.c.b16 %v3459, %v3331
        %v4868 = vpack.c.b16 %v3460, %v3332
        %v4869 = vpack.c.b16 %v3461, %v3333
        %v4870 = vpack.c.b16 %v3462, %v3334
        %v4871 = vpack.c.b16 %v3463, %v3335
        %v4872 = vpack.c.b16 %v3464, %v3336
        %v4873 = vpack.c.b16 %v3465, %v3337
        %v4874 = vpack.c.b16 %v3466, %v3338
        %v4875 = vpack.c.b16 %v3467, %v3339
        %v4876 = vpack.c.b16 %v3468, %v3340
        %v4877 = vpack.c.b16 %v3469, %v3341
        %v4878 = vpack.c.b16 %v3470, %v3342
        %v4879 = vpack.c.b16 %v3471, %v3343
        %v4880 = vpack.c.b16 %v3472, %v3344
        %v4881 = vpack.c.b16 %v3473, %v3345
        %v4882 = vpack.c.b16 %v3474, %v3346
        %v4883 = vpack.c.b16 %v3475, %v3347
        %v4884 = vpack.c.b16 %v3476, %v3348
        %v4885 = vpack.c.b16 %v3477, %v3349
        %v4886 = vpack.c.b16 %v3478, %v3350
        %v4887 = vpack.c.b16 %v3479, %v3351
        %v4888 = vpack.c.b16 %v3480, %v3352
        %v4889 = vpack.c.b16 %v3481, %v3353
        %v4890 = vpack.c.b16 %v3482, %v3354
        %v4891 = vpack.c.b16 %v3483, %v3355
        %v4892 = vpack.c.b16 %v3484, %v3356
        %v4893 = vpack.c.b16 %v3485, %v3357
        %v4894 = vpack.c.b16 %v3486, %v3358
        %v4895 = vpack.c.b16 %v3487, %v3359
        %v4896 = vpack.c.b16 %v3488, %v3360
        %v4897 = vpack.c.b16 %v3489, %v3361
        %v4898 = vpack.c.b16 %v3490, %v3362
        %v4899 = vpack.c.b16 %v3491, %v3363
        %v4900 = vpack.c.b16 %v3492, %v3364
        %v4901 = vpack.c.b16 %v3493, %v3365
        %v4902 = vpack.c.b16 %v3494, %v3366
        %v4903 = vpack.c.b16 %v3495, %v3367
        %v4904 = vpack.c.b16 %v3496, %v3368
        %v4905 = vpack.c.b16 %v3497, %v3369
        %v4906 = vpack.c.b16 %v3498, %v3370
        %v4907 = vpack.c.b16 %v3499, %v3371
        %v4908 = vpack.c.b16 %v3500, %v3372
        %v4909 = vpack.c.b16 %v3501, %v3373
        %v4910 = vpack.c.b16 %v3502, %v3374
        %v4911 = vpack.c.b16 %v3503, %v3375
        %v4912 = vpack.c.b16 %v3504, %v3376
        %v4913 = vpack.c.b16 %v3505, %v3377
        %v4914 = vpack.c.b16 %v3506, %v3378
        %v4915 = vpack.c.b16 %v3507, %v3379
        %v4916 = vpack.c.b16 %v3508, %v3380
        %v4917 = vpack.c.b16 %v3509, %v3381
        %v4918 = vpack.c.b16 %v3510, %v3382
        %v4919 = vpack.c.b16 %v3511, %v3383
        %v4920 = vpack.c.b16 %v3512, %v3384
        %v4921 = vpack.c.b16 %v3513, %v3385
        %v4922 = vpack.c.b16 %v3514, %v3386
        %v4923 = vpack.c.b16 %v3515, %v3387
        %v4924 = vpack.c.b16 %v3516, %v3388
        %v4925 = vpack.c.b16 %v3517, %v3389
        %v4926 = vpack.c.b16 %v3518, %v3390
        %v4927 = vpack.c.b16 %v3519, %v3391
        %v4928 = vpack.c.b16 %v3520, %v3392
        %v4929 = vpack.c.b16 %v3521, %v3393
        %v4930 = vpack.c.b16 %v3522, %v3394
        %v4931 = vpack.c.b16 %v3523, %v3395
        %v4932 = vpack.c.b16 %v3524, %v3396
        %v4933 = vpack.c.b16 %v3525, %v3397
        %v4934 = vpack.c.b16 %v3526, %v3398
        %v4935 = vpack.c.b16 %v3527, %v3399
        %v4936 = vpack.c.b16 %v3528, %v3400
        %v4937 = vpack.c.b16 %v3529, %v3401
        %v4938 = vpack.c.b16 %v3530, %v3402
        %v4939 = vpack.c.b16 %v3531, %v3403
        %v4940 = vpack.c.b16 %v3532, %v3404
        %v4941 = vpack.c.b16 %v3533, %v3405
        %v4942 = vpack.c.b16 %v3534, %v3406
        %v4943 = vpack.c.b16 %v3535, %v3407
        %v4944 = vpack.c.b16 %v3536, %v3408
        %v4945 = vpack.c.b16 %v3537, %v3409
        %v4946 = vpack.c.b16 %v3538, %v3410
        %v4947 = vpack.c.b16 %v3539, %v3411
        %v4948 = vpack.c.b16 %v3540, %v3412
        %v4949 = vpack.c.b16 %v3541, %v3413
        %v4950 = vpack.c.b16 %v3542, %v3414
        %v4951 = vpack.c.b16 %v3543, %v3415
        %v4952 = vpack.c.b16 %v3544, %v3416
        %v4953 = vpack.c.b16 %v3545, %v3417
        %v4954 = vpack.c.b16 %v3546, %v3418
        %v4955 = vpack.c.b16 %v3547, %v3419
        %v4956 = vpack.c.b16 %v3548, %v3420
        %v4957 = vpack.c.b16 %v3549, %v3421
        %v4958 = vpack.c.b16 %v3550, %v3422
        %v4959 = vpack.c.b16 %v3551, %v3423
        %v4960 = vpack.c.b16 %v3552, %v3424
        %v4961 = vpack.c.b16 %v3553, %v3425
        %v4962 = vpack.c.b16 %v3554, %v3426
        %v4963 = vpack.c.b16 %v3555, %v3427
        %v4964 = vpack.c.b16 %v3556, %v3428
        %v4965 = vpack.c.b16 %v3557, %v3429
        %v4966 = vpack.c.b16 %v3558, %v3430
        %v4967 = vpack.c.b16 %v3559, %v3431
        %v4968 = vpack.c.b16 %v3560, %v3432
        %v4969 = vpack.c.b16 %v3561, %v3433
        %v4970 = vpack.c.b16 %v3562, %v3434
        %v4971 = vpack.c.b16 %v3563, %v3435
        %v4972 = vpack.c.b16 %v3564, %v3436
        %v4973 = vpack.c.b16 %v3565, %v3437
        %v4974 = vpack.c.b16 %v3566, %v3438
        %v4975 = vpack.c.b16 %v3567, %v3439
        %v4976 = vpack.c.b16 %v3568, %v3440
        %v4977 = vpack.c.b16 %v3569, %v3441
        %v4978 = vpack.c.b16 %v3570, %v3442
        %v4979 = vpack.c.b16 %v3571, %v3443
        %v4980 = vpack.c.b16 %v3572, %v3444
        %v4981 = vpack.c.b16 %v3573, %v3445
        %v4982 = vpack.c.b16 %v3574, %v3446
        %v4983 = vpack.c.b16 %v3575, %v3447
        %v4984 = vpack.c.b16 %v3576, %v3448
        %v4985 = vpack.c.b16 %v3577, %v3449
        %v4986 = vpack.c.b16 %v3578, %v3450
        %v4987 = vpack.c.b16 %v3579, %v3451
        %v4988 = vpack.c.b16 %v3580, %v3452
        %v4989 = vpack.c.b16 %v3581, %v3453
        %v4990 = vpack.c.b16 %v3582, %v3454
        %v4991 = vpack.c.b16 %v3583, %v3455
        %v4992 = vpack.c.b16 %v3584, %v3456
        %v4993 = vpack.c.b16 %v3713, %v3585
        %v4994 = vpack.c.b16 %v3714, %v3586
        %v4995 = vpack.c.b16 %v3715, %v3587
        %v4996 = vpack.c.b16 %v3716, %v3588
        %v4997 = vpack.c.b16 %v3717, %v3589
        %v4998 = vpack.c.b16 %v3718, %v3590
        %v4999 = vpack.c.b16 %v3719, %v3591
        %v5000 = vpack.c.b16 %v3720, %v3592
        %v5001 = vpack.c.b16 %v3721, %v3593
        %v5002 = vpack.c.b16 %v3722, %v3594
        %v5003 = vpack.c.b16 %v3723, %v3595
        %v5004 = vpack.c.b16 %v3724, %v3596
        %v5005 = vpack.c.b16 %v3725, %v3597
        %v5006 = vpack.c.b16 %v3726, %v3598
        %v5007 = vpack.c.b16 %v3727, %v3599
        %v5008 = vpack.c.b16 %v3728, %v3600
        %v5009 = vpack.c.b16 %v3729, %v3601
        %v5010 = vpack.c.b16 %v3730, %v3602
        %v5011 = vpack.c.b16 %v3731, %v3603
        %v5012 = vpack.c.b16 %v3732, %v3604
        %v5013 = vpack.c.b16 %v3733, %v3605
        %v5014 = vpack.c.b16 %v3734, %v3606
        %v5015 = vpack.c.b16 %v3735, %v3607
        %v5016 = vpack.c.b16 %v3736, %v3608
        %v5017 = vpack.c.b16 %v3737, %v3609
        %v5018 = vpack.c.b16 %v3738, %v3610
        %v5019 = vpack.c.b16 %v3739, %v3611
        %v5020 = vpack.c.b16 %v3740, %v3612
        %v5021 = vpack.c.b16 %v3741, %v3613
        %v5022 = vpack.c.b16 %v3742, %v3614
        %v5023 = vpack.c.b16 %v3743, %v3615
        %v5024 = vpack.c.b16 %v3744, %v3616
        %v5025 = vpack.c.b16 %v3745, %v3617
        %v5026 = vpack.c.b16 %v3746, %v3618
        %v5027 = vpack.c.b16 %v3747, %v3619
        %v5028 = vpack.c.b16 %v3748, %v3620
        %v5029 = vpack.c.b16 %v3749, %v3621
        %v5030 = vpack.c.b16 %v3750, %v3622
        %v5031 = vpack.c.b16 %v3751, %v3623
        %v5032 = vpack.c.b16 %v3752, %v3624
        %v5033 = vpack.c.b16 %v3753, %v3625
        %v5034 = vpack.c.b16 %v3754, %v3626
        %v5035 = vpack.c.b16 %v3755, %v3627
        %v5036 = vpack.c.b16 %v3756, %v3628
        %v5037 = vpack.c.b16 %v3757, %v3629
        %v5038 = vpack.c.b16 %v3758, %v3630
        %v5039 = vpack.c.b16 %v3759, %v3631
        %v5040 = vpack.c.b16 %v3760, %v3632
        %v5041 = vpack.c.b16 %v3761, %v3633
        %v5042 = vpack.c.b16 %v3762, %v3634
        %v5043 = vpack.c.b16 %v3763, %v3635
        %v5044 = vpack.c.b16 %v3764, %v3636
        %v5045 = vpack.c.b16 %v3765, %v3637
        %v5046 = vpack.c.b16 %v3766, %v3638
        %v5047 = vpack.c.b16 %v3767, %v3639
        %v5048 = vpack.c.b16 %v3768, %v3640
        %v5049 = vpack.c.b16 %v3769, %v3641
        %v5050 = vpack.c.b16 %v3770, %v3642
        %v5051 = vpack.c.b16 %v3771, %v3643
        %v5052 = vpack.c.b16 %v3772, %v3644
        %v5053 = vpack.c.b16 %v3773, %v3645
        %v5054 = vpack.c.b16 %v3774, %v3646
        %v5055 = vpack.c.b16 %v3775, %v3647
        %v5056 = vpack.c.b16 %v3776, %v3648
        %v5057 = vpack.c.b16 %v3777, %v3649
        %v5058 = vpack.c.b16 %v3778, %v3650
        %v5059 = vpack.c.b16 %v3779, %v3651
        %v5060 = vpack.c.b16 %v3780, %v3652
        %v5061 = vpack.c.b16 %v3781, %v3653
        %v5062 = vpack.c.b16 %v3782, %v3654
        %v5063 = vpack.c.b16 %v3783, %v3655
        %v5064 = vpack.c.b16 %v3784, %v3656
        %v5065 = vpack.c.b16 %v3785, %v3657
        %v5066 = vpack.c.b16 %v3786, %v3658
        %v5067 = vpack.c.b16 %v3787, %v3659
        %v5068 = vpack.c.b16 %v3788, %v3660
        %v5069 = vpack.c.b16 %v3789, %v3661
        %v5070 = vpack.c.b16 %v3790, %v3662
        %v5071 = vpack.c.b16 %v3791, %v3663
        %v5072 = vpack.c.b16 %v3792, %v3664
        %v5073 = vpack.c.b16 %v3793, %v3665
        %v5074 = vpack.c.b16 %v3794, %v3666
        %v5075 = vpack.c.b16 %v3795, %v3667
        %v5076 = vpack.c.b16 %v3796, %v3668
        %v5077 = vpack.c.b16 %v3797, %v3669
        %v5078 = vpack.c.b16 %v3798, %v3670
        %v5079 = vpack.c.b16 %v3799, %v3671
        %v5080 = vpack.c.b16 %v3800, %v3672
        %v5081 = vpack.c.b16 %v3801, %v3673
        %v5082 = vpack.c.b16 %v3802, %v3674
        %v5083 = vpack.c.b16 %v3803, %v3675
        %v5084 = vpack.c.b16 %v3804, %v3676
        %v5085 = vpack.c.b16 %v3805, %v3677
        %v5086 = vpack.c.b16 %v3806, %v3678
        %v5087 = vpack.c.b16 %v3807, %v3679
        %v5088 = vpack.c.b16 %v3808, %v3680
        %v5089 = vpack.c.b16 %v3809, %v3681
        %v5090 = vpack.c.b16 %v3810, %v3682
        %v5091 = vpack.c.b16 %v3811, %v3683
        %v5092 = vpack.c.b16 %v3812, %v3684
        %v5093 = vpack.c.b16 %v3813, %v3685
        %v5094 = vpack.c.b16 %v3814, %v3686
        %v5095 = vpack.c.b16 %v3815, %v3687
        %v5096 = vpack.c.b16 %v3816, %v3688
        %v5097 = vpack.c.b16 %v3817, %v3689
        %v5098 = vpack.c.b16 %v3818, %v3690
        %v5099 = vpack.c.b16 %v3819, %v3691
        %v5100 = vpack.c.b16 %v3820, %v3692
        %v5101 = vpack.c.b16 %v3821, %v3693
        %v5102 = vpack.c.b16 %v3822, %v3694
        %v5103 = vpack.c.b16 %v3823, %v3695
        %v5104 = vpack.c.b16 %v3824, %v3696
        %v5105 = vpack.c.b16 %v3825, %v3697
        %v5106 = vpack.c.b16 %v3826, %v3698
        %v5107 = vpack.c.b16 %v3827, %v3699
        %v5108 = vpack.c.b16 %v3828, %v3700
        %v5109 = vpack.c.b16 %v3829, %v3701
        %v5110 = vpack.c.b16 %v3830, %v3702
        %v5111 = vpack.c.b16 %v3831, %v3703
        %v5112 = vpack.c.b16 %v3832, %v3704
        %v5113 = vpack.c.b16 %v3833, %v3705
        %v5114 = vpack.c.b16 %v3834, %v3706
        %v5115 = vpack.c.b16 %v3835, %v3707
        %v5116 = vpack.c.b16 %v3836, %v3708
        %v5117 = vpack.c.b16 %v3837, %v3709
        %v5118 = vpack.c.b16 %v3838, %v3710
        %v5119 = vpack.c.b16 %v3839, %v3711
        %v5120 = vpack.c.b16 %v3840, %v3712
        %v5121 = vpack.c.b16 %v3969, %v3841
        %v5122 = vpack.c.b16 %v3970, %v3842
        %v5123 = vpack.c.b16 %v3971, %v3843
        %v5124 = vpack.c.b16 %v3972, %v3844
        %v5125 = vpack.c.b16 %v3973, %v3845
        %v5126 = vpack.c.b16 %v3974, %v3846
        %v5127 = vpack.c.b16 %v3975, %v3847
        %v5128 = vpack.c.b16 %v3976, %v3848
        %v5129 = vpack.c.b16 %v3977, %v3849
        %v5130 = vpack.c.b16 %v3978, %v3850
        %v5131 = vpack.c.b16 %v3979, %v3851
        %v5132 = vpack.c.b16 %v3980, %v3852
        %v5133 = vpack.c.b16 %v3981, %v3853
        %v5134 = vpack.c.b16 %v3982, %v3854
        %v5135 = vpack.c.b16 %v3983, %v3855
        %v5136 = vpack.c.b16 %v3984, %v3856
        %v5137 = vpack.c.b16 %v3985, %v3857
        %v5138 = vpack.c.b16 %v3986, %v3858
        %v5139 = vpack.c.b16 %v3987, %v3859
        %v5140 = vpack.c.b16 %v3988, %v3860
        %v5141 = vpack.c.b16 %v3989, %v3861
        %v5142 = vpack.c.b16 %v3990, %v3862
        %v5143 = vpack.c.b16 %v3991, %v3863
        %v5144 = vpack.c.b16 %v3992, %v3864
        %v5145 = vpack.c.b16 %v3993, %v3865
        %v5146 = vpack.c.b16 %v3994, %v3866
        %v5147 = vpack.c.b16 %v3995, %v3867
        %v5148 = vpack.c.b16 %v3996, %v3868
        %v5149 = vpack.c.b16 %v3997, %v3869
        %v5150 = vpack.c.b16 %v3998, %v3870
        %v5151 = vpack.c.b16 %v3999, %v3871
        %v5152 = vpack.c.b16 %v4000, %v3872
        %v5153 = vpack.c.b16 %v4001, %v3873
        %v5154 = vpack.c.b16 %v4002, %v3874
        %v5155 = vpack.c.b16 %v4003, %v3875
        %v5156 = vpack.c.b16 %v4004, %v3876
        %v5157 = vpack.c.b16 %v4005, %v3877
        %v5158 = vpack.c.b16 %v4006, %v3878
        %v5159 = vpack.c.b16 %v4007, %v3879
        %v5160 = vpack.c.b16 %v4008, %v3880
        %v5161 = vpack.c.b16 %v4009, %v3881
        %v5162 = vpack.c.b16 %v4010, %v3882
        %v5163 = vpack.c.b16 %v4011, %v3883
        %v5164 = vpack.c.b16 %v4012, %v3884
        %v5165 = vpack.c.b16 %v4013, %v3885
        %v5166 = vpack.c.b16 %v4014, %v3886
        %v5167 = vpack.c.b16 %v4015, %v3887
        %v5168 = vpack.c.b16 %v4016, %v3888
        %v5169 = vpack.c.b16 %v4017, %v3889
        %v5170 = vpack.c.b16 %v4018, %v3890
        %v5171 = vpack.c.b16 %v4019, %v3891
        %v5172 = vpack.c.b16 %v4020, %v3892
        %v5173 = vpack.c.b16 %v4021, %v3893
        %v5174 = vpack.c.b16 %v4022, %v3894
        %v5175 = vpack.c.b16 %v4023, %v3895
        %v5176 = vpack.c.b16 %v4024, %v3896
        %v5177 = vpack.c.b16 %v4025, %v3897
        %v5178 = vpack.c.b16 %v4026, %v3898
        %v5179 = vpack.c.b16 %v4027, %v3899
        %v5180 = vpack.c.b16 %v4028, %v3900
        %v5181 = vpack.c.b16 %v4029, %v3901
        %v5182 = vpack.c.b16 %v4030, %v3902
        %v5183 = vpack.c.b16 %v4031, %v3903
        %v5184 = vpack.c.b16 %v4032, %v3904
        %v5185 = vpack.c.b16 %v4033, %v3905
        %v5186 = vpack.c.b16 %v4034, %v3906
        %v5187 = vpack.c.b16 %v4035, %v3907
        %v5188 = vpack.c.b16 %v4036, %v3908
        %v5189 = vpack.c.b16 %v4037, %v3909
        %v5190 = vpack.c.b16 %v4038, %v3910
        %v5191 = vpack.c.b16 %v4039, %v3911
        %v5192 = vpack.c.b16 %v4040, %v3912
        %v5193 = vpack.c.b16 %v4041, %v3913
        %v5194 = vpack.c.b16 %v4042, %v3914
        %v5195 = vpack.c.b16 %v4043, %v3915
        %v5196 = vpack.c.b16 %v4044, %v3916
        %v5197 = vpack.c.b16 %v4045, %v3917
        %v5198 = vpack.c.b16 %v4046, %v3918
        %v5199 = vpack.c.b16 %v4047, %v3919
        %v5200 = vpack.c.b16 %v4048, %v3920
        %v5201 = vpack.c.b16 %v4049, %v3921
        %v5202 = vpack.c.b16 %v4050, %v3922
        %v5203 = vpack.c.b16 %v4051, %v3923
        %v5204 = vpack.c.b16 %v4052, %v3924
        %v5205 = vpack.c.b16 %v4053, %v3925
        %v5206 = vpack.c.b16 %v4054, %v3926
        %v5207 = vpack.c.b16 %v4055, %v3927
        %v5208 = vpack.c.b16 %v4056, %v3928
        %v5209 = vpack.c.b16 %v4057, %v3929
        %v5210 = vpack.c.b16 %v4058, %v3930
        %v5211 = vpack.c.b16 %v4059, %v3931
        %v5212 = vpack.c.b16 %v4060, %v3932
        %v5213 = vpack.c.b16 %v4061, %v3933
        %v5214 = vpack.c.b16 %v4062, %v3934
        %v5215 = vpack.c.b16 %v4063, %v3935
        %v5216 = vpack.c.b16 %v4064, %v3936
        %v5217 = vpack.c.b16 %v4065, %v3937
        %v5218 = vpack.c.b16 %v4066, %v3938
        %v5219 = vpack.c.b16 %v4067, %v3939
        %v5220 = vpack.c.b16 %v4068, %v3940
        %v5221 = vpack.c.b16 %v4069, %v3941
        %v5222 = vpack.c.b16 %v4070, %v3942
        %v5223 = vpack.c.b16 %v4071, %v3943
        %v5224 = vpack.c.b16 %v4072, %v3944
        %v5225 = vpack.c.b16 %v4073, %v3945
        %v5226 = vpack.c.b16 %v4074, %v3946
        %v5227 = vpack.c.b16 %v4075, %v3947
        %v5228 = vpack.c.b16 %v4076, %v3948
        %v5229 = vpack.c.b16 %v4077, %v3949
        %v5230 = vpack.c.b16 %v4078, %v3950
        %v5231 = vpack.c.b16 %v4079, %v3951
        %v5232 = vpack.c.b16 %v4080, %v3952
        %v5233 = vpack.c.b16 %v4081, %v3953
        %v5234 = vpack.c.b16 %v4082, %v3954
        %v5235 = vpack.c.b16 %v4083, %v3955
        %v5236 = vpack.c.b16 %v4084, %v3956
        %v5237 = vpack.c.b16 %v4085, %v3957
        %v5238 = vpack.c.b16 %v4086, %v3958
        %v5239 = vpack.c.b16 %v4087, %v3959
        %v5240 = vpack.c.b16 %v4088, %v3960
        %v5241 = vpack.c.b16 %v4089, %v3961
        %v5242 = vpack.c.b16 %v4090, %v3962
        %v5243 = vpack.c.b16 %v4091, %v3963
        %v5244 = vpack.c.b16 %v4092, %v3964
        %v5245 = vpack.c.b16 %v4093, %v3965
        %v5246 = vpack.c.b16 %v4094, %v3966
        %v5247 = vpack.c.b16 %v4095, %v3967
        %v5248 = vpack.c.b16 %v4096, %v3968
        %v5249 = vpack.c.b16 %v4225, %v4097
        %v5250 = vpack.c.b16 %v4226, %v4098
        %v5251 = vpack.c.b16 %v4227, %v4099
        %v5252 = vpack.c.b16 %v4228, %v4100
        %v5253 = vpack.c.b16 %v4229, %v4101
        %v5254 = vpack.c.b16 %v4230, %v4102
        %v5255 = vpack.c.b16 %v4231, %v4103
        %v5256 = vpack.c.b16 %v4232, %v4104
        %v5257 = vpack.c.b16 %v4233, %v4105
        %v5258 = vpack.c.b16 %v4234, %v4106
        %v5259 = vpack.c.b16 %v4235, %v4107
        %v5260 = vpack.c.b16 %v4236, %v4108
        %v5261 = vpack.c.b16 %v4237, %v4109
        %v5262 = vpack.c.b16 %v4238, %v4110
        %v5263 = vpack.c.b16 %v4239, %v4111
        %v5264 = vpack.c.b16 %v4240, %v4112
        %v5265 = vpack.c.b16 %v4241, %v4113
        %v5266 = vpack.c.b16 %v4242, %v4114
        %v5267 = vpack.c.b16 %v4243, %v4115
        %v5268 = vpack.c.b16 %v4244, %v4116
        %v5269 = vpack.c.b16 %v4245, %v4117
        %v5270 = vpack.c.b16 %v4246, %v4118
        %v5271 = vpack.c.b16 %v4247, %v4119
        %v5272 = vpack.c.b16 %v4248, %v4120
        %v5273 = vpack.c.b16 %v4249, %v4121
        %v5274 = vpack.c.b16 %v4250, %v4122
        %v5275 = vpack.c.b16 %v4251, %v4123
        %v5276 = vpack.c.b16 %v4252, %v4124
        %v5277 = vpack.c.b16 %v4253, %v4125
        %v5278 = vpack.c.b16 %v4254, %v4126
        %v5279 = vpack.c.b16 %v4255, %v4127
        %v5280 = vpack.c.b16 %v4256, %v4128
        %v5281 = vpack.c.b16 %v4257, %v4129
        %v5282 = vpack.c.b16 %v4258, %v4130
        %v5283 = vpack.c.b16 %v4259, %v4131
        %v5284 = vpack.c.b16 %v4260, %v4132
        %v5285 = vpack.c.b16 %v4261, %v4133
        %v5286 = vpack.c.b16 %v4262, %v4134
        %v5287 = vpack.c.b16 %v4263, %v4135
        %v5288 = vpack.c.b16 %v4264, %v4136
        %v5289 = vpack.c.b16 %v4265, %v4137
        %v5290 = vpack.c.b16 %v4266, %v4138
        %v5291 = vpack.c.b16 %v4267, %v4139
        %v5292 = vpack.c.b16 %v4268, %v4140
        %v5293 = vpack.c.b16 %v4269, %v4141
        %v5294 = vpack.c.b16 %v4270, %v4142
        %v5295 = vpack.c.b16 %v4271, %v4143
        %v5296 = vpack.c.b16 %v4272, %v4144
        %v5297 = vpack.c.b16 %v4273, %v4145
        %v5298 = vpack.c.b16 %v4274, %v4146
        %v5299 = vpack.c.b16 %v4275, %v4147
        %v5300 = vpack.c.b16 %v4276, %v4148
        %v5301 = vpack.c.b16 %v4277, %v4149
        %v5302 = vpack.c.b16 %v4278, %v4150
        %v5303 = vpack.c.b16 %v4279, %v4151
        %v5304 = vpack.c.b16 %v4280, %v4152
        %v5305 = vpack.c.b16 %v4281, %v4153
        %v5306 = vpack.c.b16 %v4282, %v4154
        %v5307 = vpack.c.b16 %v4283, %v4155
        %v5308 = vpack.c.b16 %v4284, %v4156
        %v5309 = vpack.c.b16 %v4285, %v4157
        %v5310 = vpack.c.b16 %v4286, %v4158
        %v5311 = vpack.c.b16 %v4287, %v4159
        %v5312 = vpack.c.b16 %v4288, %v4160
        %v5313 = vpack.c.b16 %v4289, %v4161
        %v5314 = vpack.c.b16 %v4290, %v4162
        %v5315 = vpack.c.b16 %v4291, %v4163
        %v5316 = vpack.c.b16 %v4292, %v4164
        %v5317 = vpack.c.b16 %v4293, %v4165
        %v5318 = vpack.c.b16 %v4294, %v4166
        %v5319 = vpack.c.b16 %v4295, %v4167
        %v5320 = vpack.c.b16 %v4296, %v4168
        %v5321 = vpack.c.b16 %v4297, %v4169
        %v5322 = vpack.c.b16 %v4298, %v4170
        %v5323 = vpack.c.b16 %v4299, %v4171
        %v5324 = vpack.c.b16 %v4300, %v4172
        %v5325 = vpack.c.b16 %v4301, %v4173
        %v5326 = vpack.c.b16 %v4302, %v4174
        %v5327 = vpack.c.b16 %v4303, %v4175
        %v5328 = vpack.c.b16 %v4304, %v4176
        %v5329 = vpack.c.b16 %v4305, %v4177
        %v5330 = vpack.c.b16 %v4306, %v4178
        %v5331 = vpack.c.b16 %v4307, %v4179
        %v5332 = vpack.c.b16 %v4308, %v4180
        %v5333 = vpack.c.b16 %v4309, %v4181
        %v5334 = vpack.c.b16 %v4310, %v4182
        %v5335 = vpack.c.b16 %v4311, %v4183
        %v5336 = vpack.c.b16 %v4312, %v4184
        %v5337 = vpack.c.b16 %v4313, %v4185
        %v5338 = vpack.c.b16 %v4314, %v4186
        %v5339 = vpack.c.b16 %v4315, %v4187
        %v5340 = vpack.c.b16 %v4316, %v4188
        %v5341 = vpack.c.b16 %v4317, %v4189
        %v5342 = vpack.c.b16 %v4318, %v4190
        %v5343 = vpack.c.b16 %v4319, %v4191
        %v5344 = vpack.c.b16 %v4320, %v4192
        %v5345 = vpack.c.b16 %v4321, %v4193
        %v5346 = vpack.c.b16 %v4322, %v4194
        %v5347 = vpack.c.b16 %v4323, %v4195
        %v5348 = vpack.c.b16 %v4324, %v4196
        %v5349 = vpack.c.b16 %v4325, %v4197
        %v5350 = vpack.c.b16 %v4326, %v4198
        %v5351 = vpack.c.b16 %v4327, %v4199
        %v5352 = vpack.c.b16 %v4328, %v4200
        %v5353 = vpack.c.b16 %v4329, %v4201
        %v5354 = vpack.c.b16 %v4330, %v4202
        %v5355 = vpack.c.b16 %v4331, %v4203
        %v5356 = vpack.c.b16 %v4332, %v4204
        %v5357 = vpack.c.b16 %v4333, %v4205
        %v5358 = vpack.c.b16 %v4334, %v4206
        %v5359 = vpack.c.b16 %v4335, %v4207
        %v5360 = vpack.c.b16 %v4336, %v4208
        %v5361 = vpack.c.b16 %v4337, %v4209
        %v5362 = vpack.c.b16 %v4338, %v4210
        %v5363 = vpack.c.b16 %v4339, %v4211
        %v5364 = vpack.c.b16 %v4340, %v4212
        %v5365 = vpack.c.b16 %v4341, %v4213
        %v5366 = vpack.c.b16 %v4342, %v4214
        %v5367 = vpack.c.b16 %v4343, %v4215
        %v5368 = vpack.c.b16 %v4344, %v4216
        %v5369 = vpack.c.b16 %v4345, %v4217
        %v5370 = vpack.c.b16 %v4346, %v4218
        %v5371 = vpack.c.b16 %v4347, %v4219
        %v5372 = vpack.c.b16 %v4348, %v4220
        %v5373 = vpack.c.b16 %v4349, %v4221
        %v5374 = vpack.c.b16 %v4350, %v4222
        %v5375 = vpack.c.b16 %v4351, %v4223
        %v5376 = vpack.c.b16 %v4352, %v4224
        %6401 = vmatprep.subr.bf16.mxu0 %v4354
        %6402 = vmatpush1.bf16.msra.mxu0 %v4353
        %6403 = vmatprep.subr.bf16.mxu0 %v4482
        %6404 = vmatpush1.bf16.msra.mxu0 %v4481
        %6405 = vmatprep.subr.bf16.mxu0 %v4610
        %6406 = vmatpush1.bf16.msra.mxu0 %v4609
        %6407 = vmatprep.subr.bf16.mxu0 %v4738
        %6408 = vmatpush1.bf16.msra.mxu0 %v4737
        %6409 = vmatprep.subr.bf16.mxu0 %v4866
        %6410 = vmatpush1.bf16.msra.mxu0 %v4865
        %6411 = vmatprep.subr.bf16.mxu0 %v4994
        %6412 = vmatpush1.bf16.msra.mxu0 %v4993
        %6413 = vmatprep.subr.bf16.mxu0 %v5122
        %6414 = vmatpush1.bf16.msra.mxu0 %v5121
        %6415 = vmatprep.subr.bf16.mxu0 %v5250
        %6416 = vmatpush1.bf16.msra.mxu0 %v5249
        %6417 = vmatprep.subr.bf16.mxu0 0
        %6418 = vmatpush1.bf16.msra.mxu0 0
        %6419 = vmatprep.subr.bf16.mxu0 0
        %6420 = vmatpush1.bf16.msra.mxu0 0
        %6421 = vmatprep.subr.bf16.mxu0 0
        %6422 = vmatpush1.bf16.msra.mxu0 0
        %6423 = vmatprep.subr.bf16.mxu0 0
        %6424 = vmatpush1.bf16.msra.mxu0 0
        %6425 = vmatprep.subr.bf16.mxu0 0
        %6426 = vmatpush1.bf16.msra.mxu0 0
        %6427 = vmatprep.subr.bf16.mxu0 0
        %6428 = vmatpush1.bf16.msra.mxu0 0
        %6429 = vmatprep.subr.bf16.mxu0 0
        %6430 = vmatpush1.bf16.msra.mxu0 0
        %6431 = vmatprep.subr.bf16.mxu0 0
        %6432 = vmatpush1.bf16.msra.mxu0 0
        %6433 = vmatprep.mubr.bf16.mxu0 0
        %6434 = vmatmul.mubr.bf16.gmra.mrb[0].mxu0 %v256
        %v6435 = vpop.f32.mrb[0].mxu0
        %v6436 = vadd.f32 0.0, %v6435
        %v6437 = vpop.f32.mrb[0].mxu0
        %v6438 = vadd.f32 0.0, %v6437
        %v6439 = vpop.f32.mrb[0].mxu0
        %v6440 = vadd.f32 0.0, %v6439
        %v6441 = vpop.f32.mrb[0].mxu0
        %v6442 = vadd.f32 0.0, %v6441
        %6443 = vdwg.mxu0
        %6444 = vmatprep.subr.bf16.mxu0 %v4356
        %6445 = vmatpush1.bf16.msra.mxu0 %v4355
        %6446 = vmatprep.subr.bf16.mxu0 %v4484
        %6447 = vmatpush1.bf16.msra.mxu0 %v4483
        %6448 = vmatprep.subr.bf16.mxu0 %v4612
        %6449 = vmatpush1.bf16.msra.mxu0 %v4611
        %6450 = vmatprep.subr.bf16.mxu0 %v4740
        %6451 = vmatpush1.bf16.msra.mxu0 %v4739
        %6452 = vmatprep.subr.bf16.mxu0 %v4868
        %6453 = vmatpush1.bf16.msra.mxu0 %v4867
        %6454 = vmatprep.subr.bf16.mxu0 %v4996
        %6455 = vmatpush1.bf16.msra.mxu0 %v4995
        %6456 = vmatprep.subr.bf16.mxu0 %v5124
        %6457 = vmatpush1.bf16.msra.mxu0 %v5123
        %6458 = vmatprep.subr.bf16.mxu0 %v5252
        %6459 = vmatpush1.bf16.msra.mxu0 %v5251
        %6460 = vmatprep.subr.bf16.mxu0 0
        %6461 = vmatpush1.bf16.msra.mxu0 0
        %6462 = vmatprep.subr.bf16.mxu0 0
        %6463 = vmatpush1.bf16.msra.mxu0 0
        %6464 = vmatprep.subr.bf16.mxu0 0
        %6465 = vmatpush1.bf16.msra.mxu0 0
        %6466 = vmatprep.subr.bf16.mxu0 0
        %6467 = vmatpush1.bf16.msra.mxu0 0
        %6468 = vmatprep.subr.bf16.mxu0 0
        %6469 = vmatpush1.bf16.msra.mxu0 0
        %6470 = vmatprep.subr.bf16.mxu0 0
        %6471 = vmatpush1.bf16.msra.mxu0 0
        %6472 = vmatprep.subr.bf16.mxu0 0
        %6473 = vmatpush1.bf16.msra.mxu0 0
        %6474 = vmatprep.subr.bf16.mxu0 0
        %6475 = vmatpush1.bf16.msra.mxu0 0
        %6476 = vmatprep.mubr.bf16.mxu0 0
        %6477 = vmatmul.mubr.bf16.gmra.mrb[0].mxu0 %v256
        %v6478 = vpop.f32.mrb[0].mxu0
        %v6479 = vadd.f32 0.0, %v6478
        %v6480 = vpop.f32.mrb[0].mxu0
        %v6481 = vadd.f32 0.0, %v6480
        %v6482 = vpop.f32.mrb[0].mxu0
        %v6483 = vadd.f32 0.0, %v6482
        %v6484 = vpop.f32.mrb[0].mxu0
        %v6485 = vadd.f32 0.0, %v6484
        %6486 = vdwg.mxu0
        %6487 = vmatprep.subr.bf16.mxu0 %v4358
        %6488 = vmatpush1.bf16.msra.mxu0 %v4357
        %6489 = vmatprep.subr.bf16.mxu0 %v4486
        %6490 = vmatpush1.bf16.msra.mxu0 %v4485
        %6491 = vmatprep.subr.bf16.mxu0 %v4614
        %6492 = vmatpush1.bf16.msra.mxu0 %v4613
        %6493 = vmatprep.subr.bf16.mxu0 %v4742
        %6494 = vmatpush1.bf16.msra.mxu0 %v4741
        %6495 = vmatprep.subr.bf16.mxu0 %v4870
        %6496 = vmatpush1.bf16.msra.mxu0 %v4869
        %6497 = vmatprep.subr.bf16.mxu0 %v4998
        %6498 = vmatpush1.bf16.msra.mxu0 %v4997
        %6499 = vmatprep.subr.bf16.mxu0 %v5126
        %6500 = vmatpush1.bf16.msra.mxu0 %v5125
        %6501 = vmatprep.subr.bf16.mxu0 %v5254
        %6502 = vmatpush1.bf16.msra.mxu0 %v5253
        %6503 = vmatprep.subr.bf16.mxu0 0
        %6504 = vmatpush1.bf16.msra.mxu0 0
        %6505 = vmatprep.subr.bf16.mxu0 0
        %6506 = vmatpush1.bf16.msra.mxu0 0
        %6507 = vmatprep.subr.bf16.mxu0 0
        %6508 = vmatpush1.bf16.msra.mxu0 0
        %6509 = vmatprep.subr.bf16.mxu0 0
        %6510 = vmatpush1.bf16.msra.mxu0 0
        %6511 = vmatprep.subr.bf16.mxu0 0
        %6512 = vmatpush1.bf16.msra.mxu0 0
        %6513 = vmatprep.subr.bf16.mxu0 0
        %6514 = vmatpush1.bf16.msra.mxu0 0
        %6515 = vmatprep.subr.bf16.mxu0 0
        %6516 = vmatpush1.bf16.msra.mxu0 0
        %6517 = vmatprep.subr.bf16.mxu0 0
        %6518 = vmatpush1.bf16.msra.mxu0 0
        %6519 = vmatprep.mubr.bf16.mxu0 0
        %6520 = vmatmul.mubr.bf16.gmra.mrb[0].mxu0 %v256
        %v6521 = vpop.f32.mrb[0].mxu0
        %v6522 = vadd.f32 0.0, %v6521
        %v6523 = vpop.f32.mrb[0].mxu0
        %v6524 = vadd.f32 0.0, %v6523
        %v6525 = vpop.f32.mrb[0].mxu0
        %v6526 = vadd.f32 0.0, %v6525
        %v6527 = vpop.f32.mrb[0].mxu0
        %v6528 = vadd.f32 0.0, %v6527
        %6529 = vdwg.mxu0
        %6530 = vmatprep.subr.bf16.mxu0 %v4360
        %6531 = vmatpush1.bf16.msra.mxu0 %v4359
        %6532 = vmatprep.subr.bf16.mxu0 %v4488
        %6533 = vmatpush1.bf16.msra.mxu0 %v4487
        %6534 = vmatprep.subr.bf16.mxu0 %v4616
        %6535 = vmatpush1.bf16.msra.mxu0 %v4615
        %6536 = vmatprep.subr.bf16.mxu0 %v4744
        %6537 = vmatpush1.bf16.msra.mxu0 %v4743
        %6538 = vmatprep.subr.bf16.mxu0 %v4872
        %6539 = vmatpush1.bf16.msra.mxu0 %v4871
        %6540 = vmatprep.subr.bf16.mxu0 %v5000
        %6541 = vmatpush1.bf16.msra.mxu0 %v4999
        %6542 = vmatprep.subr.bf16.mxu0 %v5128
        %6543 = vmatpush1.bf16.msra.mxu0 %v5127
        %6544 = vmatprep.subr.bf16.mxu0 %v5256
        %6545 = vmatpush1.bf16.msra.mxu0 %v5255
        %6546 = vmatprep.subr.bf16.mxu0 0
        %6547 = vmatpush1.bf16.msra.mxu0 0
        %6548 = vmatprep.subr.bf16.mxu0 0
        %6549 = vmatpush1.bf16.msra.mxu0 0
        %6550 = vmatprep.subr.bf16.mxu0 0
        %6551 = vmatpush1.bf16.msra.mxu0 0
        %6552 = vmatprep.subr.bf16.mxu0 0
        %6553 = vmatpush1.bf16.msra.mxu0 0
        %6554 = vmatprep.subr.bf16.mxu0 0
        %6555 = vmatpush1.bf16.msra.mxu0 0
        %6556 = vmatprep.subr.bf16.mxu0 0
        %6557 = vmatpush1.bf16.msra.mxu0 0
        %6558 = vmatprep.subr.bf16.mxu0 0
        %6559 = vmatpush1.bf16.msra.mxu0 0
        %6560 = vmatprep.subr.bf16.mxu0 0
        %6561 = vmatpush1.bf16.msra.mxu0 0
        %6562 = vmatprep.mubr.bf16.mxu0 0
        %6563 = vmatmul.mubr.bf16.gmra.mrb[0].mxu0 %v256
        %v6564 = vpop.f32.mrb[0].mxu0
        %v6565 = vadd.f32 0.0, %v6564
        %v6566 = vpop.f32.mrb[0].mxu0
        %v6567 = vadd.f32 0.0, %v6566
        %v6568 = vpop.f32.mrb[0].mxu0
        %v6569 = vadd.f32 0.0, %v6568
        %v6570 = vpop.f32.mrb[0].mxu0
        %v6571 = vadd.f32 0.0, %v6570
        %6572 = vdwg.mxu0
        %6573 = vmatprep.subr.bf16.mxu0 %v4362
        %6574 = vmatpush1.bf16.msra.mxu0 %v4361
        %6575 = vmatprep.subr.bf16.mxu0 %v4490
        %6576 = vmatpush1.bf16.msra.mxu0 %v4489
        %6577 = vmatprep.subr.bf16.mxu0 %v4618
        %6578 = vmatpush1.bf16.msra.mxu0 %v4617
        %6579 = vmatprep.subr.bf16.mxu0 %v4746
        %6580 = vmatpush1.bf16.msra.mxu0 %v4745
        %6581 = vmatprep.subr.bf16.mxu0 %v4874
        %6582 = vmatpush1.bf16.msra.mxu0 %v4873
        %6583 = vmatprep.subr.bf16.mxu0 %v5002
        %6584 = vmatpush1.bf16.msra.mxu0 %v5001
        %6585 = vmatprep.subr.bf16.mxu0 %v5130
        %6586 = vmatpush1.bf16.msra.mxu0 %v5129
        %6587 = vmatprep.subr.bf16.mxu0 %v5258
        %6588 = vmatpush1.bf16.msra.mxu0 %v5257
        %6589 = vmatprep.subr.bf16.mxu0 0
        %6590 = vmatpush1.bf16.msra.mxu0 0
        %6591 = vmatprep.subr.bf16.mxu0 0
        %6592 = vmatpush1.bf16.msra.mxu0 0
        %6593 = vmatprep.subr.bf16.mxu0 0
        %6594 = vmatpush1.bf16.msra.mxu0 0
        %6595 = vmatprep.subr.bf16.mxu0 0
        %6596 = vmatpush1.bf16.msra.mxu0 0
        %6597 = vmatprep.subr.bf16.mxu0 0
        %6598 = vmatpush1.bf16.msra.mxu0 0
        %6599 = vmatprep.subr.bf16.mxu0 0
        %6600 = vmatpush1.bf16.msra.mxu0 0
        %6601 = vmatprep.subr.bf16.mxu0 0
        %6602 = vmatpush1.bf16.msra.mxu0 0
        %6603 = vmatprep.subr.bf16.mxu0 0
        %6604 = vmatpush1.bf16.msra.mxu0 0
        %6605 = vmatprep.mubr.bf16.mxu0 0
        %6606 = vmatmul.mubr.bf16.gmra.mrb[0].mxu0 %v256
        %v6607 = vpop.f32.mrb[0].mxu0
        %v6608 = vadd.f32 0.0, %v6607
        %v6609 = vpop.f32.mrb[0].mxu0
        %v6610 = vadd.f32 0.0, %v6609
        %v6611 = vpop.f32.mrb[0].mxu0
        %v6612 = vadd.f32 0.0, %v6611
        %v6613 = vpop.f32.mrb[0].mxu0
        %v6614 = vadd.f32 0.0, %v6613
        %6615 = vdwg.mxu0
        %6616 = vmatprep.subr.bf16.mxu0 %v4364
        %6617 = vmatpush1.bf16.msra.mxu0 %v4363
        %6618 = vmatprep.subr.bf16.mxu0 %v4492
        %6619 = vmatpush1.bf16.msra.mxu0 %v4491
        %6620 = vmatprep.subr.bf16.mxu0 %v4620
        %6621 = vmatpush1.bf16.msra.mxu0 %v4619
        %6622 = vmatprep.subr.bf16.mxu0 %v4748
        %6623 = vmatpush1.bf16.msra.mxu0 %v4747
        %6624 = vmatprep.subr.bf16.mxu0 %v4876
        %6625 = vmatpush1.bf16.msra.mxu0 %v4875
        %6626 = vmatprep.subr.bf16.mxu0 %v5004
        %6627 = vmatpush1.bf16.msra.mxu0 %v5003
        %6628 = vmatprep.subr.bf16.mxu0 %v5132
        %6629 = vmatpush1.bf16.msra.mxu0 %v5131
        %6630 = vmatprep.subr.bf16.mxu0 %v5260
        %6631 = vmatpush1.bf16.msra.mxu0 %v5259
        %6632 = vmatprep.subr.bf16.mxu0 0
        %6633 = vmatpush1.bf16.msra.mxu0 0
        %6634 = vmatprep.subr.bf16.mxu0 0
        %6635 = vmatpush1.bf16.msra.mxu0 0
        %6636 = vmatprep.subr.bf16.mxu0 0
        %6637 = vmatpush1.bf16.msra.mxu0 0
        %6638 = vmatprep.subr.bf16.mxu0 0
        %6639 = vmatpush1.bf16.msra.mxu0 0
        %6640 = vmatprep.subr.bf16.mxu0 0
        %6641 = vmatpush1.bf16.msra.mxu0 0
        %6642 = vmatprep.subr.bf16.mxu0 0
        %6643 = vmatpush1.bf16.msra.mxu0 0
        %6644 = vmatprep.subr.bf16.mxu0 0
        %6645 = vmatpush1.bf16.msra.mxu0 0
        %6646 = vmatprep.subr.bf16.mxu0 0
        %6647 = vmatpush1.bf16.msra.mxu0 0
        %6648 = vmatprep.mubr.bf16.mxu0 0
        %6649 = vmatmul.mubr.bf16.gmra.mrb[0].mxu0 %v256
        %v6650 = vpop.f32.mrb[0].mxu0
        %v6651 = vadd.f32 0.0, %v6650
        %v6652 = vpop.f32.mrb[0].mxu0
        %v6653 = vadd.f32 0.0, %v6652
        %v6654 = vpop.f32.mrb[0].mxu0
        %v6655 = vadd.f32 0.0, %v6654
        %v6656 = vpop.f32.mrb[0].mxu0
        %v6657 = vadd.f32 0.0, %v6656
        %6658 = vdwg.mxu0
        %6659 = vmatprep.subr.bf16.mxu0 %v4366
        %6660 = vmatpush1.bf16.msra.mxu0 %v4365
        %6661 = vmatprep.subr.bf16.mxu0 %v4494
        %6662 = vmatpush1.bf16.msra.mxu0 %v4493
        %6663 = vmatprep.subr.bf16.mxu0 %v4622
        %6664 = vmatpush1.bf16.msra.mxu0 %v4621
        %6665 = vmatprep.subr.bf16.mxu0 %v4750
        %6666 = vmatpush1.bf16.msra.mxu0 %v4749
        %6667 = vmatprep.subr.bf16.mxu0 %v4878
        %6668 = vmatpush1.bf16.msra.mxu0 %v4877
        %6669 = vmatprep.subr.bf16.mxu0 %v5006
        %6670 = vmatpush1.bf16.msra.mxu0 %v5005
        %6671 = vmatprep.subr.bf16.mxu0 %v5134
        %6672 = vmatpush1.bf16.msra.mxu0 %v5133
        %6673 = vmatprep.subr.bf16.mxu0 %v5262
        %6674 = vmatpush1.bf16.msra.mxu0 %v5261
        %6675 = vmatprep.subr.bf16.mxu0 0
        %6676 = vmatpush1.bf16.msra.mxu0 0
        %6677 = vmatprep.subr.bf16.mxu0 0
        %6678 = vmatpush1.bf16.msra.mxu0 0
        %6679 = vmatprep.subr.bf16.mxu0 0
        %6680 = vmatpush1.bf16.msra.mxu0 0
        %6681 = vmatprep.subr.bf16.mxu0 0
        %6682 = vmatpush1.bf16.msra.mxu0 0
        %6683 = vmatprep.subr.bf16.mxu0 0
        %6684 = vmatpush1.bf16.msra.mxu0 0
        %6685 = vmatprep.subr.bf16.mxu0 0
        %6686 = vmatpush1.bf16.msra.mxu0 0
        %6687 = vmatprep.subr.bf16.mxu0 0
        %6688 = vmatpush1.bf16.msra.mxu0 0
        %6689 = vmatprep.subr.bf16.mxu0 0
        %6690 = vmatpush1.bf16.msra.mxu0 0
        %6691 = vmatprep.mubr.bf16.mxu0 0
        %6692 = vmatmul.mubr.bf16.gmra.mrb[0].mxu0 %v256
        %v6693 = vpop.f32.mrb[0].mxu0
        %v6694 = vadd.f32 0.0, %v6693
        %v6695 = vpop.f32.mrb[0].mxu0
        %v6696 = vadd.f32 0.0, %v6695
        %v6697 = vpop.f32.mrb[0].mxu0
        %v6698 = vadd.f32 0.0, %v6697
        %v6699 = vpop.f32.mrb[0].mxu0
        %v6700 = vadd.f32 0.0, %v6699
        %6701 = vdwg.mxu0
        %6702 = vmatprep.subr.bf16.mxu0 %v4368
        %6703 = vmatpush1.bf16.msra.mxu0 %v4367
        %6704 = vmatprep.subr.bf16.mxu0 %v4496
        %6705 = vmatpush1.bf16.msra.mxu0 %v4495
        %6706 = vmatprep.subr.bf16.mxu0 %v4624
        %6707 = vmatpush1.bf16.msra.mxu0 %v4623
        %6708 = vmatprep.subr.bf16.mxu0 %v4752
        %6709 = vmatpush1.bf16.msra.mxu0 %v4751
        %6710 = vmatprep.subr.bf16.mxu0 %v4880
        %6711 = vmatpush1.bf16.msra.mxu0 %v4879
        %6712 = vmatprep.subr.bf16.mxu0 %v5008
        %6713 = vmatpush1.bf16.msra.mxu0 %v5007
        %6714 = vmatprep.subr.bf16.mxu0 %v5136
        %6715 = vmatpush1.bf16.msra.mxu0 %v5135
        %6716 = vmatprep.subr.bf16.mxu0 %v5264
        %6717 = vmatpush1.bf16.msra.mxu0 %v5263
        %6718 = vmatprep.subr.bf16.mxu0 0
        %6719 = vmatpush1.bf16.msra.mxu0 0
        %6720 = vmatprep.subr.bf16.mxu0 0
        %6721 = vmatpush1.bf16.msra.mxu0 0
        %6722 = vmatprep.subr.bf16.mxu0 0
        %6723 = vmatpush1.bf16.msra.mxu0 0
        %6724 = vmatprep.subr.bf16.mxu0 0
        %6725 = vmatpush1.bf16.msra.mxu0 0
        %6726 = vmatprep.subr.bf16.mxu0 0
        %6727 = vmatpush1.bf16.msra.mxu0 0
        %6728 = vmatprep.subr.bf16.mxu0 0
        %6729 = vmatpush1.bf16.msra.mxu0 0
        %6730 = vmatprep.subr.bf16.mxu0 0
        %6731 = vmatpush1.bf16.msra.mxu0 0
        %6732 = vmatprep.subr.bf16.mxu0 0
        %6733 = vmatpush1.bf16.msra.mxu0 0
        %6734 = vmatprep.mubr.bf16.mxu0 0
        %6735 = vmatmul.mubr.bf16.gmra.mrb[0].mxu0 %v256
        %v6736 = vpop.f32.mrb[0].mxu0
        %v6737 = vadd.f32 0.0, %v6736
        %v6738 = vpop.f32.mrb[0].mxu0
        %v6739 = vadd.f32 0.0, %v6738
        %v6740 = vpop.f32.mrb[0].mxu0
        %v6741 = vadd.f32 0.0, %v6740
        %v6742 = vpop.f32.mrb[0].mxu0
        %v6743 = vadd.f32 0.0, %v6742
        %6744 = vdwg.mxu0
        %6745 = vmatprep.subr.bf16.mxu0 %v4370
        %6746 = vmatpush1.bf16.msra.mxu0 %v4369
        %6747 = vmatprep.subr.bf16.mxu0 %v4498
        %6748 = vmatpush1.bf16.msra.mxu0 %v4497
        %6749 = vmatprep.subr.bf16.mxu0 %v4626
        %6750 = vmatpush1.bf16.msra.mxu0 %v4625
        %6751 = vmatprep.subr.bf16.mxu0 %v4754
        %6752 = vmatpush1.bf16.msra.mxu0 %v4753
        %6753 = vmatprep.subr.bf16.mxu0 %v4882
        %6754 = vmatpush1.bf16.msra.mxu0 %v4881
        %6755 = vmatprep.subr.bf16.mxu0 %v5010
        %6756 = vmatpush1.bf16.msra.mxu0 %v5009
        %6757 = vmatprep.subr.bf16.mxu0 %v5138
        %6758 = vmatpush1.bf16.msra.mxu0 %v5137
        %6759 = vmatprep.subr.bf16.mxu0 %v5266
        %6760 = vmatpush1.bf16.msra.mxu0 %v5265
        %6761 = vmatprep.subr.bf16.mxu0 0
        %6762 = vmatpush1.bf16.msra.mxu0 0
        %6763 = vmatprep.subr.bf16.mxu0 0
        %6764 = vmatpush1.bf16.msra.mxu0 0
        %6765 = vmatprep.subr.bf16.mxu0 0
        %6766 = vmatpush1.bf16.msra.mxu0 0
        %6767 = vmatprep.subr.bf16.mxu0 0
        %6768 = vmatpush1.bf16.msra.mxu0 0
        %6769 = vmatprep.subr.bf16.mxu0 0
        %6770 = vmatpush1.bf16.msra.mxu0 0
        %6771 = vmatprep.subr.bf16.mxu0 0
        %6772 = vmatpush1.bf16.msra.mxu0 0
        %6773 = vmatprep.subr.bf16.mxu0 0
        %6774 = vmatpush1.bf16.msra.mxu0 0
        %6775 = vmatprep.subr.bf16.mxu0 0
        %6776 = vmatpush1.bf16.msra.mxu0 0
        %6777 = vmatprep.mubr.bf16.mxu0 0
        %6778 = vmatmul.mubr.bf16.gmra.mrb[0].mxu0 %v256
        %v6779 = vpop.f32.mrb[0].mxu0
        %v6780 = vadd.f32 0.0, %v6779
        %v6781 = vpop.f32.mrb[0].mxu0
        %v6782 = vadd.f32 0.0, %v6781
        %v6783 = vpop.f32.mrb[0].mxu0
        %v6784 = vadd.f32 0.0, %v6783
        %v6785 = vpop.f32.mrb[0].mxu0
        %v6786 = vadd.f32 0.0, %v6785
        %6787 = vdwg.mxu0
        %6788 = vmatprep.subr.bf16.mxu0 %v4372
        %6789 = vmatpush1.bf16.msra.mxu0 %v4371
        %6790 = vmatprep.subr.bf16.mxu0 %v4500
        %6791 = vmatpush1.bf16.msra.mxu0 %v4499
        %6792 = vmatprep.subr.bf16.mxu0 %v4628
        %6793 = vmatpush1.bf16.msra.mxu0 %v4627
        %6794 = vmatprep.subr.bf16.mxu0 %v4756
        %6795 = vmatpush1.bf16.msra.mxu0 %v4755
        %6796 = vmatprep.subr.bf16.mxu0 %v4884
        %6797 = vmatpush1.bf16.msra.mxu0 %v4883
        %6798 = vmatprep.subr.bf16.mxu0 %v5012
        %6799 = vmatpush1.bf16.msra.mxu0 %v5011
        %6800 = vmatprep.subr.bf16.mxu0 %v5140
        %6801 = vmatpush1.bf16.msra.mxu0 %v5139
        %6802 = vmatprep.subr.bf16.mxu0 %v5268
        %6803 = vmatpush1.bf16.msra.mxu0 %v5267
        %6804 = vmatprep.subr.bf16.mxu0 0
        %6805 = vmatpush1.bf16.msra.mxu0 0
        %6806 = vmatprep.subr.bf16.mxu0 0
        %6807 = vmatpush1.bf16.msra.mxu0 0
        %6808 = vmatprep.subr.bf16.mxu0 0
        %6809 = vmatpush1.bf16.msra.mxu0 0
        %6810 = vmatprep.subr.bf16.mxu0 0
        %6811 = vmatpush1.bf16.msra.mxu0 0
        %6812 = vmatprep.subr.bf16.mxu0 0
        %6813 = vmatpush1.bf16.msra.mxu0 0
        %6814 = vmatprep.subr.bf16.mxu0 0
        %6815 = vmatpush1.bf16.msra.mxu0 0
        %6816 = vmatprep.subr.bf16.mxu0 0
        %6817 = vmatpush1.bf16.msra.mxu0 0
        %6818 = vmatprep.subr.bf16.mxu0 0
        %6819 = vmatpush1.bf16.msra.mxu0 0
        %6820 = vmatprep.mubr.bf16.mxu0 0
        %6821 = vmatmul.mubr.bf16.gmra.mrb[0].mxu0 %v256
        %v6822 = vpop.f32.mrb[0].mxu0
        %v6823 = vadd.f32 0.0, %v6822
        %v6824 = vpop.f32.mrb[0].mxu0
        %v6825 = vadd.f32 0.0, %v6824
        %v6826 = vpop.f32.mrb[0].mxu0
        %v6827 = vadd.f32 0.0, %v6826
        %v6828 = vpop.f32.mrb[0].mxu0
        %v6829 = vadd.f32 0.0, %v6828
        %6830 = vdwg.mxu0
        %6831 = vmatprep.subr.bf16.mxu0 %v4374
        %6832 = vmatpush1.bf16.msra.mxu0 %v4373
        %6833 = vmatprep.subr.bf16.mxu0 %v4502
        %6834 = vmatpush1.bf16.msra.mxu0 %v4501
        %6835 = vmatprep.subr.bf16.mxu0 %v4630
        %6836 = vmatpush1.bf16.msra.mxu0 %v4629
        %6837 = vmatprep.subr.bf16.mxu0 %v4758
        %6838 = vmatpush1.bf16.msra.mxu0 %v4757
        %6839 = vmatprep.subr.bf16.mxu0 %v4886
        %6840 = vmatpush1.bf16.msra.mxu0 %v4885
        %6841 = vmatprep.subr.bf16.mxu0 %v5014
        %6842 = vmatpush1.bf16.msra.mxu0 %v5013
        %6843 = vmatprep.subr.bf16.mxu0 %v5142
        %6844 = vmatpush1.bf16.msra.mxu0 %v5141
        %6845 = vmatprep.subr.bf16.mxu0 %v5270
        %6846 = vmatpush1.bf16.msra.mxu0 %v5269
        %6847 = vmatprep.subr.bf16.mxu0 0
        %6848 = vmatpush1.bf16.msra.mxu0 0
        %6849 = vmatprep.subr.bf16.mxu0 0
        %6850 = vmatpush1.bf16.msra.mxu0 0
        %6851 = vmatprep.subr.bf16.mxu0 0
        %6852 = vmatpush1.bf16.msra.mxu0 0
        %6853 = vmatprep.subr.bf16.mxu0 0
        %6854 = vmatpush1.bf16.msra.mxu0 0
        %6855 = vmatprep.subr.bf16.mxu0 0
        %6856 = vmatpush1.bf16.msra.mxu0 0
        %6857 = vmatprep.subr.bf16.mxu0 0
        %6858 = vmatpush1.bf16.msra.mxu0 0
        %6859 = vmatprep.subr.bf16.mxu0 0
        %6860 = vmatpush1.bf16.msra.mxu0 0
        %6861 = vmatprep.subr.bf16.mxu0 0
        %6862 = vmatpush1.bf16.msra.mxu0 0
        %6863 = vmatprep.mubr.bf16.mxu0 0
        %6864 = vmatmul.mubr.bf16.gmra.mrb[0].mxu0 %v256
        %v6865 = vpop.f32.mrb[0].mxu0
        %v6866 = vadd.f32 0.0, %v6865
        %v6867 = vpop.f32.mrb[0].mxu0
        %v6868 = vadd.f32 0.0, %v6867
        %v6869 = vpop.f32.mrb[0].mxu0
        %v6870 = vadd.f32 0.0, %v6869
        %v6871 = vpop.f32.mrb[0].mxu0
        %v6872 = vadd.f32 0.0, %v6871
        %6873 = vdwg.mxu0
        %6874 = vmatprep.subr.bf16.mxu0 %v4376
        %6875 = vmatpush1.bf16.msra.mxu0 %v4375
        %6876 = vmatprep.subr.bf16.mxu0 %v4504
        %6877 = vmatpush1.bf16.msra.mxu0 %v4503
        %6878 = vmatprep.subr.bf16.mxu0 %v4632
        %6879 = vmatpush1.bf16.msra.mxu0 %v4631
        %6880 = vmatprep.subr.bf16.mxu0 %v4760
        %6881 = vmatpush1.bf16.msra.mxu0 %v4759
        %6882 = vmatprep.subr.bf16.mxu0 %v4888
        %6883 = vmatpush1.bf16.msra.mxu0 %v4887
        %6884 = vmatprep.subr.bf16.mxu0 %v5016
        %6885 = vmatpush1.bf16.msra.mxu0 %v5015
        %6886 = vmatprep.subr.bf16.mxu0 %v5144
        %6887 = vmatpush1.bf16.msra.mxu0 %v5143
        %6888 = vmatprep.subr.bf16.mxu0 %v5272
        %6889 = vmatpush1.bf16.msra.mxu0 %v5271
        %6890 = vmatprep.subr.bf16.mxu0 0
        %6891 = vmatpush1.bf16.msra.mxu0 0
        %6892 = vmatprep.subr.bf16.mxu0 0
        %6893 = vmatpush1.bf16.msra.mxu0 0
        %6894 = vmatprep.subr.bf16.mxu0 0
        %6895 = vmatpush1.bf16.msra.mxu0 0
        %6896 = vmatprep.subr.bf16.mxu0 0
        %6897 = vmatpush1.bf16.msra.mxu0 0
        %6898 = vmatprep.subr.bf16.mxu0 0
        %6899 = vmatpush1.bf16.msra.mxu0 0
        %6900 = vmatprep.subr.bf16.mxu0 0
        %6901 = vmatpush1.bf16.msra.mxu0 0
        %6902 = vmatprep.subr.bf16.mxu0 0
        %6903 = vmatpush1.bf16.msra.mxu0 0
        %6904 = vmatprep.subr.bf16.mxu0 0
        %6905 = vmatpush1.bf16.msra.mxu0 0
        %6906 = vmatprep.mubr.bf16.mxu0 0
        %6907 = vmatmul.mubr.bf16.gmra.mrb[0].mxu0 %v256
        %v6908 = vpop.f32.mrb[0].mxu0
        %v6909 = vadd.f32 0.0, %v6908
        %v6910 = vpop.f32.mrb[0].mxu0
        %v6911 = vadd.f32 0.0, %v6910
        %v6912 = vpop.f32.mrb[0].mxu0
        %v6913 = vadd.f32 0.0, %v6912
        %v6914 = vpop.f32.mrb[0].mxu0
        %v6915 = vadd.f32 0.0, %v6914
        %6916 = vdwg.mxu0
        %6917 = vmatprep.subr.bf16.mxu0 %v4378
        %6918 = vmatpush1.bf16.msra.mxu0 %v4377
        %6919 = vmatprep.subr.bf16.mxu0 %v4506
        %6920 = vmatpush1.bf16.msra.mxu0 %v4505
        %6921 = vmatprep.subr.bf16.mxu0 %v4634
        %6922 = vmatpush1.bf16.msra.mxu0 %v4633
        %6923 = vmatprep.subr.bf16.mxu0 %v4762
        %6924 = vmatpush1.bf16.msra.mxu0 %v4761
        %6925 = vmatprep.subr.bf16.mxu0 %v4890
        %6926 = vmatpush1.bf16.msra.mxu0 %v4889
        %6927 = vmatprep.subr.bf16.mxu0 %v5018
        %6928 = vmatpush1.bf16.msra.mxu0 %v5017
        %6929 = vmatprep.subr.bf16.mxu0 %v5146
        %6930 = vmatpush1.bf16.msra.mxu0 %v5145
        %6931 = vmatprep.subr.bf16.mxu0 %v5274
        %6932 = vmatpush1.bf16.msra.mxu0 %v5273
        %6933 = vmatprep.subr.bf16.mxu0 0
        %6934 = vmatpush1.bf16.msra.mxu0 0
        %6935 = vmatprep.subr.bf16.mxu0 0
        %6936 = vmatpush1.bf16.msra.mxu0 0
        %6937 = vmatprep.subr.bf16.mxu0 0
        %6938 = vmatpush1.bf16.msra.mxu0 0
        %6939 = vmatprep.subr.bf16.mxu0 0
        %6940 = vmatpush1.bf16.msra.mxu0 0
        %6941 = vmatprep.subr.bf16.mxu0 0
        %6942 = vmatpush1.bf16.msra.mxu0 0
        %6943 = vmatprep.subr.bf16.mxu0 0
        %6944 = vmatpush1.bf16.msra.mxu0 0
        %6945 = vmatprep.subr.bf16.mxu0 0
        %6946 = vmatpush1.bf16.msra.mxu0 0
        %6947 = vmatprep.subr.bf16.mxu0 0
        %6948 = vmatpush1.bf16.msra.mxu0 0
        %6949 = vmatprep.mubr.bf16.mxu0 0
        %6950 = vmatmul.mubr.bf16.gmra.mrb[0].mxu0 %v256
        %v6951 = vpop.f32.mrb[0].mxu0
        %v6952 = vadd.f32 0.0, %v6951
        %v6953 = vpop.f32.mrb[0].mxu0
        %v6954 = vadd.f32 0.0, %v6953
        %v6955 = vpop.f32.mrb[0].mxu0
        %v6956 = vadd.f32 0.0, %v6955
        %v6957 = vpop.f32.mrb[0].mxu0
        %v6958 = vadd.f32 0.0, %v6957
        %6959 = vdwg.mxu0
        %6960 = vmatprep.subr.bf16.mxu0 %v4380
        %6961 = vmatpush1.bf16.msra.mxu0 %v4379
        %6962 = vmatprep.subr.bf16.mxu0 %v4508
        %6963 = vmatpush1.bf16.msra.mxu0 %v4507
        %6964 = vmatprep.subr.bf16.mxu0 %v4636
        %6965 = vmatpush1.bf16.msra.mxu0 %v4635
        %6966 = vmatprep.subr.bf16.mxu0 %v4764
        %6967 = vmatpush1.bf16.msra.mxu0 %v4763
        %6968 = vmatprep.subr.bf16.mxu0 %v4892
        %6969 = vmatpush1.bf16.msra.mxu0 %v4891
        %6970 = vmatprep.subr.bf16.mxu0 %v5020
        %6971 = vmatpush1.bf16.msra.mxu0 %v5019
        %6972 = vmatprep.subr.bf16.mxu0 %v5148
        %6973 = vmatpush1.bf16.msra.mxu0 %v5147
        %6974 = vmatprep.subr.bf16.mxu0 %v5276
        %6975 = vmatpush1.bf16.msra.mxu0 %v5275
        %6976 = vmatprep.subr.bf16.mxu0 0
        %6977 = vmatpush1.bf16.msra.mxu0 0
        %6978 = vmatprep.subr.bf16.mxu0 0
        %6979 = vmatpush1.bf16.msra.mxu0 0
        %6980 = vmatprep.subr.bf16.mxu0 0
        %6981 = vmatpush1.bf16.msra.mxu0 0
        %6982 = vmatprep.subr.bf16.mxu0 0
        %6983 = vmatpush1.bf16.msra.mxu0 0
        %6984 = vmatprep.subr.bf16.mxu0 0
        %6985 = vmatpush1.bf16.msra.mxu0 0
        %6986 = vmatprep.subr.bf16.mxu0 0
        %6987 = vmatpush1.bf16.msra.mxu0 0
        %6988 = vmatprep.subr.bf16.mxu0 0
        %6989 = vmatpush1.bf16.msra.mxu0 0
        %6990 = vmatprep.subr.bf16.mxu0 0
        %6991 = vmatpush1.bf16.msra.mxu0 0
        %6992 = vmatprep.mubr.bf16.mxu0 0
        %6993 = vmatmul.mubr.bf16.gmra.mrb[0].mxu0 %v256
        %v6994 = vpop.f32.mrb[0].mxu0
        %v6995 = vadd.f32 0.0, %v6994
        %v6996 = vpop.f32.mrb[0].mxu0
        %v6997 = vadd.f32 0.0, %v6996
        %v6998 = vpop.f32.mrb[0].mxu0
        %v6999 = vadd.f32 0.0, %v6998
        %v7000 = vpop.f32.mrb[0].mxu0
        %v7001 = vadd.f32 0.0, %v7000
        %7002 = vdwg.mxu0
        %7003 = vmatprep.subr.bf16.mxu0 %v4382
        %7004 = vmatpush1.bf16.msra.mxu0 %v4381
        %7005 = vmatprep.subr.bf16.mxu0 %v4510
        %7006 = vmatpush1.bf16.msra.mxu0 %v4509
        %7007 = vmatprep.subr.bf16.mxu0 %v4638
        %7008 = vmatpush1.bf16.msra.mxu0 %v4637
        %7009 = vmatprep.subr.bf16.mxu0 %v4766
        %7010 = vmatpush1.bf16.msra.mxu0 %v4765
        %7011 = vmatprep.subr.bf16.mxu0 %v4894
        %7012 = vmatpush1.bf16.msra.mxu0 %v4893
        %7013 = vmatprep.subr.bf16.mxu0 %v5022
        %7014 = vmatpush1.bf16.msra.mxu0 %v5021
        %7015 = vmatprep.subr.bf16.mxu0 %v5150
        %7016 = vmatpush1.bf16.msra.mxu0 %v5149
        %7017 = vmatprep.subr.bf16.mxu0 %v5278
        %7018 = vmatpush1.bf16.msra.mxu0 %v5277
        %7019 = vmatprep.subr.bf16.mxu0 0
        %7020 = vmatpush1.bf16.msra.mxu0 0
        %7021 = vmatprep.subr.bf16.mxu0 0
        %7022 = vmatpush1.bf16.msra.mxu0 0
        %7023 = vmatprep.subr.bf16.mxu0 0
        %7024 = vmatpush1.bf16.msra.mxu0 0
        %7025 = vmatprep.subr.bf16.mxu0 0
        %7026 = vmatpush1.bf16.msra.mxu0 0
        %7027 = vmatprep.subr.bf16.mxu0 0
        %7028 = vmatpush1.bf16.msra.mxu0 0
        %7029 = vmatprep.subr.bf16.mxu0 0
        %7030 = vmatpush1.bf16.msra.mxu0 0
        %7031 = vmatprep.subr.bf16.mxu0 0
        %7032 = vmatpush1.bf16.msra.mxu0 0
        %7033 = vmatprep.subr.bf16.mxu0 0
        %7034 = vmatpush1.bf16.msra.mxu0 0
        %7035 = vmatprep.mubr.bf16.mxu0 0
        %7036 = vmatmul.mubr.bf16.gmra.mrb[0].mxu0 %v256
        %v7037 = vpop.f32.mrb[0].mxu0
        %v7038 = vadd.f32 0.0, %v7037
        %v7039 = vpop.f32.mrb[0].mxu0
        %v7040 = vadd.f32 0.0, %v7039
        %v7041 = vpop.f32.mrb[0].mxu0
        %v7042 = vadd.f32 0.0, %v7041
        %v7043 = vpop.f32.mrb[0].mxu0
        %v7044 = vadd.f32 0.0, %v7043
        %7045 = vdwg.mxu0
        %7046 = vmatprep.subr.bf16.mxu0 %v4384
        %7047 = vmatpush1.bf16.msra.mxu0 %v4383
        %7048 = vmatprep.subr.bf16.mxu0 %v4512
        %7049 = vmatpush1.bf16.msra.mxu0 %v4511
        %7050 = vmatprep.subr.bf16.mxu0 %v4640
        %7051 = vmatpush1.bf16.msra.mxu0 %v4639
        %7052 = vmatprep.subr.bf16.mxu0 %v4768
        %7053 = vmatpush1.bf16.msra.mxu0 %v4767
        %7054 = vmatprep.subr.bf16.mxu0 %v4896
        %7055 = vmatpush1.bf16.msra.mxu0 %v4895
        %7056 = vmatprep.subr.bf16.mxu0 %v5024
        %7057 = vmatpush1.bf16.msra.mxu0 %v5023
        %7058 = vmatprep.subr.bf16.mxu0 %v5152
        %7059 = vmatpush1.bf16.msra.mxu0 %v5151
        %7060 = vmatprep.subr.bf16.mxu0 %v5280
        %7061 = vmatpush1.bf16.msra.mxu0 %v5279
        %7062 = vmatprep.subr.bf16.mxu0 0
        %7063 = vmatpush1.bf16.msra.mxu0 0
        %7064 = vmatprep.subr.bf16.mxu0 0
        %7065 = vmatpush1.bf16.msra.mxu0 0
        %7066 = vmatprep.subr.bf16.mxu0 0
        %7067 = vmatpush1.bf16.msra.mxu0 0
        %7068 = vmatprep.subr.bf16.mxu0 0
        %7069 = vmatpush1.bf16.msra.mxu0 0
        %7070 = vmatprep.subr.bf16.mxu0 0
        %7071 = vmatpush1.bf16.msra.mxu0 0
        %7072 = vmatprep.subr.bf16.mxu0 0
        %7073 = vmatpush1.bf16.msra.mxu0 0
        %7074 = vmatprep.subr.bf16.mxu0 0
        %7075 = vmatpush1.bf16.msra.mxu0 0
        %7076 = vmatprep.subr.bf16.mxu0 0
        %7077 = vmatpush1.bf16.msra.mxu0 0
        %7078 = vmatprep.mubr.bf16.mxu0 0
        %7079 = vmatmul.mubr.bf16.gmra.mrb[0].mxu0 %v256
        %v7080 = vpop.f32.mrb[0].mxu0
        %v7081 = vadd.f32 0.0, %v7080
        %v7082 = vpop.f32.mrb[0].mxu0
        %v7083 = vadd.f32 0.0, %v7082
        %v7084 = vpop.f32.mrb[0].mxu0
        %v7085 = vadd.f32 0.0, %v7084
        %v7086 = vpop.f32.mrb[0].mxu0
        %v7087 = vadd.f32 0.0, %v7086
        %7088 = vdwg.mxu0
        %7089 = vmatprep.subr.bf16.mxu0 %v4386
        %7090 = vmatpush1.bf16.msra.mxu0 %v4385
        %7091 = vmatprep.subr.bf16.mxu0 %v4514
        %7092 = vmatpush1.bf16.msra.mxu0 %v4513
        %7093 = vmatprep.subr.bf16.mxu0 %v4642
        %7094 = vmatpush1.bf16.msra.mxu0 %v4641
        %7095 = vmatprep.subr.bf16.mxu0 %v4770
        %7096 = vmatpush1.bf16.msra.mxu0 %v4769
        %7097 = vmatprep.subr.bf16.mxu0 %v4898
        %7098 = vmatpush1.bf16.msra.mxu0 %v4897
        %7099 = vmatprep.subr.bf16.mxu0 %v5026
        %7100 = vmatpush1.bf16.msra.mxu0 %v5025
        %7101 = vmatprep.subr.bf16.mxu0 %v5154
        %7102 = vmatpush1.bf16.msra.mxu0 %v5153
        %7103 = vmatprep.subr.bf16.mxu0 %v5282
        %7104 = vmatpush1.bf16.msra.mxu0 %v5281
        %7105 = vmatprep.subr.bf16.mxu0 0
        %7106 = vmatpush1.bf16.msra.mxu0 0
        %7107 = vmatprep.subr.bf16.mxu0 0
        %7108 = vmatpush1.bf16.msra.mxu0 0
        %7109 = vmatprep.subr.bf16.mxu0 0
        %7110 = vmatpush1.bf16.msra.mxu0 0
        %7111 = vmatprep.subr.bf16.mxu0 0
        %7112 = vmatpush1.bf16.msra.mxu0 0
        %7113 = vmatprep.subr.bf16.mxu0 0
        %7114 = vmatpush1.bf16.msra.mxu0 0
        %7115 = vmatprep.subr.bf16.mxu0 0
        %7116 = vmatpush1.bf16.msra.mxu0 0
        %7117 = vmatprep.subr.bf16.mxu0 0
        %7118 = vmatpush1.bf16.msra.mxu0 0
        %7119 = vmatprep.subr.bf16.mxu0 0
        %7120 = vmatpush1.bf16.msra.mxu0 0
        %7121 = vmatprep.mubr.bf16.mxu0 0
        %7122 = vmatmul.mubr.bf16.gmra.mrb[0].mxu0 %v256
        %v7123 = vpop.f32.mrb[0].mxu0
        %v7124 = vadd.f32 0.0, %v7123
        %v7125 = vpop.f32.mrb[0].mxu0
        %v7126 = vadd.f32 0.0, %v7125
        %v7127 = vpop.f32.mrb[0].mxu0
        %v7128 = vadd.f32 0.0, %v7127
        %v7129 = vpop.f32.mrb[0].mxu0
        %v7130 = vadd.f32 0.0, %v7129
        %7131 = vdwg.mxu0
        %7132 = vmatprep.subr.bf16.mxu0 %v4388
        %7133 = vmatpush1.bf16.msra.mxu0 %v4387
        %7134 = vmatprep.subr.bf16.mxu0 %v4516
        %7135 = vmatpush1.bf16.msra.mxu0 %v4515
        %7136 = vmatprep.subr.bf16.mxu0 %v4644
        %7137 = vmatpush1.bf16.msra.mxu0 %v4643
        %7138 = vmatprep.subr.bf16.mxu0 %v4772
        %7139 = vmatpush1.bf16.msra.mxu0 %v4771
        %7140 = vmatprep.subr.bf16.mxu0 %v4900
        %7141 = vmatpush1.bf16.msra.mxu0 %v4899
        %7142 = vmatprep.subr.bf16.mxu0 %v5028
        %7143 = vmatpush1.bf16.msra.mxu0 %v5027
        %7144 = vmatprep.subr.bf16.mxu0 %v5156
        %7145 = vmatpush1.bf16.msra.mxu0 %v5155
        %7146 = vmatprep.subr.bf16.mxu0 %v5284
        %7147 = vmatpush1.bf16.msra.mxu0 %v5283
        %7148 = vmatprep.subr.bf16.mxu0 0
        %7149 = vmatpush1.bf16.msra.mxu0 0
        %7150 = vmatprep.subr.bf16.mxu0 0
        %7151 = vmatpush1.bf16.msra.mxu0 0
        %7152 = vmatprep.subr.bf16.mxu0 0
        %7153 = vmatpush1.bf16.msra.mxu0 0
        %7154 = vmatprep.subr.bf16.mxu0 0
        %7155 = vmatpush1.bf16.msra.mxu0 0
        %7156 = vmatprep.subr.bf16.mxu0 0
        %7157 = vmatpush1.bf16.msra.mxu0 0
        %7158 = vmatprep.subr.bf16.mxu0 0
        %7159 = vmatpush1.bf16.msra.mxu0 0
        %7160 = vmatprep.subr.bf16.mxu0 0
        %7161 = vmatpush1.bf16.msra.mxu0 0
        %7162 = vmatprep.subr.bf16.mxu0 0
        %7163 = vmatpush1.bf16.msra.mxu0 0
        %7164 = vmatprep.mubr.bf16.mxu0 0
        %7165 = vmatmul.mubr.bf16.gmra.mrb[0].mxu0 %v256
        %v7166 = vpop.f32.mrb[0].mxu0
        %v7167 = vadd.f32 0.0, %v7166
        %v7168 = vpop.f32.mrb[0].mxu0
        %v7169 = vadd.f32 0.0, %v7168
        %v7170 = vpop.f32.mrb[0].mxu0
        %v7171 = vadd.f32 0.0, %v7170
        %v7172 = vpop.f32.mrb[0].mxu0
        %v7173 = vadd.f32 0.0, %v7172
        %7174 = vdwg.mxu0
        %7175 = vmatprep.subr.bf16.mxu0 %v4390
        %7176 = vmatpush1.bf16.msra.mxu0 %v4389
        %7177 = vmatprep.subr.bf16.mxu0 %v4518
        %7178 = vmatpush1.bf16.msra.mxu0 %v4517
        %7179 = vmatprep.subr.bf16.mxu0 %v4646
        %7180 = vmatpush1.bf16.msra.mxu0 %v4645
        %7181 = vmatprep.subr.bf16.mxu0 %v4774
        %7182 = vmatpush1.bf16.msra.mxu0 %v4773
        %7183 = vmatprep.subr.bf16.mxu0 %v4902
        %7184 = vmatpush1.bf16.msra.mxu0 %v4901
        %7185 = vmatprep.subr.bf16.mxu0 %v5030
        %7186 = vmatpush1.bf16.msra.mxu0 %v5029
        %7187 = vmatprep.subr.bf16.mxu0 %v5158
        %7188 = vmatpush1.bf16.msra.mxu0 %v5157
        %7189 = vmatprep.subr.bf16.mxu0 %v5286
        %7190 = vmatpush1.bf16.msra.mxu0 %v5285
        %7191 = vmatprep.subr.bf16.mxu0 0
        %7192 = vmatpush1.bf16.msra.mxu0 0
        %7193 = vmatprep.subr.bf16.mxu0 0
        %7194 = vmatpush1.bf16.msra.mxu0 0
        %7195 = vmatprep.subr.bf16.mxu0 0
        %7196 = vmatpush1.bf16.msra.mxu0 0
        %7197 = vmatprep.subr.bf16.mxu0 0
        %7198 = vmatpush1.bf16.msra.mxu0 0
        %7199 = vmatprep.subr.bf16.mxu0 0
        %7200 = vmatpush1.bf16.msra.mxu0 0
        %7201 = vmatprep.subr.bf16.mxu0 0
        %7202 = vmatpush1.bf16.msra.mxu0 0
        %7203 = vmatprep.subr.bf16.mxu0 0
        %7204 = vmatpush1.bf16.msra.mxu0 0
        %7205 = vmatprep.subr.bf16.mxu0 0
        %7206 = vmatpush1.bf16.msra.mxu0 0
        %7207 = vmatprep.mubr.bf16.mxu0 0
        %7208 = vmatmul.mubr.bf16.gmra.mrb[0].mxu0 %v256
        %v7209 = vpop.f32.mrb[0].mxu0
        %v7210 = vadd.f32 0.0, %v7209
        %v7211 = vpop.f32.mrb[0].mxu0
        %v7212 = vadd.f32 0.0, %v7211
        %v7213 = vpop.f32.mrb[0].mxu0
        %v7214 = vadd.f32 0.0, %v7213
        %v7215 = vpop.f32.mrb[0].mxu0
        %v7216 = vadd.f32 0.0, %v7215
        %7217 = vdwg.mxu0
        %7218 = vmatprep.subr.bf16.mxu0 %v4392
        %7219 = vmatpush1.bf16.msra.mxu0 %v4391
        %7220 = vmatprep.subr.bf16.mxu0 %v4520
        %7221 = vmatpush1.bf16.msra.mxu0 %v4519
        %7222 = vmatprep.subr.bf16.mxu0 %v4648
        %7223 = vmatpush1.bf16.msra.mxu0 %v4647
        %7224 = vmatprep.subr.bf16.mxu0 %v4776
        %7225 = vmatpush1.bf16.msra.mxu0 %v4775
        %7226 = vmatprep.subr.bf16.mxu0 %v4904
        %7227 = vmatpush1.bf16.msra.mxu0 %v4903
        %7228 = vmatprep.subr.bf16.mxu0 %v5032
        %7229 = vmatpush1.bf16.msra.mxu0 %v5031
        %7230 = vmatprep.subr.bf16.mxu0 %v5160
        %7231 = vmatpush1.bf16.msra.mxu0 %v5159
        %7232 = vmatprep.subr.bf16.mxu0 %v5288
        %7233 = vmatpush1.bf16.msra.mxu0 %v5287
        %7234 = vmatprep.subr.bf16.mxu0 0
        %7235 = vmatpush1.bf16.msra.mxu0 0
        %7236 = vmatprep.subr.bf16.mxu0 0
        %7237 = vmatpush1.bf16.msra.mxu0 0
        %7238 = vmatprep.subr.bf16.mxu0 0
        %7239 = vmatpush1.bf16.msra.mxu0 0
        %7240 = vmatprep.subr.bf16.mxu0 0
        %7241 = vmatpush1.bf16.msra.mxu0 0
        %7242 = vmatprep.subr.bf16.mxu0 0
        %7243 = vmatpush1.bf16.msra.mxu0 0
        %7244 = vmatprep.subr.bf16.mxu0 0
        %7245 = vmatpush1.bf16.msra.mxu0 0
        %7246 = vmatprep.subr.bf16.mxu0 0
        %7247 = vmatpush1.bf16.msra.mxu0 0
        %7248 = vmatprep.subr.bf16.mxu0 0
        %7249 = vmatpush1.bf16.msra.mxu0 0
        %7250 = vmatprep.mubr.bf16.mxu0 0
        %7251 = vmatmul.mubr.bf16.gmra.mrb[0].mxu0 %v256
        %v7252 = vpop.f32.mrb[0].mxu0
        %v7253 = vadd.f32 0.0, %v7252
        %v7254 = vpop.f32.mrb[0].mxu0
        %v7255 = vadd.f32 0.0, %v7254
        %v7256 = vpop.f32.mrb[0].mxu0
        %v7257 = vadd.f32 0.0, %v7256
        %v7258 = vpop.f32.mrb[0].mxu0
        %v7259 = vadd.f32 0.0, %v7258
        %7260 = vdwg.mxu0
        %7261 = vmatprep.subr.bf16.mxu0 %v4394
        %7262 = vmatpush1.bf16.msra.mxu0 %v4393
        %7263 = vmatprep.subr.bf16.mxu0 %v4522
        %7264 = vmatpush1.bf16.msra.mxu0 %v4521
        %7265 = vmatprep.subr.bf16.mxu0 %v4650
        %7266 = vmatpush1.bf16.msra.mxu0 %v4649
        %7267 = vmatprep.subr.bf16.mxu0 %v4778
        %7268 = vmatpush1.bf16.msra.mxu0 %v4777
        %7269 = vmatprep.subr.bf16.mxu0 %v4906
        %7270 = vmatpush1.bf16.msra.mxu0 %v4905
        %7271 = vmatprep.subr.bf16.mxu0 %v5034
        %7272 = vmatpush1.bf16.msra.mxu0 %v5033
        %7273 = vmatprep.subr.bf16.mxu0 %v5162
        %7274 = vmatpush1.bf16.msra.mxu0 %v5161
        %7275 = vmatprep.subr.bf16.mxu0 %v5290
        %7276 = vmatpush1.bf16.msra.mxu0 %v5289
        %7277 = vmatprep.subr.bf16.mxu0 0
        %7278 = vmatpush1.bf16.msra.mxu0 0
        %7279 = vmatprep.subr.bf16.mxu0 0
        %7280 = vmatpush1.bf16.msra.mxu0 0
        %7281 = vmatprep.subr.bf16.mxu0 0
        %7282 = vmatpush1.bf16.msra.mxu0 0
        %7283 = vmatprep.subr.bf16.mxu0 0
        %7284 = vmatpush1.bf16.msra.mxu0 0
        %7285 = vmatprep.subr.bf16.mxu0 0
        %7286 = vmatpush1.bf16.msra.mxu0 0
        %7287 = vmatprep.subr.bf16.mxu0 0
        %7288 = vmatpush1.bf16.msra.mxu0 0
        %7289 = vmatprep.subr.bf16.mxu0 0
        %7290 = vmatpush1.bf16.msra.mxu0 0
        %7291 = vmatprep.subr.bf16.mxu0 0
        %7292 = vmatpush1.bf16.msra.mxu0 0
        %7293 = vmatprep.mubr.bf16.mxu0 0
        %7294 = vmatmul.mubr.bf16.gmra.mrb[0].mxu0 %v256
        %v7295 = vpop.f32.mrb[0].mxu0
        %v7296 = vadd.f32 0.0, %v7295
        %v7297 = vpop.f32.mrb[0].mxu0
        %v7298 = vadd.f32 0.0, %v7297
        %v7299 = vpop.f32.mrb[0].mxu0
        %v7300 = vadd.f32 0.0, %v7299
        %v7301 = vpop.f32.mrb[0].mxu0
        %v7302 = vadd.f32 0.0, %v7301
        %7303 = vdwg.mxu0
        %7304 = vmatprep.subr.bf16.mxu0 %v4396
        %7305 = vmatpush1.bf16.msra.mxu0 %v4395
        %7306 = vmatprep.subr.bf16.mxu0 %v4524
        %7307 = vmatpush1.bf16.msra.mxu0 %v4523
        %7308 = vmatprep.subr.bf16.mxu0 %v4652
        %7309 = vmatpush1.bf16.msra.mxu0 %v4651
        %7310 = vmatprep.subr.bf16.mxu0 %v4780
        %7311 = vmatpush1.bf16.msra.mxu0 %v4779
        %7312 = vmatprep.subr.bf16.mxu0 %v4908
        %7313 = vmatpush1.bf16.msra.mxu0 %v4907
        %7314 = vmatprep.subr.bf16.mxu0 %v5036
        %7315 = vmatpush1.bf16.msra.mxu0 %v5035
        %7316 = vmatprep.subr.bf16.mxu0 %v5164
        %7317 = vmatpush1.bf16.msra.mxu0 %v5163
        %7318 = vmatprep.subr.bf16.mxu0 %v5292
        %7319 = vmatpush1.bf16.msra.mxu0 %v5291
        %7320 = vmatprep.subr.bf16.mxu0 0
        %7321 = vmatpush1.bf16.msra.mxu0 0
        %7322 = vmatprep.subr.bf16.mxu0 0
        %7323 = vmatpush1.bf16.msra.mxu0 0
        %7324 = vmatprep.subr.bf16.mxu0 0
        %7325 = vmatpush1.bf16.msra.mxu0 0
        %7326 = vmatprep.subr.bf16.mxu0 0
        %7327 = vmatpush1.bf16.msra.mxu0 0
        %7328 = vmatprep.subr.bf16.mxu0 0
        %7329 = vmatpush1.bf16.msra.mxu0 0
        %7330 = vmatprep.subr.bf16.mxu0 0
        %7331 = vmatpush1.bf16.msra.mxu0 0
        %7332 = vmatprep.subr.bf16.mxu0 0
        %7333 = vmatpush1.bf16.msra.mxu0 0
        %7334 = vmatprep.subr.bf16.mxu0 0
        %7335 = vmatpush1.bf16.msra.mxu0 0
        %7336 = vmatprep.mubr.bf16.mxu0 0
        %7337 = vmatmul.mubr.bf16.gmra.mrb[0].mxu0 %v256
        %v7338 = vpop.f32.mrb[0].mxu0
        %v7339 = vadd.f32 0.0, %v7338
        %v7340 = vpop.f32.mrb[0].mxu0
        %v7341 = vadd.f32 0.0, %v7340
        %v7342 = vpop.f32.mrb[0].mxu0
        %v7343 = vadd.f32 0.0, %v7342
        %v7344 = vpop.f32.mrb[0].mxu0
        %v7345 = vadd.f32 0.0, %v7344
        %7346 = vdwg.mxu0
        %7347 = vmatprep.subr.bf16.mxu0 %v4398
        %7348 = vmatpush1.bf16.msra.mxu0 %v4397
        %7349 = vmatprep.subr.bf16.mxu0 %v4526
        %7350 = vmatpush1.bf16.msra.mxu0 %v4525
        %7351 = vmatprep.subr.bf16.mxu0 %v4654
        %7352 = vmatpush1.bf16.msra.mxu0 %v4653
        %7353 = vmatprep.subr.bf16.mxu0 %v4782
        %7354 = vmatpush1.bf16.msra.mxu0 %v4781
        %7355 = vmatprep.subr.bf16.mxu0 %v4910
        %7356 = vmatpush1.bf16.msra.mxu0 %v4909
        %7357 = vmatprep.subr.bf16.mxu0 %v5038
        %7358 = vmatpush1.bf16.msra.mxu0 %v5037
        %7359 = vmatprep.subr.bf16.mxu0 %v5166
        %7360 = vmatpush1.bf16.msra.mxu0 %v5165
        %7361 = vmatprep.subr.bf16.mxu0 %v5294
        %7362 = vmatpush1.bf16.msra.mxu0 %v5293
        %7363 = vmatprep.subr.bf16.mxu0 0
        %7364 = vmatpush1.bf16.msra.mxu0 0
        %7365 = vmatprep.subr.bf16.mxu0 0
        %7366 = vmatpush1.bf16.msra.mxu0 0
        %7367 = vmatprep.subr.bf16.mxu0 0
        %7368 = vmatpush1.bf16.msra.mxu0 0
        %7369 = vmatprep.subr.bf16.mxu0 0
        %7370 = vmatpush1.bf16.msra.mxu0 0
        %7371 = vmatprep.subr.bf16.mxu0 0
        %7372 = vmatpush1.bf16.msra.mxu0 0
        %7373 = vmatprep.subr.bf16.mxu0 0
        %7374 = vmatpush1.bf16.msra.mxu0 0
        %7375 = vmatprep.subr.bf16.mxu0 0
        %7376 = vmatpush1.bf16.msra.mxu0 0
        %7377 = vmatprep.subr.bf16.mxu0 0
        %7378 = vmatpush1.bf16.msra.mxu0 0
        %7379 = vmatprep.mubr.bf16.mxu0 0
        %7380 = vmatmul.mubr.bf16.gmra.mrb[0].mxu0 %v256
        %v7381 = vpop.f32.mrb[0].mxu0
        %v7382 = vadd.f32 0.0, %v7381
        %v7383 = vpop.f32.mrb[0].mxu0
        %v7384 = vadd.f32 0.0, %v7383
        %v7385 = vpop.f32.mrb[0].mxu0
        %v7386 = vadd.f32 0.0, %v7385
        %v7387 = vpop.f32.mrb[0].mxu0
        %v7388 = vadd.f32 0.0, %v7387
        %7389 = vdwg.mxu0
        %7390 = vmatprep.subr.bf16.mxu0 %v4400
        %7391 = vmatpush1.bf16.msra.mxu0 %v4399
        %7392 = vmatprep.subr.bf16.mxu0 %v4528
        %7393 = vmatpush1.bf16.msra.mxu0 %v4527
        %7394 = vmatprep.subr.bf16.mxu0 %v4656
        %7395 = vmatpush1.bf16.msra.mxu0 %v4655
        %7396 = vmatprep.subr.bf16.mxu0 %v4784
        %7397 = vmatpush1.bf16.msra.mxu0 %v4783
        %7398 = vmatprep.subr.bf16.mxu0 %v4912
        %7399 = vmatpush1.bf16.msra.mxu0 %v4911
        %7400 = vmatprep.subr.bf16.mxu0 %v5040
        %7401 = vmatpush1.bf16.msra.mxu0 %v5039
        %7402 = vmatprep.subr.bf16.mxu0 %v5168
        %7403 = vmatpush1.bf16.msra.mxu0 %v5167
        %7404 = vmatprep.subr.bf16.mxu0 %v5296
        %7405 = vmatpush1.bf16.msra.mxu0 %v5295
        %7406 = vmatprep.subr.bf16.mxu0 0
        %7407 = vmatpush1.bf16.msra.mxu0 0
        %7408 = vmatprep.subr.bf16.mxu0 0
        %7409 = vmatpush1.bf16.msra.mxu0 0
        %7410 = vmatprep.subr.bf16.mxu0 0
        %7411 = vmatpush1.bf16.msra.mxu0 0
        %7412 = vmatprep.subr.bf16.mxu0 0
        %7413 = vmatpush1.bf16.msra.mxu0 0
        %7414 = vmatprep.subr.bf16.mxu0 0
        %7415 = vmatpush1.bf16.msra.mxu0 0
        %7416 = vmatprep.subr.bf16.mxu0 0
        %7417 = vmatpush1.bf16.msra.mxu0 0
        %7418 = vmatprep.subr.bf16.mxu0 0
        %7419 = vmatpush1.bf16.msra.mxu0 0
        %7420 = vmatprep.subr.bf16.mxu0 0
        %7421 = vmatpush1.bf16.msra.mxu0 0
        %7422 = vmatprep.mubr.bf16.mxu0 0
        %7423 = vmatmul.mubr.bf16.gmra.mrb[0].mxu0 %v256
        %v7424 = vpop.f32.mrb[0].mxu0
        %v7425 = vadd.f32 0.0, %v7424
        %v7426 = vpop.f32.mrb[0].mxu0
        %v7427 = vadd.f32 0.0, %v7426
        %v7428 = vpop.f32.mrb[0].mxu0
        %v7429 = vadd.f32 0.0, %v7428
        %v7430 = vpop.f32.mrb[0].mxu0
        %v7431 = vadd.f32 0.0, %v7430
        %7432 = vdwg.mxu0
        %7433 = vmatprep.subr.bf16.mxu0 %v4402
        %7434 = vmatpush1.bf16.msra.mxu0 %v4401
        %7435 = vmatprep.subr.bf16.mxu0 %v4530
        %7436 = vmatpush1.bf16.msra.mxu0 %v4529
        %7437 = vmatprep.subr.bf16.mxu0 %v4658
        %7438 = vmatpush1.bf16.msra.mxu0 %v4657
        %7439 = vmatprep.subr.bf16.mxu0 %v4786
        %7440 = vmatpush1.bf16.msra.mxu0 %v4785
        %7441 = vmatprep.subr.bf16.mxu0 %v4914
        %7442 = vmatpush1.bf16.msra.mxu0 %v4913
        %7443 = vmatprep.subr.bf16.mxu0 %v5042
        %7444 = vmatpush1.bf16.msra.mxu0 %v5041
        %7445 = vmatprep.subr.bf16.mxu0 %v5170
        %7446 = vmatpush1.bf16.msra.mxu0 %v5169
        %7447 = vmatprep.subr.bf16.mxu0 %v5298
        %7448 = vmatpush1.bf16.msra.mxu0 %v5297
        %7449 = vmatprep.subr.bf16.mxu0 0
        %7450 = vmatpush1.bf16.msra.mxu0 0
        %7451 = vmatprep.subr.bf16.mxu0 0
        %7452 = vmatpush1.bf16.msra.mxu0 0
        %7453 = vmatprep.subr.bf16.mxu0 0
        %7454 = vmatpush1.bf16.msra.mxu0 0
        %7455 = vmatprep.subr.bf16.mxu0 0
        %7456 = vmatpush1.bf16.msra.mxu0 0
        %7457 = vmatprep.subr.bf16.mxu0 0
        %7458 = vmatpush1.bf16.msra.mxu0 0
        %7459 = vmatprep.subr.bf16.mxu0 0
        %7460 = vmatpush1.bf16.msra.mxu0 0
        %7461 = vmatprep.subr.bf16.mxu0 0
        %7462 = vmatpush1.bf16.msra.mxu0 0
        %7463 = vmatprep.subr.bf16.mxu0 0
        %7464 = vmatpush1.bf16.msra.mxu0 0
        %7465 = vmatprep.mubr.bf16.mxu0 0
        %7466 = vmatmul.mubr.bf16.gmra.mrb[0].mxu0 %v256
        %v7467 = vpop.f32.mrb[0].mxu0
        %v7468 = vadd.f32 0.0, %v7467
        %v7469 = vpop.f32.mrb[0].mxu0
        %v7470 = vadd.f32 0.0, %v7469
        %v7471 = vpop.f32.mrb[0].mxu0
        %v7472 = vadd.f32 0.0, %v7471
        %v7473 = vpop.f32.mrb[0].mxu0
        %v7474 = vadd.f32 0.0, %v7473
        %7475 = vdwg.mxu0
        %7476 = vmatprep.subr.bf16.mxu0 %v4404
        %7477 = vmatpush1.bf16.msra.mxu0 %v4403
        %7478 = vmatprep.subr.bf16.mxu0 %v4532
        %7479 = vmatpush1.bf16.msra.mxu0 %v4531
        %7480 = vmatprep.subr.bf16.mxu0 %v4660
        %7481 = vmatpush1.bf16.msra.mxu0 %v4659
        %7482 = vmatprep.subr.bf16.mxu0 %v4788
        %7483 = vmatpush1.bf16.msra.mxu0 %v4787
        %7484 = vmatprep.subr.bf16.mxu0 %v4916
        %7485 = vmatpush1.bf16.msra.mxu0 %v4915
        %7486 = vmatprep.subr.bf16.mxu0 %v5044
        %7487 = vmatpush1.bf16.msra.mxu0 %v5043
        %7488 = vmatprep.subr.bf16.mxu0 %v5172
        %7489 = vmatpush1.bf16.msra.mxu0 %v5171
        %7490 = vmatprep.subr.bf16.mxu0 %v5300
        %7491 = vmatpush1.bf16.msra.mxu0 %v5299
        %7492 = vmatprep.subr.bf16.mxu0 0
        %7493 = vmatpush1.bf16.msra.mxu0 0
        %7494 = vmatprep.subr.bf16.mxu0 0
        %7495 = vmatpush1.bf16.msra.mxu0 0
        %7496 = vmatprep.subr.bf16.mxu0 0
        %7497 = vmatpush1.bf16.msra.mxu0 0
        %7498 = vmatprep.subr.bf16.mxu0 0
        %7499 = vmatpush1.bf16.msra.mxu0 0
        %7500 = vmatprep.subr.bf16.mxu0 0
        %7501 = vmatpush1.bf16.msra.mxu0 0
        %7502 = vmatprep.subr.bf16.mxu0 0
        %7503 = vmatpush1.bf16.msra.mxu0 0
        %7504 = vmatprep.subr.bf16.mxu0 0
        %7505 = vmatpush1.bf16.msra.mxu0 0
        %7506 = vmatprep.subr.bf16.mxu0 0
        %7507 = vmatpush1.bf16.msra.mxu0 0
        %7508 = vmatprep.mubr.bf16.mxu0 0
        %7509 = vmatmul.mubr.bf16.gmra.mrb[0].mxu0 %v256
        %v7510 = vpop.f32.mrb[0].mxu0
        %v7511 = vadd.f32 0.0, %v7510
        %v7512 = vpop.f32.mrb[0].mxu0
        %v7513 = vadd.f32 0.0, %v7512
        %v7514 = vpop.f32.mrb[0].mxu0
        %v7515 = vadd.f32 0.0, %v7514
        %v7516 = vpop.f32.mrb[0].mxu0
        %v7517 = vadd.f32 0.0, %v7516
        %7518 = vdwg.mxu0
        %7519 = vmatprep.subr.bf16.mxu0 %v4406
        %7520 = vmatpush1.bf16.msra.mxu0 %v4405
        %7521 = vmatprep.subr.bf16.mxu0 %v4534
        %7522 = vmatpush1.bf16.msra.mxu0 %v4533
        %7523 = vmatprep.subr.bf16.mxu0 %v4662
        %7524 = vmatpush1.bf16.msra.mxu0 %v4661
        %7525 = vmatprep.subr.bf16.mxu0 %v4790
        %7526 = vmatpush1.bf16.msra.mxu0 %v4789
        %7527 = vmatprep.subr.bf16.mxu0 %v4918
        %7528 = vmatpush1.bf16.msra.mxu0 %v4917
        %7529 = vmatprep.subr.bf16.mxu0 %v5046
        %7530 = vmatpush1.bf16.msra.mxu0 %v5045
        %7531 = vmatprep.subr.bf16.mxu0 %v5174
        %7532 = vmatpush1.bf16.msra.mxu0 %v5173
        %7533 = vmatprep.subr.bf16.mxu0 %v5302
        %7534 = vmatpush1.bf16.msra.mxu0 %v5301
        %7535 = vmatprep.subr.bf16.mxu0 0
        %7536 = vmatpush1.bf16.msra.mxu0 0
        %7537 = vmatprep.subr.bf16.mxu0 0
        %7538 = vmatpush1.bf16.msra.mxu0 0
        %7539 = vmatprep.subr.bf16.mxu0 0
        %7540 = vmatpush1.bf16.msra.mxu0 0
        %7541 = vmatprep.subr.bf16.mxu0 0
        %7542 = vmatpush1.bf16.msra.mxu0 0
        %7543 = vmatprep.subr.bf16.mxu0 0
        %7544 = vmatpush1.bf16.msra.mxu0 0
        %7545 = vmatprep.subr.bf16.mxu0 0
        %7546 = vmatpush1.bf16.msra.mxu0 0
        %7547 = vmatprep.subr.bf16.mxu0 0
        %7548 = vmatpush1.bf16.msra.mxu0 0
        %7549 = vmatprep.subr.bf16.mxu0 0
        %7550 = vmatpush1.bf16.msra.mxu0 0
        %7551 = vmatprep.mubr.bf16.mxu0 0
        %7552 = vmatmul.mubr.bf16.gmra.mrb[0].mxu0 %v256
        %v7553 = vpop.f32.mrb[0].mxu0
        %v7554 = vadd.f32 0.0, %v7553
        %v7555 = vpop.f32.mrb[0].mxu0
        %v7556 = vadd.f32 0.0, %v7555
        %v7557 = vpop.f32.mrb[0].mxu0
        %v7558 = vadd.f32 0.0, %v7557
        %v7559 = vpop.f32.mrb[0].mxu0
        %v7560 = vadd.f32 0.0, %v7559
        %7561 = vdwg.mxu0
        %7562 = vmatprep.subr.bf16.mxu0 %v4408
        %7563 = vmatpush1.bf16.msra.mxu0 %v4407
        %7564 = vmatprep.subr.bf16.mxu0 %v4536
        %7565 = vmatpush1.bf16.msra.mxu0 %v4535
        %7566 = vmatprep.subr.bf16.mxu0 %v4664
        %7567 = vmatpush1.bf16.msra.mxu0 %v4663
        %7568 = vmatprep.subr.bf16.mxu0 %v4792
        %7569 = vmatpush1.bf16.msra.mxu0 %v4791
        %7570 = vmatprep.subr.bf16.mxu0 %v4920
        %7571 = vmatpush1.bf16.msra.mxu0 %v4919
        %7572 = vmatprep.subr.bf16.mxu0 %v5048
        %7573 = vmatpush1.bf16.msra.mxu0 %v5047
        %7574 = vmatprep.subr.bf16.mxu0 %v5176
        %7575 = vmatpush1.bf16.msra.mxu0 %v5175
        %7576 = vmatprep.subr.bf16.mxu0 %v5304
        %7577 = vmatpush1.bf16.msra.mxu0 %v5303
        %7578 = vmatprep.subr.bf16.mxu0 0
        %7579 = vmatpush1.bf16.msra.mxu0 0
        %7580 = vmatprep.subr.bf16.mxu0 0
        %7581 = vmatpush1.bf16.msra.mxu0 0
        %7582 = vmatprep.subr.bf16.mxu0 0
        %7583 = vmatpush1.bf16.msra.mxu0 0
        %7584 = vmatprep.subr.bf16.mxu0 0
        %7585 = vmatpush1.bf16.msra.mxu0 0
        %7586 = vmatprep.subr.bf16.mxu0 0
        %7587 = vmatpush1.bf16.msra.mxu0 0
        %7588 = vmatprep.subr.bf16.mxu0 0
        %7589 = vmatpush1.bf16.msra.mxu0 0
        %7590 = vmatprep.subr.bf16.mxu0 0
        %7591 = vmatpush1.bf16.msra.mxu0 0
        %7592 = vmatprep.subr.bf16.mxu0 0
        %7593 = vmatpush1.bf16.msra.mxu0 0
        %7594 = vmatprep.mubr.bf16.mxu0 0
        %7595 = vmatmul.mubr.bf16.gmra.mrb[0].mxu0 %v256
        %v7596 = vpop.f32.mrb[0].mxu0
        %v7597 = vadd.f32 0.0, %v7596
        %v7598 = vpop.f32.mrb[0].mxu0
        %v7599 = vadd.f32 0.0, %v7598
        %v7600 = vpop.f32.mrb[0].mxu0
        %v7601 = vadd.f32 0.0, %v7600
        %v7602 = vpop.f32.mrb[0].mxu0
        %v7603 = vadd.f32 0.0, %v7602
        %7604 = vdwg.mxu0
        %7605 = vmatprep.subr.bf16.mxu0 %v4410
        %7606 = vmatpush1.bf16.msra.mxu0 %v4409
        %7607 = vmatprep.subr.bf16.mxu0 %v4538
        %7608 = vmatpush1.bf16.msra.mxu0 %v4537
        %7609 = vmatprep.subr.bf16.mxu0 %v4666
        %7610 = vmatpush1.bf16.msra.mxu0 %v4665
        %7611 = vmatprep.subr.bf16.mxu0 %v4794
        %7612 = vmatpush1.bf16.msra.mxu0 %v4793
        %7613 = vmatprep.subr.bf16.mxu0 %v4922
        %7614 = vmatpush1.bf16.msra.mxu0 %v4921
        %7615 = vmatprep.subr.bf16.mxu0 %v5050
        %7616 = vmatpush1.bf16.msra.mxu0 %v5049
        %7617 = vmatprep.subr.bf16.mxu0 %v5178
        %7618 = vmatpush1.bf16.msra.mxu0 %v5177
        %7619 = vmatprep.subr.bf16.mxu0 %v5306
        %7620 = vmatpush1.bf16.msra.mxu0 %v5305
        %7621 = vmatprep.subr.bf16.mxu0 0
        %7622 = vmatpush1.bf16.msra.mxu0 0
        %7623 = vmatprep.subr.bf16.mxu0 0
        %7624 = vmatpush1.bf16.msra.mxu0 0
        %7625 = vmatprep.subr.bf16.mxu0 0
        %7626 = vmatpush1.bf16.msra.mxu0 0
        %7627 = vmatprep.subr.bf16.mxu0 0
        %7628 = vmatpush1.bf16.msra.mxu0 0
        %7629 = vmatprep.subr.bf16.mxu0 0
        %7630 = vmatpush1.bf16.msra.mxu0 0
        %7631 = vmatprep.subr.bf16.mxu0 0
        %7632 = vmatpush1.bf16.msra.mxu0 0
        %7633 = vmatprep.subr.bf16.mxu0 0
        %7634 = vmatpush1.bf16.msra.mxu0 0
        %7635 = vmatprep.subr.bf16.mxu0 0
        %7636 = vmatpush1.bf16.msra.mxu0 0
        %7637 = vmatprep.mubr.bf16.mxu0 0
        %7638 = vmatmul.mubr.bf16.gmra.mrb[0].mxu0 %v256
        %v7639 = vpop.f32.mrb[0].mxu0
        %v7640 = vadd.f32 0.0, %v7639
        %v7641 = vpop.f32.mrb[0].mxu0
        %v7642 = vadd.f32 0.0, %v7641
        %v7643 = vpop.f32.mrb[0].mxu0
        %v7644 = vadd.f32 0.0, %v7643
        %v7645 = vpop.f32.mrb[0].mxu0
        %v7646 = vadd.f32 0.0, %v7645
        %7647 = vdwg.mxu0
        %7648 = vmatprep.subr.bf16.mxu0 %v4412
        %7649 = vmatpush1.bf16.msra.mxu0 %v4411
        %7650 = vmatprep.subr.bf16.mxu0 %v4540
        %7651 = vmatpush1.bf16.msra.mxu0 %v4539
        %7652 = vmatprep.subr.bf16.mxu0 %v4668
        %7653 = vmatpush1.bf16.msra.mxu0 %v4667
        %7654 = vmatprep.subr.bf16.mxu0 %v4796
        %7655 = vmatpush1.bf16.msra.mxu0 %v4795
        %7656 = vmatprep.subr.bf16.mxu0 %v4924
        %7657 = vmatpush1.bf16.msra.mxu0 %v4923
        %7658 = vmatprep.subr.bf16.mxu0 %v5052
        %7659 = vmatpush1.bf16.msra.mxu0 %v5051
        %7660 = vmatprep.subr.bf16.mxu0 %v5180
        %7661 = vmatpush1.bf16.msra.mxu0 %v5179
        %7662 = vmatprep.subr.bf16.mxu0 %v5308
        %7663 = vmatpush1.bf16.msra.mxu0 %v5307
        %7664 = vmatprep.subr.bf16.mxu0 0
        %7665 = vmatpush1.bf16.msra.mxu0 0
        %7666 = vmatprep.subr.bf16.mxu0 0
        %7667 = vmatpush1.bf16.msra.mxu0 0
        %7668 = vmatprep.subr.bf16.mxu0 0
        %7669 = vmatpush1.bf16.msra.mxu0 0
        %7670 = vmatprep.subr.bf16.mxu0 0
        %7671 = vmatpush1.bf16.msra.mxu0 0
        %7672 = vmatprep.subr.bf16.mxu0 0
        %7673 = vmatpush1.bf16.msra.mxu0 0
        %7674 = vmatprep.subr.bf16.mxu0 0
        %7675 = vmatpush1.bf16.msra.mxu0 0
        %7676 = vmatprep.subr.bf16.mxu0 0
        %7677 = vmatpush1.bf16.msra.mxu0 0
        %7678 = vmatprep.subr.bf16.mxu0 0
        %7679 = vmatpush1.bf16.msra.mxu0 0
        %7680 = vmatprep.mubr.bf16.mxu0 0
        %7681 = vmatmul.mubr.bf16.gmra.mrb[0].mxu0 %v256
        %v7682 = vpop.f32.mrb[0].mxu0
        %v7683 = vadd.f32 0.0, %v7682
        %v7684 = vpop.f32.mrb[0].mxu0
        %v7685 = vadd.f32 0.0, %v7684
        %v7686 = vpop.f32.mrb[0].mxu0
        %v7687 = vadd.f32 0.0, %v7686
        %v7688 = vpop.f32.mrb[0].mxu0
        %v7689 = vadd.f32 0.0, %v7688
        %7690 = vdwg.mxu0
        %7691 = vmatprep.subr.bf16.mxu0 %v4414
        %7692 = vmatpush1.bf16.msra.mxu0 %v4413
        %7693 = vmatprep.subr.bf16.mxu0 %v4542
        %7694 = vmatpush1.bf16.msra.mxu0 %v4541
        %7695 = vmatprep.subr.bf16.mxu0 %v4670
        %7696 = vmatpush1.bf16.msra.mxu0 %v4669
        %7697 = vmatprep.subr.bf16.mxu0 %v4798
        %7698 = vmatpush1.bf16.msra.mxu0 %v4797
        %7699 = vmatprep.subr.bf16.mxu0 %v4926
        %7700 = vmatpush1.bf16.msra.mxu0 %v4925
        %7701 = vmatprep.subr.bf16.mxu0 %v5054
        %7702 = vmatpush1.bf16.msra.mxu0 %v5053
        %7703 = vmatprep.subr.bf16.mxu0 %v5182
        %7704 = vmatpush1.bf16.msra.mxu0 %v5181
        %7705 = vmatprep.subr.bf16.mxu0 %v5310
        %7706 = vmatpush1.bf16.msra.mxu0 %v5309
        %7707 = vmatprep.subr.bf16.mxu0 0
        %7708 = vmatpush1.bf16.msra.mxu0 0
        %7709 = vmatprep.subr.bf16.mxu0 0
        %7710 = vmatpush1.bf16.msra.mxu0 0
        %7711 = vmatprep.subr.bf16.mxu0 0
        %7712 = vmatpush1.bf16.msra.mxu0 0
        %7713 = vmatprep.subr.bf16.mxu0 0
        %7714 = vmatpush1.bf16.msra.mxu0 0
        %7715 = vmatprep.subr.bf16.mxu0 0
        %7716 = vmatpush1.bf16.msra.mxu0 0
        %7717 = vmatprep.subr.bf16.mxu0 0
        %7718 = vmatpush1.bf16.msra.mxu0 0
        %7719 = vmatprep.subr.bf16.mxu0 0
        %7720 = vmatpush1.bf16.msra.mxu0 0
        %7721 = vmatprep.subr.bf16.mxu0 0
        %7722 = vmatpush1.bf16.msra.mxu0 0
        %7723 = vmatprep.mubr.bf16.mxu0 0
        %7724 = vmatmul.mubr.bf16.gmra.mrb[0].mxu0 %v256
        %v7725 = vpop.f32.mrb[0].mxu0
        %v7726 = vadd.f32 0.0, %v7725
        %v7727 = vpop.f32.mrb[0].mxu0
        %v7728 = vadd.f32 0.0, %v7727
        %v7729 = vpop.f32.mrb[0].mxu0
        %v7730 = vadd.f32 0.0, %v7729
        %v7731 = vpop.f32.mrb[0].mxu0
        %v7732 = vadd.f32 0.0, %v7731
        %7733 = vdwg.mxu0
        %7734 = vmatprep.subr.bf16.mxu0 %v4416
        %7735 = vmatpush1.bf16.msra.mxu0 %v4415
        %7736 = vmatprep.subr.bf16.mxu0 %v4544
        %7737 = vmatpush1.bf16.msra.mxu0 %v4543
        %7738 = vmatprep.subr.bf16.mxu0 %v4672
        %7739 = vmatpush1.bf16.msra.mxu0 %v4671
        %7740 = vmatprep.subr.bf16.mxu0 %v4800
        %7741 = vmatpush1.bf16.msra.mxu0 %v4799
        %7742 = vmatprep.subr.bf16.mxu0 %v4928
        %7743 = vmatpush1.bf16.msra.mxu0 %v4927
        %7744 = vmatprep.subr.bf16.mxu0 %v5056
        %7745 = vmatpush1.bf16.msra.mxu0 %v5055
        %7746 = vmatprep.subr.bf16.mxu0 %v5184
        %7747 = vmatpush1.bf16.msra.mxu0 %v5183
        %7748 = vmatprep.subr.bf16.mxu0 %v5312
        %7749 = vmatpush1.bf16.msra.mxu0 %v5311
        %7750 = vmatprep.subr.bf16.mxu0 0
        %7751 = vmatpush1.bf16.msra.mxu0 0
        %7752 = vmatprep.subr.bf16.mxu0 0
        %7753 = vmatpush1.bf16.msra.mxu0 0
        %7754 = vmatprep.subr.bf16.mxu0 0
        %7755 = vmatpush1.bf16.msra.mxu0 0
        %7756 = vmatprep.subr.bf16.mxu0 0
        %7757 = vmatpush1.bf16.msra.mxu0 0
        %7758 = vmatprep.subr.bf16.mxu0 0
        %7759 = vmatpush1.bf16.msra.mxu0 0
        %7760 = vmatprep.subr.bf16.mxu0 0
        %7761 = vmatpush1.bf16.msra.mxu0 0
        %7762 = vmatprep.subr.bf16.mxu0 0
        %7763 = vmatpush1.bf16.msra.mxu0 0
        %7764 = vmatprep.subr.bf16.mxu0 0
        %7765 = vmatpush1.bf16.msra.mxu0 0
        %7766 = vmatprep.mubr.bf16.mxu0 0
        %7767 = vmatmul.mubr.bf16.gmra.mrb[0].mxu0 %v256
        %v7768 = vpop.f32.mrb[0].mxu0
        %v7769 = vadd.f32 0.0, %v7768
        %v7770 = vpop.f32.mrb[0].mxu0
        %v7771 = vadd.f32 0.0, %v7770
        %v7772 = vpop.f32.mrb[0].mxu0
        %v7773 = vadd.f32 0.0, %v7772
        %v7774 = vpop.f32.mrb[0].mxu0
        %v7775 = vadd.f32 0.0, %v7774
        %7776 = vdwg.mxu0
        %7777 = vmatprep.subr.bf16.mxu0 %v4418
        %7778 = vmatpush1.bf16.msra.mxu0 %v4417
        %7779 = vmatprep.subr.bf16.mxu0 %v4546
        %7780 = vmatpush1.bf16.msra.mxu0 %v4545
        %7781 = vmatprep.subr.bf16.mxu0 %v4674
        %7782 = vmatpush1.bf16.msra.mxu0 %v4673
        %7783 = vmatprep.subr.bf16.mxu0 %v4802
        %7784 = vmatpush1.bf16.msra.mxu0 %v4801
        %7785 = vmatprep.subr.bf16.mxu0 %v4930
        %7786 = vmatpush1.bf16.msra.mxu0 %v4929
        %7787 = vmatprep.subr.bf16.mxu0 %v5058
        %7788 = vmatpush1.bf16.msra.mxu0 %v5057
        %7789 = vmatprep.subr.bf16.mxu0 %v5186
        %7790 = vmatpush1.bf16.msra.mxu0 %v5185
        %7791 = vmatprep.subr.bf16.mxu0 %v5314
        %7792 = vmatpush1.bf16.msra.mxu0 %v5313
        %7793 = vmatprep.subr.bf16.mxu0 0
        %7794 = vmatpush1.bf16.msra.mxu0 0
        %7795 = vmatprep.subr.bf16.mxu0 0
        %7796 = vmatpush1.bf16.msra.mxu0 0
        %7797 = vmatprep.subr.bf16.mxu0 0
        %7798 = vmatpush1.bf16.msra.mxu0 0
        %7799 = vmatprep.subr.bf16.mxu0 0
        %7800 = vmatpush1.bf16.msra.mxu0 0
        %7801 = vmatprep.subr.bf16.mxu0 0
        %7802 = vmatpush1.bf16.msra.mxu0 0
        %7803 = vmatprep.subr.bf16.mxu0 0
        %7804 = vmatpush1.bf16.msra.mxu0 0
        %7805 = vmatprep.subr.bf16.mxu0 0
        %7806 = vmatpush1.bf16.msra.mxu0 0
        %7807 = vmatprep.subr.bf16.mxu0 0
        %7808 = vmatpush1.bf16.msra.mxu0 0
        %7809 = vmatprep.mubr.bf16.mxu0 0
        %7810 = vmatmul.mubr.bf16.gmra.mrb[0].mxu0 %v256
        %v7811 = vpop.f32.mrb[0].mxu0
        %v7812 = vadd.f32 0.0, %v7811
        %v7813 = vpop.f32.mrb[0].mxu0
        %v7814 = vadd.f32 0.0, %v7813
        %v7815 = vpop.f32.mrb[0].mxu0
        %v7816 = vadd.f32 0.0, %v7815
        %v7817 = vpop.f32.mrb[0].mxu0
        %v7818 = vadd.f32 0.0, %v7817
        %7819 = vdwg.mxu0
        %7820 = vmatprep.subr.bf16.mxu0 %v4420
        %7821 = vmatpush1.bf16.msra.mxu0 %v4419
        %7822 = vmatprep.subr.bf16.mxu0 %v4548
        %7823 = vmatpush1.bf16.msra.mxu0 %v4547
        %7824 = vmatprep.subr.bf16.mxu0 %v4676
        %7825 = vmatpush1.bf16.msra.mxu0 %v4675
        %7826 = vmatprep.subr.bf16.mxu0 %v4804
        %7827 = vmatpush1.bf16.msra.mxu0 %v4803
        %7828 = vmatprep.subr.bf16.mxu0 %v4932
        %7829 = vmatpush1.bf16.msra.mxu0 %v4931
        %7830 = vmatprep.subr.bf16.mxu0 %v5060
        %7831 = vmatpush1.bf16.msra.mxu0 %v5059
        %7832 = vmatprep.subr.bf16.mxu0 %v5188
        %7833 = vmatpush1.bf16.msra.mxu0 %v5187
        %7834 = vmatprep.subr.bf16.mxu0 %v5316
        %7835 = vmatpush1.bf16.msra.mxu0 %v5315
        %7836 = vmatprep.subr.bf16.mxu0 0
        %7837 = vmatpush1.bf16.msra.mxu0 0
        %7838 = vmatprep.subr.bf16.mxu0 0
        %7839 = vmatpush1.bf16.msra.mxu0 0
        %7840 = vmatprep.subr.bf16.mxu0 0
        %7841 = vmatpush1.bf16.msra.mxu0 0
        %7842 = vmatprep.subr.bf16.mxu0 0
        %7843 = vmatpush1.bf16.msra.mxu0 0
        %7844 = vmatprep.subr.bf16.mxu0 0
        %7845 = vmatpush1.bf16.msra.mxu0 0
        %7846 = vmatprep.subr.bf16.mxu0 0
        %7847 = vmatpush1.bf16.msra.mxu0 0
        %7848 = vmatprep.subr.bf16.mxu0 0
        %7849 = vmatpush1.bf16.msra.mxu0 0
        %7850 = vmatprep.subr.bf16.mxu0 0
        %7851 = vmatpush1.bf16.msra.mxu0 0
        %7852 = vmatprep.mubr.bf16.mxu0 0
        %7853 = vmatmul.mubr.bf16.gmra.mrb[0].mxu0 %v256
        %v7854 = vpop.f32.mrb[0].mxu0
        %v7855 = vadd.f32 0.0, %v7854
        %v7856 = vpop.f32.mrb[0].mxu0
        %v7857 = vadd.f32 0.0, %v7856
        %v7858 = vpop.f32.mrb[0].mxu0
        %v7859 = vadd.f32 0.0, %v7858
        %v7860 = vpop.f32.mrb[0].mxu0
        %v7861 = vadd.f32 0.0, %v7860
        %7862 = vdwg.mxu0
        %7863 = vmatprep.subr.bf16.mxu0 %v4422
        %7864 = vmatpush1.bf16.msra.mxu0 %v4421
        %7865 = vmatprep.subr.bf16.mxu0 %v4550
        %7866 = vmatpush1.bf16.msra.mxu0 %v4549
        %7867 = vmatprep.subr.bf16.mxu0 %v4678
        %7868 = vmatpush1.bf16.msra.mxu0 %v4677
        %7869 = vmatprep.subr.bf16.mxu0 %v4806
        %7870 = vmatpush1.bf16.msra.mxu0 %v4805
        %7871 = vmatprep.subr.bf16.mxu0 %v4934
        %7872 = vmatpush1.bf16.msra.mxu0 %v4933
        %7873 = vmatprep.subr.bf16.mxu0 %v5062
        %7874 = vmatpush1.bf16.msra.mxu0 %v5061
        %7875 = vmatprep.subr.bf16.mxu0 %v5190
        %7876 = vmatpush1.bf16.msra.mxu0 %v5189
        %7877 = vmatprep.subr.bf16.mxu0 %v5318
        %7878 = vmatpush1.bf16.msra.mxu0 %v5317
        %7879 = vmatprep.subr.bf16.mxu0 0
        %7880 = vmatpush1.bf16.msra.mxu0 0
        %7881 = vmatprep.subr.bf16.mxu0 0
        %7882 = vmatpush1.bf16.msra.mxu0 0
        %7883 = vmatprep.subr.bf16.mxu0 0
        %7884 = vmatpush1.bf16.msra.mxu0 0
        %7885 = vmatprep.subr.bf16.mxu0 0
        %7886 = vmatpush1.bf16.msra.mxu0 0
        %7887 = vmatprep.subr.bf16.mxu0 0
        %7888 = vmatpush1.bf16.msra.mxu0 0
        %7889 = vmatprep.subr.bf16.mxu0 0
        %7890 = vmatpush1.bf16.msra.mxu0 0
        %7891 = vmatprep.subr.bf16.mxu0 0
        %7892 = vmatpush1.bf16.msra.mxu0 0
        %7893 = vmatprep.subr.bf16.mxu0 0
        %7894 = vmatpush1.bf16.msra.mxu0 0
        %7895 = vmatprep.mubr.bf16.mxu0 0
        %7896 = vmatmul.mubr.bf16.gmra.mrb[0].mxu0 %v256
        %v7897 = vpop.f32.mrb[0].mxu0
        %v7898 = vadd.f32 0.0, %v7897
        %v7899 = vpop.f32.mrb[0].mxu0
        %v7900 = vadd.f32 0.0, %v7899
        %v7901 = vpop.f32.mrb[0].mxu0
        %v7902 = vadd.f32 0.0, %v7901
        %v7903 = vpop.f32.mrb[0].mxu0
        %v7904 = vadd.f32 0.0, %v7903
        %7905 = vdwg.mxu0
        %7906 = vmatprep.subr.bf16.mxu0 %v4424
        %7907 = vmatpush1.bf16.msra.mxu0 %v4423
        %7908 = vmatprep.subr.bf16.mxu0 %v4552
        %7909 = vmatpush1.bf16.msra.mxu0 %v4551
        %7910 = vmatprep.subr.bf16.mxu0 %v4680
        %7911 = vmatpush1.bf16.msra.mxu0 %v4679
        %7912 = vmatprep.subr.bf16.mxu0 %v4808
        %7913 = vmatpush1.bf16.msra.mxu0 %v4807
        %7914 = vmatprep.subr.bf16.mxu0 %v4936
        %7915 = vmatpush1.bf16.msra.mxu0 %v4935
        %7916 = vmatprep.subr.bf16.mxu0 %v5064
        %7917 = vmatpush1.bf16.msra.mxu0 %v5063
        %7918 = vmatprep.subr.bf16.mxu0 %v5192
        %7919 = vmatpush1.bf16.msra.mxu0 %v5191
        %7920 = vmatprep.subr.bf16.mxu0 %v5320
        %7921 = vmatpush1.bf16.msra.mxu0 %v5319
        %7922 = vmatprep.subr.bf16.mxu0 0
        %7923 = vmatpush1.bf16.msra.mxu0 0
        %7924 = vmatprep.subr.bf16.mxu0 0
        %7925 = vmatpush1.bf16.msra.mxu0 0
        %7926 = vmatprep.subr.bf16.mxu0 0
        %7927 = vmatpush1.bf16.msra.mxu0 0
        %7928 = vmatprep.subr.bf16.mxu0 0
        %7929 = vmatpush1.bf16.msra.mxu0 0
        %7930 = vmatprep.subr.bf16.mxu0 0
        %7931 = vmatpush1.bf16.msra.mxu0 0
        %7932 = vmatprep.subr.bf16.mxu0 0
        %7933 = vmatpush1.bf16.msra.mxu0 0
        %7934 = vmatprep.subr.bf16.mxu0 0
        %7935 = vmatpush1.bf16.msra.mxu0 0
        %7936 = vmatprep.subr.bf16.mxu0 0
        %7937 = vmatpush1.bf16.msra.mxu0 0
        %7938 = vmatprep.mubr.bf16.mxu0 0
        %7939 = vmatmul.mubr.bf16.gmra.mrb[0].mxu0 %v256
        %v7940 = vpop.f32.mrb[0].mxu0
        %v7941 = vadd.f32 0.0, %v7940
        %v7942 = vpop.f32.mrb[0].mxu0
        %v7943 = vadd.f32 0.0, %v7942
        %v7944 = vpop.f32.mrb[0].mxu0
        %v7945 = vadd.f32 0.0, %v7944
        %v7946 = vpop.f32.mrb[0].mxu0
        %v7947 = vadd.f32 0.0, %v7946
        %7948 = vdwg.mxu0
        %7949 = vmatprep.subr.bf16.mxu0 %v4426
        %7950 = vmatpush1.bf16.msra.mxu0 %v4425
        %7951 = vmatprep.subr.bf16.mxu0 %v4554
        %7952 = vmatpush1.bf16.msra.mxu0 %v4553
        %7953 = vmatprep.subr.bf16.mxu0 %v4682
        %7954 = vmatpush1.bf16.msra.mxu0 %v4681
        %7955 = vmatprep.subr.bf16.mxu0 %v4810
        %7956 = vmatpush1.bf16.msra.mxu0 %v4809
        %7957 = vmatprep.subr.bf16.mxu0 %v4938
        %7958 = vmatpush1.bf16.msra.mxu0 %v4937
        %7959 = vmatprep.subr.bf16.mxu0 %v5066
        %7960 = vmatpush1.bf16.msra.mxu0 %v5065
        %7961 = vmatprep.subr.bf16.mxu0 %v5194
        %7962 = vmatpush1.bf16.msra.mxu0 %v5193
        %7963 = vmatprep.subr.bf16.mxu0 %v5322
        %7964 = vmatpush1.bf16.msra.mxu0 %v5321
        %7965 = vmatprep.subr.bf16.mxu0 0
        %7966 = vmatpush1.bf16.msra.mxu0 0
        %7967 = vmatprep.subr.bf16.mxu0 0
        %7968 = vmatpush1.bf16.msra.mxu0 0
        %7969 = vmatprep.subr.bf16.mxu0 0
        %7970 = vmatpush1.bf16.msra.mxu0 0
        %7971 = vmatprep.subr.bf16.mxu0 0
        %7972 = vmatpush1.bf16.msra.mxu0 0
        %7973 = vmatprep.subr.bf16.mxu0 0
        %7974 = vmatpush1.bf16.msra.mxu0 0
        %7975 = vmatprep.subr.bf16.mxu0 0
        %7976 = vmatpush1.bf16.msra.mxu0 0
        %7977 = vmatprep.subr.bf16.mxu0 0
        %7978 = vmatpush1.bf16.msra.mxu0 0
        %7979 = vmatprep.subr.bf16.mxu0 0
        %7980 = vmatpush1.bf16.msra.mxu0 0
        %7981 = vmatprep.mubr.bf16.mxu0 0
        %7982 = vmatmul.mubr.bf16.gmra.mrb[0].mxu0 %v256
        %v7983 = vpop.f32.mrb[0].mxu0
        %v7984 = vadd.f32 0.0, %v7983
        %v7985 = vpop.f32.mrb[0].mxu0
        %v7986 = vadd.f32 0.0, %v7985
        %v7987 = vpop.f32.mrb[0].mxu0
        %v7988 = vadd.f32 0.0, %v7987
        %v7989 = vpop.f32.mrb[0].mxu0
        %v7990 = vadd.f32 0.0, %v7989
        %7991 = vdwg.mxu0
        %7992 = vmatprep.subr.bf16.mxu0 %v4428
        %7993 = vmatpush1.bf16.msra.mxu0 %v4427
        %7994 = vmatprep.subr.bf16.mxu0 %v4556
        %7995 = vmatpush1.bf16.msra.mxu0 %v4555
        %7996 = vmatprep.subr.bf16.mxu0 %v4684
        %7997 = vmatpush1.bf16.msra.mxu0 %v4683
        %7998 = vmatprep.subr.bf16.mxu0 %v4812
        %7999 = vmatpush1.bf16.msra.mxu0 %v4811
        %8000 = vmatprep.subr.bf16.mxu0 %v4940
        %8001 = vmatpush1.bf16.msra.mxu0 %v4939
        %8002 = vmatprep.subr.bf16.mxu0 %v5068
        %8003 = vmatpush1.bf16.msra.mxu0 %v5067
        %8004 = vmatprep.subr.bf16.mxu0 %v5196
        %8005 = vmatpush1.bf16.msra.mxu0 %v5195
        %8006 = vmatprep.subr.bf16.mxu0 %v5324
        %8007 = vmatpush1.bf16.msra.mxu0 %v5323
        %8008 = vmatprep.subr.bf16.mxu0 0
        %8009 = vmatpush1.bf16.msra.mxu0 0
        %8010 = vmatprep.subr.bf16.mxu0 0
        %8011 = vmatpush1.bf16.msra.mxu0 0
        %8012 = vmatprep.subr.bf16.mxu0 0
        %8013 = vmatpush1.bf16.msra.mxu0 0
        %8014 = vmatprep.subr.bf16.mxu0 0
        %8015 = vmatpush1.bf16.msra.mxu0 0
        %8016 = vmatprep.subr.bf16.mxu0 0
        %8017 = vmatpush1.bf16.msra.mxu0 0
        %8018 = vmatprep.subr.bf16.mxu0 0
        %8019 = vmatpush1.bf16.msra.mxu0 0
        %8020 = vmatprep.subr.bf16.mxu0 0
        %8021 = vmatpush1.bf16.msra.mxu0 0
        %8022 = vmatprep.subr.bf16.mxu0 0
        %8023 = vmatpush1.bf16.msra.mxu0 0
        %8024 = vmatprep.mubr.bf16.mxu0 0
        %8025 = vmatmul.mubr.bf16.gmra.mrb[0].mxu0 %v256
        %v8026 = vpop.f32.mrb[0].mxu0
        %v8027 = vadd.f32 0.0, %v8026
        %v8028 = vpop.f32.mrb[0].mxu0
        %v8029 = vadd.f32 0.0, %v8028
        %v8030 = vpop.f32.mrb[0].mxu0
        %v8031 = vadd.f32 0.0, %v8030
        %v8032 = vpop.f32.mrb[0].mxu0
        %v8033 = vadd.f32 0.0, %v8032
        %8034 = vdwg.mxu0
        %8035 = vmatprep.subr.bf16.mxu0 %v4430
        %8036 = vmatpush1.bf16.msra.mxu0 %v4429
        %8037 = vmatprep.subr.bf16.mxu0 %v4558
        %8038 = vmatpush1.bf16.msra.mxu0 %v4557
        %8039 = vmatprep.subr.bf16.mxu0 %v4686
        %8040 = vmatpush1.bf16.msra.mxu0 %v4685
        %8041 = vmatprep.subr.bf16.mxu0 %v4814
        %8042 = vmatpush1.bf16.msra.mxu0 %v4813
        %8043 = vmatprep.subr.bf16.mxu0 %v4942
        %8044 = vmatpush1.bf16.msra.mxu0 %v4941
        %8045 = vmatprep.subr.bf16.mxu0 %v5070
        %8046 = vmatpush1.bf16.msra.mxu0 %v5069
        %8047 = vmatprep.subr.bf16.mxu0 %v5198
        %8048 = vmatpush1.bf16.msra.mxu0 %v5197
        %8049 = vmatprep.subr.bf16.mxu0 %v5326
        %8050 = vmatpush1.bf16.msra.mxu0 %v5325
        %8051 = vmatprep.subr.bf16.mxu0 0
        %8052 = vmatpush1.bf16.msra.mxu0 0
        %8053 = vmatprep.subr.bf16.mxu0 0
        %8054 = vmatpush1.bf16.msra.mxu0 0
        %8055 = vmatprep.subr.bf16.mxu0 0
        %8056 = vmatpush1.bf16.msra.mxu0 0
        %8057 = vmatprep.subr.bf16.mxu0 0
        %8058 = vmatpush1.bf16.msra.mxu0 0
        %8059 = vmatprep.subr.bf16.mxu0 0
        %8060 = vmatpush1.bf16.msra.mxu0 0
        %8061 = vmatprep.subr.bf16.mxu0 0
        %8062 = vmatpush1.bf16.msra.mxu0 0
        %8063 = vmatprep.subr.bf16.mxu0 0
        %8064 = vmatpush1.bf16.msra.mxu0 0
        %8065 = vmatprep.subr.bf16.mxu0 0
        %8066 = vmatpush1.bf16.msra.mxu0 0
        %8067 = vmatprep.mubr.bf16.mxu0 0
        %8068 = vmatmul.mubr.bf16.gmra.mrb[0].mxu0 %v256
        %v8069 = vpop.f32.mrb[0].mxu0
        %v8070 = vadd.f32 0.0, %v8069
        %v8071 = vpop.f32.mrb[0].mxu0
        %v8072 = vadd.f32 0.0, %v8071
        %v8073 = vpop.f32.mrb[0].mxu0
        %v8074 = vadd.f32 0.0, %v8073
        %v8075 = vpop.f32.mrb[0].mxu0
        %v8076 = vadd.f32 0.0, %v8075
        %8077 = vdwg.mxu0
        %8078 = vmatprep.subr.bf16.mxu0 %v4432
        %8079 = vmatpush1.bf16.msra.mxu0 %v4431
        %8080 = vmatprep.subr.bf16.mxu0 %v4560
        %8081 = vmatpush1.bf16.msra.mxu0 %v4559
        %8082 = vmatprep.subr.bf16.mxu0 %v4688
        %8083 = vmatpush1.bf16.msra.mxu0 %v4687
        %8084 = vmatprep.subr.bf16.mxu0 %v4816
        %8085 = vmatpush1.bf16.msra.mxu0 %v4815
        %8086 = vmatprep.subr.bf16.mxu0 %v4944
        %8087 = vmatpush1.bf16.msra.mxu0 %v4943
        %8088 = vmatprep.subr.bf16.mxu0 %v5072
        %8089 = vmatpush1.bf16.msra.mxu0 %v5071
        %8090 = vmatprep.subr.bf16.mxu0 %v5200
        %8091 = vmatpush1.bf16.msra.mxu0 %v5199
        %8092 = vmatprep.subr.bf16.mxu0 %v5328
        %8093 = vmatpush1.bf16.msra.mxu0 %v5327
        %8094 = vmatprep.subr.bf16.mxu0 0
        %8095 = vmatpush1.bf16.msra.mxu0 0
        %8096 = vmatprep.subr.bf16.mxu0 0
        %8097 = vmatpush1.bf16.msra.mxu0 0
        %8098 = vmatprep.subr.bf16.mxu0 0
        %8099 = vmatpush1.bf16.msra.mxu0 0
        %8100 = vmatprep.subr.bf16.mxu0 0
        %8101 = vmatpush1.bf16.msra.mxu0 0
        %8102 = vmatprep.subr.bf16.mxu0 0
        %8103 = vmatpush1.bf16.msra.mxu0 0
        %8104 = vmatprep.subr.bf16.mxu0 0
        %8105 = vmatpush1.bf16.msra.mxu0 0
        %8106 = vmatprep.subr.bf16.mxu0 0
        %8107 = vmatpush1.bf16.msra.mxu0 0
        %8108 = vmatprep.subr.bf16.mxu0 0
        %8109 = vmatpush1.bf16.msra.mxu0 0
        %8110 = vmatprep.mubr.bf16.mxu0 0
        %8111 = vmatmul.mubr.bf16.gmra.mrb[0].mxu0 %v256
        %v8112 = vpop.f32.mrb[0].mxu0
        %v8113 = vadd.f32 0.0, %v8112
        %v8114 = vpop.f32.mrb[0].mxu0
        %v8115 = vadd.f32 0.0, %v8114
        %v8116 = vpop.f32.mrb[0].mxu0
        %v8117 = vadd.f32 0.0, %v8116
        %v8118 = vpop.f32.mrb[0].mxu0
        %v8119 = vadd.f32 0.0, %v8118
        %8120 = vdwg.mxu0
        %8121 = vmatprep.subr.bf16.mxu0 %v4434
        %8122 = vmatpush1.bf16.msra.mxu0 %v4433
        %8123 = vmatprep.subr.bf16.mxu0 %v4562
        %8124 = vmatpush1.bf16.msra.mxu0 %v4561
        %8125 = vmatprep.subr.bf16.mxu0 %v4690
        %8126 = vmatpush1.bf16.msra.mxu0 %v4689
        %8127 = vmatprep.subr.bf16.mxu0 %v4818
        %8128 = vmatpush1.bf16.msra.mxu0 %v4817
        %8129 = vmatprep.subr.bf16.mxu0 %v4946
        %8130 = vmatpush1.bf16.msra.mxu0 %v4945
        %8131 = vmatprep.subr.bf16.mxu0 %v5074
        %8132 = vmatpush1.bf16.msra.mxu0 %v5073
        %8133 = vmatprep.subr.bf16.mxu0 %v5202
        %8134 = vmatpush1.bf16.msra.mxu0 %v5201
        %8135 = vmatprep.subr.bf16.mxu0 %v5330
        %8136 = vmatpush1.bf16.msra.mxu0 %v5329
        %8137 = vmatprep.subr.bf16.mxu0 0
        %8138 = vmatpush1.bf16.msra.mxu0 0
        %8139 = vmatprep.subr.bf16.mxu0 0
        %8140 = vmatpush1.bf16.msra.mxu0 0
        %8141 = vmatprep.subr.bf16.mxu0 0
        %8142 = vmatpush1.bf16.msra.mxu0 0
        %8143 = vmatprep.subr.bf16.mxu0 0
        %8144 = vmatpush1.bf16.msra.mxu0 0
        %8145 = vmatprep.subr.bf16.mxu0 0
        %8146 = vmatpush1.bf16.msra.mxu0 0
        %8147 = vmatprep.subr.bf16.mxu0 0
        %8148 = vmatpush1.bf16.msra.mxu0 0
        %8149 = vmatprep.subr.bf16.mxu0 0
        %8150 = vmatpush1.bf16.msra.mxu0 0
        %8151 = vmatprep.subr.bf16.mxu0 0
        %8152 = vmatpush1.bf16.msra.mxu0 0
        %8153 = vmatprep.mubr.bf16.mxu0 0
        %8154 = vmatmul.mubr.bf16.gmra.mrb[0].mxu0 %v256
        %v8155 = vpop.f32.mrb[0].mxu0
        %v8156 = vadd.f32 0.0, %v8155
        %v8157 = vpop.f32.mrb[0].mxu0
        %v8158 = vadd.f32 0.0, %v8157
        %v8159 = vpop.f32.mrb[0].mxu0
        %v8160 = vadd.f32 0.0, %v8159
        %v8161 = vpop.f32.mrb[0].mxu0
        %v8162 = vadd.f32 0.0, %v8161
        %8163 = vdwg.mxu0
        %8164 = vmatprep.subr.bf16.mxu0 %v4436
        %8165 = vmatpush1.bf16.msra.mxu0 %v4435
        %8166 = vmatprep.subr.bf16.mxu0 %v4564
        %8167 = vmatpush1.bf16.msra.mxu0 %v4563
        %8168 = vmatprep.subr.bf16.mxu0 %v4692
        %8169 = vmatpush1.bf16.msra.mxu0 %v4691
        %8170 = vmatprep.subr.bf16.mxu0 %v4820
        %8171 = vmatpush1.bf16.msra.mxu0 %v4819
        %8172 = vmatprep.subr.bf16.mxu0 %v4948
        %8173 = vmatpush1.bf16.msra.mxu0 %v4947
        %8174 = vmatprep.subr.bf16.mxu0 %v5076
        %8175 = vmatpush1.bf16.msra.mxu0 %v5075
        %8176 = vmatprep.subr.bf16.mxu0 %v5204
        %8177 = vmatpush1.bf16.msra.mxu0 %v5203
        %8178 = vmatprep.subr.bf16.mxu0 %v5332
        %8179 = vmatpush1.bf16.msra.mxu0 %v5331
        %8180 = vmatprep.subr.bf16.mxu0 0
        %8181 = vmatpush1.bf16.msra.mxu0 0
        %8182 = vmatprep.subr.bf16.mxu0 0
        %8183 = vmatpush1.bf16.msra.mxu0 0
        %8184 = vmatprep.subr.bf16.mxu0 0
        %8185 = vmatpush1.bf16.msra.mxu0 0
        %8186 = vmatprep.subr.bf16.mxu0 0
        %8187 = vmatpush1.bf16.msra.mxu0 0
        %8188 = vmatprep.subr.bf16.mxu0 0
        %8189 = vmatpush1.bf16.msra.mxu0 0
        %8190 = vmatprep.subr.bf16.mxu0 0
        %8191 = vmatpush1.bf16.msra.mxu0 0
        %8192 = vmatprep.subr.bf16.mxu0 0
        %8193 = vmatpush1.bf16.msra.mxu0 0
        %8194 = vmatprep.subr.bf16.mxu0 0
        %8195 = vmatpush1.bf16.msra.mxu0 0
        %8196 = vmatprep.mubr.bf16.mxu0 0
        %8197 = vmatmul.mubr.bf16.gmra.mrb[0].mxu0 %v256
        %v8198 = vpop.f32.mrb[0].mxu0
        %v8199 = vadd.f32 0.0, %v8198
        %v8200 = vpop.f32.mrb[0].mxu0
        %v8201 = vadd.f32 0.0, %v8200
        %v8202 = vpop.f32.mrb[0].mxu0
        %v8203 = vadd.f32 0.0, %v8202
        %v8204 = vpop.f32.mrb[0].mxu0
        %v8205 = vadd.f32 0.0, %v8204
        %8206 = vdwg.mxu0
        %8207 = vmatprep.subr.bf16.mxu0 %v4438
        %8208 = vmatpush1.bf16.msra.mxu0 %v4437
        %8209 = vmatprep.subr.bf16.mxu0 %v4566
        %8210 = vmatpush1.bf16.msra.mxu0 %v4565
        %8211 = vmatprep.subr.bf16.mxu0 %v4694
        %8212 = vmatpush1.bf16.msra.mxu0 %v4693
        %8213 = vmatprep.subr.bf16.mxu0 %v4822
        %8214 = vmatpush1.bf16.msra.mxu0 %v4821
        %8215 = vmatprep.subr.bf16.mxu0 %v4950
        %8216 = vmatpush1.bf16.msra.mxu0 %v4949
        %8217 = vmatprep.subr.bf16.mxu0 %v5078
        %8218 = vmatpush1.bf16.msra.mxu0 %v5077
        %8219 = vmatprep.subr.bf16.mxu0 %v5206
        %8220 = vmatpush1.bf16.msra.mxu0 %v5205
        %8221 = vmatprep.subr.bf16.mxu0 %v5334
        %8222 = vmatpush1.bf16.msra.mxu0 %v5333
        %8223 = vmatprep.subr.bf16.mxu0 0
        %8224 = vmatpush1.bf16.msra.mxu0 0
        %8225 = vmatprep.subr.bf16.mxu0 0
        %8226 = vmatpush1.bf16.msra.mxu0 0
        %8227 = vmatprep.subr.bf16.mxu0 0
        %8228 = vmatpush1.bf16.msra.mxu0 0
        %8229 = vmatprep.subr.bf16.mxu0 0
        %8230 = vmatpush1.bf16.msra.mxu0 0
        %8231 = vmatprep.subr.bf16.mxu0 0
        %8232 = vmatpush1.bf16.msra.mxu0 0
        %8233 = vmatprep.subr.bf16.mxu0 0
        %8234 = vmatpush1.bf16.msra.mxu0 0
        %8235 = vmatprep.subr.bf16.mxu0 0
        %8236 = vmatpush1.bf16.msra.mxu0 0
        %8237 = vmatprep.subr.bf16.mxu0 0
        %8238 = vmatpush1.bf16.msra.mxu0 0
        %8239 = vmatprep.mubr.bf16.mxu0 0
        %8240 = vmatmul.mubr.bf16.gmra.mrb[0].mxu0 %v256
        %v8241 = vpop.f32.mrb[0].mxu0
        %v8242 = vadd.f32 0.0, %v8241
        %v8243 = vpop.f32.mrb[0].mxu0
        %v8244 = vadd.f32 0.0, %v8243
        %v8245 = vpop.f32.mrb[0].mxu0
        %v8246 = vadd.f32 0.0, %v8245
        %v8247 = vpop.f32.mrb[0].mxu0
        %v8248 = vadd.f32 0.0, %v8247
        %8249 = vdwg.mxu0
        %8250 = vmatprep.subr.bf16.mxu0 %v4440
        %8251 = vmatpush1.bf16.msra.mxu0 %v4439
        %8252 = vmatprep.subr.bf16.mxu0 %v4568
        %8253 = vmatpush1.bf16.msra.mxu0 %v4567
        %8254 = vmatprep.subr.bf16.mxu0 %v4696
        %8255 = vmatpush1.bf16.msra.mxu0 %v4695
        %8256 = vmatprep.subr.bf16.mxu0 %v4824
        %8257 = vmatpush1.bf16.msra.mxu0 %v4823
        %8258 = vmatprep.subr.bf16.mxu0 %v4952
        %8259 = vmatpush1.bf16.msra.mxu0 %v4951
        %8260 = vmatprep.subr.bf16.mxu0 %v5080
        %8261 = vmatpush1.bf16.msra.mxu0 %v5079
        %8262 = vmatprep.subr.bf16.mxu0 %v5208
        %8263 = vmatpush1.bf16.msra.mxu0 %v5207
        %8264 = vmatprep.subr.bf16.mxu0 %v5336
        %8265 = vmatpush1.bf16.msra.mxu0 %v5335
        %8266 = vmatprep.subr.bf16.mxu0 0
        %8267 = vmatpush1.bf16.msra.mxu0 0
        %8268 = vmatprep.subr.bf16.mxu0 0
        %8269 = vmatpush1.bf16.msra.mxu0 0
        %8270 = vmatprep.subr.bf16.mxu0 0
        %8271 = vmatpush1.bf16.msra.mxu0 0
        %8272 = vmatprep.subr.bf16.mxu0 0
        %8273 = vmatpush1.bf16.msra.mxu0 0
        %8274 = vmatprep.subr.bf16.mxu0 0
        %8275 = vmatpush1.bf16.msra.mxu0 0
        %8276 = vmatprep.subr.bf16.mxu0 0
        %8277 = vmatpush1.bf16.msra.mxu0 0
        %8278 = vmatprep.subr.bf16.mxu0 0
        %8279 = vmatpush1.bf16.msra.mxu0 0
        %8280 = vmatprep.subr.bf16.mxu0 0
        %8281 = vmatpush1.bf16.msra.mxu0 0
        %8282 = vmatprep.mubr.bf16.mxu0 0
        %8283 = vmatmul.mubr.bf16.gmra.mrb[0].mxu0 %v256
        %v8284 = vpop.f32.mrb[0].mxu0
        %v8285 = vadd.f32 0.0, %v8284
        %v8286 = vpop.f32.mrb[0].mxu0
        %v8287 = vadd.f32 0.0, %v8286
        %v8288 = vpop.f32.mrb[0].mxu0
        %v8289 = vadd.f32 0.0, %v8288
        %v8290 = vpop.f32.mrb[0].mxu0
        %v8291 = vadd.f32 0.0, %v8290
        %8292 = vdwg.mxu0
        %8293 = vmatprep.subr.bf16.mxu0 %v4442
        %8294 = vmatpush1.bf16.msra.mxu0 %v4441
        %8295 = vmatprep.subr.bf16.mxu0 %v4570
        %8296 = vmatpush1.bf16.msra.mxu0 %v4569
        %8297 = vmatprep.subr.bf16.mxu0 %v4698
        %8298 = vmatpush1.bf16.msra.mxu0 %v4697
        %8299 = vmatprep.subr.bf16.mxu0 %v4826
        %8300 = vmatpush1.bf16.msra.mxu0 %v4825
        %8301 = vmatprep.subr.bf16.mxu0 %v4954
        %8302 = vmatpush1.bf16.msra.mxu0 %v4953
        %8303 = vmatprep.subr.bf16.mxu0 %v5082
        %8304 = vmatpush1.bf16.msra.mxu0 %v5081
        %8305 = vmatprep.subr.bf16.mxu0 %v5210
        %8306 = vmatpush1.bf16.msra.mxu0 %v5209
        %8307 = vmatprep.subr.bf16.mxu0 %v5338
        %8308 = vmatpush1.bf16.msra.mxu0 %v5337
        %8309 = vmatprep.subr.bf16.mxu0 0
        %8310 = vmatpush1.bf16.msra.mxu0 0
        %8311 = vmatprep.subr.bf16.mxu0 0
        %8312 = vmatpush1.bf16.msra.mxu0 0
        %8313 = vmatprep.subr.bf16.mxu0 0
        %8314 = vmatpush1.bf16.msra.mxu0 0
        %8315 = vmatprep.subr.bf16.mxu0 0
        %8316 = vmatpush1.bf16.msra.mxu0 0
        %8317 = vmatprep.subr.bf16.mxu0 0
        %8318 = vmatpush1.bf16.msra.mxu0 0
        %8319 = vmatprep.subr.bf16.mxu0 0
        %8320 = vmatpush1.bf16.msra.mxu0 0
        %8321 = vmatprep.subr.bf16.mxu0 0
        %8322 = vmatpush1.bf16.msra.mxu0 0
        %8323 = vmatprep.subr.bf16.mxu0 0
        %8324 = vmatpush1.bf16.msra.mxu0 0
        %8325 = vmatprep.mubr.bf16.mxu0 0
        %8326 = vmatmul.mubr.bf16.gmra.mrb[0].mxu0 %v256
        %v8327 = vpop.f32.mrb[0].mxu0
        %v8328 = vadd.f32 0.0, %v8327
        %v8329 = vpop.f32.mrb[0].mxu0
        %v8330 = vadd.f32 0.0, %v8329
        %v8331 = vpop.f32.mrb[0].mxu0
        %v8332 = vadd.f32 0.0, %v8331
        %v8333 = vpop.f32.mrb[0].mxu0
        %v8334 = vadd.f32 0.0, %v8333
        %8335 = vdwg.mxu0
        %8336 = vmatprep.subr.bf16.mxu0 %v4444
        %8337 = vmatpush1.bf16.msra.mxu0 %v4443
        %8338 = vmatprep.subr.bf16.mxu0 %v4572
        %8339 = vmatpush1.bf16.msra.mxu0 %v4571
        %8340 = vmatprep.subr.bf16.mxu0 %v4700
        %8341 = vmatpush1.bf16.msra.mxu0 %v4699
        %8342 = vmatprep.subr.bf16.mxu0 %v4828
        %8343 = vmatpush1.bf16.msra.mxu0 %v4827
        %8344 = vmatprep.subr.bf16.mxu0 %v4956
        %8345 = vmatpush1.bf16.msra.mxu0 %v4955
        %8346 = vmatprep.subr.bf16.mxu0 %v5084
        %8347 = vmatpush1.bf16.msra.mxu0 %v5083
        %8348 = vmatprep.subr.bf16.mxu0 %v5212
        %8349 = vmatpush1.bf16.msra.mxu0 %v5211
        %8350 = vmatprep.subr.bf16.mxu0 %v5340
        %8351 = vmatpush1.bf16.msra.mxu0 %v5339
        %8352 = vmatprep.subr.bf16.mxu0 0
        %8353 = vmatpush1.bf16.msra.mxu0 0
        %8354 = vmatprep.subr.bf16.mxu0 0
        %8355 = vmatpush1.bf16.msra.mxu0 0
        %8356 = vmatprep.subr.bf16.mxu0 0
        %8357 = vmatpush1.bf16.msra.mxu0 0
        %8358 = vmatprep.subr.bf16.mxu0 0
        %8359 = vmatpush1.bf16.msra.mxu0 0
        %8360 = vmatprep.subr.bf16.mxu0 0
        %8361 = vmatpush1.bf16.msra.mxu0 0
        %8362 = vmatprep.subr.bf16.mxu0 0
        %8363 = vmatpush1.bf16.msra.mxu0 0
        %8364 = vmatprep.subr.bf16.mxu0 0
        %8365 = vmatpush1.bf16.msra.mxu0 0
        %8366 = vmatprep.subr.bf16.mxu0 0
        %8367 = vmatpush1.bf16.msra.mxu0 0
        %8368 = vmatprep.mubr.bf16.mxu0 0
        %8369 = vmatmul.mubr.bf16.gmra.mrb[0].mxu0 %v256
        %v8370 = vpop.f32.mrb[0].mxu0
        %v8371 = vadd.f32 0.0, %v8370
        %v8372 = vpop.f32.mrb[0].mxu0
        %v8373 = vadd.f32 0.0, %v8372
        %v8374 = vpop.f32.mrb[0].mxu0
        %v8375 = vadd.f32 0.0, %v8374
        %v8376 = vpop.f32.mrb[0].mxu0
        %v8377 = vadd.f32 0.0, %v8376
        %8378 = vdwg.mxu0
        %8379 = vmatprep.subr.bf16.mxu0 %v4446
        %8380 = vmatpush1.bf16.msra.mxu0 %v4445
        %8381 = vmatprep.subr.bf16.mxu0 %v4574
        %8382 = vmatpush1.bf16.msra.mxu0 %v4573
        %8383 = vmatprep.subr.bf16.mxu0 %v4702
        %8384 = vmatpush1.bf16.msra.mxu0 %v4701
        %8385 = vmatprep.subr.bf16.mxu0 %v4830
        %8386 = vmatpush1.bf16.msra.mxu0 %v4829
        %8387 = vmatprep.subr.bf16.mxu0 %v4958
        %8388 = vmatpush1.bf16.msra.mxu0 %v4957
        %8389 = vmatprep.subr.bf16.mxu0 %v5086
        %8390 = vmatpush1.bf16.msra.mxu0 %v5085
        %8391 = vmatprep.subr.bf16.mxu0 %v5214
        %8392 = vmatpush1.bf16.msra.mxu0 %v5213
        %8393 = vmatprep.subr.bf16.mxu0 %v5342
        %8394 = vmatpush1.bf16.msra.mxu0 %v5341
        %8395 = vmatprep.subr.bf16.mxu0 0
        %8396 = vmatpush1.bf16.msra.mxu0 0
        %8397 = vmatprep.subr.bf16.mxu0 0
        %8398 = vmatpush1.bf16.msra.mxu0 0
        %8399 = vmatprep.subr.bf16.mxu0 0
        %8400 = vmatpush1.bf16.msra.mxu0 0
        %8401 = vmatprep.subr.bf16.mxu0 0
        %8402 = vmatpush1.bf16.msra.mxu0 0
        %8403 = vmatprep.subr.bf16.mxu0 0
        %8404 = vmatpush1.bf16.msra.mxu0 0
        %8405 = vmatprep.subr.bf16.mxu0 0
        %8406 = vmatpush1.bf16.msra.mxu0 0
        %8407 = vmatprep.subr.bf16.mxu0 0
        %8408 = vmatpush1.bf16.msra.mxu0 0
        %8409 = vmatprep.subr.bf16.mxu0 0
        %8410 = vmatpush1.bf16.msra.mxu0 0
        %8411 = vmatprep.mubr.bf16.mxu0 0
        %8412 = vmatmul.mubr.bf16.gmra.mrb[0].mxu0 %v256
        %v8413 = vpop.f32.mrb[0].mxu0
        %v8414 = vadd.f32 0.0, %v8413
        %v8415 = vpop.f32.mrb[0].mxu0
        %v8416 = vadd.f32 0.0, %v8415
        %v8417 = vpop.f32.mrb[0].mxu0
        %v8418 = vadd.f32 0.0, %v8417
        %v8419 = vpop.f32.mrb[0].mxu0
        %v8420 = vadd.f32 0.0, %v8419
        %8421 = vdwg.mxu0
        %8422 = vmatprep.subr.bf16.mxu0 %v4448
        %8423 = vmatpush1.bf16.msra.mxu0 %v4447
        %8424 = vmatprep.subr.bf16.mxu0 %v4576
        %8425 = vmatpush1.bf16.msra.mxu0 %v4575
        %8426 = vmatprep.subr.bf16.mxu0 %v4704
        %8427 = vmatpush1.bf16.msra.mxu0 %v4703
        %8428 = vmatprep.subr.bf16.mxu0 %v4832
        %8429 = vmatpush1.bf16.msra.mxu0 %v4831
        %8430 = vmatprep.subr.bf16.mxu0 %v4960
        %8431 = vmatpush1.bf16.msra.mxu0 %v4959
        %8432 = vmatprep.subr.bf16.mxu0 %v5088
        %8433 = vmatpush1.bf16.msra.mxu0 %v5087
        %8434 = vmatprep.subr.bf16.mxu0 %v5216
        %8435 = vmatpush1.bf16.msra.mxu0 %v5215
        %8436 = vmatprep.subr.bf16.mxu0 %v5344
        %8437 = vmatpush1.bf16.msra.mxu0 %v5343
        %8438 = vmatprep.subr.bf16.mxu0 0
        %8439 = vmatpush1.bf16.msra.mxu0 0
        %8440 = vmatprep.subr.bf16.mxu0 0
        %8441 = vmatpush1.bf16.msra.mxu0 0
        %8442 = vmatprep.subr.bf16.mxu0 0
        %8443 = vmatpush1.bf16.msra.mxu0 0
        %8444 = vmatprep.subr.bf16.mxu0 0
        %8445 = vmatpush1.bf16.msra.mxu0 0
        %8446 = vmatprep.subr.bf16.mxu0 0
        %8447 = vmatpush1.bf16.msra.mxu0 0
        %8448 = vmatprep.subr.bf16.mxu0 0
        %8449 = vmatpush1.bf16.msra.mxu0 0
        %8450 = vmatprep.subr.bf16.mxu0 0
        %8451 = vmatpush1.bf16.msra.mxu0 0
        %8452 = vmatprep.subr.bf16.mxu0 0
        %8453 = vmatpush1.bf16.msra.mxu0 0
        %8454 = vmatprep.mubr.bf16.mxu0 0
        %8455 = vmatmul.mubr.bf16.gmra.mrb[0].mxu0 %v256
        %v8456 = vpop.f32.mrb[0].mxu0
        %v8457 = vadd.f32 0.0, %v8456
        %v8458 = vpop.f32.mrb[0].mxu0
        %v8459 = vadd.f32 0.0, %v8458
        %v8460 = vpop.f32.mrb[0].mxu0
        %v8461 = vadd.f32 0.0, %v8460
        %v8462 = vpop.f32.mrb[0].mxu0
        %v8463 = vadd.f32 0.0, %v8462
        %8464 = vdwg.mxu0
        %8465 = vmatprep.subr.bf16.mxu0 %v4450
        %8466 = vmatpush1.bf16.msra.mxu0 %v4449
        %8467 = vmatprep.subr.bf16.mxu0 %v4578
        %8468 = vmatpush1.bf16.msra.mxu0 %v4577
        %8469 = vmatprep.subr.bf16.mxu0 %v4706
        %8470 = vmatpush1.bf16.msra.mxu0 %v4705
        %8471 = vmatprep.subr.bf16.mxu0 %v4834
        %8472 = vmatpush1.bf16.msra.mxu0 %v4833
        %8473 = vmatprep.subr.bf16.mxu0 %v4962
        %8474 = vmatpush1.bf16.msra.mxu0 %v4961
        %8475 = vmatprep.subr.bf16.mxu0 %v5090
        %8476 = vmatpush1.bf16.msra.mxu0 %v5089
        %8477 = vmatprep.subr.bf16.mxu0 %v5218
        %8478 = vmatpush1.bf16.msra.mxu0 %v5217
        %8479 = vmatprep.subr.bf16.mxu0 %v5346
        %8480 = vmatpush1.bf16.msra.mxu0 %v5345
        %8481 = vmatprep.subr.bf16.mxu0 0
        %8482 = vmatpush1.bf16.msra.mxu0 0
        %8483 = vmatprep.subr.bf16.mxu0 0
        %8484 = vmatpush1.bf16.msra.mxu0 0
        %8485 = vmatprep.subr.bf16.mxu0 0
        %8486 = vmatpush1.bf16.msra.mxu0 0
        %8487 = vmatprep.subr.bf16.mxu0 0
        %8488 = vmatpush1.bf16.msra.mxu0 0
        %8489 = vmatprep.subr.bf16.mxu0 0
        %8490 = vmatpush1.bf16.msra.mxu0 0
        %8491 = vmatprep.subr.bf16.mxu0 0
        %8492 = vmatpush1.bf16.msra.mxu0 0
        %8493 = vmatprep.subr.bf16.mxu0 0
        %8494 = vmatpush1.bf16.msra.mxu0 0
        %8495 = vmatprep.subr.bf16.mxu0 0
        %8496 = vmatpush1.bf16.msra.mxu0 0
        %8497 = vmatprep.mubr.bf16.mxu0 0
        %8498 = vmatmul.mubr.bf16.gmra.mrb[0].mxu0 %v256
        %v8499 = vpop.f32.mrb[0].mxu0
        %v8500 = vadd.f32 0.0, %v8499
        %v8501 = vpop.f32.mrb[0].mxu0
        %v8502 = vadd.f32 0.0, %v8501
        %v8503 = vpop.f32.mrb[0].mxu0
        %v8504 = vadd.f32 0.0, %v8503
        %v8505 = vpop.f32.mrb[0].mxu0
        %v8506 = vadd.f32 0.0, %v8505
        %8507 = vdwg.mxu0
        %8508 = vmatprep.subr.bf16.mxu0 %v4452
        %8509 = vmatpush1.bf16.msra.mxu0 %v4451
        %8510 = vmatprep.subr.bf16.mxu0 %v4580
        %8511 = vmatpush1.bf16.msra.mxu0 %v4579
        %8512 = vmatprep.subr.bf16.mxu0 %v4708
        %8513 = vmatpush1.bf16.msra.mxu0 %v4707
        %8514 = vmatprep.subr.bf16.mxu0 %v4836
        %8515 = vmatpush1.bf16.msra.mxu0 %v4835
        %8516 = vmatprep.subr.bf16.mxu0 %v4964
        %8517 = vmatpush1.bf16.msra.mxu0 %v4963
        %8518 = vmatprep.subr.bf16.mxu0 %v5092
        %8519 = vmatpush1.bf16.msra.mxu0 %v5091
        %8520 = vmatprep.subr.bf16.mxu0 %v5220
        %8521 = vmatpush1.bf16.msra.mxu0 %v5219
        %8522 = vmatprep.subr.bf16.mxu0 %v5348
        %8523 = vmatpush1.bf16.msra.mxu0 %v5347
        %8524 = vmatprep.subr.bf16.mxu0 0
        %8525 = vmatpush1.bf16.msra.mxu0 0
        %8526 = vmatprep.subr.bf16.mxu0 0
        %8527 = vmatpush1.bf16.msra.mxu0 0
        %8528 = vmatprep.subr.bf16.mxu0 0
        %8529 = vmatpush1.bf16.msra.mxu0 0
        %8530 = vmatprep.subr.bf16.mxu0 0
        %8531 = vmatpush1.bf16.msra.mxu0 0
        %8532 = vmatprep.subr.bf16.mxu0 0
        %8533 = vmatpush1.bf16.msra.mxu0 0
        %8534 = vmatprep.subr.bf16.mxu0 0
        %8535 = vmatpush1.bf16.msra.mxu0 0
        %8536 = vmatprep.subr.bf16.mxu0 0
        %8537 = vmatpush1.bf16.msra.mxu0 0
        %8538 = vmatprep.subr.bf16.mxu0 0
        %8539 = vmatpush1.bf16.msra.mxu0 0
        %8540 = vmatprep.mubr.bf16.mxu0 0
        %8541 = vmatmul.mubr.bf16.gmra.mrb[0].mxu0 %v256
        %v8542 = vpop.f32.mrb[0].mxu0
        %v8543 = vadd.f32 0.0, %v8542
        %v8544 = vpop.f32.mrb[0].mxu0
        %v8545 = vadd.f32 0.0, %v8544
        %v8546 = vpop.f32.mrb[0].mxu0
        %v8547 = vadd.f32 0.0, %v8546
        %v8548 = vpop.f32.mrb[0].mxu0
        %v8549 = vadd.f32 0.0, %v8548
        %8550 = vdwg.mxu0
        %8551 = vmatprep.subr.bf16.mxu0 %v4454
        %8552 = vmatpush1.bf16.msra.mxu0 %v4453
        %8553 = vmatprep.subr.bf16.mxu0 %v4582
        %8554 = vmatpush1.bf16.msra.mxu0 %v4581
        %8555 = vmatprep.subr.bf16.mxu0 %v4710
        %8556 = vmatpush1.bf16.msra.mxu0 %v4709
        %8557 = vmatprep.subr.bf16.mxu0 %v4838
        %8558 = vmatpush1.bf16.msra.mxu0 %v4837
        %8559 = vmatprep.subr.bf16.mxu0 %v4966
        %8560 = vmatpush1.bf16.msra.mxu0 %v4965
        %8561 = vmatprep.subr.bf16.mxu0 %v5094
        %8562 = vmatpush1.bf16.msra.mxu0 %v5093
        %8563 = vmatprep.subr.bf16.mxu0 %v5222
        %8564 = vmatpush1.bf16.msra.mxu0 %v5221
        %8565 = vmatprep.subr.bf16.mxu0 %v5350
        %8566 = vmatpush1.bf16.msra.mxu0 %v5349
        %8567 = vmatprep.subr.bf16.mxu0 0
        %8568 = vmatpush1.bf16.msra.mxu0 0
        %8569 = vmatprep.subr.bf16.mxu0 0
        %8570 = vmatpush1.bf16.msra.mxu0 0
        %8571 = vmatprep.subr.bf16.mxu0 0
        %8572 = vmatpush1.bf16.msra.mxu0 0
        %8573 = vmatprep.subr.bf16.mxu0 0
        %8574 = vmatpush1.bf16.msra.mxu0 0
        %8575 = vmatprep.subr.bf16.mxu0 0
        %8576 = vmatpush1.bf16.msra.mxu0 0
        %8577 = vmatprep.subr.bf16.mxu0 0
        %8578 = vmatpush1.bf16.msra.mxu0 0
        %8579 = vmatprep.subr.bf16.mxu0 0
        %8580 = vmatpush1.bf16.msra.mxu0 0
        %8581 = vmatprep.subr.bf16.mxu0 0
        %8582 = vmatpush1.bf16.msra.mxu0 0
        %8583 = vmatprep.mubr.bf16.mxu0 0
        %8584 = vmatmul.mubr.bf16.gmra.mrb[0].mxu0 %v256
        %v8585 = vpop.f32.mrb[0].mxu0
        %v8586 = vadd.f32 0.0, %v8585
        %v8587 = vpop.f32.mrb[0].mxu0
        %v8588 = vadd.f32 0.0, %v8587
        %v8589 = vpop.f32.mrb[0].mxu0
        %v8590 = vadd.f32 0.0, %v8589
        %v8591 = vpop.f32.mrb[0].mxu0
        %v8592 = vadd.f32 0.0, %v8591
        %8593 = vdwg.mxu0
        %8594 = vmatprep.subr.bf16.mxu0 %v4456
        %8595 = vmatpush1.bf16.msra.mxu0 %v4455
        %8596 = vmatprep.subr.bf16.mxu0 %v4584
        %8597 = vmatpush1.bf16.msra.mxu0 %v4583
        %8598 = vmatprep.subr.bf16.mxu0 %v4712
        %8599 = vmatpush1.bf16.msra.mxu0 %v4711
        %8600 = vmatprep.subr.bf16.mxu0 %v4840
        %8601 = vmatpush1.bf16.msra.mxu0 %v4839
        %8602 = vmatprep.subr.bf16.mxu0 %v4968
        %8603 = vmatpush1.bf16.msra.mxu0 %v4967
        %8604 = vmatprep.subr.bf16.mxu0 %v5096
        %8605 = vmatpush1.bf16.msra.mxu0 %v5095
        %8606 = vmatprep.subr.bf16.mxu0 %v5224
        %8607 = vmatpush1.bf16.msra.mxu0 %v5223
        %8608 = vmatprep.subr.bf16.mxu0 %v5352
        %8609 = vmatpush1.bf16.msra.mxu0 %v5351
        %8610 = vmatprep.subr.bf16.mxu0 0
        %8611 = vmatpush1.bf16.msra.mxu0 0
        %8612 = vmatprep.subr.bf16.mxu0 0
        %8613 = vmatpush1.bf16.msra.mxu0 0
        %8614 = vmatprep.subr.bf16.mxu0 0
        %8615 = vmatpush1.bf16.msra.mxu0 0
        %8616 = vmatprep.subr.bf16.mxu0 0
        %8617 = vmatpush1.bf16.msra.mxu0 0
        %8618 = vmatprep.subr.bf16.mxu0 0
        %8619 = vmatpush1.bf16.msra.mxu0 0
        %8620 = vmatprep.subr.bf16.mxu0 0
        %8621 = vmatpush1.bf16.msra.mxu0 0
        %8622 = vmatprep.subr.bf16.mxu0 0
        %8623 = vmatpush1.bf16.msra.mxu0 0
        %8624 = vmatprep.subr.bf16.mxu0 0
        %8625 = vmatpush1.bf16.msra.mxu0 0
        %8626 = vmatprep.mubr.bf16.mxu0 0
        %8627 = vmatmul.mubr.bf16.gmra.mrb[0].mxu0 %v256
        %v8628 = vpop.f32.mrb[0].mxu0
        %v8629 = vadd.f32 0.0, %v8628
        %v8630 = vpop.f32.mrb[0].mxu0
        %v8631 = vadd.f32 0.0, %v8630
        %v8632 = vpop.f32.mrb[0].mxu0
        %v8633 = vadd.f32 0.0, %v8632
        %v8634 = vpop.f32.mrb[0].mxu0
        %v8635 = vadd.f32 0.0, %v8634
        %8636 = vdwg.mxu0
        %8637 = vmatprep.subr.bf16.mxu0 %v4458
        %8638 = vmatpush1.bf16.msra.mxu0 %v4457
        %8639 = vmatprep.subr.bf16.mxu0 %v4586
        %8640 = vmatpush1.bf16.msra.mxu0 %v4585
        %8641 = vmatprep.subr.bf16.mxu0 %v4714
        %8642 = vmatpush1.bf16.msra.mxu0 %v4713
        %8643 = vmatprep.subr.bf16.mxu0 %v4842
        %8644 = vmatpush1.bf16.msra.mxu0 %v4841
        %8645 = vmatprep.subr.bf16.mxu0 %v4970
        %8646 = vmatpush1.bf16.msra.mxu0 %v4969
        %8647 = vmatprep.subr.bf16.mxu0 %v5098
        %8648 = vmatpush1.bf16.msra.mxu0 %v5097
        %8649 = vmatprep.subr.bf16.mxu0 %v5226
        %8650 = vmatpush1.bf16.msra.mxu0 %v5225
        %8651 = vmatprep.subr.bf16.mxu0 %v5354
        %8652 = vmatpush1.bf16.msra.mxu0 %v5353
        %8653 = vmatprep.subr.bf16.mxu0 0
        %8654 = vmatpush1.bf16.msra.mxu0 0
        %8655 = vmatprep.subr.bf16.mxu0 0
        %8656 = vmatpush1.bf16.msra.mxu0 0
        %8657 = vmatprep.subr.bf16.mxu0 0
        %8658 = vmatpush1.bf16.msra.mxu0 0
        %8659 = vmatprep.subr.bf16.mxu0 0
        %8660 = vmatpush1.bf16.msra.mxu0 0
        %8661 = vmatprep.subr.bf16.mxu0 0
        %8662 = vmatpush1.bf16.msra.mxu0 0
        %8663 = vmatprep.subr.bf16.mxu0 0
        %8664 = vmatpush1.bf16.msra.mxu0 0
        %8665 = vmatprep.subr.bf16.mxu0 0
        %8666 = vmatpush1.bf16.msra.mxu0 0
        %8667 = vmatprep.subr.bf16.mxu0 0
        %8668 = vmatpush1.bf16.msra.mxu0 0
        %8669 = vmatprep.mubr.bf16.mxu0 0
        %8670 = vmatmul.mubr.bf16.gmra.mrb[0].mxu0 %v256
        %v8671 = vpop.f32.mrb[0].mxu0
        %v8672 = vadd.f32 0.0, %v8671
        %v8673 = vpop.f32.mrb[0].mxu0
        %v8674 = vadd.f32 0.0, %v8673
        %v8675 = vpop.f32.mrb[0].mxu0
        %v8676 = vadd.f32 0.0, %v8675
        %v8677 = vpop.f32.mrb[0].mxu0
        %v8678 = vadd.f32 0.0, %v8677
        %8679 = vdwg.mxu0
        %8680 = vmatprep.subr.bf16.mxu0 %v4460
        %8681 = vmatpush1.bf16.msra.mxu0 %v4459
        %8682 = vmatprep.subr.bf16.mxu0 %v4588
        %8683 = vmatpush1.bf16.msra.mxu0 %v4587
        %8684 = vmatprep.subr.bf16.mxu0 %v4716
        %8685 = vmatpush1.bf16.msra.mxu0 %v4715
        %8686 = vmatprep.subr.bf16.mxu0 %v4844
        %8687 = vmatpush1.bf16.msra.mxu0 %v4843
        %8688 = vmatprep.subr.bf16.mxu0 %v4972
        %8689 = vmatpush1.bf16.msra.mxu0 %v4971
        %8690 = vmatprep.subr.bf16.mxu0 %v5100
        %8691 = vmatpush1.bf16.msra.mxu0 %v5099
        %8692 = vmatprep.subr.bf16.mxu0 %v5228
        %8693 = vmatpush1.bf16.msra.mxu0 %v5227
        %8694 = vmatprep.subr.bf16.mxu0 %v5356
        %8695 = vmatpush1.bf16.msra.mxu0 %v5355
        %8696 = vmatprep.subr.bf16.mxu0 0
        %8697 = vmatpush1.bf16.msra.mxu0 0
        %8698 = vmatprep.subr.bf16.mxu0 0
        %8699 = vmatpush1.bf16.msra.mxu0 0
        %8700 = vmatprep.subr.bf16.mxu0 0
        %8701 = vmatpush1.bf16.msra.mxu0 0
        %8702 = vmatprep.subr.bf16.mxu0 0
        %8703 = vmatpush1.bf16.msra.mxu0 0
        %8704 = vmatprep.subr.bf16.mxu0 0
        %8705 = vmatpush1.bf16.msra.mxu0 0
        %8706 = vmatprep.subr.bf16.mxu0 0
        %8707 = vmatpush1.bf16.msra.mxu0 0
        %8708 = vmatprep.subr.bf16.mxu0 0
        %8709 = vmatpush1.bf16.msra.mxu0 0
        %8710 = vmatprep.subr.bf16.mxu0 0
        %8711 = vmatpush1.bf16.msra.mxu0 0
        %8712 = vmatprep.mubr.bf16.mxu0 0
        %8713 = vmatmul.mubr.bf16.gmra.mrb[0].mxu0 %v256
        %v8714 = vpop.f32.mrb[0].mxu0
        %v8715 = vadd.f32 0.0, %v8714
        %v8716 = vpop.f32.mrb[0].mxu0
        %v8717 = vadd.f32 0.0, %v8716
        %v8718 = vpop.f32.mrb[0].mxu0
        %v8719 = vadd.f32 0.0, %v8718
        %v8720 = vpop.f32.mrb[0].mxu0
        %v8721 = vadd.f32 0.0, %v8720
        %8722 = vdwg.mxu0
        %8723 = vmatprep.subr.bf16.mxu0 %v4462
        %8724 = vmatpush1.bf16.msra.mxu0 %v4461
        %8725 = vmatprep.subr.bf16.mxu0 %v4590
        %8726 = vmatpush1.bf16.msra.mxu0 %v4589
        %8727 = vmatprep.subr.bf16.mxu0 %v4718
        %8728 = vmatpush1.bf16.msra.mxu0 %v4717
        %8729 = vmatprep.subr.bf16.mxu0 %v4846
        %8730 = vmatpush1.bf16.msra.mxu0 %v4845
        %8731 = vmatprep.subr.bf16.mxu0 %v4974
        %8732 = vmatpush1.bf16.msra.mxu0 %v4973
        %8733 = vmatprep.subr.bf16.mxu0 %v5102
        %8734 = vmatpush1.bf16.msra.mxu0 %v5101
        %8735 = vmatprep.subr.bf16.mxu0 %v5230
        %8736 = vmatpush1.bf16.msra.mxu0 %v5229
        %8737 = vmatprep.subr.bf16.mxu0 %v5358
        %8738 = vmatpush1.bf16.msra.mxu0 %v5357
        %8739 = vmatprep.subr.bf16.mxu0 0
        %8740 = vmatpush1.bf16.msra.mxu0 0
        %8741 = vmatprep.subr.bf16.mxu0 0
        %8742 = vmatpush1.bf16.msra.mxu0 0
        %8743 = vmatprep.subr.bf16.mxu0 0
        %8744 = vmatpush1.bf16.msra.mxu0 0
        %8745 = vmatprep.subr.bf16.mxu0 0
        %8746 = vmatpush1.bf16.msra.mxu0 0
        %8747 = vmatprep.subr.bf16.mxu0 0
        %8748 = vmatpush1.bf16.msra.mxu0 0
        %8749 = vmatprep.subr.bf16.mxu0 0
        %8750 = vmatpush1.bf16.msra.mxu0 0
        %8751 = vmatprep.subr.bf16.mxu0 0
        %8752 = vmatpush1.bf16.msra.mxu0 0
        %8753 = vmatprep.subr.bf16.mxu0 0
        %8754 = vmatpush1.bf16.msra.mxu0 0
        %8755 = vmatprep.mubr.bf16.mxu0 0
        %8756 = vmatmul.mubr.bf16.gmra.mrb[0].mxu0 %v256
        %v8757 = vpop.f32.mrb[0].mxu0
        %v8758 = vadd.f32 0.0, %v8757
        %v8759 = vpop.f32.mrb[0].mxu0
        %v8760 = vadd.f32 0.0, %v8759
        %v8761 = vpop.f32.mrb[0].mxu0
        %v8762 = vadd.f32 0.0, %v8761
        %v8763 = vpop.f32.mrb[0].mxu0
        %v8764 = vadd.f32 0.0, %v8763
        %8765 = vdwg.mxu0
        %8766 = vmatprep.subr.bf16.mxu0 %v4464
        %8767 = vmatpush1.bf16.msra.mxu0 %v4463
        %8768 = vmatprep.subr.bf16.mxu0 %v4592
        %8769 = vmatpush1.bf16.msra.mxu0 %v4591
        %8770 = vmatprep.subr.bf16.mxu0 %v4720
        %8771 = vmatpush1.bf16.msra.mxu0 %v4719
        %8772 = vmatprep.subr.bf16.mxu0 %v4848
        %8773 = vmatpush1.bf16.msra.mxu0 %v4847
        %8774 = vmatprep.subr.bf16.mxu0 %v4976
        %8775 = vmatpush1.bf16.msra.mxu0 %v4975
        %8776 = vmatprep.subr.bf16.mxu0 %v5104
        %8777 = vmatpush1.bf16.msra.mxu0 %v5103
        %8778 = vmatprep.subr.bf16.mxu0 %v5232
        %8779 = vmatpush1.bf16.msra.mxu0 %v5231
        %8780 = vmatprep.subr.bf16.mxu0 %v5360
        %8781 = vmatpush1.bf16.msra.mxu0 %v5359
        %8782 = vmatprep.subr.bf16.mxu0 0
        %8783 = vmatpush1.bf16.msra.mxu0 0
        %8784 = vmatprep.subr.bf16.mxu0 0
        %8785 = vmatpush1.bf16.msra.mxu0 0
        %8786 = vmatprep.subr.bf16.mxu0 0
        %8787 = vmatpush1.bf16.msra.mxu0 0
        %8788 = vmatprep.subr.bf16.mxu0 0
        %8789 = vmatpush1.bf16.msra.mxu0 0
        %8790 = vmatprep.subr.bf16.mxu0 0
        %8791 = vmatpush1.bf16.msra.mxu0 0
        %8792 = vmatprep.subr.bf16.mxu0 0
        %8793 = vmatpush1.bf16.msra.mxu0 0
        %8794 = vmatprep.subr.bf16.mxu0 0
        %8795 = vmatpush1.bf16.msra.mxu0 0
        %8796 = vmatprep.subr.bf16.mxu0 0
        %8797 = vmatpush1.bf16.msra.mxu0 0
        %8798 = vmatprep.mubr.bf16.mxu0 0
        %8799 = vmatmul.mubr.bf16.gmra.mrb[0].mxu0 %v256
        %v8800 = vpop.f32.mrb[0].mxu0
        %v8801 = vadd.f32 0.0, %v8800
        %v8802 = vpop.f32.mrb[0].mxu0
        %v8803 = vadd.f32 0.0, %v8802
        %v8804 = vpop.f32.mrb[0].mxu0
        %v8805 = vadd.f32 0.0, %v8804
        %v8806 = vpop.f32.mrb[0].mxu0
        %v8807 = vadd.f32 0.0, %v8806
        %8808 = vdwg.mxu0
        %8809 = vmatprep.subr.bf16.mxu0 %v4466
        %8810 = vmatpush1.bf16.msra.mxu0 %v4465
        %8811 = vmatprep.subr.bf16.mxu0 %v4594
        %8812 = vmatpush1.bf16.msra.mxu0 %v4593
        %8813 = vmatprep.subr.bf16.mxu0 %v4722
        %8814 = vmatpush1.bf16.msra.mxu0 %v4721
        %8815 = vmatprep.subr.bf16.mxu0 %v4850
        %8816 = vmatpush1.bf16.msra.mxu0 %v4849
        %8817 = vmatprep.subr.bf16.mxu0 %v4978
        %8818 = vmatpush1.bf16.msra.mxu0 %v4977
        %8819 = vmatprep.subr.bf16.mxu0 %v5106
        %8820 = vmatpush1.bf16.msra.mxu0 %v5105
        %8821 = vmatprep.subr.bf16.mxu0 %v5234
        %8822 = vmatpush1.bf16.msra.mxu0 %v5233
        %8823 = vmatprep.subr.bf16.mxu0 %v5362
        %8824 = vmatpush1.bf16.msra.mxu0 %v5361
        %8825 = vmatprep.subr.bf16.mxu0 0
        %8826 = vmatpush1.bf16.msra.mxu0 0
        %8827 = vmatprep.subr.bf16.mxu0 0
        %8828 = vmatpush1.bf16.msra.mxu0 0
        %8829 = vmatprep.subr.bf16.mxu0 0
        %8830 = vmatpush1.bf16.msra.mxu0 0
        %8831 = vmatprep.subr.bf16.mxu0 0
        %8832 = vmatpush1.bf16.msra.mxu0 0
        %8833 = vmatprep.subr.bf16.mxu0 0
        %8834 = vmatpush1.bf16.msra.mxu0 0
        %8835 = vmatprep.subr.bf16.mxu0 0
        %8836 = vmatpush1.bf16.msra.mxu0 0
        %8837 = vmatprep.subr.bf16.mxu0 0
        %8838 = vmatpush1.bf16.msra.mxu0 0
        %8839 = vmatprep.subr.bf16.mxu0 0
        %8840 = vmatpush1.bf16.msra.mxu0 0
        %8841 = vmatprep.mubr.bf16.mxu0 0
        %8842 = vmatmul.mubr.bf16.gmra.mrb[0].mxu0 %v256
        %v8843 = vpop.f32.mrb[0].mxu0
        %v8844 = vadd.f32 0.0, %v8843
        %v8845 = vpop.f32.mrb[0].mxu0
        %v8846 = vadd.f32 0.0, %v8845
        %v8847 = vpop.f32.mrb[0].mxu0
        %v8848 = vadd.f32 0.0, %v8847
        %v8849 = vpop.f32.mrb[0].mxu0
        %v8850 = vadd.f32 0.0, %v8849
        %8851 = vdwg.mxu0
        %8852 = vmatprep.subr.bf16.mxu0 %v4468
        %8853 = vmatpush1.bf16.msra.mxu0 %v4467
        %8854 = vmatprep.subr.bf16.mxu0 %v4596
        %8855 = vmatpush1.bf16.msra.mxu0 %v4595
        %8856 = vmatprep.subr.bf16.mxu0 %v4724
        %8857 = vmatpush1.bf16.msra.mxu0 %v4723
        %8858 = vmatprep.subr.bf16.mxu0 %v4852
        %8859 = vmatpush1.bf16.msra.mxu0 %v4851
        %8860 = vmatprep.subr.bf16.mxu0 %v4980
        %8861 = vmatpush1.bf16.msra.mxu0 %v4979
        %8862 = vmatprep.subr.bf16.mxu0 %v5108
        %8863 = vmatpush1.bf16.msra.mxu0 %v5107
        %8864 = vmatprep.subr.bf16.mxu0 %v5236
        %8865 = vmatpush1.bf16.msra.mxu0 %v5235
        %8866 = vmatprep.subr.bf16.mxu0 %v5364
        %8867 = vmatpush1.bf16.msra.mxu0 %v5363
        %8868 = vmatprep.subr.bf16.mxu0 0
        %8869 = vmatpush1.bf16.msra.mxu0 0
        %8870 = vmatprep.subr.bf16.mxu0 0
        %8871 = vmatpush1.bf16.msra.mxu0 0
        %8872 = vmatprep.subr.bf16.mxu0 0
        %8873 = vmatpush1.bf16.msra.mxu0 0
        %8874 = vmatprep.subr.bf16.mxu0 0
        %8875 = vmatpush1.bf16.msra.mxu0 0
        %8876 = vmatprep.subr.bf16.mxu0 0
        %8877 = vmatpush1.bf16.msra.mxu0 0
        %8878 = vmatprep.subr.bf16.mxu0 0
        %8879 = vmatpush1.bf16.msra.mxu0 0
        %8880 = vmatprep.subr.bf16.mxu0 0
        %8881 = vmatpush1.bf16.msra.mxu0 0
        %8882 = vmatprep.subr.bf16.mxu0 0
        %8883 = vmatpush1.bf16.msra.mxu0 0
        %8884 = vmatprep.mubr.bf16.mxu0 0
        %8885 = vmatmul.mubr.bf16.gmra.mrb[0].mxu0 %v256
        %v8886 = vpop.f32.mrb[0].mxu0
        %v8887 = vadd.f32 0.0, %v8886
        %v8888 = vpop.f32.mrb[0].mxu0
        %v8889 = vadd.f32 0.0, %v8888
        %v8890 = vpop.f32.mrb[0].mxu0
        %v8891 = vadd.f32 0.0, %v8890
        %v8892 = vpop.f32.mrb[0].mxu0
        %v8893 = vadd.f32 0.0, %v8892
        %8894 = vdwg.mxu0
        %8895 = vmatprep.subr.bf16.mxu0 %v4470
        %8896 = vmatpush1.bf16.msra.mxu0 %v4469
        %8897 = vmatprep.subr.bf16.mxu0 %v4598
        %8898 = vmatpush1.bf16.msra.mxu0 %v4597
        %8899 = vmatprep.subr.bf16.mxu0 %v4726
        %8900 = vmatpush1.bf16.msra.mxu0 %v4725
        %8901 = vmatprep.subr.bf16.mxu0 %v4854
        %8902 = vmatpush1.bf16.msra.mxu0 %v4853
        %8903 = vmatprep.subr.bf16.mxu0 %v4982
        %8904 = vmatpush1.bf16.msra.mxu0 %v4981
        %8905 = vmatprep.subr.bf16.mxu0 %v5110
        %8906 = vmatpush1.bf16.msra.mxu0 %v5109
        %8907 = vmatprep.subr.bf16.mxu0 %v5238
        %8908 = vmatpush1.bf16.msra.mxu0 %v5237
        %8909 = vmatprep.subr.bf16.mxu0 %v5366
        %8910 = vmatpush1.bf16.msra.mxu0 %v5365
        %8911 = vmatprep.subr.bf16.mxu0 0
        %8912 = vmatpush1.bf16.msra.mxu0 0
        %8913 = vmatprep.subr.bf16.mxu0 0
        %8914 = vmatpush1.bf16.msra.mxu0 0
        %8915 = vmatprep.subr.bf16.mxu0 0
        %8916 = vmatpush1.bf16.msra.mxu0 0
        %8917 = vmatprep.subr.bf16.mxu0 0
        %8918 = vmatpush1.bf16.msra.mxu0 0
        %8919 = vmatprep.subr.bf16.mxu0 0
        %8920 = vmatpush1.bf16.msra.mxu0 0
        %8921 = vmatprep.subr.bf16.mxu0 0
        %8922 = vmatpush1.bf16.msra.mxu0 0
        %8923 = vmatprep.subr.bf16.mxu0 0
        %8924 = vmatpush1.bf16.msra.mxu0 0
        %8925 = vmatprep.subr.bf16.mxu0 0
        %8926 = vmatpush1.bf16.msra.mxu0 0
        %8927 = vmatprep.mubr.bf16.mxu0 0
        %8928 = vmatmul.mubr.bf16.gmra.mrb[0].mxu0 %v256
        %v8929 = vpop.f32.mrb[0].mxu0
        %v8930 = vadd.f32 0.0, %v8929
        %v8931 = vpop.f32.mrb[0].mxu0
        %v8932 = vadd.f32 0.0, %v8931
        %v8933 = vpop.f32.mrb[0].mxu0
        %v8934 = vadd.f32 0.0, %v8933
        %v8935 = vpop.f32.mrb[0].mxu0
        %v8936 = vadd.f32 0.0, %v8935
        %8937 = vdwg.mxu0
        %8938 = vmatprep.subr.bf16.mxu0 %v4472
        %8939 = vmatpush1.bf16.msra.mxu0 %v4471
        %8940 = vmatprep.subr.bf16.mxu0 %v4600
        %8941 = vmatpush1.bf16.msra.mxu0 %v4599
        %8942 = vmatprep.subr.bf16.mxu0 %v4728
        %8943 = vmatpush1.bf16.msra.mxu0 %v4727
        %8944 = vmatprep.subr.bf16.mxu0 %v4856
        %8945 = vmatpush1.bf16.msra.mxu0 %v4855
        %8946 = vmatprep.subr.bf16.mxu0 %v4984
        %8947 = vmatpush1.bf16.msra.mxu0 %v4983
        %8948 = vmatprep.subr.bf16.mxu0 %v5112
        %8949 = vmatpush1.bf16.msra.mxu0 %v5111
        %8950 = vmatprep.subr.bf16.mxu0 %v5240
        %8951 = vmatpush1.bf16.msra.mxu0 %v5239
        %8952 = vmatprep.subr.bf16.mxu0 %v5368
        %8953 = vmatpush1.bf16.msra.mxu0 %v5367
        %8954 = vmatprep.subr.bf16.mxu0 0
        %8955 = vmatpush1.bf16.msra.mxu0 0
        %8956 = vmatprep.subr.bf16.mxu0 0
        %8957 = vmatpush1.bf16.msra.mxu0 0
        %8958 = vmatprep.subr.bf16.mxu0 0
        %8959 = vmatpush1.bf16.msra.mxu0 0
        %8960 = vmatprep.subr.bf16.mxu0 0
        %8961 = vmatpush1.bf16.msra.mxu0 0
        %8962 = vmatprep.subr.bf16.mxu0 0
        %8963 = vmatpush1.bf16.msra.mxu0 0
        %8964 = vmatprep.subr.bf16.mxu0 0
        %8965 = vmatpush1.bf16.msra.mxu0 0
        %8966 = vmatprep.subr.bf16.mxu0 0
        %8967 = vmatpush1.bf16.msra.mxu0 0
        %8968 = vmatprep.subr.bf16.mxu0 0
        %8969 = vmatpush1.bf16.msra.mxu0 0
        %8970 = vmatprep.mubr.bf16.mxu0 0
        %8971 = vmatmul.mubr.bf16.gmra.mrb[0].mxu0 %v256
        %v8972 = vpop.f32.mrb[0].mxu0
        %v8973 = vadd.f32 0.0, %v8972
        %v8974 = vpop.f32.mrb[0].mxu0
        %v8975 = vadd.f32 0.0, %v8974
        %v8976 = vpop.f32.mrb[0].mxu0
        %v8977 = vadd.f32 0.0, %v8976
        %v8978 = vpop.f32.mrb[0].mxu0
        %v8979 = vadd.f32 0.0, %v8978
        %8980 = vdwg.mxu0
        %8981 = vmatprep.subr.bf16.mxu0 %v4474
        %8982 = vmatpush1.bf16.msra.mxu0 %v4473
        %8983 = vmatprep.subr.bf16.mxu0 %v4602
        %8984 = vmatpush1.bf16.msra.mxu0 %v4601
        %8985 = vmatprep.subr.bf16.mxu0 %v4730
        %8986 = vmatpush1.bf16.msra.mxu0 %v4729
        %8987 = vmatprep.subr.bf16.mxu0 %v4858
        %8988 = vmatpush1.bf16.msra.mxu0 %v4857
        %8989 = vmatprep.subr.bf16.mxu0 %v4986
        %8990 = vmatpush1.bf16.msra.mxu0 %v4985
        %8991 = vmatprep.subr.bf16.mxu0 %v5114
        %8992 = vmatpush1.bf16.msra.mxu0 %v5113
        %8993 = vmatprep.subr.bf16.mxu0 %v5242
        %8994 = vmatpush1.bf16.msra.mxu0 %v5241
        %8995 = vmatprep.subr.bf16.mxu0 %v5370
        %8996 = vmatpush1.bf16.msra.mxu0 %v5369
        %8997 = vmatprep.subr.bf16.mxu0 0
        %8998 = vmatpush1.bf16.msra.mxu0 0
        %8999 = vmatprep.subr.bf16.mxu0 0
        %9000 = vmatpush1.bf16.msra.mxu0 0
        %9001 = vmatprep.subr.bf16.mxu0 0
        %9002 = vmatpush1.bf16.msra.mxu0 0
        %9003 = vmatprep.subr.bf16.mxu0 0
        %9004 = vmatpush1.bf16.msra.mxu0 0
        %9005 = vmatprep.subr.bf16.mxu0 0
        %9006 = vmatpush1.bf16.msra.mxu0 0
        %9007 = vmatprep.subr.bf16.mxu0 0
        %9008 = vmatpush1.bf16.msra.mxu0 0
        %9009 = vmatprep.subr.bf16.mxu0 0
        %9010 = vmatpush1.bf16.msra.mxu0 0
        %9011 = vmatprep.subr.bf16.mxu0 0
        %9012 = vmatpush1.bf16.msra.mxu0 0
        %9013 = vmatprep.mubr.bf16.mxu0 0
        %9014 = vmatmul.mubr.bf16.gmra.mrb[0].mxu0 %v256
        %v9015 = vpop.f32.mrb[0].mxu0
        %v9016 = vadd.f32 0.0, %v9015
        %v9017 = vpop.f32.mrb[0].mxu0
        %v9018 = vadd.f32 0.0, %v9017
        %v9019 = vpop.f32.mrb[0].mxu0
        %v9020 = vadd.f32 0.0, %v9019
        %v9021 = vpop.f32.mrb[0].mxu0
        %v9022 = vadd.f32 0.0, %v9021
        %9023 = vdwg.mxu0
        %9024 = vmatprep.subr.bf16.mxu0 %v4476
        %9025 = vmatpush1.bf16.msra.mxu0 %v4475
        %9026 = vmatprep.subr.bf16.mxu0 %v4604
        %9027 = vmatpush1.bf16.msra.mxu0 %v4603
        %9028 = vmatprep.subr.bf16.mxu0 %v4732
        %9029 = vmatpush1.bf16.msra.mxu0 %v4731
        %9030 = vmatprep.subr.bf16.mxu0 %v4860
        %9031 = vmatpush1.bf16.msra.mxu0 %v4859
        %9032 = vmatprep.subr.bf16.mxu0 %v4988
        %9033 = vmatpush1.bf16.msra.mxu0 %v4987
        %9034 = vmatprep.subr.bf16.mxu0 %v5116
        %9035 = vmatpush1.bf16.msra.mxu0 %v5115
        %9036 = vmatprep.subr.bf16.mxu0 %v5244
        %9037 = vmatpush1.bf16.msra.mxu0 %v5243
        %9038 = vmatprep.subr.bf16.mxu0 %v5372
        %9039 = vmatpush1.bf16.msra.mxu0 %v5371
        %9040 = vmatprep.subr.bf16.mxu0 0
        %9041 = vmatpush1.bf16.msra.mxu0 0
        %9042 = vmatprep.subr.bf16.mxu0 0
        %9043 = vmatpush1.bf16.msra.mxu0 0
        %9044 = vmatprep.subr.bf16.mxu0 0
        %9045 = vmatpush1.bf16.msra.mxu0 0
        %9046 = vmatprep.subr.bf16.mxu0 0
        %9047 = vmatpush1.bf16.msra.mxu0 0
        %9048 = vmatprep.subr.bf16.mxu0 0
        %9049 = vmatpush1.bf16.msra.mxu0 0
        %9050 = vmatprep.subr.bf16.mxu0 0
        %9051 = vmatpush1.bf16.msra.mxu0 0
        %9052 = vmatprep.subr.bf16.mxu0 0
        %9053 = vmatpush1.bf16.msra.mxu0 0
        %9054 = vmatprep.subr.bf16.mxu0 0
        %9055 = vmatpush1.bf16.msra.mxu0 0
        %9056 = vmatprep.mubr.bf16.mxu0 0
        %9057 = vmatmul.mubr.bf16.gmra.mrb[0].mxu0 %v256
        %v9058 = vpop.f32.mrb[0].mxu0
        %v9059 = vadd.f32 0.0, %v9058
        %v9060 = vpop.f32.mrb[0].mxu0
        %v9061 = vadd.f32 0.0, %v9060
        %v9062 = vpop.f32.mrb[0].mxu0
        %v9063 = vadd.f32 0.0, %v9062
        %v9064 = vpop.f32.mrb[0].mxu0
        %v9065 = vadd.f32 0.0, %v9064
        %9066 = vdwg.mxu0
        %9067 = vmatprep.subr.bf16.mxu0 %v4478
        %9068 = vmatpush1.bf16.msra.mxu0 %v4477
        %9069 = vmatprep.subr.bf16.mxu0 %v4606
        %9070 = vmatpush1.bf16.msra.mxu0 %v4605
        %9071 = vmatprep.subr.bf16.mxu0 %v4734
        %9072 = vmatpush1.bf16.msra.mxu0 %v4733
        %9073 = vmatprep.subr.bf16.mxu0 %v4862
        %9074 = vmatpush1.bf16.msra.mxu0 %v4861
        %9075 = vmatprep.subr.bf16.mxu0 %v4990
        %9076 = vmatpush1.bf16.msra.mxu0 %v4989
        %9077 = vmatprep.subr.bf16.mxu0 %v5118
        %9078 = vmatpush1.bf16.msra.mxu0 %v5117
        %9079 = vmatprep.subr.bf16.mxu0 %v5246
        %9080 = vmatpush1.bf16.msra.mxu0 %v5245
        %9081 = vmatprep.subr.bf16.mxu0 %v5374
        %9082 = vmatpush1.bf16.msra.mxu0 %v5373
        %9083 = vmatprep.subr.bf16.mxu0 0
        %9084 = vmatpush1.bf16.msra.mxu0 0
        %9085 = vmatprep.subr.bf16.mxu0 0
        %9086 = vmatpush1.bf16.msra.mxu0 0
        %9087 = vmatprep.subr.bf16.mxu0 0
        %9088 = vmatpush1.bf16.msra.mxu0 0
        %9089 = vmatprep.subr.bf16.mxu0 0
        %9090 = vmatpush1.bf16.msra.mxu0 0
        %9091 = vmatprep.subr.bf16.mxu0 0
        %9092 = vmatpush1.bf16.msra.mxu0 0
        %9093 = vmatprep.subr.bf16.mxu0 0
        %9094 = vmatpush1.bf16.msra.mxu0 0
        %9095 = vmatprep.subr.bf16.mxu0 0
        %9096 = vmatpush1.bf16.msra.mxu0 0
        %9097 = vmatprep.subr.bf16.mxu0 0
        %9098 = vmatpush1.bf16.msra.mxu0 0
        %9099 = vmatprep.mubr.bf16.mxu0 0
        %9100 = vmatmul.mubr.bf16.gmra.mrb[0].mxu0 %v256
        %v9101 = vpop.f32.mrb[0].mxu0
        %v9102 = vadd.f32 0.0, %v9101
        %v9103 = vpop.f32.mrb[0].mxu0
        %v9104 = vadd.f32 0.0, %v9103
        %v9105 = vpop.f32.mrb[0].mxu0
        %v9106 = vadd.f32 0.0, %v9105
        %v9107 = vpop.f32.mrb[0].mxu0
        %v9108 = vadd.f32 0.0, %v9107
        %9109 = vdwg.mxu0
        %9110 = vmatprep.subr.bf16.mxu0 %v4480
        %9111 = vmatpush1.bf16.msra.mxu0 %v4479
        %9112 = vmatprep.subr.bf16.mxu0 %v4608
        %9113 = vmatpush1.bf16.msra.mxu0 %v4607
        %9114 = vmatprep.subr.bf16.mxu0 %v4736
        %9115 = vmatpush1.bf16.msra.mxu0 %v4735
        %9116 = vmatprep.subr.bf16.mxu0 %v4864
        %9117 = vmatpush1.bf16.msra.mxu0 %v4863
        %9118 = vmatprep.subr.bf16.mxu0 %v4992
        %9119 = vmatpush1.bf16.msra.mxu0 %v4991
        %9120 = vmatprep.subr.bf16.mxu0 %v5120
        %9121 = vmatpush1.bf16.msra.mxu0 %v5119
        %9122 = vmatprep.subr.bf16.mxu0 %v5248
        %9123 = vmatpush1.bf16.msra.mxu0 %v5247
        %9124 = vmatprep.subr.bf16.mxu0 %v5376
        %9125 = vmatpush1.bf16.msra.mxu0 %v5375
        %9126 = vmatprep.subr.bf16.mxu0 0
        %9127 = vmatpush1.bf16.msra.mxu0 0
        %9128 = vmatprep.subr.bf16.mxu0 0
        %9129 = vmatpush1.bf16.msra.mxu0 0
        %9130 = vmatprep.subr.bf16.mxu0 0
        %9131 = vmatpush1.bf16.msra.mxu0 0
        %9132 = vmatprep.subr.bf16.mxu0 0
        %9133 = vmatpush1.bf16.msra.mxu0 0
        %9134 = vmatprep.subr.bf16.mxu0 0
        %9135 = vmatpush1.bf16.msra.mxu0 0
        %9136 = vmatprep.subr.bf16.mxu0 0
        %9137 = vmatpush1.bf16.msra.mxu0 0
        %9138 = vmatprep.subr.bf16.mxu0 0
        %9139 = vmatpush1.bf16.msra.mxu0 0
        %9140 = vmatprep.subr.bf16.mxu0 0
        %9141 = vmatpush1.bf16.msra.mxu0 0
        %9142 = vmatprep.mubr.bf16.mxu0 0
        %9143 = vmatmul.mubr.bf16.gmra.mrb[0].mxu0 %v256
        %v9144 = vpop.f32.mrb[0].mxu0
        %v9145 = vadd.f32 0.0, %v9144
        %v9146 = vpop.f32.mrb[0].mxu0
        %v9147 = vadd.f32 0.0, %v9146
        %v9148 = vpop.f32.mrb[0].mxu0
        %v9149 = vadd.f32 0.0, %v9148
        %v9150 = vpop.f32.mrb[0].mxu0
        %v9151 = vadd.f32 0.0, %v9150
        %9152 = vdwg.mxu0
        %v9153 = vld [vmem:[#allocation3] sm:$0xff]
        %v9154 = vld [vmem:[#allocation3 + $0x8] sm:$0xff]
        %v9155 = vmax.f32 %v6436, %v6479
        %v9156 = vmax.f32 %v6438, %v6481
        %v9157 = vmax.f32 %v9155, %v6522
        %v9158 = vmax.f32 %v9156, %v6524
        %v9159 = vmax.f32 %v9157, %v6565
        %v9160 = vmax.f32 %v9158, %v6567
        %v9161 = vmax.f32 %v9159, %v6608
        %v9162 = vmax.f32 %v9160, %v6610
        %v9163 = vmax.f32 %v9161, %v6651
        %v9164 = vmax.f32 %v9162, %v6653
        %v9165 = vmax.f32 %v9163, %v6694
        %v9166 = vmax.f32 %v9164, %v6696
        %v9167 = vmax.f32 %v9165, %v6737
        %v9168 = vmax.f32 %v9166, %v6739
        %v9169 = vmax.f32 %v9167, %v6780
        %v9170 = vmax.f32 %v9168, %v6782
        %v9171 = vmax.f32 %v9169, %v6823
        %v9172 = vmax.f32 %v9170, %v6825
        %v9173 = vmax.f32 %v9171, %v6866
        %v9174 = vmax.f32 %v9172, %v6868
        %v9175 = vmax.f32 %v9173, %v6909
        %v9176 = vmax.f32 %v9174, %v6911
        %v9177 = vmax.f32 %v9175, %v6952
        %v9178 = vmax.f32 %v9176, %v6954
        %v9179 = vmax.f32 %v9177, %v6995
        %v9180 = vmax.f32 %v9178, %v6997
        %v9181 = vmax.f32 %v9179, %v7038
        %v9182 = vmax.f32 %v9180, %v7040
        %v9183 = vmax.f32 %v9181, %v7081
        %v9184 = vmax.f32 %v9182, %v7083
        %v9185 = vmax.f32 %v9183, %v7124
        %v9186 = vmax.f32 %v9184, %v7126
        %v9187 = vmax.f32 %v9185, %v7167
        %v9188 = vmax.f32 %v9186, %v7169
        %v9189 = vmax.f32 %v9187, %v7210
        %v9190 = vmax.f32 %v9188, %v7212
        %v9191 = vmax.f32 %v9189, %v7253
        %v9192 = vmax.f32 %v9190, %v7255
        %v9193 = vmax.f32 %v9191, %v7296
        %v9194 = vmax.f32 %v9192, %v7298
        %v9195 = vmax.f32 %v9193, %v7339
        %v9196 = vmax.f32 %v9194, %v7341
        %v9197 = vmax.f32 %v9195, %v7382
        %v9198 = vmax.f32 %v9196, %v7384
        %v9199 = vmax.f32 %v9197, %v7425
        %v9200 = vmax.f32 %v9198, %v7427
        %v9201 = vmax.f32 %v9199, %v7468
        %v9202 = vmax.f32 %v9200, %v7470
        %v9203 = vmax.f32 %v9201, %v7511
        %v9204 = vmax.f32 %v9202, %v7513
        %v9205 = vmax.f32 %v9203, %v7554
        %v9206 = vmax.f32 %v9204, %v7556
        %v9207 = vmax.f32 %v9205, %v7597
        %v9208 = vmax.f32 %v9206, %v7599
        %v9209 = vmax.f32 %v9207, %v7640
        %v9210 = vmax.f32 %v9208, %v7642
        %v9211 = vmax.f32 %v9209, %v7683
        %v9212 = vmax.f32 %v9210, %v7685
        %v9213 = vmax.f32 %v9211, %v7726
        %v9214 = vmax.f32 %v9212, %v7728
        %v9215 = vmax.f32 %v9213, %v7769
        %v9216 = vmax.f32 %v9214, %v7771
        %v9217 = vmax.f32 %v9215, %v7812
        %v9218 = vmax.f32 %v9216, %v7814
        %v9219 = vmax.f32 %v9217, %v7855
        %v9220 = vmax.f32 %v9218, %v7857
        %v9221 = vmax.f32 %v9219, %v7898
        %v9222 = vmax.f32 %v9220, %v7900
        %v9223 = vmax.f32 %v9221, %v7941
        %v9224 = vmax.f32 %v9222, %v7943
        %v9225 = vmax.f32 %v9223, %v7984
        %v9226 = vmax.f32 %v9224, %v7986
        %v9227 = vmax.f32 %v9225, %v8027
        %v9228 = vmax.f32 %v9226, %v8029
        %v9229 = vmax.f32 %v9227, %v8070
        %v9230 = vmax.f32 %v9228, %v8072
        %v9231 = vmax.f32 %v9229, %v8113
        %v9232 = vmax.f32 %v9230, %v8115
        %v9233 = vmax.f32 %v9231, %v8156
        %v9234 = vmax.f32 %v9232, %v8158
        %v9235 = vmax.f32 %v9233, %v8199
        %v9236 = vmax.f32 %v9234, %v8201
        %v9237 = vmax.f32 %v9235, %v8242
        %v9238 = vmax.f32 %v9236, %v8244
        %v9239 = vmax.f32 %v9237, %v8285
        %v9240 = vmax.f32 %v9238, %v8287
        %v9241 = vmax.f32 %v9239, %v8328
        %v9242 = vmax.f32 %v9240, %v8330
        %v9243 = vmax.f32 %v9241, %v8371
        %v9244 = vmax.f32 %v9242, %v8373
        %v9245 = vmax.f32 %v9243, %v8414
        %v9246 = vmax.f32 %v9244, %v8416
        %v9247 = vmax.f32 %v9245, %v8457
        %v9248 = vmax.f32 %v9246, %v8459
        %v9249 = vmax.f32 %v9247, %v8500
        %v9250 = vmax.f32 %v9248, %v8502
        %v9251 = vmax.f32 %v9249, %v8543
        %v9252 = vmax.f32 %v9250, %v8545
        %v9253 = vmax.f32 %v9251, %v8586
        %v9254 = vmax.f32 %v9252, %v8588
        %v9255 = vmax.f32 %v9253, %v8629
        %v9256 = vmax.f32 %v9254, %v8631
        %v9257 = vmax.f32 %v9255, %v8672
        %v9258 = vmax.f32 %v9256, %v8674
        %v9259 = vmax.f32 %v9257, %v8715
        %v9260 = vmax.f32 %v9258, %v8717
        %v9261 = vmax.f32 %v9259, %v8758
        %v9262 = vmax.f32 %v9260, %v8760
        %v9263 = vmax.f32 %v9261, %v8801
        %v9264 = vmax.f32 %v9262, %v8803
        %v9265 = vmax.f32 %v9263, %v8844
        %v9266 = vmax.f32 %v9264, %v8846
        %v9267 = vmax.f32 %v9265, %v8887
        %v9268 = vmax.f32 %v9266, %v8889
        %v9269 = vmax.f32 %v9267, %v8930
        %v9270 = vmax.f32 %v9268, %v8932
        %v9271 = vmax.f32 %v9269, %v8973
        %v9272 = vmax.f32 %v9270, %v8975
        %v9273 = vmax.f32 %v9271, %v9016
        %v9274 = vmax.f32 %v9272, %v9018
        %v9275 = vmax.f32 %v9273, %v9059
        %v9276 = vmax.f32 %v9274, %v9061
        %v9277 = vmax.f32 %v9275, %v9102
        %v9278 = vmax.f32 %v9276, %v9104
        %v9279 = vmax.f32 %v9277, %v9145
        %v9280 = vmax.f32 %v9278, %v9147
        %v9281 = vmax.f32 %v9279, %v9280
        %9282 = vmax.xlane.f32.xlu0 %v9281
        %v9283 = vpop.xlane.xlu0 %9282
        %v9284 = vmax.f32 %v6440, %v6483
        %v9285 = vmax.f32 %v6442, %v6485
        %v9286 = vmax.f32 %v9284, %v6526
        %v9287 = vmax.f32 %v9285, %v6528
        %v9288 = vmax.f32 %v9286, %v6569
        %v9289 = vmax.f32 %v9287, %v6571
        %v9290 = vmax.f32 %v9288, %v6612
        %v9291 = vmax.f32 %v9289, %v6614
        %v9292 = vmax.f32 %v9290, %v6655
        %v9293 = vmax.f32 %v9291, %v6657
        %v9294 = vmax.f32 %v9292, %v6698
        %v9295 = vmax.f32 %v9293, %v6700
        %v9296 = vmax.f32 %v9294, %v6741
        %v9297 = vmax.f32 %v9295, %v6743
        %v9298 = vmax.f32 %v9296, %v6784
        %v9299 = vmax.f32 %v9297, %v6786
        %v9300 = vmax.f32 %v9298, %v6827
        %v9301 = vmax.f32 %v9299, %v6829
        %v9302 = vmax.f32 %v9300, %v6870
        %v9303 = vmax.f32 %v9301, %v6872
        %v9304 = vmax.f32 %v9302, %v6913
        %v9305 = vmax.f32 %v9303, %v6915
        %v9306 = vmax.f32 %v9304, %v6956
        %v9307 = vmax.f32 %v9305, %v6958
        %v9308 = vmax.f32 %v9306, %v6999
        %v9309 = vmax.f32 %v9307, %v7001
        %v9310 = vmax.f32 %v9308, %v7042
        %v9311 = vmax.f32 %v9309, %v7044
        %v9312 = vmax.f32 %v9310, %v7085
        %v9313 = vmax.f32 %v9311, %v7087
        %v9314 = vmax.f32 %v9312, %v7128
        %v9315 = vmax.f32 %v9313, %v7130
        %v9316 = vmax.f32 %v9314, %v7171
        %v9317 = vmax.f32 %v9315, %v7173
        %v9318 = vmax.f32 %v9316, %v7214
        %v9319 = vmax.f32 %v9317, %v7216
        %v9320 = vmax.f32 %v9318, %v7257
        %v9321 = vmax.f32 %v9319, %v7259
        %v9322 = vmax.f32 %v9320, %v7300
        %v9323 = vmax.f32 %v9321, %v7302
        %v9324 = vmax.f32 %v9322, %v7343
        %v9325 = vmax.f32 %v9323, %v7345
        %v9326 = vmax.f32 %v9324, %v7386
        %v9327 = vmax.f32 %v9325, %v7388
        %v9328 = vmax.f32 %v9326, %v7429
        %v9329 = vmax.f32 %v9327, %v7431
        %v9330 = vmax.f32 %v9328, %v7472
        %v9331 = vmax.f32 %v9329, %v7474
        %v9332 = vmax.f32 %v9330, %v7515
        %v9333 = vmax.f32 %v9331, %v7517
        %v9334 = vmax.f32 %v9332, %v7558
        %v9335 = vmax.f32 %v9333, %v7560
        %v9336 = vmax.f32 %v9334, %v7601
        %v9337 = vmax.f32 %v9335, %v7603
        %v9338 = vmax.f32 %v9336, %v7644
        %v9339 = vmax.f32 %v9337, %v7646
        %v9340 = vmax.f32 %v9338, %v7687
        %v9341 = vmax.f32 %v9339, %v7689
        %v9342 = vmax.f32 %v9340, %v7730
        %v9343 = vmax.f32 %v9341, %v7732
        %v9344 = vmax.f32 %v9342, %v7773
        %v9345 = vmax.f32 %v9343, %v7775
        %v9346 = vmax.f32 %v9344, %v7816
        %v9347 = vmax.f32 %v9345, %v7818
        %v9348 = vmax.f32 %v9346, %v7859
        %v9349 = vmax.f32 %v9347, %v7861
        %v9350 = vmax.f32 %v9348, %v7902
        %v9351 = vmax.f32 %v9349, %v7904
        %v9352 = vmax.f32 %v9350, %v7945
        %v9353 = vmax.f32 %v9351, %v7947
        %v9354 = vmax.f32 %v9352, %v7988
        %v9355 = vmax.f32 %v9353, %v7990
        %v9356 = vmax.f32 %v9354, %v8031
        %v9357 = vmax.f32 %v9355, %v8033
        %v9358 = vmax.f32 %v9356, %v8074
        %v9359 = vmax.f32 %v9357, %v8076
        %v9360 = vmax.f32 %v9358, %v8117
        %v9361 = vmax.f32 %v9359, %v8119
        %v9362 = vmax.f32 %v9360, %v8160
        %v9363 = vmax.f32 %v9361, %v8162
        %v9364 = vmax.f32 %v9362, %v8203
        %v9365 = vmax.f32 %v9363, %v8205
        %v9366 = vmax.f32 %v9364, %v8246
        %v9367 = vmax.f32 %v9365, %v8248
        %v9368 = vmax.f32 %v9366, %v8289
        %v9369 = vmax.f32 %v9367, %v8291
        %v9370 = vmax.f32 %v9368, %v8332
        %v9371 = vmax.f32 %v9369, %v8334
        %v9372 = vmax.f32 %v9370, %v8375
        %v9373 = vmax.f32 %v9371, %v8377
        %v9374 = vmax.f32 %v9372, %v8418
        %v9375 = vmax.f32 %v9373, %v8420
        %v9376 = vmax.f32 %v9374, %v8461
        %v9377 = vmax.f32 %v9375, %v8463
        %v9378 = vmax.f32 %v9376, %v8504
        %v9379 = vmax.f32 %v9377, %v8506
        %v9380 = vmax.f32 %v9378, %v8547
        %v9381 = vmax.f32 %v9379, %v8549
        %v9382 = vmax.f32 %v9380, %v8590
        %v9383 = vmax.f32 %v9381, %v8592
        %v9384 = vmax.f32 %v9382, %v8633
        %v9385 = vmax.f32 %v9383, %v8635
        %v9386 = vmax.f32 %v9384, %v8676
        %v9387 = vmax.f32 %v9385, %v8678
        %v9388 = vmax.f32 %v9386, %v8719
        %v9389 = vmax.f32 %v9387, %v8721
        %v9390 = vmax.f32 %v9388, %v8762
        %v9391 = vmax.f32 %v9389, %v8764
        %v9392 = vmax.f32 %v9390, %v8805
        %v9393 = vmax.f32 %v9391, %v8807
        %v9394 = vmax.f32 %v9392, %v8848
        %v9395 = vmax.f32 %v9393, %v8850
        %v9396 = vmax.f32 %v9394, %v8891
        %v9397 = vmax.f32 %v9395, %v8893
        %v9398 = vmax.f32 %v9396, %v8934
        %v9399 = vmax.f32 %v9397, %v8936
        %v9400 = vmax.f32 %v9398, %v8977
        %v9401 = vmax.f32 %v9399, %v8979
        %v9402 = vmax.f32 %v9400, %v9020
        %v9403 = vmax.f32 %v9401, %v9022
        %v9404 = vmax.f32 %v9402, %v9063
        %v9405 = vmax.f32 %v9403, %v9065
        %v9406 = vmax.f32 %v9404, %v9106
        %v9407 = vmax.f32 %v9405, %v9108
        %v9408 = vmax.f32 %v9406, %v9149
        %v9409 = vmax.f32 %v9407, %v9151
        %v9410 = vmax.f32 %v9408, %v9409
        %9411 = vmax.xlane.f32.xlu0 %v9410
        %v9412 = vpop.xlane.xlu0 %9411
        %v9413 = vmax.f32 %v9153, %v9283
        %v9414 = vmax.f32 %v9154, %v9412
        %v9415 = vld [vmem:[#allocation4] sm:$0xff]
        %v9416 = vld [vmem:[#allocation4 + $0x8] sm:$0xff]
        %v9417 = vsub.f32 %v9153, %v9413
        %v9418 = vsub.f32 %v9154, %v9414
        %v9419 = vmul.f32 %v9417, 1.442695
        %v9420 = vpow.pop %v9419
        %v9421 = vmul.f32 %v9418, 1.442695
        %v9422 = vpow.pop %v9421
        %v9423 = vmul.f32 %v9415, %v9420
        %v9424 = vmul.f32 %v9416, %v9422
        %9426 = vset.pattern.permute.xlu0 0
        %9427 = vperm.xlu0 %9426, %v9413
        %v9428 = vpop.permute.xlu0 %9427
        %9431 = vset.pattern.permute.xlu0 0
        %9432 = vperm.xlu0 %9431, %v9414
        %v9433 = vpop.permute.xlu0 %9432
        %v9435 = vsub.f32 %v6436, %v9428
        %v9436 = vsub.f32 %v6438, %v9428
        %v9437 = vsub.f32 %v6479, %v9428
        %v9438 = vsub.f32 %v6481, %v9428
        %v9439 = vsub.f32 %v6522, %v9428
        %v9440 = vsub.f32 %v6524, %v9428
        %v9441 = vsub.f32 %v6565, %v9428
        %v9442 = vsub.f32 %v6567, %v9428
        %v9443 = vsub.f32 %v6608, %v9428
        %v9444 = vsub.f32 %v6610, %v9428
        %v9445 = vsub.f32 %v6651, %v9428
        %v9446 = vsub.f32 %v6653, %v9428
        %v9447 = vsub.f32 %v6694, %v9428
        %v9448 = vsub.f32 %v6696, %v9428
        %v9449 = vsub.f32 %v6737, %v9428
        %v9450 = vsub.f32 %v6739, %v9428
        %v9451 = vsub.f32 %v6780, %v9428
        %v9452 = vsub.f32 %v6782, %v9428
        %v9453 = vsub.f32 %v6823, %v9428
        %v9454 = vsub.f32 %v6825, %v9428
        %v9455 = vsub.f32 %v6866, %v9428
        %v9456 = vsub.f32 %v6868, %v9428
        %v9457 = vsub.f32 %v6909, %v9428
        %v9458 = vsub.f32 %v6911, %v9428
        %v9459 = vsub.f32 %v6952, %v9428
        %v9460 = vsub.f32 %v6954, %v9428
        %v9461 = vsub.f32 %v6995, %v9428
        %v9462 = vsub.f32 %v6997, %v9428
        %v9463 = vsub.f32 %v7038, %v9428
        %v9464 = vsub.f32 %v7040, %v9428
        %v9465 = vsub.f32 %v7081, %v9428
        %v9466 = vsub.f32 %v7083, %v9428
        %v9467 = vsub.f32 %v7124, %v9428
        %v9468 = vsub.f32 %v7126, %v9428
        %v9469 = vsub.f32 %v7167, %v9428
        %v9470 = vsub.f32 %v7169, %v9428
        %v9471 = vsub.f32 %v7210, %v9428
        %v9472 = vsub.f32 %v7212, %v9428
        %v9473 = vsub.f32 %v7253, %v9428
        %v9474 = vsub.f32 %v7255, %v9428
        %v9475 = vsub.f32 %v7296, %v9428
        %v9476 = vsub.f32 %v7298, %v9428
        %v9477 = vsub.f32 %v7339, %v9428
        %v9478 = vsub.f32 %v7341, %v9428
        %v9479 = vsub.f32 %v7382, %v9428
        %v9480 = vsub.f32 %v7384, %v9428
        %v9481 = vsub.f32 %v7425, %v9428
        %v9482 = vsub.f32 %v7427, %v9428
        %v9483 = vsub.f32 %v7468, %v9428
        %v9484 = vsub.f32 %v7470, %v9428
        %v9485 = vsub.f32 %v7511, %v9428
        %v9486 = vsub.f32 %v7513, %v9428
        %v9487 = vsub.f32 %v7554, %v9428
        %v9488 = vsub.f32 %v7556, %v9428
        %v9489 = vsub.f32 %v7597, %v9428
        %v9490 = vsub.f32 %v7599, %v9428
        %v9491 = vsub.f32 %v7640, %v9428
        %v9492 = vsub.f32 %v7642, %v9428
        %v9493 = vsub.f32 %v7683, %v9428
        %v9494 = vsub.f32 %v7685, %v9428
        %v9495 = vsub.f32 %v7726, %v9428
        %v9496 = vsub.f32 %v7728, %v9428
        %v9497 = vsub.f32 %v7769, %v9428
        %v9498 = vsub.f32 %v7771, %v9428
        %v9499 = vsub.f32 %v7812, %v9428
        %v9500 = vsub.f32 %v7814, %v9428
        %v9501 = vsub.f32 %v7855, %v9428
        %v9502 = vsub.f32 %v7857, %v9428
        %v9503 = vsub.f32 %v7898, %v9428
        %v9504 = vsub.f32 %v7900, %v9428
        %v9505 = vsub.f32 %v7941, %v9428
        %v9506 = vsub.f32 %v7943, %v9428
        %v9507 = vsub.f32 %v7984, %v9428
        %v9508 = vsub.f32 %v7986, %v9428
        %v9509 = vsub.f32 %v8027, %v9428
        %v9510 = vsub.f32 %v8029, %v9428
        %v9511 = vsub.f32 %v8070, %v9428
        %v9512 = vsub.f32 %v8072, %v9428
        %v9513 = vsub.f32 %v8113, %v9428
        %v9514 = vsub.f32 %v8115, %v9428
        %v9515 = vsub.f32 %v8156, %v9428
        %v9516 = vsub.f32 %v8158, %v9428
        %v9517 = vsub.f32 %v8199, %v9428
        %v9518 = vsub.f32 %v8201, %v9428
        %v9519 = vsub.f32 %v8242, %v9428
        %v9520 = vsub.f32 %v8244, %v9428
        %v9521 = vsub.f32 %v8285, %v9428
        %v9522 = vsub.f32 %v8287, %v9428
        %v9523 = vsub.f32 %v8328, %v9428
        %v9524 = vsub.f32 %v8330, %v9428
        %v9525 = vsub.f32 %v8371, %v9428
        %v9526 = vsub.f32 %v8373, %v9428
        %v9527 = vsub.f32 %v8414, %v9428
        %v9528 = vsub.f32 %v8416, %v9428
        %v9529 = vsub.f32 %v8457, %v9428
        %v9530 = vsub.f32 %v8459, %v9428
        %v9531 = vsub.f32 %v8500, %v9428
        %v9532 = vsub.f32 %v8502, %v9428
        %v9533 = vsub.f32 %v8543, %v9428
        %v9534 = vsub.f32 %v8545, %v9428
        %v9535 = vsub.f32 %v8586, %v9428
        %v9536 = vsub.f32 %v8588, %v9428
        %v9537 = vsub.f32 %v8629, %v9428
        %v9538 = vsub.f32 %v8631, %v9428
        %v9539 = vsub.f32 %v8672, %v9428
        %v9540 = vsub.f32 %v8674, %v9428
        %v9541 = vsub.f32 %v8715, %v9428
        %v9542 = vsub.f32 %v8717, %v9428
        %v9543 = vsub.f32 %v8758, %v9428
        %v9544 = vsub.f32 %v8760, %v9428
        %v9545 = vsub.f32 %v8801, %v9428
        %v9546 = vsub.f32 %v8803, %v9428
        %v9547 = vsub.f32 %v8844, %v9428
        %v9548 = vsub.f32 %v8846, %v9428
        %v9549 = vsub.f32 %v8887, %v9428
        %v9550 = vsub.f32 %v8889, %v9428
        %v9551 = vsub.f32 %v8930, %v9428
        %v9552 = vsub.f32 %v8932, %v9428
        %v9553 = vsub.f32 %v8973, %v9428
        %v9554 = vsub.f32 %v8975, %v9428
        %v9555 = vsub.f32 %v9016, %v9428
        %v9556 = vsub.f32 %v9018, %v9428
        %v9557 = vsub.f32 %v9059, %v9428
        %v9558 = vsub.f32 %v9061, %v9428
        %v9559 = vsub.f32 %v9102, %v9428
        %v9560 = vsub.f32 %v9104, %v9428
        %v9561 = vsub.f32 %v9145, %v9428
        %v9562 = vsub.f32 %v9147, %v9428
        %v9563 = vsub.f32 %v6440, %v9433
        %v9564 = vsub.f32 %v6442, %v9433
        %v9565 = vsub.f32 %v6483, %v9433
        %v9566 = vsub.f32 %v6485, %v9433
        %v9567 = vsub.f32 %v6526, %v9433
        %v9568 = vsub.f32 %v6528, %v9433
        %v9569 = vsub.f32 %v6569, %v9433
        %v9570 = vsub.f32 %v6571, %v9433
        %v9571 = vsub.f32 %v6612, %v9433
        %v9572 = vsub.f32 %v6614, %v9433
        %v9573 = vsub.f32 %v6655, %v9433
        %v9574 = vsub.f32 %v6657, %v9433
        %v9575 = vsub.f32 %v6698, %v9433
        %v9576 = vsub.f32 %v6700, %v9433
        %v9577 = vsub.f32 %v6741, %v9433
        %v9578 = vsub.f32 %v6743, %v9433
        %v9579 = vsub.f32 %v6784, %v9433
        %v9580 = vsub.f32 %v6786, %v9433
        %v9581 = vsub.f32 %v6827, %v9433
        %v9582 = vsub.f32 %v6829, %v9433
        %v9583 = vsub.f32 %v6870, %v9433
        %v9584 = vsub.f32 %v6872, %v9433
        %v9585 = vsub.f32 %v6913, %v9433
        %v9586 = vsub.f32 %v6915, %v9433
        %v9587 = vsub.f32 %v6956, %v9433
        %v9588 = vsub.f32 %v6958, %v9433
        %v9589 = vsub.f32 %v6999, %v9433
        %v9590 = vsub.f32 %v7001, %v9433
        %v9591 = vsub.f32 %v7042, %v9433
        %v9592 = vsub.f32 %v7044, %v9433
        %v9593 = vsub.f32 %v7085, %v9433
        %v9594 = vsub.f32 %v7087, %v9433
        %v9595 = vsub.f32 %v7128, %v9433
        %v9596 = vsub.f32 %v7130, %v9433
        %v9597 = vsub.f32 %v7171, %v9433
        %v9598 = vsub.f32 %v7173, %v9433
        %v9599 = vsub.f32 %v7214, %v9433
        %v9600 = vsub.f32 %v7216, %v9433
        %v9601 = vsub.f32 %v7257, %v9433
        %v9602 = vsub.f32 %v7259, %v9433
        %v9603 = vsub.f32 %v7300, %v9433
        %v9604 = vsub.f32 %v7302, %v9433
        %v9605 = vsub.f32 %v7343, %v9433
        %v9606 = vsub.f32 %v7345, %v9433
        %v9607 = vsub.f32 %v7386, %v9433
        %v9608 = vsub.f32 %v7388, %v9433
        %v9609 = vsub.f32 %v7429, %v9433
        %v9610 = vsub.f32 %v7431, %v9433
        %v9611 = vsub.f32 %v7472, %v9433
        %v9612 = vsub.f32 %v7474, %v9433
        %v9613 = vsub.f32 %v7515, %v9433
        %v9614 = vsub.f32 %v7517, %v9433
        %v9615 = vsub.f32 %v7558, %v9433
        %v9616 = vsub.f32 %v7560, %v9433
        %v9617 = vsub.f32 %v7601, %v9433
        %v9618 = vsub.f32 %v7603, %v9433
        %v9619 = vsub.f32 %v7644, %v9433
        %v9620 = vsub.f32 %v7646, %v9433
        %v9621 = vsub.f32 %v7687, %v9433
        %v9622 = vsub.f32 %v7689, %v9433
        %v9623 = vsub.f32 %v7730, %v9433
        %v9624 = vsub.f32 %v7732, %v9433
        %v9625 = vsub.f32 %v7773, %v9433
        %v9626 = vsub.f32 %v7775, %v9433
        %v9627 = vsub.f32 %v7816, %v9433
        %v9628 = vsub.f32 %v7818, %v9433
        %v9629 = vsub.f32 %v7859, %v9433
        %v9630 = vsub.f32 %v7861, %v9433
        %v9631 = vsub.f32 %v7902, %v9433
        %v9632 = vsub.f32 %v7904, %v9433
        %v9633 = vsub.f32 %v7945, %v9433
        %v9634 = vsub.f32 %v7947, %v9433
        %v9635 = vsub.f32 %v7988, %v9433
        %v9636 = vsub.f32 %v7990, %v9433
        %v9637 = vsub.f32 %v8031, %v9433
        %v9638 = vsub.f32 %v8033, %v9433
        %v9639 = vsub.f32 %v8074, %v9433
        %v9640 = vsub.f32 %v8076, %v9433
        %v9641 = vsub.f32 %v8117, %v9433
        %v9642 = vsub.f32 %v8119, %v9433
        %v9643 = vsub.f32 %v8160, %v9433
        %v9644 = vsub.f32 %v8162, %v9433
        %v9645 = vsub.f32 %v8203, %v9433
        %v9646 = vsub.f32 %v8205, %v9433
        %v9647 = vsub.f32 %v8246, %v9433
        %v9648 = vsub.f32 %v8248, %v9433
        %v9649 = vsub.f32 %v8289, %v9433
        %v9650 = vsub.f32 %v8291, %v9433
        %v9651 = vsub.f32 %v8332, %v9433
        %v9652 = vsub.f32 %v8334, %v9433
        %v9653 = vsub.f32 %v8375, %v9433
        %v9654 = vsub.f32 %v8377, %v9433
        %v9655 = vsub.f32 %v8418, %v9433
        %v9656 = vsub.f32 %v8420, %v9433
        %v9657 = vsub.f32 %v8461, %v9433
        %v9658 = vsub.f32 %v8463, %v9433
        %v9659 = vsub.f32 %v8504, %v9433
        %v9660 = vsub.f32 %v8506, %v9433
        %v9661 = vsub.f32 %v8547, %v9433
        %v9662 = vsub.f32 %v8549, %v9433
        %v9663 = vsub.f32 %v8590, %v9433
        %v9664 = vsub.f32 %v8592, %v9433
        %v9665 = vsub.f32 %v8633, %v9433
        %v9666 = vsub.f32 %v8635, %v9433
        %v9667 = vsub.f32 %v8676, %v9433
        %v9668 = vsub.f32 %v8678, %v9433
        %v9669 = vsub.f32 %v8719, %v9433
        %v9670 = vsub.f32 %v8721, %v9433
        %v9671 = vsub.f32 %v8762, %v9433
        %v9672 = vsub.f32 %v8764, %v9433
        %v9673 = vsub.f32 %v8805, %v9433
        %v9674 = vsub.f32 %v8807, %v9433
        %v9675 = vsub.f32 %v8848, %v9433
        %v9676 = vsub.f32 %v8850, %v9433
        %v9677 = vsub.f32 %v8891, %v9433
        %v9678 = vsub.f32 %v8893, %v9433
        %v9679 = vsub.f32 %v8934, %v9433
        %v9680 = vsub.f32 %v8936, %v9433
        %v9681 = vsub.f32 %v8977, %v9433
        %v9682 = vsub.f32 %v8979, %v9433
        %v9683 = vsub.f32 %v9020, %v9433
        %v9684 = vsub.f32 %v9022, %v9433
        %v9685 = vsub.f32 %v9063, %v9433
        %v9686 = vsub.f32 %v9065, %v9433
        %v9687 = vsub.f32 %v9106, %v9433
        %v9688 = vsub.f32 %v9108, %v9433
        %v9689 = vsub.f32 %v9149, %v9433
        %v9690 = vsub.f32 %v9151, %v9433
        %v9691 = vmul.f32 %v9435, 1.442695
        %v9692 = vpow.pop %v9691
        %v9693 = vmul.f32 %v9436, 1.442695
        %v9694 = vpow.pop %v9693
        %v9695 = vmul.f32 %v9437, 1.442695
        %v9696 = vpow.pop %v9695
        %v9697 = vmul.f32 %v9438, 1.442695
        %v9698 = vpow.pop %v9697
        %v9699 = vmul.f32 %v9439, 1.442695
        %v9700 = vpow.pop %v9699
        %v9701 = vmul.f32 %v9440, 1.442695
        %v9702 = vpow.pop %v9701
        %v9703 = vmul.f32 %v9441, 1.442695
        %v9704 = vpow.pop %v9703
        %v9705 = vmul.f32 %v9442, 1.442695
        %v9706 = vpow.pop %v9705
        %v9707 = vmul.f32 %v9443, 1.442695
        %v9708 = vpow.pop %v9707
        %v9709 = vmul.f32 %v9444, 1.442695
        %v9710 = vpow.pop %v9709
        %v9711 = vmul.f32 %v9445, 1.442695
        %v9712 = vpow.pop %v9711
        %v9713 = vmul.f32 %v9446, 1.442695
        %v9714 = vpow.pop %v9713
        %v9715 = vmul.f32 %v9447, 1.442695
        %v9716 = vpow.pop %v9715
        %v9717 = vmul.f32 %v9448, 1.442695
        %v9718 = vpow.pop %v9717
        %v9719 = vmul.f32 %v9449, 1.442695
        %v9720 = vpow.pop %v9719
        %v9721 = vmul.f32 %v9450, 1.442695
        %v9722 = vpow.pop %v9721
        %v9723 = vmul.f32 %v9451, 1.442695
        %v9724 = vpow.pop %v9723
        %v9725 = vmul.f32 %v9452, 1.442695
        %v9726 = vpow.pop %v9725
        %v9727 = vmul.f32 %v9453, 1.442695
        %v9728 = vpow.pop %v9727
        %v9729 = vmul.f32 %v9454, 1.442695
        %v9730 = vpow.pop %v9729
        %v9731 = vmul.f32 %v9455, 1.442695
        %v9732 = vpow.pop %v9731
        %v9733 = vmul.f32 %v9456, 1.442695
        %v9734 = vpow.pop %v9733
        %v9735 = vmul.f32 %v9457, 1.442695
        %v9736 = vpow.pop %v9735
        %v9737 = vmul.f32 %v9458, 1.442695
        %v9738 = vpow.pop %v9737
        %v9739 = vmul.f32 %v9459, 1.442695
        %v9740 = vpow.pop %v9739
        %v9741 = vmul.f32 %v9460, 1.442695
        %v9742 = vpow.pop %v9741
        %v9743 = vmul.f32 %v9461, 1.442695
        %v9744 = vpow.pop %v9743
        %v9745 = vmul.f32 %v9462, 1.442695
        %v9746 = vpow.pop %v9745
        %v9747 = vmul.f32 %v9463, 1.442695
        %v9748 = vpow.pop %v9747
        %v9749 = vmul.f32 %v9464, 1.442695
        %v9750 = vpow.pop %v9749
        %v9751 = vmul.f32 %v9465, 1.442695
        %v9752 = vpow.pop %v9751
        %v9753 = vmul.f32 %v9466, 1.442695
        %v9754 = vpow.pop %v9753
        %v9755 = vmul.f32 %v9467, 1.442695
        %v9756 = vpow.pop %v9755
        %v9757 = vmul.f32 %v9468, 1.442695
        %v9758 = vpow.pop %v9757
        %v9759 = vmul.f32 %v9469, 1.442695
        %v9760 = vpow.pop %v9759
        %v9761 = vmul.f32 %v9470, 1.442695
        %v9762 = vpow.pop %v9761
        %v9763 = vmul.f32 %v9471, 1.442695
        %v9764 = vpow.pop %v9763
        %v9765 = vmul.f32 %v9472, 1.442695
        %v9766 = vpow.pop %v9765
        %v9767 = vmul.f32 %v9473, 1.442695
        %v9768 = vpow.pop %v9767
        %v9769 = vmul.f32 %v9474, 1.442695
        %v9770 = vpow.pop %v9769
        %v9771 = vmul.f32 %v9475, 1.442695
        %v9772 = vpow.pop %v9771
        %v9773 = vmul.f32 %v9476, 1.442695
        %v9774 = vpow.pop %v9773
        %v9775 = vmul.f32 %v9477, 1.442695
        %v9776 = vpow.pop %v9775
        %v9777 = vmul.f32 %v9478, 1.442695
        %v9778 = vpow.pop %v9777
        %v9779 = vmul.f32 %v9479, 1.442695
        %v9780 = vpow.pop %v9779
        %v9781 = vmul.f32 %v9480, 1.442695
        %v9782 = vpow.pop %v9781
        %v9783 = vmul.f32 %v9481, 1.442695
        %v9784 = vpow.pop %v9783
        %v9785 = vmul.f32 %v9482, 1.442695
        %v9786 = vpow.pop %v9785
        %v9787 = vmul.f32 %v9483, 1.442695
        %v9788 = vpow.pop %v9787
        %v9789 = vmul.f32 %v9484, 1.442695
        %v9790 = vpow.pop %v9789
        %v9791 = vmul.f32 %v9485, 1.442695
        %v9792 = vpow.pop %v9791
        %v9793 = vmul.f32 %v9486, 1.442695
        %v9794 = vpow.pop %v9793
        %v9795 = vmul.f32 %v9487, 1.442695
        %v9796 = vpow.pop %v9795
        %v9797 = vmul.f32 %v9488, 1.442695
        %v9798 = vpow.pop %v9797
        %v9799 = vmul.f32 %v9489, 1.442695
        %v9800 = vpow.pop %v9799
        %v9801 = vmul.f32 %v9490, 1.442695
        %v9802 = vpow.pop %v9801
        %v9803 = vmul.f32 %v9491, 1.442695
        %v9804 = vpow.pop %v9803
        %v9805 = vmul.f32 %v9492, 1.442695
        %v9806 = vpow.pop %v9805
        %v9807 = vmul.f32 %v9493, 1.442695
        %v9808 = vpow.pop %v9807
        %v9809 = vmul.f32 %v9494, 1.442695
        %v9810 = vpow.pop %v9809
        %v9811 = vmul.f32 %v9495, 1.442695
        %v9812 = vpow.pop %v9811
        %v9813 = vmul.f32 %v9496, 1.442695
        %v9814 = vpow.pop %v9813
        %v9815 = vmul.f32 %v9497, 1.442695
        %v9816 = vpow.pop %v9815
        %v9817 = vmul.f32 %v9498, 1.442695
        %v9818 = vpow.pop %v9817
        %v9819 = vmul.f32 %v9499, 1.442695
        %v9820 = vpow.pop %v9819
        %v9821 = vmul.f32 %v9500, 1.442695
        %v9822 = vpow.pop %v9821
        %v9823 = vmul.f32 %v9501, 1.442695
        %v9824 = vpow.pop %v9823
        %v9825 = vmul.f32 %v9502, 1.442695
        %v9826 = vpow.pop %v9825
        %v9827 = vmul.f32 %v9503, 1.442695
        %v9828 = vpow.pop %v9827
        %v9829 = vmul.f32 %v9504, 1.442695
        %v9830 = vpow.pop %v9829
        %v9831 = vmul.f32 %v9505, 1.442695
        %v9832 = vpow.pop %v9831
        %v9833 = vmul.f32 %v9506, 1.442695
        %v9834 = vpow.pop %v9833
        %v9835 = vmul.f32 %v9507, 1.442695
        %v9836 = vpow.pop %v9835
        %v9837 = vmul.f32 %v9508, 1.442695
        %v9838 = vpow.pop %v9837
        %v9839 = vmul.f32 %v9509, 1.442695
        %v9840 = vpow.pop %v9839
        %v9841 = vmul.f32 %v9510, 1.442695
        %v9842 = vpow.pop %v9841
        %v9843 = vmul.f32 %v9511, 1.442695
        %v9844 = vpow.pop %v9843
        %v9845 = vmul.f32 %v9512, 1.442695
        %v9846 = vpow.pop %v9845
        %v9847 = vmul.f32 %v9513, 1.442695
        %v9848 = vpow.pop %v9847
        %v9849 = vmul.f32 %v9514, 1.442695
        %v9850 = vpow.pop %v9849
        %v9851 = vmul.f32 %v9515, 1.442695
        %v9852 = vpow.pop %v9851
        %v9853 = vmul.f32 %v9516, 1.442695
        %v9854 = vpow.pop %v9853
        %v9855 = vmul.f32 %v9517, 1.442695
        %v9856 = vpow.pop %v9855
        %v9857 = vmul.f32 %v9518, 1.442695
        %v9858 = vpow.pop %v9857
        %v9859 = vmul.f32 %v9519, 1.442695
        %v9860 = vpow.pop %v9859
        %v9861 = vmul.f32 %v9520, 1.442695
        %v9862 = vpow.pop %v9861
        %v9863 = vmul.f32 %v9521, 1.442695
        %v9864 = vpow.pop %v9863
        %v9865 = vmul.f32 %v9522, 1.442695
        %v9866 = vpow.pop %v9865
        %v9867 = vmul.f32 %v9523, 1.442695
        %v9868 = vpow.pop %v9867
        %v9869 = vmul.f32 %v9524, 1.442695
        %v9870 = vpow.pop %v9869
        %v9871 = vmul.f32 %v9525, 1.442695
        %v9872 = vpow.pop %v9871
        %v9873 = vmul.f32 %v9526, 1.442695
        %v9874 = vpow.pop %v9873
        %v9875 = vmul.f32 %v9527, 1.442695
        %v9876 = vpow.pop %v9875
        %v9877 = vmul.f32 %v9528, 1.442695
        %v9878 = vpow.pop %v9877
        %v9879 = vmul.f32 %v9529, 1.442695
        %v9880 = vpow.pop %v9879
        %v9881 = vmul.f32 %v9530, 1.442695
        %v9882 = vpow.pop %v9881
        %v9883 = vmul.f32 %v9531, 1.442695
        %v9884 = vpow.pop %v9883
        %v9885 = vmul.f32 %v9532, 1.442695
        %v9886 = vpow.pop %v9885
        %v9887 = vmul.f32 %v9533, 1.442695
        %v9888 = vpow.pop %v9887
        %v9889 = vmul.f32 %v9534, 1.442695
        %v9890 = vpow.pop %v9889
        %v9891 = vmul.f32 %v9535, 1.442695
        %v9892 = vpow.pop %v9891
        %v9893 = vmul.f32 %v9536, 1.442695
        %v9894 = vpow.pop %v9893
        %v9895 = vmul.f32 %v9537, 1.442695
        %v9896 = vpow.pop %v9895
        %v9897 = vmul.f32 %v9538, 1.442695
        %v9898 = vpow.pop %v9897
        %v9899 = vmul.f32 %v9539, 1.442695
        %v9900 = vpow.pop %v9899
        %v9901 = vmul.f32 %v9540, 1.442695
        %v9902 = vpow.pop %v9901
        %v9903 = vmul.f32 %v9541, 1.442695
        %v9904 = vpow.pop %v9903
        %v9905 = vmul.f32 %v9542, 1.442695
        %v9906 = vpow.pop %v9905
        %v9907 = vmul.f32 %v9543, 1.442695
        %v9908 = vpow.pop %v9907
        %v9909 = vmul.f32 %v9544, 1.442695
        %v9910 = vpow.pop %v9909
        %v9911 = vmul.f32 %v9545, 1.442695
        %v9912 = vpow.pop %v9911
        %v9913 = vmul.f32 %v9546, 1.442695
        %v9914 = vpow.pop %v9913
        %v9915 = vmul.f32 %v9547, 1.442695
        %v9916 = vpow.pop %v9915
        %v9917 = vmul.f32 %v9548, 1.442695
        %v9918 = vpow.pop %v9917
        %v9919 = vmul.f32 %v9549, 1.442695
        %v9920 = vpow.pop %v9919
        %v9921 = vmul.f32 %v9550, 1.442695
        %v9922 = vpow.pop %v9921
        %v9923 = vmul.f32 %v9551, 1.442695
        %v9924 = vpow.pop %v9923
        %v9925 = vmul.f32 %v9552, 1.442695
        %v9926 = vpow.pop %v9925
        %v9927 = vmul.f32 %v9553, 1.442695
        %v9928 = vpow.pop %v9927
        %v9929 = vmul.f32 %v9554, 1.442695
        %v9930 = vpow.pop %v9929
        %v9931 = vmul.f32 %v9555, 1.442695
        %v9932 = vpow.pop %v9931
        %v9933 = vmul.f32 %v9556, 1.442695
        %v9934 = vpow.pop %v9933
        %v9935 = vmul.f32 %v9557, 1.442695
        %v9936 = vpow.pop %v9935
        %v9937 = vmul.f32 %v9558, 1.442695
        %v9938 = vpow.pop %v9937
        %v9939 = vmul.f32 %v9559, 1.442695
        %v9940 = vpow.pop %v9939
        %v9941 = vmul.f32 %v9560, 1.442695
        %v9942 = vpow.pop %v9941
        %v9943 = vmul.f32 %v9561, 1.442695
        %v9944 = vpow.pop %v9943
        %v9945 = vmul.f32 %v9562, 1.442695
        %v9946 = vpow.pop %v9945
        %v9947 = vmul.f32 %v9563, 1.442695
        %v9948 = vpow.pop %v9947
        %v9949 = vmul.f32 %v9564, 1.442695
        %v9950 = vpow.pop %v9949
        %v9951 = vmul.f32 %v9565, 1.442695
        %v9952 = vpow.pop %v9951
        %v9953 = vmul.f32 %v9566, 1.442695
        %v9954 = vpow.pop %v9953
        %v9955 = vmul.f32 %v9567, 1.442695
        %v9956 = vpow.pop %v9955
        %v9957 = vmul.f32 %v9568, 1.442695
        %v9958 = vpow.pop %v9957
        %v9959 = vmul.f32 %v9569, 1.442695
        %v9960 = vpow.pop %v9959
        %v9961 = vmul.f32 %v9570, 1.442695
        %v9962 = vpow.pop %v9961
        %v9963 = vmul.f32 %v9571, 1.442695
        %v9964 = vpow.pop %v9963
        %v9965 = vmul.f32 %v9572, 1.442695
        %v9966 = vpow.pop %v9965
        %v9967 = vmul.f32 %v9573, 1.442695
        %v9968 = vpow.pop %v9967
        %v9969 = vmul.f32 %v9574, 1.442695
        %v9970 = vpow.pop %v9969
        %v9971 = vmul.f32 %v9575, 1.442695
        %v9972 = vpow.pop %v9971
        %v9973 = vmul.f32 %v9576, 1.442695
        %v9974 = vpow.pop %v9973
        %v9975 = vmul.f32 %v9577, 1.442695
        %v9976 = vpow.pop %v9975
        %v9977 = vmul.f32 %v9578, 1.442695
        %v9978 = vpow.pop %v9977
        %v9979 = vmul.f32 %v9579, 1.442695
        %v9980 = vpow.pop %v9979
        %v9981 = vmul.f32 %v9580, 1.442695
        %v9982 = vpow.pop %v9981
        %v9983 = vmul.f32 %v9581, 1.442695
        %v9984 = vpow.pop %v9983
        %v9985 = vmul.f32 %v9582, 1.442695
        %v9986 = vpow.pop %v9985
        %v9987 = vmul.f32 %v9583, 1.442695
        %v9988 = vpow.pop %v9987
        %v9989 = vmul.f32 %v9584, 1.442695
        %v9990 = vpow.pop %v9989
        %v9991 = vmul.f32 %v9585, 1.442695
        %v9992 = vpow.pop %v9991
        %v9993 = vmul.f32 %v9586, 1.442695
        %v9994 = vpow.pop %v9993
        %v9995 = vmul.f32 %v9587, 1.442695
        %v9996 = vpow.pop %v9995
        %v9997 = vmul.f32 %v9588, 1.442695
        %v9998 = vpow.pop %v9997
        %v9999 = vmul.f32 %v9589, 1.442695
        %v10000 = vpow.pop %v9999
        %v10001 = vmul.f32 %v9590, 1.442695
        %v10002 = vpow.pop %v10001
        %v10003 = vmul.f32 %v9591, 1.442695
        %v10004 = vpow.pop %v10003
        %v10005 = vmul.f32 %v9592, 1.442695
        %v10006 = vpow.pop %v10005
        %v10007 = vmul.f32 %v9593, 1.442695
        %v10008 = vpow.pop %v10007
        %v10009 = vmul.f32 %v9594, 1.442695
        %v10010 = vpow.pop %v10009
        %v10011 = vmul.f32 %v9595, 1.442695
        %v10012 = vpow.pop %v10011
        %v10013 = vmul.f32 %v9596, 1.442695
        %v10014 = vpow.pop %v10013
        %v10015 = vmul.f32 %v9597, 1.442695
        %v10016 = vpow.pop %v10015
        %v10017 = vmul.f32 %v9598, 1.442695
        %v10018 = vpow.pop %v10017
        %v10019 = vmul.f32 %v9599, 1.442695
        %v10020 = vpow.pop %v10019
        %v10021 = vmul.f32 %v9600, 1.442695
        %v10022 = vpow.pop %v10021
        %v10023 = vmul.f32 %v9601, 1.442695
        %v10024 = vpow.pop %v10023
        %v10025 = vmul.f32 %v9602, 1.442695
        %v10026 = vpow.pop %v10025
        %v10027 = vmul.f32 %v9603, 1.442695
        %v10028 = vpow.pop %v10027
        %v10029 = vmul.f32 %v9604, 1.442695
        %v10030 = vpow.pop %v10029
        %v10031 = vmul.f32 %v9605, 1.442695
        %v10032 = vpow.pop %v10031
        %v10033 = vmul.f32 %v9606, 1.442695
        %v10034 = vpow.pop %v10033
        %v10035 = vmul.f32 %v9607, 1.442695
        %v10036 = vpow.pop %v10035
        %v10037 = vmul.f32 %v9608, 1.442695
        %v10038 = vpow.pop %v10037
        %v10039 = vmul.f32 %v9609, 1.442695
        %v10040 = vpow.pop %v10039
        %v10041 = vmul.f32 %v9610, 1.442695
        %v10042 = vpow.pop %v10041
        %v10043 = vmul.f32 %v9611, 1.442695
        %v10044 = vpow.pop %v10043
        %v10045 = vmul.f32 %v9612, 1.442695
        %v10046 = vpow.pop %v10045
        %v10047 = vmul.f32 %v9613, 1.442695
        %v10048 = vpow.pop %v10047
        %v10049 = vmul.f32 %v9614, 1.442695
        %v10050 = vpow.pop %v10049
        %v10051 = vmul.f32 %v9615, 1.442695
        %v10052 = vpow.pop %v10051
        %v10053 = vmul.f32 %v9616, 1.442695
        %v10054 = vpow.pop %v10053
        %v10055 = vmul.f32 %v9617, 1.442695
        %v10056 = vpow.pop %v10055
        %v10057 = vmul.f32 %v9618, 1.442695
        %v10058 = vpow.pop %v10057
        %v10059 = vmul.f32 %v9619, 1.442695
        %v10060 = vpow.pop %v10059
        %v10061 = vmul.f32 %v9620, 1.442695
        %v10062 = vpow.pop %v10061
        %v10063 = vmul.f32 %v9621, 1.442695
        %v10064 = vpow.pop %v10063
        %v10065 = vmul.f32 %v9622, 1.442695
        %v10066 = vpow.pop %v10065
        %v10067 = vmul.f32 %v9623, 1.442695
        %v10068 = vpow.pop %v10067
        %v10069 = vmul.f32 %v9624, 1.442695
        %v10070 = vpow.pop %v10069
        %v10071 = vmul.f32 %v9625, 1.442695
        %v10072 = vpow.pop %v10071
        %v10073 = vmul.f32 %v9626, 1.442695
        %v10074 = vpow.pop %v10073
        %v10075 = vmul.f32 %v9627, 1.442695
        %v10076 = vpow.pop %v10075
        %v10077 = vmul.f32 %v9628, 1.442695
        %v10078 = vpow.pop %v10077
        %v10079 = vmul.f32 %v9629, 1.442695
        %v10080 = vpow.pop %v10079
        %v10081 = vmul.f32 %v9630, 1.442695
        %v10082 = vpow.pop %v10081
        %v10083 = vmul.f32 %v9631, 1.442695
        %v10084 = vpow.pop %v10083
        %v10085 = vmul.f32 %v9632, 1.442695
        %v10086 = vpow.pop %v10085
        %v10087 = vmul.f32 %v9633, 1.442695
        %v10088 = vpow.pop %v10087
        %v10089 = vmul.f32 %v9634, 1.442695
        %v10090 = vpow.pop %v10089
        %v10091 = vmul.f32 %v9635, 1.442695
        %v10092 = vpow.pop %v10091
        %v10093 = vmul.f32 %v9636, 1.442695
        %v10094 = vpow.pop %v10093
        %v10095 = vmul.f32 %v9637, 1.442695
        %v10096 = vpow.pop %v10095
        %v10097 = vmul.f32 %v9638, 1.442695
        %v10098 = vpow.pop %v10097
        %v10099 = vmul.f32 %v9639, 1.442695
        %v10100 = vpow.pop %v10099
        %v10101 = vmul.f32 %v9640, 1.442695
        %v10102 = vpow.pop %v10101
        %v10103 = vmul.f32 %v9641, 1.442695
        %v10104 = vpow.pop %v10103
        %v10105 = vmul.f32 %v9642, 1.442695
        %v10106 = vpow.pop %v10105
        %v10107 = vmul.f32 %v9643, 1.442695
        %v10108 = vpow.pop %v10107
        %v10109 = vmul.f32 %v9644, 1.442695
        %v10110 = vpow.pop %v10109
        %v10111 = vmul.f32 %v9645, 1.442695
        %v10112 = vpow.pop %v10111
        %v10113 = vmul.f32 %v9646, 1.442695
        %v10114 = vpow.pop %v10113
        %v10115 = vmul.f32 %v9647, 1.442695
        %v10116 = vpow.pop %v10115
        %v10117 = vmul.f32 %v9648, 1.442695
        %v10118 = vpow.pop %v10117
        %v10119 = vmul.f32 %v9649, 1.442695
        %v10120 = vpow.pop %v10119
        %v10121 = vmul.f32 %v9650, 1.442695
        %v10122 = vpow.pop %v10121
        %v10123 = vmul.f32 %v9651, 1.442695
        %v10124 = vpow.pop %v10123
        %v10125 = vmul.f32 %v9652, 1.442695
        %v10126 = vpow.pop %v10125
        %v10127 = vmul.f32 %v9653, 1.442695
        %v10128 = vpow.pop %v10127
        %v10129 = vmul.f32 %v9654, 1.442695
        %v10130 = vpow.pop %v10129
        %v10131 = vmul.f32 %v9655, 1.442695
        %v10132 = vpow.pop %v10131
        %v10133 = vmul.f32 %v9656, 1.442695
        %v10134 = vpow.pop %v10133
        %v10135 = vmul.f32 %v9657, 1.442695
        %v10136 = vpow.pop %v10135
        %v10137 = vmul.f32 %v9658, 1.442695
        %v10138 = vpow.pop %v10137
        %v10139 = vmul.f32 %v9659, 1.442695
        %v10140 = vpow.pop %v10139
        %v10141 = vmul.f32 %v9660, 1.442695
        %v10142 = vpow.pop %v10141
        %v10143 = vmul.f32 %v9661, 1.442695
        %v10144 = vpow.pop %v10143
        %v10145 = vmul.f32 %v9662, 1.442695
        %v10146 = vpow.pop %v10145
        %v10147 = vmul.f32 %v9663, 1.442695
        %v10148 = vpow.pop %v10147
        %v10149 = vmul.f32 %v9664, 1.442695
        %v10150 = vpow.pop %v10149
        %v10151 = vmul.f32 %v9665, 1.442695
        %v10152 = vpow.pop %v10151
        %v10153 = vmul.f32 %v9666, 1.442695
        %v10154 = vpow.pop %v10153
        %v10155 = vmul.f32 %v9667, 1.442695
        %v10156 = vpow.pop %v10155
        %v10157 = vmul.f32 %v9668, 1.442695
        %v10158 = vpow.pop %v10157
        %v10159 = vmul.f32 %v9669, 1.442695
        %v10160 = vpow.pop %v10159
        %v10161 = vmul.f32 %v9670, 1.442695
        %v10162 = vpow.pop %v10161
        %v10163 = vmul.f32 %v9671, 1.442695
        %v10164 = vpow.pop %v10163
        %v10165 = vmul.f32 %v9672, 1.442695
        %v10166 = vpow.pop %v10165
        %v10167 = vmul.f32 %v9673, 1.442695
        %v10168 = vpow.pop %v10167
        %v10169 = vmul.f32 %v9674, 1.442695
        %v10170 = vpow.pop %v10169
        %v10171 = vmul.f32 %v9675, 1.442695
        %v10172 = vpow.pop %v10171
        %v10173 = vmul.f32 %v9676, 1.442695
        %v10174 = vpow.pop %v10173
        %v10175 = vmul.f32 %v9677, 1.442695
        %v10176 = vpow.pop %v10175
        %v10177 = vmul.f32 %v9678, 1.442695
        %v10178 = vpow.pop %v10177
        %v10179 = vmul.f32 %v9679, 1.442695
        %v10180 = vpow.pop %v10179
        %v10181 = vmul.f32 %v9680, 1.442695
        %v10182 = vpow.pop %v10181
        %v10183 = vmul.f32 %v9681, 1.442695
        %v10184 = vpow.pop %v10183
        %v10185 = vmul.f32 %v9682, 1.442695
        %v10186 = vpow.pop %v10185
        %v10187 = vmul.f32 %v9683, 1.442695
        %v10188 = vpow.pop %v10187
        %v10189 = vmul.f32 %v9684, 1.442695
        %v10190 = vpow.pop %v10189
        %v10191 = vmul.f32 %v9685, 1.442695
        %v10192 = vpow.pop %v10191
        %v10193 = vmul.f32 %v9686, 1.442695
        %v10194 = vpow.pop %v10193
        %v10195 = vmul.f32 %v9687, 1.442695
        %v10196 = vpow.pop %v10195
        %v10197 = vmul.f32 %v9688, 1.442695
        %v10198 = vpow.pop %v10197
        %v10199 = vmul.f32 %v9689, 1.442695
        %v10200 = vpow.pop %v10199
        %v10201 = vmul.f32 %v9690, 1.442695
        %v10202 = vpow.pop %v10201
        %v10203 = vadd.f32 %v9692, %v9694
        %v10204 = vadd.f32 %v10203, %v9696
        %v10205 = vadd.f32 %v10204, %v9698
        %v10206 = vadd.f32 %v10205, %v9700
        %v10207 = vadd.f32 %v10206, %v9702
        %v10208 = vadd.f32 %v10207, %v9704
        %v10209 = vadd.f32 %v10208, %v9706
        %v10210 = vadd.f32 %v10209, %v9708
        %v10211 = vadd.f32 %v10210, %v9710
        %v10212 = vadd.f32 %v10211, %v9712
        %v10213 = vadd.f32 %v10212, %v9714
        %v10214 = vadd.f32 %v10213, %v9716
        %v10215 = vadd.f32 %v10214, %v9718
        %v10216 = vadd.f32 %v10215, %v9720
        %v10217 = vadd.f32 %v10216, %v9722
        %v10218 = vadd.f32 %v10217, %v9724
        %v10219 = vadd.f32 %v10218, %v9726
        %v10220 = vadd.f32 %v10219, %v9728
        %v10221 = vadd.f32 %v10220, %v9730
        %v10222 = vadd.f32 %v10221, %v9732
        %v10223 = vadd.f32 %v10222, %v9734
        %v10224 = vadd.f32 %v10223, %v9736
        %v10225 = vadd.f32 %v10224, %v9738
        %v10226 = vadd.f32 %v10225, %v9740
        %v10227 = vadd.f32 %v10226, %v9742
        %v10228 = vadd.f32 %v10227, %v9744
        %v10229 = vadd.f32 %v10228, %v9746
        %v10230 = vadd.f32 %v10229, %v9748
        %v10231 = vadd.f32 %v10230, %v9750
        %v10232 = vadd.f32 %v10231, %v9752
        %v10233 = vadd.f32 %v10232, %v9754
        %v10234 = vadd.f32 %v10233, %v9756
        %v10235 = vadd.f32 %v10234, %v9758
        %v10236 = vadd.f32 %v10235, %v9760
        %v10237 = vadd.f32 %v10236, %v9762
        %v10238 = vadd.f32 %v10237, %v9764
        %v10239 = vadd.f32 %v10238, %v9766
        %v10240 = vadd.f32 %v10239, %v9768
        %v10241 = vadd.f32 %v10240, %v9770
        %v10242 = vadd.f32 %v10241, %v9772
        %v10243 = vadd.f32 %v10242, %v9774
        %v10244 = vadd.f32 %v10243, %v9776
        %v10245 = vadd.f32 %v10244, %v9778
        %v10246 = vadd.f32 %v10245, %v9780
        %v10247 = vadd.f32 %v10246, %v9782
        %v10248 = vadd.f32 %v10247, %v9784
        %v10249 = vadd.f32 %v10248, %v9786
        %v10250 = vadd.f32 %v10249, %v9788
        %v10251 = vadd.f32 %v10250, %v9790
        %v10252 = vadd.f32 %v10251, %v9792
        %v10253 = vadd.f32 %v10252, %v9794
        %v10254 = vadd.f32 %v10253, %v9796
        %v10255 = vadd.f32 %v10254, %v9798
        %v10256 = vadd.f32 %v10255, %v9800
        %v10257 = vadd.f32 %v10256, %v9802
        %v10258 = vadd.f32 %v10257, %v9804
        %v10259 = vadd.f32 %v10258, %v9806
        %v10260 = vadd.f32 %v10259, %v9808
        %v10261 = vadd.f32 %v10260, %v9810
        %v10262 = vadd.f32 %v10261, %v9812
        %v10263 = vadd.f32 %v10262, %v9814
        %v10264 = vadd.f32 %v10263, %v9816
        %v10265 = vadd.f32 %v10264, %v9818
        %v10266 = vadd.f32 %v10265, %v9820
        %v10267 = vadd.f32 %v10266, %v9822
        %v10268 = vadd.f32 %v10267, %v9824
        %v10269 = vadd.f32 %v10268, %v9826
        %v10270 = vadd.f32 %v10269, %v9828
        %v10271 = vadd.f32 %v10270, %v9830
        %v10272 = vadd.f32 %v10271, %v9832
        %v10273 = vadd.f32 %v10272, %v9834
        %v10274 = vadd.f32 %v10273, %v9836
        %v10275 = vadd.f32 %v10274, %v9838
        %v10276 = vadd.f32 %v10275, %v9840
        %v10277 = vadd.f32 %v10276, %v9842
        %v10278 = vadd.f32 %v10277, %v9844
        %v10279 = vadd.f32 %v10278, %v9846
        %v10280 = vadd.f32 %v10279, %v9848
        %v10281 = vadd.f32 %v10280, %v9850
        %v10282 = vadd.f32 %v10281, %v9852
        %v10283 = vadd.f32 %v10282, %v9854
        %v10284 = vadd.f32 %v10283, %v9856
        %v10285 = vadd.f32 %v10284, %v9858
        %v10286 = vadd.f32 %v10285, %v9860
        %v10287 = vadd.f32 %v10286, %v9862
        %v10288 = vadd.f32 %v10287, %v9864
        %v10289 = vadd.f32 %v10288, %v9866
        %v10290 = vadd.f32 %v10289, %v9868
        %v10291 = vadd.f32 %v10290, %v9870
        %v10292 = vadd.f32 %v10291, %v9872
        %v10293 = vadd.f32 %v10292, %v9874
        %v10294 = vadd.f32 %v10293, %v9876
        %v10295 = vadd.f32 %v10294, %v9878
        %v10296 = vadd.f32 %v10295, %v9880
        %v10297 = vadd.f32 %v10296, %v9882
        %v10298 = vadd.f32 %v10297, %v9884
        %v10299 = vadd.f32 %v10298, %v9886
        %v10300 = vadd.f32 %v10299, %v9888
        %v10301 = vadd.f32 %v10300, %v9890
        %v10302 = vadd.f32 %v10301, %v9892
        %v10303 = vadd.f32 %v10302, %v9894
        %v10304 = vadd.f32 %v10303, %v9896
        %v10305 = vadd.f32 %v10304, %v9898
        %v10306 = vadd.f32 %v10305, %v9900
        %v10307 = vadd.f32 %v10306, %v9902
        %v10308 = vadd.f32 %v10307, %v9904
        %v10309 = vadd.f32 %v10308, %v9906
        %v10310 = vadd.f32 %v10309, %v9908
        %v10311 = vadd.f32 %v10310, %v9910
        %v10312 = vadd.f32 %v10311, %v9912
        %v10313 = vadd.f32 %v10312, %v9914
        %v10314 = vadd.f32 %v10313, %v9916
        %v10315 = vadd.f32 %v10314, %v9918
        %v10316 = vadd.f32 %v10315, %v9920
        %v10317 = vadd.f32 %v10316, %v9922
        %v10318 = vadd.f32 %v10317, %v9924
        %v10319 = vadd.f32 %v10318, %v9926
        %v10320 = vadd.f32 %v10319, %v9928
        %v10321 = vadd.f32 %v10320, %v9930
        %v10322 = vadd.f32 %v10321, %v9932
        %v10323 = vadd.f32 %v10322, %v9934
        %v10324 = vadd.f32 %v10323, %v9936
        %v10325 = vadd.f32 %v10324, %v9938
        %v10326 = vadd.f32 %v10325, %v9940
        %v10327 = vadd.f32 %v10326, %v9942
        %v10328 = vadd.f32 %v10327, %v9944
        %v10329 = vadd.f32 %v10328, %v9946
        %10330 = vadd.xlane.f32.xlu0 %v10329
        %v10331 = vpop.xlane.xlu0 %10330
        %v10332 = vadd.f32 %v9948, %v9950
        %v10333 = vadd.f32 %v10332, %v9952
        %v10334 = vadd.f32 %v10333, %v9954
        %v10335 = vadd.f32 %v10334, %v9956
        %v10336 = vadd.f32 %v10335, %v9958
        %v10337 = vadd.f32 %v10336, %v9960
        %v10338 = vadd.f32 %v10337, %v9962
        %v10339 = vadd.f32 %v10338, %v9964
        %v10340 = vadd.f32 %v10339, %v9966
        %v10341 = vadd.f32 %v10340, %v9968
        %v10342 = vadd.f32 %v10341, %v9970
        %v10343 = vadd.f32 %v10342, %v9972
        %v10344 = vadd.f32 %v10343, %v9974
        %v10345 = vadd.f32 %v10344, %v9976
        %v10346 = vadd.f32 %v10345, %v9978
        %v10347 = vadd.f32 %v10346, %v9980
        %v10348 = vadd.f32 %v10347, %v9982
        %v10349 = vadd.f32 %v10348, %v9984
        %v10350 = vadd.f32 %v10349, %v9986
        %v10351 = vadd.f32 %v10350, %v9988
        %v10352 = vadd.f32 %v10351, %v9990
        %v10353 = vadd.f32 %v10352, %v9992
        %v10354 = vadd.f32 %v10353, %v9994
        %v10355 = vadd.f32 %v10354, %v9996
        %v10356 = vadd.f32 %v10355, %v9998
        %v10357 = vadd.f32 %v10356, %v10000
        %v10358 = vadd.f32 %v10357, %v10002
        %v10359 = vadd.f32 %v10358, %v10004
        %v10360 = vadd.f32 %v10359, %v10006
        %v10361 = vadd.f32 %v10360, %v10008
        %v10362 = vadd.f32 %v10361, %v10010
        %v10363 = vadd.f32 %v10362, %v10012
        %v10364 = vadd.f32 %v10363, %v10014
        %v10365 = vadd.f32 %v10364, %v10016
        %v10366 = vadd.f32 %v10365, %v10018
        %v10367 = vadd.f32 %v10366, %v10020
        %v10368 = vadd.f32 %v10367, %v10022
        %v10369 = vadd.f32 %v10368, %v10024
        %v10370 = vadd.f32 %v10369, %v10026
        %v10371 = vadd.f32 %v10370, %v10028
        %v10372 = vadd.f32 %v10371, %v10030
        %v10373 = vadd.f32 %v10372, %v10032
        %v10374 = vadd.f32 %v10373, %v10034
        %v10375 = vadd.f32 %v10374, %v10036
        %v10376 = vadd.f32 %v10375, %v10038
        %v10377 = vadd.f32 %v10376, %v10040
        %v10378 = vadd.f32 %v10377, %v10042
        %v10379 = vadd.f32 %v10378, %v10044
        %v10380 = vadd.f32 %v10379, %v10046
        %v10381 = vadd.f32 %v10380, %v10048
        %v10382 = vadd.f32 %v10381, %v10050
        %v10383 = vadd.f32 %v10382, %v10052
        %v10384 = vadd.f32 %v10383, %v10054
        %v10385 = vadd.f32 %v10384, %v10056
        %v10386 = vadd.f32 %v10385, %v10058
        %v10387 = vadd.f32 %v10386, %v10060
        %v10388 = vadd.f32 %v10387, %v10062
        %v10389 = vadd.f32 %v10388, %v10064
        %v10390 = vadd.f32 %v10389, %v10066
        %v10391 = vadd.f32 %v10390, %v10068
        %v10392 = vadd.f32 %v10391, %v10070
        %v10393 = vadd.f32 %v10392, %v10072
        %v10394 = vadd.f32 %v10393, %v10074
        %v10395 = vadd.f32 %v10394, %v10076
        %v10396 = vadd.f32 %v10395, %v10078
        %v10397 = vadd.f32 %v10396, %v10080
        %v10398 = vadd.f32 %v10397, %v10082
        %v10399 = vadd.f32 %v10398, %v10084
        %v10400 = vadd.f32 %v10399, %v10086
        %v10401 = vadd.f32 %v10400, %v10088
        %v10402 = vadd.f32 %v10401, %v10090
        %v10403 = vadd.f32 %v10402, %v10092
        %v10404 = vadd.f32 %v10403, %v10094
        %v10405 = vadd.f32 %v10404, %v10096
        %v10406 = vadd.f32 %v10405, %v10098
        %v10407 = vadd.f32 %v10406, %v10100
        %v10408 = vadd.f32 %v10407, %v10102
        %v10409 = vadd.f32 %v10408, %v10104
        %v10410 = vadd.f32 %v10409, %v10106
        %v10411 = vadd.f32 %v10410, %v10108
        %v10412 = vadd.f32 %v10411, %v10110
        %v10413 = vadd.f32 %v10412, %v10112
        %v10414 = vadd.f32 %v10413, %v10114
        %v10415 = vadd.f32 %v10414, %v10116
        %v10416 = vadd.f32 %v10415, %v10118
        %v10417 = vadd.f32 %v10416, %v10120
        %v10418 = vadd.f32 %v10417, %v10122
        %v10419 = vadd.f32 %v10418, %v10124
        %v10420 = vadd.f32 %v10419, %v10126
        %v10421 = vadd.f32 %v10420, %v10128
        %v10422 = vadd.f32 %v10421, %v10130
        %v10423 = vadd.f32 %v10422, %v10132
        %v10424 = vadd.f32 %v10423, %v10134
        %v10425 = vadd.f32 %v10424, %v10136
        %v10426 = vadd.f32 %v10425, %v10138
        %v10427 = vadd.f32 %v10426, %v10140
        %v10428 = vadd.f32 %v10427, %v10142
        %v10429 = vadd.f32 %v10428, %v10144
        %v10430 = vadd.f32 %v10429, %v10146
        %v10431 = vadd.f32 %v10430, %v10148
        %v10432 = vadd.f32 %v10431, %v10150
        %v10433 = vadd.f32 %v10432, %v10152
        %v10434 = vadd.f32 %v10433, %v10154
        %v10435 = vadd.f32 %v10434, %v10156
        %v10436 = vadd.f32 %v10435, %v10158
        %v10437 = vadd.f32 %v10436, %v10160
        %v10438 = vadd.f32 %v10437, %v10162
        %v10439 = vadd.f32 %v10438, %v10164
        %v10440 = vadd.f32 %v10439, %v10166
        %v10441 = vadd.f32 %v10440, %v10168
        %v10442 = vadd.f32 %v10441, %v10170
        %v10443 = vadd.f32 %v10442, %v10172
        %v10444 = vadd.f32 %v10443, %v10174
        %v10445 = vadd.f32 %v10444, %v10176
        %v10446 = vadd.f32 %v10445, %v10178
        %v10447 = vadd.f32 %v10446, %v10180
        %v10448 = vadd.f32 %v10447, %v10182
        %v10449 = vadd.f32 %v10448, %v10184
        %v10450 = vadd.f32 %v10449, %v10186
        %v10451 = vadd.f32 %v10450, %v10188
        %v10452 = vadd.f32 %v10451, %v10190
        %v10453 = vadd.f32 %v10452, %v10192
        %v10454 = vadd.f32 %v10453, %v10194
        %v10455 = vadd.f32 %v10454, %v10196
        %v10456 = vadd.f32 %v10455, %v10198
        %v10457 = vadd.f32 %v10456, %v10200
        %v10458 = vadd.f32 %v10457, %v10202
        %10459 = vadd.xlane.f32.xlu0 %v10458
        %v10460 = vpop.xlane.xlu0 %10459
        %v10461 = vadd.f32 %v9423, %v10331
        %v10462 = vadd.f32 %v9424, %v10460
        %vm10463 = vcmask 7168
        %10464 = vst.msk [vmem:[#allocation4] sm:$0xff] %vm10463, %v10461
        %10465 = vst.msk [vmem:[#allocation4 + $0x8] sm:$0xff] %vm10463, %v10462
        %10466 = vst.msk [vmem:[#allocation3] sm:$0xff] %vm10463, %v9413
        %10467 = vst.msk [vmem:[#allocation3 + $0x8] sm:$0xff] %vm10463, %v9414
        %p10468 = scmp.eq.s32.totalorder %s24, 1
        // Predicated region
        $region41: #{tpu_custom_call.1} parent=27 // pred_check
          %p10469 = pneg %p10468
        $region42: #{tpu_custom_call.1} parent=27 // pred_check_branch
          %10471 = sbr.rel (%p10469) target = $region44
        $region43: #{tpu_custom_call.1} parent=27 // pred_region
          %v10472 = vld [vmem:[#allocation3] sm:$0xff]
          %v10473 = vld [vmem:[#allocation3 + $0x8] sm:$0xff]
          %10474 = vst.msk [vmem:[%s234] sm:$0xff] %vm10463, %v10472
          %10475 = vst.msk [vmem:[%s234 + $0x8] sm:$0xff] %vm10463, %v10473
          %v10476 = vld [vmem:[#allocation4] sm:$0xff]
          %v10477 = vld [vmem:[#allocation4 + $0x8] sm:$0xff]
          %10478 = vst.msk [vmem:[%s239] sm:$0xff] %vm10463, %v10476
          %10479 = vst.msk [vmem:[%s239 + $0x8] sm:$0xff] %vm10463, %v10477
        $region44: #{tpu_custom_call.1} parent=27 // pred_fallthru
          _
        %p10480 = scmp.lt.s32.totalorder %s23, 1
        %s10481 = scalar_select %p10480, %s23, 1
        %s10482 = smul.addr %s10481, 2
        %s10483 = smul.addr %s10482, 8
        %s10484 = scalar_lea.vmem %s2, %s10483
        %p10485 = scmp.lt.s32.totalorder %s23, 1
        %s10486 = scalar_select %p10485, %s23, 1
        %s10487 = smul.addr %s10486, 2
        %s10488 = smul.addr %s10487, 8
        %s10489 = scalar_lea.vmem %s3, %s10488
        // Predicated region
        $region45: #{tpu_custom_call.1} parent=27 // pred_check
          %p10490 = pneg %p100
        $region46: #{tpu_custom_call.1} parent=27 // pred_check_branch
          %10492 = sbr.rel (%p10490) target = $region48
        $region47: #{tpu_custom_call.1} parent=27 // pred_region
          _
        $region48: #{tpu_custom_call.1} parent=27 // pred_fallthru
          _
        // Predicated region
        $region49: #{tpu_custom_call.1} parent=27 // pred_check
          %p10493 = pneg %p126
        $region50: #{tpu_custom_call.1} parent=27 // pred_check_branch
          %10495 = sbr.rel (%p10493) target = $region52
        $region51: #{tpu_custom_call.1} parent=27 // pred_region
          _
        $region52: #{tpu_custom_call.1} parent=27 // pred_fallthru
          _
      $region28: #{tpu_custom_call.1} parent=5 // pred_fallthru
        _
      %p10496 = scmp.le.s32.totalorder 2, %s14
      // Predicated region
      $region53: #{tpu_custom_call.1} parent=5 // pred_check
        %p10497 = pneg %p10496
      $region54: #{tpu_custom_call.1} parent=5 // pred_check_branch
        %10499 = sbr.rel (%p10497) target = $region56
      $region55: #{tpu_custom_call.1} parent=5 // pred_region
        %s10500 = ssub.s32 %s14, 2
        // Predicated region
        $region57: #{tpu_custom_call.1} parent=55 // pred_check
          %p10501 = pneg %p106
        $region58: #{tpu_custom_call.1} parent=55 // pred_check_branch
          %10503 = sbr.rel (%p10501) target = $region60
        $region59: #{tpu_custom_call.1} parent=55 // pred_region
          %p10504 = scmp.lt.s32.totalorder %s25, 1
          %s10505 = scalar_select %p10504, %s25, 1
          %s10506 = smul.addr %s10505, 2
          %s10507 = smul.addr %s10506, 8
          %s10508 = scalar_lea.vmem %s2, %s10507
        $region60: #{tpu_custom_call.1} parent=55 // pred_fallthru
          _
        // Predicated region
        $region61: #{tpu_custom_call.1} parent=55 // pred_check
          %p10509 = pneg %p132
        $region62: #{tpu_custom_call.1} parent=55 // pred_check_branch
          %10511 = sbr.rel (%p10509) target = $region64
        $region63: #{tpu_custom_call.1} parent=55 // pred_region
          %p10512 = scmp.lt.s32.totalorder %s25, 1
          %s10513 = scalar_select %p10512, %s25, 1
          %s10514 = smul.addr %s10513, 2
          %s10515 = smul.addr %s10514, 8
          %s10516 = scalar_lea.vmem %s3, %s10515
        $region64: #{tpu_custom_call.1} parent=55 // pred_fallthru
          _
      $region56: #{tpu_custom_call.1} parent=5 // pred_fallthru
        _
    $region6: #{tpu_custom_call.1} parent=1 // loop_footer
      %s18 = sadd.s32 1, %s14
    $region7: #{tpu_custom_call.1} parent=1 // loop_footer_branch
      %13 = sbr.rel target = $region3
    $region8: #{tpu_custom_call.1} parent=1 // loop_exit
      _
    %10517 = vsyncpa [#allocation6], 1
    %s10518 = scalar_lea.sflag [#allocation6], 1
    %10519 = vsyncpa %s10518, 1
    %10520 = vsyncpa [#allocation8], 1
    %s10521 = scalar_lea.sflag [#allocation8], 1
    %10522 = vsyncpa %s10521, 1

</llo_original>
